<compile_context>
chip_gen: v7x
topology: tpu7x:2x2x1
jax: 0.10.0
libtpu: 0.0.40
codegen_flags: <defaults>
</compile_context>

<pallas_src>
import jax
import jax.numpy as jnp
from jax.experimental import pallas as pl
from jax.experimental.pallas import tpu as pltpu

NEG_SLOPE = 0.01  # torch.nn.LeakyReLU default
BN_EPS = 1e-5


def _leaky(x):
    return jnp.where(x > 0, x, NEG_SLOPE * x)


def fused_convbnact_se_kernel(
    x_ref,      # (NB, H, W, 9*Cin) bf16  9-tap (kh,kw)-packed input block
    w1_ref,     # (9*Cin, Cout)     bf16  conv1 weights, all taps folded into K
    s1_ref,     # (1, Cout)         f32   folded BN1 scale
    b1_ref,     # (1, Cout)         f32   folded BN1 shift (includes conv bias)
    w2_ref,     # (9, Cout, Cout)   bf16  conv2 weights, taps flattened row-major
    s2_ref,     # (1, Cout)         f32   folded BN2 scale
    b2_ref,     # (1, Cout)         f32   folded BN2 shift
    wa_ref,     # (Cout, Cmid)      f32   SE fc1 weight (applied as s @ Wa)
    ba_ref,     # (1, Cmid)         f32   SE fc1 bias
    wb_ref,     # (Cmid, Cout)      f32   SE fc2 weight
    bb_ref,     # (1, Cout)         f32   SE fc2 bias
    out_ref,    # (NB, H, W, Cout)  bf16
    pad_ref,    # VMEM scratch (NB, H+2, W+2, Cout) bf16 : zero-padded y1
):
    NB, H, W, Cout = out_ref.shape
    Hp, Wp = pad_ref.shape[1], pad_ref.shape[2]
    K1 = x_ref.shape[3]          # 9 * Cin
    HW = H * W
    M = NB * HW

    # ---- Conv1 (3x3, same): ONE MXU matmul, all 9 taps folded into K ----
    patches1 = x_ref[...].reshape(M, K1)                                 # bf16
    acc1 = jnp.dot(patches1, w1_ref[...], preferred_element_type=jnp.float32)
    # Folded BN (eval mode) + LeakyReLU in f32 (v5e has no bf16 VPU/EUP).
    y1 = _leaky(acc1 * s1_ref[...] + b1_ref[...])
    # Dropout: identity at inference.
    # TODO(synk): training-mode dropout / batch-statistics BN not implemented.

    # ---- Stage y1 (bf16, single cast) with a 1-px zero halo for conv2 ----
    zrow = jnp.zeros((NB, 1, Wp, Cout), pad_ref.dtype)
    zcol = jnp.zeros((NB, H, 1, Cout), pad_ref.dtype)
    pad_ref[:, 0:1, :, :] = zrow
    pad_ref[:, Hp - 1:Hp, :, :] = zrow
    pad_ref[:, 1:H + 1, 0:1, :] = zcol
    pad_ref[:, 1:H + 1, Wp - 1:Wp, :] = zcol
    pad_ref[:, 1:H + 1, 1:W + 1, :] = (
        y1.reshape(NB, H, W, Cout).astype(pad_ref.dtype))

    # ---- Conv2 (3x3, same): 9 bf16 taps, f32 accumulation ----
    # TODO(synk): fold kw into K (3 matmuls, K=3*Cout) once in-kernel
    # lane-concat of <128-lane chunks is verified to lower in Mosaic.
    acc2 = jnp.zeros((M, Cout), jnp.float32)
    for kh in range(3):
        for kw in range(3):
            patch = pad_ref[:, kh:kh + H, kw:kw + W, :].reshape(M, Cout)  # bf16
            acc2 += jnp.dot(patch, w2_ref[kh * 3 + kw],
                            preferred_element_type=jnp.float32)
    y2 = _leaky(acc2 * s2_ref[...] + b2_ref[...])

    # ---- Residual SE per image: x + x * relu(Wb @ leakyrelu(Wa @ avgpool(x)))
    # (Tiny matmuls kept in f32; static per-image unroll, NB <= 8.)
    for b in range(NB):
        y2b = y2[b * HW:(b + 1) * HW, :]                           # (HW, Cout)
        s = jnp.mean(y2b, axis=0, keepdims=True)                   # (1, Cout)
        z = _leaky(jnp.dot(s, wa_ref[...],
                           preferred_element_type=jnp.float32) + ba_ref[...])
        g = jnp.maximum(jnp.dot(z, wb_ref[...],
                                preferred_element_type=jnp.float32) + bb_ref[...],
                        0.0)
        outb = y2b * (1.0 + g)                                     # broadcast rows
        out_ref[b, :, :, :] = outb.reshape(H, W, Cout).astype(out_ref.dtype)


def conv_bn_act_block(x_nchw, p, images_per_step=None):
    """Runs the fused Pallas kernel. x_nchw: (N, Cin, H, W) f32 -> (N, Cout, H, W) f32."""
    x = jnp.transpose(x_nchw, (0, 2, 3, 1))                  # NHWC
    N, H, W, Cin = x.shape
    Hp, Wp = H + 2, W + 2
    Cout = p["w2"].shape[-1]
    Cmid = p["wa"].shape[-1]

    if images_per_step is None:
        nb = 1
        for d in range(1, min(N, 8) + 1):
            if N % d == 0:
                nb = d
    else:
        nb = images_per_step
    assert N % nb == 0, "images_per_step must divide the batch"

    # Pack all 9 conv1 taps into the channel (contraction/lane) dim, bf16.
    # NOTE: ~9x input inflation -- fine for small Cin (here 9*Cin = 36 lanes);
    # for large Cin, pack kw-only or build patches in-kernel (v6e HBM note).
    x_pad = jnp.pad(x, ((0, 0), (1, 1), (1, 1), (0, 0)))
    x_taps = jnp.concatenate(
        [x_pad[:, kh:kh + H, kw:kw + W, :]
         for kh in range(3) for kw in range(3)],
        axis=-1).astype(jnp.bfloat16)                         # (N, H, W, 9*Cin)

    w1p = p["w1"].reshape(9 * Cin, Cout).astype(jnp.bfloat16)   # taps folded into K
    w2t = p["w2"].reshape(9, Cout, Cout).astype(jnp.bfloat16)   # per-tap

    flops = int(N * (2 * H * W * (9 * Cin * Cout + 9 * Cout * Cout)
                     + 4 * Cout * Cmid))
    bytes_accessed = int(
        x_taps.size * 2 + N * H * W * Cout * 2 + (w1p.size + w2t.size) * 2
        + 4 * (p["s1"].size + p["sh1"].size + p["s2"].size + p["sh2"].size
               + p["wa"].size + p["ba"].size + p["wb"].size + p["bb"].size))

    out_nhwc = pl.pallas_call(
        fused_convbnact_se_kernel,
        out_shape=jax.ShapeDtypeStruct((N, H, W, Cout), jnp.bfloat16),
        grid=(N // nb,),
        in_specs=[
            pl.BlockSpec((nb, H, W, 9 * Cin), lambda n: (n, 0, 0, 0)),
            pl.BlockSpec((9 * Cin, Cout), lambda n: (0, 0)),
            pl.BlockSpec((1, Cout), lambda n: (0, 0)),
            pl.BlockSpec((1, Cout), lambda n: (0, 0)),
            pl.BlockSpec((9, Cout, Cout), lambda n: (0, 0, 0)),
            pl.BlockSpec((1, Cout), lambda n: (0, 0)),
            pl.BlockSpec((1, Cout), lambda n: (0, 0)),
            pl.BlockSpec((Cout, Cmid), lambda n: (0, 0)),
            pl.BlockSpec((1, Cmid), lambda n: (0, 0)),
            pl.BlockSpec((Cmid, Cout), lambda n: (0, 0)),
            pl.BlockSpec((1, Cout), lambda n: (0, 0)),
        ],
        out_specs=pl.BlockSpec((nb, H, W, Cout), lambda n: (n, 0, 0, 0)),
        scratch_shapes=[pltpu.VMEM((nb, Hp, Wp, Cout), jnp.bfloat16)],
        compiler_params=pltpu.CompilerParams(
            dimension_semantics=("parallel",),
            vmem_limit_bytes=32 * 1024 * 1024),
        cost_estimate=pl.CostEstimate(flops=flops, transcendentals=0,
                                      bytes_accessed=bytes_accessed),
    )(x_taps, w1p, p["s1"], p["sh1"], w2t, p["s2"], p["sh2"],
      p["wa"], p["ba"], p["wb"], p["bb"])

    # bf16 -> f32 convert fuses into the unavoidable NHWC->NCHW transpose.
    return jnp.transpose(out_nhwc.astype(jnp.float32), (0, 3, 1, 2))


def make_params(key, cin, cout):
    """Deterministic synthetic parameters; BN folded into scale/shift (eval mode)."""
    cmid = cout // 2  # ResidualSELayer r = 2
    ks = jax.random.split(key, 16)
    w1 = jax.random.normal(ks[0], (3, 3, cin, cout), jnp.float32) * 0.2
    bias1 = jax.random.normal(ks[1], (cout,), jnp.float32) * 0.1
    g1 = jax.random.uniform(ks[2], (cout,), jnp.float32, 0.5, 1.5)
    beta1 = jax.random.normal(ks[3], (cout,), jnp.float32) * 0.1
    m1 = jax.random.normal(ks[4], (cout,), jnp.float32) * 0.1
    v1 = jax.random.uniform(ks[5], (cout,), jnp.float32, 0.5, 1.5)

    w2 = jax.random.normal(ks[6], (3, 3, cout, cout), jnp.float32) * 0.2
    bias2 = jax.random.normal(ks[7], (cout,), jnp.float32) * 0.1
    g2 = jax.random.uniform(ks[8], (cout,), jnp.float32, 0.5, 1.5)
    beta2 = jax.random.normal(ks[9], (cout,), jnp.float32) * 0.1
    m2 = jax.random.normal(ks[10], (cout,), jnp.float32) * 0.1
    v2 = jax.random.uniform(ks[11], (cout,), jnp.float32, 0.5, 1.5)

    wa = jax.random.normal(ks[12], (cout, cmid), jnp.float32) * 0.3
    ba = jax.random.normal(ks[13], (cmid,), jnp.float32) * 0.1
    wb = jax.random.normal(ks[14], (cmid, cout), jnp.float32) * 0.3
    bb = jax.random.normal(ks[15], (cout,), jnp.float32) * 0.1

    s1 = g1 / jnp.sqrt(v1 + BN_EPS)
    sh1 = beta1 + (bias1 - m1) * s1
    s2 = g2 / jnp.sqrt(v2 + BN_EPS)
    sh2 = beta2 + (bias2 - m2) * s2

    return {
        "w1": w1, "s1": s1[None, :], "sh1": sh1[None, :],
        "w2": w2, "s2": s2[None, :], "sh2": sh2[None, :],
        "wa": wa, "ba": ba[None, :], "wb": wb, "bb": bb[None, :],
    }


def reference_forward(x_nchw, p, *, round_bf16=False):
    """Pure-JAX reference (eval-mode PyTorch semantics). If round_bf16, the conv
    inputs/weights are rounded through bf16 to mirror the kernel's MXU dtypes."""
    def rd(a):
        return a.astype(jnp.bfloat16).astype(jnp.float32) if round_bf16 else a

    x = jnp.transpose(x_nchw, (0, 2, 3, 1))  # NHWC
    dn = ("NHWC", "HWIO", "NHWC")
    y = jax.lax.conv_general_dilated(rd(x), rd(p["w1"]), (1, 1), "SAME",
                                     dimension_numbers=dn)
    y = _leaky(y * p["s1"][0] + p["sh1"][0])
    y = jax.lax.conv_general_dilated(rd(y), rd(p["w2"]), (1, 1), "SAME",
                                     dimension_numbers=dn)
    y = _leaky(y * p["s2"][0] + p["sh2"][0])
    s = jnp.mean(y, axis=(1, 2))                       # (N, Cout)
    z = _leaky(s @ p["wa"] + p["ba"][0])
    z = jnp.maximum(z @ p["wb"] + p["bb"][0], 0.0)
    out = y + y * z[:, None, None, :]
    return jnp.transpose(out, (0, 3, 1, 2))


if __name__ == "__main__":
    N, Cin, Cout, H, W = 2, 4, 32, 16, 16
    key = jax.random.PRNGKey(0)
    kx, kp = jax.random.split(key)
    x = jax.random.normal(kx, (N, Cin, H, W), jnp.float32)
    params = make_params(kp, Cin, Cout)

    out = jax.jit(conv_bn_act_block)(x, params)
    out = jax.block_until_ready(out)

    ref = reference_forward(x, params, round_bf16=True)
    assert out.shape == (N, Cout, H, W)
    assert jnp.allclose(out, ref, rtol=2e-2, atol=2e-2), "mismatch vs reference"
    print("KERNEL_OK")
</pallas_src>

<mosaic_0001>
module attributes {stable_mosaic.version = 11 : i64} {
  func.func @fused_convbnact_se_kernel(%arg0: i32, %arg1: memref<2x16x16x36xbf16, #tpu.memory_space<vmem>>, %arg2: memref<36x32xbf16, #tpu.memory_space<vmem>>, %arg3: memref<1x32xf32, #tpu.memory_space<vmem>>, %arg4: memref<1x32xf32, #tpu.memory_space<vmem>>, %arg5: memref<9x32x32xbf16, #tpu.memory_space<vmem>>, %arg6: memref<1x32xf32, #tpu.memory_space<vmem>>, %arg7: memref<1x32xf32, #tpu.memory_space<vmem>>, %arg8: memref<32x16xf32, #tpu.memory_space<vmem>>, %arg9: memref<1x16xf32, #tpu.memory_space<vmem>>, %arg10: memref<16x32xf32, #tpu.memory_space<vmem>>, %arg11: memref<1x32xf32, #tpu.memory_space<vmem>>, %arg12: memref<2x16x16x32xbf16, #tpu.memory_space<vmem>>, %arg13: memref<2x18x18x32xbf16, #tpu.memory_space<vmem>>) attributes {dimension_semantics = [#tpu.dimension_semantics<parallel>], iteration_bounds = array<i64: 1>, scalar_prefetch = 0 : i64, scratch_operands = 1 : i64, tpu.core_type = #tpu.core_type<tc>, window_params = [{transform_indices = @transform_0, window_bounds = array<i64: 2, 16, 16, 36>}, {pipeline_mode = #tpu.pipeline_mode<synchronous>, transform_indices = @transform_1, window_bounds = array<i64: 36, 32>}, {pipeline_mode = #tpu.pipeline_mode<synchronous>, transform_indices = @transform_2, window_bounds = array<i64: 1, 32>}, {pipeline_mode = #tpu.pipeline_mode<synchronous>, transform_indices = @transform_3, window_bounds = array<i64: 1, 32>}, {pipeline_mode = #tpu.pipeline_mode<synchronous>, transform_indices = @transform_4, window_bounds = array<i64: 9, 32, 32>}, {pipeline_mode = #tpu.pipeline_mode<synchronous>, transform_indices = @transform_5, window_bounds = array<i64: 1, 32>}, {pipeline_mode = #tpu.pipeline_mode<synchronous>, transform_indices = @transform_6, window_bounds = array<i64: 1, 32>}, {pipeline_mode = #tpu.pipeline_mode<synchronous>, transform_indices = @transform_7, window_bounds = array<i64: 32, 16>}, {pipeline_mode = #tpu.pipeline_mode<synchronous>, transform_indices = @transform_8, window_bounds = array<i64: 1, 16>}, {pipeline_mode = #tpu.pipeline_mode<synchronous>, transform_indices = @transform_9, window_bounds = array<i64: 16, 32>}, {pipeline_mode = #tpu.pipeline_mode<synchronous>, transform_indices = @transform_10, window_bounds = array<i64: 1, 32>}, {transform_indices = @transform_11, window_bounds = array<i64: 2, 16, 16, 32>}]} {
    %c0 = arith.constant 0 : index
    %c0_0 = arith.constant 0 : index
    %c0_1 = arith.constant 0 : index
    %c0_2 = arith.constant 0 : index
    %0 = vector.load %arg1[%c0, %c0_0, %c0_1, %c0_2] : memref<2x16x16x36xbf16, #tpu.memory_space<vmem>>, vector<2x16x16x36xbf16>
    %1 = vector.shape_cast %0 : vector<2x16x16x36xbf16> to vector<512x36xbf16>
    %c0_3 = arith.constant 0 : index
    %c0_4 = arith.constant 0 : index
    %2 = vector.load %arg2[%c0_3, %c0_4] : memref<36x32xbf16, #tpu.memory_space<vmem>>, vector<36x32xbf16>
    %cst = arith.constant dense<0.000000e+00> : vector<512x32xf32>
    %3 = tpu.matmul %1, %2, %cst {dimension_numbers = #tpu.dot_dimension_numbers<[1], [0], [0], [1], [0, 0, 1, 1], [], []>} : vector<512x36xbf16>, vector<36x32xbf16>, vector<512x32xf32> -> vector<512x32xf32>
    %c0_5 = arith.constant 0 : index
    %c0_6 = arith.constant 0 : index
    %4 = vector.load %arg3[%c0_5, %c0_6] : memref<1x32xf32, #tpu.memory_space<vmem>>, vector<1x32xf32>
    %5 = vector.broadcast %4 : vector<1x32xf32> to vector<512x32xf32>
    %6 = arith.mulf %3, %5 : vector<512x32xf32>
    %c0_7 = arith.constant 0 : index
    %c0_8 = arith.constant 0 : index
    %7 = vector.load %arg4[%c0_7, %c0_8] : memref<1x32xf32, #tpu.memory_space<vmem>>, vector<1x32xf32>
    %8 = vector.broadcast %7 : vector<1x32xf32> to vector<512x32xf32>
    %9 = arith.addf %6, %8 : vector<512x32xf32>
    %cst_9 = arith.constant 0.000000e+00 : f32
    %10 = vector.broadcast %cst_9 : f32 to vector<512x32xf32>
    %11 = arith.cmpf ogt, %9, %10 : vector<512x32xf32>
    %cst_10 = arith.constant 0.00999999977 : f32
    %12 = vector.broadcast %cst_10 : f32 to vector<512x32xf32>
    %13 = arith.mulf %12, %9 : vector<512x32xf32>
    %14 = arith.select %11, %9, %13 : vector<512x32xi1>, vector<512x32xf32>
    %cst_11 = arith.constant 0.000000e+00 : bf16
    %15 = vector.broadcast %cst_11 : bf16 to vector<2x1x18x32xbf16>
    %cst_12 = arith.constant 0.000000e+00 : bf16
    %16 = vector.broadcast %cst_12 : bf16 to vector<2x16x1x32xbf16>
    %c0_13 = arith.constant 0 : index
    %c0_14 = arith.constant 0 : index
    %c0_15 = arith.constant 0 : index
    %c0_16 = arith.constant 0 : index
    %17 = vector.load %arg13[%c0_13, %c0_14, %c0_15, %c0_16] : memref<2x18x18x32xbf16, #tpu.memory_space<vmem>>, vector<2x1x18x32xbf16>
    tpu.vector_store %arg13[%c0_13, %c0_14, %c0_15, %c0_16], %15 {strides = array<i32>} : memref<2x18x18x32xbf16, #tpu.memory_space<vmem>>, vector<2x1x18x32xbf16>,
    %c0_17 = arith.constant 0 : index
    %c17 = arith.constant 17 : index
    %c0_18 = arith.constant 0 : index
    %c0_19 = arith.constant 0 : index
    %18 = vector.load %arg13[%c0_17, %c17, %c0_18, %c0_19] : memref<2x18x18x32xbf16, #tpu.memory_space<vmem>>, vector<2x1x18x32xbf16>
    tpu.vector_store %arg13[%c0_17, %c17, %c0_18, %c0_19], %15 {strides = array<i32>} : memref<2x18x18x32xbf16, #tpu.memory_space<vmem>>, vector<2x1x18x32xbf16>,
    %c0_20 = arith.constant 0 : index
    %c1 = arith.constant 1 : index
    %c0_21 = arith.constant 0 : index
    %c0_22 = arith.constant 0 : index
    %19 = vector.load %arg13[%c0_20, %c1, %c0_21, %c0_22] : memref<2x18x18x32xbf16, #tpu.memory_space<vmem>>, vector<2x16x1x32xbf16>
    tpu.vector_store %arg13[%c0_20, %c1, %c0_21, %c0_22], %16 {strides = array<i32>} : memref<2x18x18x32xbf16, #tpu.memory_space<vmem>>, vector<2x16x1x32xbf16>,
    %c0_23 = arith.constant 0 : index
    %c1_24 = arith.constant 1 : index
    %c17_25 = arith.constant 17 : index
    %c0_26 = arith.constant 0 : index
    %20 = vector.load %arg13[%c0_23, %c1_24, %c17_25, %c0_26] : memref<2x18x18x32xbf16, #tpu.memory_space<vmem>>, vector<2x16x1x32xbf16>
    tpu.vector_store %arg13[%c0_23, %c1_24, %c17_25, %c0_26], %16 {strides = array<i32>} : memref<2x18x18x32xbf16, #tpu.memory_space<vmem>>, vector<2x16x1x32xbf16>,
    %21 = vector.shape_cast %14 : vector<512x32xf32> to vector<2x16x16x32xf32>
    %22 = arith.truncf %21 : vector<2x16x16x32xf32> to vector<2x16x16x32xbf16>
    %c0_27 = arith.constant 0 : index
    %c1_28 = arith.constant 1 : index
    %c1_29 = arith.constant 1 : index
    %c0_30 = arith.constant 0 : index
    %23 = vector.load %arg13[%c0_27, %c1_28, %c1_29, %c0_30] : memref<2x18x18x32xbf16, #tpu.memory_space<vmem>>, vector<2x16x16x32xbf16>
    tpu.vector_store %arg13[%c0_27, %c1_28, %c1_29, %c0_30], %22 {strides = array<i32>} : memref<2x18x18x32xbf16, #tpu.memory_space<vmem>>, vector<2x16x16x32xbf16>,
    %cst_31 = arith.constant 0.000000e+00 : f32
    %24 = vector.broadcast %cst_31 : f32 to vector<512x32xf32>
    %c0_32 = arith.constant 0 : index
    %c0_33 = arith.constant 0 : index
    %c0_34 = arith.constant 0 : index
    %c0_35 = arith.constant 0 : index
    %25 = vector.load %arg13[%c0_32, %c0_33, %c0_34, %c0_35] : memref<2x18x18x32xbf16, #tpu.memory_space<vmem>>, vector<2x16x16x32xbf16>
    %26 = vector.shape_cast %25 : vector<2x16x16x32xbf16> to vector<512x32xbf16>
    %c0_36 = arith.constant 0 : index
    %c0_37 = arith.constant 0 : index
    %c0_38 = arith.constant 0 : index
    %27 = vector.load %arg5[%c0_36, %c0_37, %c0_38] : memref<9x32x32xbf16, #tpu.memory_space<vmem>>, vector<1x32x32xbf16>
    %28 = vector.shape_cast %27 : vector<1x32x32xbf16> to vector<32x32xbf16>
    %cst_39 = arith.constant dense<0.000000e+00> : vector<512x32xf32>
    %29 = tpu.matmul %26, %28, %cst_39 {dimension_numbers = #tpu.dot_dimension_numbers<[1], [0], [0], [1], [0, 0, 1, 1], [], []>} : vector<512x32xbf16>, vector<32x32xbf16>, vector<512x32xf32> -> vector<512x32xf32>
    %30 = arith.addf %24, %29 : vector<512x32xf32>
    %c0_40 = arith.constant 0 : index
    %c0_41 = arith.constant 0 : index
    %c1_42 = arith.constant 1 : index
    %c0_43 = arith.constant 0 : index
    %31 = vector.load %arg13[%c0_40, %c0_41, %c1_42, %c0_43] : memref<2x18x18x32xbf16, #tpu.memory_space<vmem>>, vector<2x16x16x32xbf16>
    %32 = vector.shape_cast %31 : vector<2x16x16x32xbf16> to vector<512x32xbf16>
    %c1_44 = arith.constant 1 : index
    %c0_45 = arith.constant 0 : index
    %c0_46 = arith.constant 0 : index
    %33 = vector.load %arg5[%c1_44, %c0_45, %c0_46] : memref<9x32x32xbf16, #tpu.memory_space<vmem>>, vector<1x32x32xbf16>
    %34 = vector.shape_cast %33 : vector<1x32x32xbf16> to vector<32x32xbf16>
    %cst_47 = arith.constant dense<0.000000e+00> : vector<512x32xf32>
    %35 = tpu.matmul %32, %34, %cst_47 {dimension_numbers = #tpu.dot_dimension_numbers<[1], [0], [0], [1], [0, 0, 1, 1], [], []>} : vector<512x32xbf16>, vector<32x32xbf16>, vector<512x32xf32> -> vector<512x32xf32>
    %36 = arith.addf %30, %35 : vector<512x32xf32>
    %c0_48 = arith.constant 0 : index
    %c0_49 = arith.constant 0 : index
    %c2 = arith.constant 2 : index
    %c0_50 = arith.constant 0 : index
    %37 = vector.load %arg13[%c0_48, %c0_49, %c2, %c0_50] : memref<2x18x18x32xbf16, #tpu.memory_space<vmem>>, vector<2x16x16x32xbf16>
    %38 = vector.shape_cast %37 : vector<2x16x16x32xbf16> to vector<512x32xbf16>
    %c2_51 = arith.constant 2 : index
    %c0_52 = arith.constant 0 : index
    %c0_53 = arith.constant 0 : index
    %39 = vector.load %arg5[%c2_51, %c0_52, %c0_53] : memref<9x32x32xbf16, #tpu.memory_space<vmem>>, vector<1x32x32xbf16>
    %40 = vector.shape_cast %39 : vector<1x32x32xbf16> to vector<32x32xbf16>
    %cst_54 = arith.constant dense<0.000000e+00> : vector<512x32xf32>
    %41 = tpu.matmul %38, %40, %cst_54 {dimension_numbers = #tpu.dot_dimension_numbers<[1], [0], [0], [1], [0, 0, 1, 1], [], []>} : vector<512x32xbf16>, vector<32x32xbf16>, vector<512x32xf32> -> vector<512x32xf32>
    %42 = arith.addf %36, %41 : vector<512x32xf32>
    %c0_55 = arith.constant 0 : index
    %c1_56 = arith.constant 1 : index
    %c0_57 = arith.constant 0 : index
    %c0_58 = arith.constant 0 : index
    %43 = vector.load %arg13[%c0_55, %c1_56, %c0_57, %c0_58] : memref<2x18x18x32xbf16, #tpu.memory_space<vmem>>, vector<2x16x16x32xbf16>
    %44 = vector.shape_cast %43 : vector<2x16x16x32xbf16> to vector<512x32xbf16>
    %c3 = arith.constant 3 : index
    %c0_59 = arith.constant 0 : index
    %c0_60 = arith.constant 0 : index
    %45 = vector.load %arg5[%c3, %c0_59, %c0_60] : memref<9x32x32xbf16, #tpu.memory_space<vmem>>, vector<1x32x32xbf16>
    %46 = vector.shape_cast %45 : vector<1x32x32xbf16> to vector<32x32xbf16>
    %cst_61 = arith.constant dense<0.000000e+00> : vector<512x32xf32>
    %47 = tpu.matmul %44, %46, %cst_61 {dimension_numbers = #tpu.dot_dimension_numbers<[1], [0], [0], [1], [0, 0, 1, 1], [], []>} : vector<512x32xbf16>, vector<32x32xbf16>, vector<512x32xf32> -> vector<512x32xf32>
    %48 = arith.addf %42, %47 : vector<512x32xf32>
    %c0_62 = arith.constant 0 : index
    %c1_63 = arith.constant 1 : index
    %c1_64 = arith.constant 1 : index
    %c0_65 = arith.constant 0 : index
    %49 = vector.load %arg13[%c0_62, %c1_63, %c1_64, %c0_65] : memref<2x18x18x32xbf16, #tpu.memory_space<vmem>>, vector<2x16x16x32xbf16>
    %50 = vector.shape_cast %49 : vector<2x16x16x32xbf16> to vector<512x32xbf16>
    %c4 = arith.constant 4 : index
    %c0_66 = arith.constant 0 : index
    %c0_67 = arith.constant 0 : index
    %51 = vector.load %arg5[%c4, %c0_66, %c0_67] : memref<9x32x32xbf16, #tpu.memory_space<vmem>>, vector<1x32x32xbf16>
    %52 = vector.shape_cast %51 : vector<1x32x32xbf16> to vector<32x32xbf16>
    %cst_68 = arith.constant dense<0.000000e+00> : vector<512x32xf32>
    %53 = tpu.matmul %50, %52, %cst_68 {dimension_numbers = #tpu.dot_dimension_numbers<[1], [0], [0], [1], [0, 0, 1, 1], [], []>} : vector<512x32xbf16>, vector<32x32xbf16>, vector<512x32xf32> -> vector<512x32xf32>
    %54 = arith.addf %48, %53 : vector<512x32xf32>
    %c0_69 = arith.constant 0 : index
    %c1_70 = arith.constant 1 : index
    %c2_71 = arith.constant 2 : index
    %c0_72 = arith.constant 0 : index
    %55 = vector.load %arg13[%c0_69, %c1_70, %c2_71, %c0_72] : memref<2x18x18x32xbf16, #tpu.memory_space<vmem>>, vector<2x16x16x32xbf16>
    %56 = vector.shape_cast %55 : vector<2x16x16x32xbf16> to vector<512x32xbf16>
    %c5 = arith.constant 5 : index
    %c0_73 = arith.constant 0 : index
    %c0_74 = arith.constant 0 : index
    %57 = vector.load %arg5[%c5, %c0_73, %c0_74] : memref<9x32x32xbf16, #tpu.memory_space<vmem>>, vector<1x32x32xbf16>
    %58 = vector.shape_cast %57 : vector<1x32x32xbf16> to vector<32x32xbf16>
    %cst_75 = arith.constant dense<0.000000e+00> : vector<512x32xf32>
    %59 = tpu.matmul %56, %58, %cst_75 {dimension_numbers = #tpu.dot_dimension_numbers<[1], [0], [0], [1], [0, 0, 1, 1], [], []>} : vector<512x32xbf16>, vector<32x32xbf16>, vector<512x32xf32> -> vector<512x32xf32>
    %60 = arith.addf %54, %59 : vector<512x32xf32>
    %c0_76 = arith.constant 0 : index
    %c2_77 = arith.constant 2 : index
    %c0_78 = arith.constant 0 : index
    %c0_79 = arith.constant 0 : index
    %61 = vector.load %arg13[%c0_76, %c2_77, %c0_78, %c0_79] : memref<2x18x18x32xbf16, #tpu.memory_space<vmem>>, vector<2x16x16x32xbf16>
    %62 = vector.shape_cast %61 : vector<2x16x16x32xbf16> to vector<512x32xbf16>
    %c6 = arith.constant 6 : index
    %c0_80 = arith.constant 0 : index
    %c0_81 = arith.constant 0 : index
    %63 = vector.load %arg5[%c6, %c0_80, %c0_81] : memref<9x32x32xbf16, #tpu.memory_space<vmem>>, vector<1x32x32xbf16>
    %64 = vector.shape_cast %63 : vector<1x32x32xbf16> to vector<32x32xbf16>
    %cst_82 = arith.constant dense<0.000000e+00> : vector<512x32xf32>
    %65 = tpu.matmul %62, %64, %cst_82 {dimension_numbers = #tpu.dot_dimension_numbers<[1], [0], [0], [1], [0, 0, 1, 1], [], []>} : vector<512x32xbf16>, vector<32x32xbf16>, vector<512x32xf32> -> vector<512x32xf32>
    %66 = arith.addf %60, %65 : vector<512x32xf32>
    %c0_83 = arith.constant 0 : index
    %c2_84 = arith.constant 2 : index
    %c1_85 = arith.constant 1 : index
    %c0_86 = arith.constant 0 : index
    %67 = vector.load %arg13[%c0_83, %c2_84, %c1_85, %c0_86] : memref<2x18x18x32xbf16, #tpu.memory_space<vmem>>, vector<2x16x16x32xbf16>
    %68 = vector.shape_cast %67 : vector<2x16x16x32xbf16> to vector<512x32xbf16>
    %c7 = arith.constant 7 : index
    %c0_87 = arith.constant 0 : index
    %c0_88 = arith.constant 0 : index
    %69 = vector.load %arg5[%c7, %c0_87, %c0_88] : memref<9x32x32xbf16, #tpu.memory_space<vmem>>, vector<1x32x32xbf16>
    %70 = vector.shape_cast %69 : vector<1x32x32xbf16> to vector<32x32xbf16>
    %cst_89 = arith.constant dense<0.000000e+00> : vector<512x32xf32>
    %71 = tpu.matmul %68, %70, %cst_89 {dimension_numbers = #tpu.dot_dimension_numbers<[1], [0], [0], [1], [0, 0, 1, 1], [], []>} : vector<512x32xbf16>, vector<32x32xbf16>, vector<512x32xf32> -> vector<512x32xf32>
    %72 = arith.addf %66, %71 : vector<512x32xf32>
    %c0_90 = arith.constant 0 : index
    %c2_91 = arith.constant 2 : index
    %c2_92 = arith.constant 2 : index
    %c0_93 = arith.constant 0 : index
    %73 = vector.load %arg13[%c0_90, %c2_91, %c2_92, %c0_93] : memref<2x18x18x32xbf16, #tpu.memory_space<vmem>>, vector<2x16x16x32xbf16>
    %74 = vector.shape_cast %73 : vector<2x16x16x32xbf16> to vector<512x32xbf16>
    %c8 = arith.constant 8 : index
    %c0_94 = arith.constant 0 : index
    %c0_95 = arith.constant 0 : index
    %75 = vector.load %arg5[%c8, %c0_94, %c0_95] : memref<9x32x32xbf16, #tpu.memory_space<vmem>>, vector<1x32x32xbf16>
    %76 = vector.shape_cast %75 : vector<1x32x32xbf16> to vector<32x32xbf16>
    %cst_96 = arith.constant dense<0.000000e+00> : vector<512x32xf32>
    %77 = tpu.matmul %74, %76, %cst_96 {dimension_numbers = #tpu.dot_dimension_numbers<[1], [0], [0], [1], [0, 0, 1, 1], [], []>} : vector<512x32xbf16>, vector<32x32xbf16>, vector<512x32xf32> -> vector<512x32xf32>
    %78 = arith.addf %72, %77 : vector<512x32xf32>
    %c0_97 = arith.constant 0 : index
    %c0_98 = arith.constant 0 : index
    %79 = vector.load %arg6[%c0_97, %c0_98] : memref<1x32xf32, #tpu.memory_space<vmem>>, vector<1x32xf32>
    %80 = vector.broadcast %79 : vector<1x32xf32> to vector<512x32xf32>
    %81 = arith.mulf %78, %80 : vector<512x32xf32>
    %c0_99 = arith.constant 0 : index
    %c0_100 = arith.constant 0 : index
    %82 = vector.load %arg7[%c0_99, %c0_100] : memref<1x32xf32, #tpu.memory_space<vmem>>, vector<1x32xf32>
    %83 = vector.broadcast %82 : vector<1x32xf32> to vector<512x32xf32>
    %84 = arith.addf %81, %83 : vector<512x32xf32>
    %cst_101 = arith.constant 0.000000e+00 : f32
    %85 = vector.broadcast %cst_101 : f32 to vector<512x32xf32>
    %86 = arith.cmpf ogt, %84, %85 : vector<512x32xf32>
    %cst_102 = arith.constant 0.00999999977 : f32
    %87 = vector.broadcast %cst_102 : f32 to vector<512x32xf32>
    %88 = arith.mulf %87, %84 : vector<512x32xf32>
    %89 = arith.select %86, %84, %88 : vector<512x32xi1>, vector<512x32xf32>
    %90 = vector.extract_strided_slice %89 {offsets = [0, 0], sizes = [256, 32], strides = [1, 1]} : vector<512x32xf32> to vector<256x32xf32>
    %cst_103 = arith.constant dense<0.000000e+00> : vector<32xf32>
    %91 = vector.multi_reduction <add>, %90, %cst_103 [0] : vector<256x32xf32> to vector<32xf32>
    %92 = vector.shape_cast %91 : vector<32xf32> to vector<1x32xf32>
    %cst_104 = arith.constant 2.560000e+02 : f32
    %93 = vector.broadcast %cst_104 : f32 to vector<1x32xf32>
    %94 = arith.divf %92, %93 : vector<1x32xf32>
    %c0_105 = arith.constant 0 : index
    %c0_106 = arith.constant 0 : index
    %95 = vector.load %arg8[%c0_105, %c0_106] : memref<32x16xf32, #tpu.memory_space<vmem>>, vector<32x16xf32>
    %cst_107 = arith.constant dense<0.000000e+00> : vector<1x16xf32>
    %96 = tpu.matmul %94, %95, %cst_107 {dimension_numbers = #tpu.dot_dimension_numbers<[1], [0], [0], [1], [0, 0, 1, 1], [], []>} : vector<1x32xf32>, vector<32x16xf32>, vector<1x16xf32> -> vector<1x16xf32>
    %c0_108 = arith.constant 0 : index
    %c0_109 = arith.constant 0 : index
    %97 = vector.load %arg9[%c0_108, %c0_109] : memref<1x16xf32, #tpu.memory_space<vmem>>, vector<1x16xf32>
    %98 = arith.addf %96, %97 : vector<1x16xf32>
    %cst_110 = arith.constant 0.000000e+00 : f32
    %99 = vector.broadcast %cst_110 : f32 to vector<1x16xf32>
    %100 = arith.cmpf ogt, %98, %99 : vector<1x16xf32>
    %cst_111 = arith.constant 0.00999999977 : f32
    %101 = vector.broadcast %cst_111 : f32 to vector<1x16xf32>
    %102 = arith.mulf %101, %98 : vector<1x16xf32>
    %103 = arith.select %100, %98, %102 : vector<1x16xi1>, vector<1x16xf32>
    %c0_112 = arith.constant 0 : index
    %c0_113 = arith.constant 0 : index
    %104 = vector.load %arg10[%c0_112, %c0_113] : memref<16x32xf32, #tpu.memory_space<vmem>>, vector<16x32xf32>
    %cst_114 = arith.constant dense<0.000000e+00> : vector<1x32xf32>
    %105 = tpu.matmul %103, %104, %cst_114 {dimension_numbers = #tpu.dot_dimension_numbers<[1], [0], [0], [1], [0, 0, 1, 1], [], []>} : vector<1x16xf32>, vector<16x32xf32>, vector<1x32xf32> -> vector<1x32xf32>
    %c0_115 = arith.constant 0 : index
    %c0_116 = arith.constant 0 : index
    %106 = vector.load %arg11[%c0_115, %c0_116] : memref<1x32xf32, #tpu.memory_space<vmem>>, vector<1x32xf32>
    %107 = arith.addf %105, %106 : vector<1x32xf32>
    %cst_117 = arith.constant 0.000000e+00 : f32
    %108 = vector.broadcast %cst_117 : f32 to vector<1x32xf32>
    %109 = arith.maximumf %107, %108 : vector<1x32xf32>
    %cst_118 = arith.constant 1.000000e+00 : f32
    %110 = vector.broadcast %cst_118 : f32 to vector<1x32xf32>
    %111 = arith.addf %110, %109 : vector<1x32xf32>
    %112 = vector.broadcast %111 : vector<1x32xf32> to vector<256x32xf32>
    %113 = arith.mulf %90, %112 : vector<256x32xf32>
    %114 = vector.shape_cast %113 : vector<256x32xf32> to vector<16x16x32xf32>
    %115 = arith.truncf %114 : vector<16x16x32xf32> to vector<16x16x32xbf16>
    %c0_119 = arith.constant 0 : index
    %c0_120 = arith.constant 0 : index
    %c0_121 = arith.constant 0 : index
    %c0_122 = arith.constant 0 : index
    %116 = vector.load %arg12[%c0_119, %c0_120, %c0_121, %c0_122] : memref<2x16x16x32xbf16, #tpu.memory_space<vmem>>, vector<1x16x16x32xbf16>
    %117 = vector.shape_cast %116 : vector<1x16x16x32xbf16> to vector<16x16x32xbf16>
    %118 = vector.shape_cast %115 : vector<16x16x32xbf16> to vector<1x16x16x32xbf16>
    tpu.vector_store %arg12[%c0_119, %c0_120, %c0_121, %c0_122], %118 {strides = array<i32>} : memref<2x16x16x32xbf16, #tpu.memory_space<vmem>>, vector<1x16x16x32xbf16>,
    %119 = vector.extract_strided_slice %89 {offsets = [256, 0], sizes = [256, 32], strides = [1, 1]} : vector<512x32xf32> to vector<256x32xf32>
    %cst_123 = arith.constant dense<0.000000e+00> : vector<32xf32>
    %120 = vector.multi_reduction <add>, %119, %cst_123 [0] : vector<256x32xf32> to vector<32xf32>
    %121 = vector.shape_cast %120 : vector<32xf32> to vector<1x32xf32>
    %cst_124 = arith.constant 2.560000e+02 : f32
    %122 = vector.broadcast %cst_124 : f32 to vector<1x32xf32>
    %123 = arith.divf %121, %122 : vector<1x32xf32>
    %c0_125 = arith.constant 0 : index
    %c0_126 = arith.constant 0 : index
    %124 = vector.load %arg8[%c0_125, %c0_126] : memref<32x16xf32, #tpu.memory_space<vmem>>, vector<32x16xf32>
    %cst_127 = arith.constant dense<0.000000e+00> : vector<1x16xf32>
    %125 = tpu.matmul %123, %124, %cst_127 {dimension_numbers = #tpu.dot_dimension_numbers<[1], [0], [0], [1], [0, 0, 1, 1], [], []>} : vector<1x32xf32>, vector<32x16xf32>, vector<1x16xf32> -> vector<1x16xf32>
    %c0_128 = arith.constant 0 : index
    %c0_129 = arith.constant 0 : index
    %126 = vector.load %arg9[%c0_128, %c0_129] : memref<1x16xf32, #tpu.memory_space<vmem>>, vector<1x16xf32>
    %127 = arith.addf %125, %126 : vector<1x16xf32>
    %cst_130 = arith.constant 0.000000e+00 : f32
    %128 = vector.broadcast %cst_130 : f32 to vector<1x16xf32>
    %129 = arith.cmpf ogt, %127, %128 : vector<1x16xf32>
    %cst_131 = arith.constant 0.00999999977 : f32
    %130 = vector.broadcast %cst_131 : f32 to vector<1x16xf32>
    %131 = arith.mulf %130, %127 : vector<1x16xf32>
    %132 = arith.select %129, %127, %131 : vector<1x16xi1>, vector<1x16xf32>
    %c0_132 = arith.constant 0 : index
    %c0_133 = arith.constant 0 : index
    %133 = vector.load %arg10[%c0_132, %c0_133] : memref<16x32xf32, #tpu.memory_space<vmem>>, vector<16x32xf32>
    %cst_134 = arith.constant dense<0.000000e+00> : vector<1x32xf32>
    %134 = tpu.matmul %132, %133, %cst_134 {dimension_numbers = #tpu.dot_dimension_numbers<[1], [0], [0], [1], [0, 0, 1, 1], [], []>} : vector<1x16xf32>, vector<16x32xf32>, vector<1x32xf32> -> vector<1x32xf32>
    %c0_135 = arith.constant 0 : index
    %c0_136 = arith.constant 0 : index
    %135 = vector.load %arg11[%c0_135, %c0_136] : memref<1x32xf32, #tpu.memory_space<vmem>>, vector<1x32xf32>
    %136 = arith.addf %134, %135 : vector<1x32xf32>
    %cst_137 = arith.constant 0.000000e+00 : f32
    %137 = vector.broadcast %cst_137 : f32 to vector<1x32xf32>
    %138 = arith.maximumf %136, %137 : vector<1x32xf32>
    %cst_138 = arith.constant 1.000000e+00 : f32
    %139 = vector.broadcast %cst_138 : f32 to vector<1x32xf32>
    %140 = arith.addf %139, %138 : vector<1x32xf32>
    %141 = vector.broadcast %140 : vector<1x32xf32> to vector<256x32xf32>
    %142 = arith.mulf %119, %141 : vector<256x32xf32>
    %143 = vector.shape_cast %142 : vector<256x32xf32> to vector<16x16x32xf32>
    %144 = arith.truncf %143 : vector<16x16x32xf32> to vector<16x16x32xbf16>
    %c1_139 = arith.constant 1 : index
    %c0_140 = arith.constant 0 : index
    %c0_141 = arith.constant 0 : index
    %c0_142 = arith.constant 0 : index
    %145 = vector.load %arg12[%c1_139, %c0_140, %c0_141, %c0_142] : memref<2x16x16x32xbf16, #tpu.memory_space<vmem>>, vector<1x16x16x32xbf16>
    %146 = vector.shape_cast %145 : vector<1x16x16x32xbf16> to vector<16x16x32xbf16>
    %147 = vector.shape_cast %144 : vector<16x16x32xbf16> to vector<1x16x16x32xbf16>
    tpu.vector_store %arg12[%c1_139, %c0_140, %c0_141, %c0_142], %147 {strides = array<i32>} : memref<2x16x16x32xbf16, #tpu.memory_space<vmem>>, vector<1x16x16x32xbf16>,
    return
  }
  func.func @transform_0(%arg0: i32) -> (i32, i32, i32, i32) {
    %c0_i32 = arith.constant 0 : i32
    %c0_i32_0 = arith.constant 0 : i32
    %c0_i32_1 = arith.constant 0 : i32
    %c0_i32_2 = arith.constant 0 : i32
    return %arg0, %c0_i32, %c0_i32_0, %c0_i32_1 : i32, i32, i32, i32
  }
  func.func @transform_1(%arg0: i32) -> (i32, i32) {
    %c0_i32 = arith.constant 0 : i32
    %c0_i32_0 = arith.constant 0 : i32
    %c0_i32_1 = arith.constant 0 : i32
    return %c0_i32, %c0_i32_0 : i32, i32
  }
  func.func @transform_2(%arg0: i32) -> (i32, i32) {
    %c0_i32 = arith.constant 0 : i32
    %c0_i32_0 = arith.constant 0 : i32
    %c0_i32_1 = arith.constant 0 : i32
    return %c0_i32, %c0_i32_0 : i32, i32
  }
  func.func @transform_3(%arg0: i32) -> (i32, i32) {
    %c0_i32 = arith.constant 0 : i32
    %c0_i32_0 = arith.constant 0 : i32
    %c0_i32_1 = arith.constant 0 : i32
    return %c0_i32, %c0_i32_0 : i32, i32
  }
  func.func @transform_4(%arg0: i32) -> (i32, i32, i32) {
    %c0_i32 = arith.constant 0 : i32
    %c0_i32_0 = arith.constant 0 : i32
    %c0_i32_1 = arith.constant 0 : i32
    %c0_i32_2 = arith.constant 0 : i32
    return %c0_i32, %c0_i32_0, %c0_i32_1 : i32, i32, i32
  }
  func.func @transform_5(%arg0: i32) -> (i32, i32) {
    %c0_i32 = arith.constant 0 : i32
    %c0_i32_0 = arith.constant 0 : i32
    %c0_i32_1 = arith.constant 0 : i32
    return %c0_i32, %c0_i32_0 : i32, i32
  }
  func.func @transform_6(%arg0: i32) -> (i32, i32) {
    %c0_i32 = arith.constant 0 : i32
    %c0_i32_0 = arith.constant 0 : i32
    %c0_i32_1 = arith.constant 0 : i32
    return %c0_i32, %c0_i32_0 : i32, i32
  }
  func.func @transform_7(%arg0: i32) -> (i32, i32) {
    %c0_i32 = arith.constant 0 : i32
    %c0_i32_0 = arith.constant 0 : i32
    %c0_i32_1 = arith.constant 0 : i32
    return %c0_i32, %c0_i32_0 : i32, i32
  }
  func.func @transform_8(%arg0: i32) -> (i32, i32) {
    %c0_i32 = arith.constant 0 : i32
    %c0_i32_0 = arith.constant 0 : i32
    %c0_i32_1 = arith.constant 0 : i32
    return %c0_i32, %c0_i32_0 : i32, i32
  }
  func.func @transform_9(%arg0: i32) -> (i32, i32) {
    %c0_i32 = arith.constant 0 : i32
    %c0_i32_0 = arith.constant 0 : i32
    %c0_i32_1 = arith.constant 0 : i32
    return %c0_i32, %c0_i32_0 : i32, i32
  }
  func.func @transform_10(%arg0: i32) -> (i32, i32) {
    %c0_i32 = arith.constant 0 : i32
    %c0_i32_0 = arith.constant 0 : i32
    %c0_i32_1 = arith.constant 0 : i32
    return %c0_i32, %c0_i32_0 : i32, i32
  }
  func.func @transform_11(%arg0: i32) -> (i32, i32, i32, i32) {
    %c0_i32 = arith.constant 0 : i32
    %c0_i32_0 = arith.constant 0 : i32
    %c0_i32_1 = arith.constant 0 : i32
    %c0_i32_2 = arith.constant 0 : i32
    return %arg0, %c0_i32, %c0_i32_0, %c0_i32_1 : i32, i32, i32, i32
  }
}

</mosaic_0001>

<llo_original>
// kernel: conv_bn_act_block.1
$region0: #{conv_bn_act_block.1}
  #allocation0 [shape = 'u32[]', space=smem, size = 0x4, offset = 0x4, fixed_abs, tag = 'smem constant byte address 0x4 - core index']
  #allocation1 [shape = 'u32[144,128]{1,0:T(1,128)}', space=vmem, size = 0x12000, scoped, tag = 'internal scratch']
  #allocation2 [shape = 'bf16[2,18,18,32]{3,2,1,0:T(8,128)(2,1)}', space=vmem, size = 0x36000, scoped, tag = 'scratch operand']
  %s0 = inlined_call_operand.vmem [shape: bf16[2,16,16,36], index: 0, kind: input, shape index: {}]
  %s1 = inlined_call_operand.vmem [shape: bf16[36,32], index: 1, kind: input, shape index: {}]
  %s2 = inlined_call_operand.vmem [shape: f32[1,32], index: 2, kind: input, shape index: {}]
  %s3 = inlined_call_operand.vmem [shape: f32[1,32], index: 3, kind: input, shape index: {}]
  %s4 = inlined_call_operand.vmem [shape: bf16[9,32,32], index: 4, kind: input, shape index: {}]
  %s5 = inlined_call_operand.vmem [shape: f32[1,32], index: 5, kind: input, shape index: {}]
  %s6 = inlined_call_operand.vmem [shape: f32[1,32], index: 6, kind: input, shape index: {}]
  %s7 = inlined_call_operand.vmem [shape: f32[32,16], index: 7, kind: input, shape index: {}]
  %s8 = inlined_call_operand.vmem [shape: f32[1,16], index: 8, kind: input, shape index: {}]
  %s9 = inlined_call_operand.vmem [shape: f32[16,32], index: 9, kind: input, shape index: {}]
  %s10 = inlined_call_operand.vmem [shape: f32[1,32], index: 10, kind: input, shape index: {}]
  %s11 = inlined_call_operand.vmem [shape: bf16[2,16,16,32], index: 11, kind: output, shape index: {}]
  %s12 = sld [smem:[#allocation0]]
  $region54: #{conv_bn_act_block.1} parent=0
    _
  %s14 = ssub.s32 1, %s12
  %s15 = scalar_select 0, %s14, %s12
  // Predicated region
  $region2: #{conv_bn_act_block.1} parent=0 // pred_check
    _
  $region3: #{conv_bn_act_block.1} parent=0 // pred_check_branch
    %17 = sbr.rel (0) target = $region5
  $region4: #{conv_bn_act_block.1} parent=0 // pred_region
    _
  $region5: #{conv_bn_act_block.1} parent=0 // pred_fallthru
    _
  // Predicated region
  $region6: #{conv_bn_act_block.1} parent=0 // pred_check
    _
  $region7: #{conv_bn_act_block.1} parent=0 // pred_check_branch
    %19 = sbr.rel (0) target = $region9
  $region8: #{conv_bn_act_block.1} parent=0 // pred_region
    _
  $region9: #{conv_bn_act_block.1} parent=0 // pred_fallthru
    _
  // Predicated region
  $region10: #{conv_bn_act_block.1} parent=0 // pred_check
    _
  $region11: #{conv_bn_act_block.1} parent=0 // pred_check_branch
    %21 = sbr.rel (0) target = $region13
  $region12: #{conv_bn_act_block.1} parent=0 // pred_region
    _
  $region13: #{conv_bn_act_block.1} parent=0 // pred_fallthru
    _
  // Predicated region
  $region14: #{conv_bn_act_block.1} parent=0 // pred_check
    _
  $region15: #{conv_bn_act_block.1} parent=0 // pred_check_branch
    %23 = sbr.rel (0) target = $region17
  $region16: #{conv_bn_act_block.1} parent=0 // pred_region
    _
  $region17: #{conv_bn_act_block.1} parent=0 // pred_fallthru
    _
  // Predicated region
  $region18: #{conv_bn_act_block.1} parent=0 // pred_check
    _
  $region19: #{conv_bn_act_block.1} parent=0 // pred_check_branch
    %25 = sbr.rel (0) target = $region21
  $region20: #{conv_bn_act_block.1} parent=0 // pred_region
    _
  $region21: #{conv_bn_act_block.1} parent=0 // pred_fallthru
    _
  // Predicated region
  $region22: #{conv_bn_act_block.1} parent=0 // pred_check
    _
  $region23: #{conv_bn_act_block.1} parent=0 // pred_check_branch
    %27 = sbr.rel (0) target = $region25
  $region24: #{conv_bn_act_block.1} parent=0 // pred_region
    _
  $region25: #{conv_bn_act_block.1} parent=0 // pred_fallthru
    _
  // Predicated region
  $region26: #{conv_bn_act_block.1} parent=0 // pred_check
    _
  $region27: #{conv_bn_act_block.1} parent=0 // pred_check_branch
    %29 = sbr.rel (0) target = $region29
  $region28: #{conv_bn_act_block.1} parent=0 // pred_region
    _
  $region29: #{conv_bn_act_block.1} parent=0 // pred_fallthru
    _
  // Predicated region
  $region30: #{conv_bn_act_block.1} parent=0 // pred_check
    _
  $region31: #{conv_bn_act_block.1} parent=0 // pred_check_branch
    %31 = sbr.rel (0) target = $region33
  $region32: #{conv_bn_act_block.1} parent=0 // pred_region
    _
  $region33: #{conv_bn_act_block.1} parent=0 // pred_fallthru
    _
  // Predicated region
  $region34: #{conv_bn_act_block.1} parent=0 // pred_check
    _
  $region35: #{conv_bn_act_block.1} parent=0 // pred_check_branch
    %33 = sbr.rel (0) target = $region37
  $region36: #{conv_bn_act_block.1} parent=0 // pred_region
    _
  $region37: #{conv_bn_act_block.1} parent=0 // pred_fallthru
    _
  // Predicated region
  $region38: #{conv_bn_act_block.1} parent=0 // pred_check
    _
  $region39: #{conv_bn_act_block.1} parent=0 // pred_check_branch
    %35 = sbr.rel (0) target = $region41
  $region40: #{conv_bn_act_block.1} parent=0 // pred_region
    _
  $region41: #{conv_bn_act_block.1} parent=0 // pred_fallthru
    _
  // Predicated region
  $region42: #{conv_bn_act_block.1} parent=0 // pred_check
    _
  $region43: #{conv_bn_act_block.1} parent=0 // pred_check_branch
    %37 = sbr.rel (0) target = $region45
  $region44: #{conv_bn_act_block.1} parent=0 // pred_region
    _
  $region45: #{conv_bn_act_block.1} parent=0 // pred_fallthru
    _
  %v39 = vld [vmem:[%s0] sm:$0xf]
  %v40 = vld [vmem:[%s0 + $0x4] sm:$0xf]
  %v41 = vld [vmem:[%s0 + $0x8] sm:$0xf]
  %v42 = vld [vmem:[%s0 + $0xc] sm:$0xf]
  %v43 = vld [vmem:[%s0 + $0x10] sm:$0xf]
  %v44 = vld [vmem:[%s0 + $0x14] sm:$0xf]
  %v45 = vld [vmem:[%s0 + $0x18] sm:$0xf]
  %v46 = vld [vmem:[%s0 + $0x1c] sm:$0xf]
  %v47 = vld [vmem:[%s0 + $0x20] sm:$0xf]
  %v48 = vld [vmem:[%s0 + $0x24] sm:$0xf]
  %v49 = vld [vmem:[%s0 + $0x28] sm:$0xf]
  %v50 = vld [vmem:[%s0 + $0x2c] sm:$0xf]
  %v51 = vld [vmem:[%s0 + $0x30] sm:$0xf]
  %v52 = vld [vmem:[%s0 + $0x34] sm:$0xf]
  %v53 = vld [vmem:[%s0 + $0x38] sm:$0xf]
  %v54 = vld [vmem:[%s0 + $0x3c] sm:$0xf]
  %v55 = vld [vmem:[%s0 + $0x40] sm:$0xf]
  %v56 = vld [vmem:[%s0 + $0x44] sm:$0xf]
  %v57 = vld [vmem:[%s0 + $0x48] sm:$0xf]
  %v58 = vld [vmem:[%s0 + $0x4c] sm:$0xf]
  %v59 = vld [vmem:[%s0 + $0x50] sm:$0xf]
  %v60 = vld [vmem:[%s0 + $0x54] sm:$0xf]
  %v61 = vld [vmem:[%s0 + $0x58] sm:$0xf]
  %v62 = vld [vmem:[%s0 + $0x5c] sm:$0xf]
  %v63 = vld [vmem:[%s0 + $0x60] sm:$0xf]
  %v64 = vld [vmem:[%s0 + $0x64] sm:$0xf]
  %v65 = vld [vmem:[%s0 + $0x68] sm:$0xf]
  %v66 = vld [vmem:[%s0 + $0x6c] sm:$0xf]
  %v67 = vld [vmem:[%s0 + $0x70] sm:$0xf]
  %v68 = vld [vmem:[%s0 + $0x74] sm:$0xf]
  %v69 = vld [vmem:[%s0 + $0x78] sm:$0xf]
  %v70 = vld [vmem:[%s0 + $0x7c] sm:$0xf]
  %v71 = vld [vmem:[%s0 + $0x80] sm:$0xf]
  %v72 = vld [vmem:[%s0 + $0x84] sm:$0xf]
  %v73 = vld [vmem:[%s0 + $0x88] sm:$0xf]
  %v74 = vld [vmem:[%s0 + $0x8c] sm:$0xf]
  %v75 = vld [vmem:[%s0 + $0x90] sm:$0xf]
  %v76 = vld [vmem:[%s0 + $0x94] sm:$0xf]
  %v77 = vld [vmem:[%s0 + $0x98] sm:$0xf]
  %v78 = vld [vmem:[%s0 + $0x9c] sm:$0xf]
  %v79 = vld [vmem:[%s0 + $0xa0] sm:$0xf]
  %v80 = vld [vmem:[%s0 + $0xa4] sm:$0xf]
  %v81 = vld [vmem:[%s0 + $0xa8] sm:$0xf]
  %v82 = vld [vmem:[%s0 + $0xac] sm:$0xf]
  %v83 = vld [vmem:[%s0 + $0xb0] sm:$0xf]
  %v84 = vld [vmem:[%s0 + $0xb4] sm:$0xf]
  %v85 = vld [vmem:[%s0 + $0xb8] sm:$0xf]
  %v86 = vld [vmem:[%s0 + $0xbc] sm:$0xf]
  %v87 = vld [vmem:[%s0 + $0xc0] sm:$0xf]
  %v88 = vld [vmem:[%s0 + $0xc4] sm:$0xf]
  %v89 = vld [vmem:[%s0 + $0xc8] sm:$0xf]
  %v90 = vld [vmem:[%s0 + $0xcc] sm:$0xf]
  %v91 = vld [vmem:[%s0 + $0xd0] sm:$0xf]
  %v92 = vld [vmem:[%s0 + $0xd4] sm:$0xf]
  %v93 = vld [vmem:[%s0 + $0xd8] sm:$0xf]
  %v94 = vld [vmem:[%s0 + $0xdc] sm:$0xf]
  %v95 = vld [vmem:[%s0 + $0xe0] sm:$0xf]
  %v96 = vld [vmem:[%s0 + $0xe4] sm:$0xf]
  %v97 = vld [vmem:[%s0 + $0xe8] sm:$0xf]
  %v98 = vld [vmem:[%s0 + $0xec] sm:$0xf]
  %v99 = vld [vmem:[%s0 + $0xf0] sm:$0xf]
  %v100 = vld [vmem:[%s0 + $0xf4] sm:$0xf]
  %v101 = vld [vmem:[%s0 + $0xf8] sm:$0xf]
  %v102 = vld [vmem:[%s0 + $0xfc] sm:$0xf]
  %v103 = vld [vmem:[%s1] sm:$0xf]
  %v104 = vld [vmem:[%s1 + $0x4] sm:$0xf]
  %v105 = vld [vmem:[%s1 + $0x8] sm:$0xf]
  %v106 = vld [vmem:[%s1 + $0xc] sm:$0xf]
  %v107 = vld [vmem:[%s1 + $0x10] sm:$0x3]
  %v172 = vunpack.c.l.b16 %v39
  %v173 = vunpack.c.l.b16 %v40
  %v174 = vunpack.c.l.b16 %v41
  %v175 = vunpack.c.l.b16 %v42
  %v176 = vunpack.c.l.b16 %v43
  %v177 = vunpack.c.l.b16 %v44
  %v178 = vunpack.c.l.b16 %v45
  %v179 = vunpack.c.l.b16 %v46
  %v180 = vunpack.c.l.b16 %v47
  %v181 = vunpack.c.l.b16 %v48
  %v182 = vunpack.c.l.b16 %v49
  %v183 = vunpack.c.l.b16 %v50
  %v184 = vunpack.c.l.b16 %v51
  %v185 = vunpack.c.l.b16 %v52
  %v186 = vunpack.c.l.b16 %v53
  %v187 = vunpack.c.l.b16 %v54
  %v188 = vunpack.c.l.b16 %v55
  %v189 = vunpack.c.l.b16 %v56
  %v190 = vunpack.c.l.b16 %v57
  %v191 = vunpack.c.l.b16 %v58
  %v192 = vunpack.c.l.b16 %v59
  %v193 = vunpack.c.l.b16 %v60
  %v194 = vunpack.c.l.b16 %v61
  %v195 = vunpack.c.l.b16 %v62
  %v196 = vunpack.c.l.b16 %v63
  %v197 = vunpack.c.l.b16 %v64
  %v198 = vunpack.c.l.b16 %v65
  %v199 = vunpack.c.l.b16 %v66
  %v200 = vunpack.c.l.b16 %v67
  %v201 = vunpack.c.l.b16 %v68
  %v202 = vunpack.c.l.b16 %v69
  %v203 = vunpack.c.l.b16 %v70
  %v204 = vunpack.c.l.b16 %v71
  %v205 = vunpack.c.l.b16 %v72
  %v206 = vunpack.c.l.b16 %v73
  %v207 = vunpack.c.l.b16 %v74
  %v208 = vunpack.c.l.b16 %v75
  %v209 = vunpack.c.l.b16 %v76
  %v210 = vunpack.c.l.b16 %v77
  %v211 = vunpack.c.l.b16 %v78
  %v212 = vunpack.c.l.b16 %v79
  %v213 = vunpack.c.l.b16 %v80
  %v214 = vunpack.c.l.b16 %v81
  %v215 = vunpack.c.l.b16 %v82
  %v216 = vunpack.c.l.b16 %v83
  %v217 = vunpack.c.l.b16 %v84
  %v218 = vunpack.c.l.b16 %v85
  %v219 = vunpack.c.l.b16 %v86
  %v220 = vunpack.c.l.b16 %v87
  %v221 = vunpack.c.l.b16 %v88
  %v222 = vunpack.c.l.b16 %v89
  %v223 = vunpack.c.l.b16 %v90
  %v224 = vunpack.c.l.b16 %v91
  %v225 = vunpack.c.l.b16 %v92
  %v226 = vunpack.c.l.b16 %v93
  %v227 = vunpack.c.l.b16 %v94
  %v228 = vunpack.c.l.b16 %v95
  %v229 = vunpack.c.l.b16 %v96
  %v230 = vunpack.c.l.b16 %v97
  %v231 = vunpack.c.l.b16 %v98
  %v232 = vunpack.c.l.b16 %v99
  %v233 = vunpack.c.l.b16 %v100
  %v234 = vunpack.c.l.b16 %v101
  %v235 = vunpack.c.l.b16 %v102
  %v236 = vpack.c.b16 %v173, %v172
  %v237 = vpack.c.b16 %v175, %v174
  %v238 = vpack.c.b16 %v177, %v176
  %v239 = vpack.c.b16 %v179, %v178
  %v240 = vpack.c.b16 %v181, %v180
  %v241 = vpack.c.b16 %v183, %v182
  %v242 = vpack.c.b16 %v185, %v184
  %v243 = vpack.c.b16 %v187, %v186
  %v244 = vpack.c.b16 %v189, %v188
  %v245 = vpack.c.b16 %v191, %v190
  %v246 = vpack.c.b16 %v193, %v192
  %v247 = vpack.c.b16 %v195, %v194
  %v248 = vpack.c.b16 %v197, %v196
  %v249 = vpack.c.b16 %v199, %v198
  %v250 = vpack.c.b16 %v201, %v200
  %v251 = vpack.c.b16 %v203, %v202
  %v252 = vpack.c.b16 %v205, %v204
  %v253 = vpack.c.b16 %v207, %v206
  %v254 = vpack.c.b16 %v209, %v208
  %v255 = vpack.c.b16 %v211, %v210
  %v256 = vpack.c.b16 %v213, %v212
  %v257 = vpack.c.b16 %v215, %v214
  %v258 = vpack.c.b16 %v217, %v216
  %v259 = vpack.c.b16 %v219, %v218
  %v260 = vpack.c.b16 %v221, %v220
  %v261 = vpack.c.b16 %v223, %v222
  %v262 = vpack.c.b16 %v225, %v224
  %v263 = vpack.c.b16 %v227, %v226
  %v264 = vpack.c.b16 %v229, %v228
  %v265 = vpack.c.b16 %v231, %v230
  %v266 = vpack.c.b16 %v233, %v232
  %v267 = vpack.c.b16 %v235, %v234
  %v273 = vunpack.c.l.b16 %v103
  %v274 = vunpack.c.l.b16 %v104
  %v275 = vunpack.c.l.b16 %v105
  %v276 = vunpack.c.l.b16 %v106
  %v277 = vunpack.c.l.b16 %v107
  %v278 = vpack.c.b16 %v274, %v273
  %v279 = vpack.c.b16 %v276, %v275
  %v280 = vpack.c.b16 %v277, %v277
  %vm283 = vcmask 293888
  %v285 = vsel %vm283, %v236, 0
  %v288 = vsel %vm283, %v237, 0
  %v291 = vsel %vm283, %v238, 0
  %v294 = vsel %vm283, %v239, 0
  %v297 = vsel %vm283, %v240, 0
  %v300 = vsel %vm283, %v241, 0
  %v303 = vsel %vm283, %v242, 0
  %v306 = vsel %vm283, %v243, 0
  %v309 = vsel %vm283, %v244, 0
  %v312 = vsel %vm283, %v245, 0
  %v315 = vsel %vm283, %v246, 0
  %v318 = vsel %vm283, %v247, 0
  %v321 = vsel %vm283, %v248, 0
  %v324 = vsel %vm283, %v249, 0
  %v327 = vsel %vm283, %v250, 0
  %v330 = vsel %vm283, %v251, 0
  %v333 = vsel %vm283, %v252, 0
  %v336 = vsel %vm283, %v253, 0
  %v339 = vsel %vm283, %v254, 0
  %v342 = vsel %vm283, %v255, 0
  %v345 = vsel %vm283, %v256, 0
  %v348 = vsel %vm283, %v257, 0
  %v351 = vsel %vm283, %v258, 0
  %v354 = vsel %vm283, %v259, 0
  %v357 = vsel %vm283, %v260, 0
  %v360 = vsel %vm283, %v261, 0
  %v363 = vsel %vm283, %v262, 0
  %v366 = vsel %vm283, %v263, 0
  %v369 = vsel %vm283, %v264, 0
  %v372 = vsel %vm283, %v265, 0
  %v375 = vsel %vm283, %v266, 0
  %v378 = vsel %vm283, %v267, 0
  %vm380 = vcmask 1041408
  %v382 = vsel %vm380, %v280, 0
  %384 = vmatprep.subr.bf16.mxu0 0
  %385 = vmatpush1.bf16.msra.mxu0 %v278
  %386 = vmatprep.subr.bf16.mxu0 0
  %387 = vmatpush1.bf16.msra.mxu0 %v279
  %388 = vmatprep.subr.bf16.mxu0 0
  %389 = vmatpush1.bf16.msra.mxu0 %v382
  %390 = vmatprep.subr.bf16.mxu0 0
  %391 = vmatpush1.bf16.msra.mxu0 0
  %392 = vmatprep.subr.bf16.mxu0 0
  %393 = vmatpush1.bf16.msra.mxu0 0
  %394 = vmatprep.subr.bf16.mxu0 0
  %395 = vmatpush1.bf16.msra.mxu0 0
  %396 = vmatprep.subr.bf16.mxu0 0
  %397 = vmatpush1.bf16.msra.mxu0 0
  %398 = vmatprep.subr.bf16.mxu0 0
  %399 = vmatpush1.bf16.msra.mxu0 0
  %400 = vmatprep.subr.bf16.mxu0 0
  %401 = vmatpush1.bf16.msra.mxu0 0
  %402 = vmatprep.subr.bf16.mxu0 0
  %403 = vmatpush1.bf16.msra.mxu0 0
  %404 = vmatprep.subr.bf16.mxu0 0
  %405 = vmatpush1.bf16.msra.mxu0 0
  %406 = vmatprep.subr.bf16.mxu0 0
  %407 = vmatpush1.bf16.msra.mxu0 0
  %408 = vmatprep.subr.bf16.mxu0 0
  %409 = vmatpush1.bf16.msra.mxu0 0
  %410 = vmatprep.subr.bf16.mxu0 0
  %411 = vmatpush1.bf16.msra.mxu0 0
  %412 = vmatprep.subr.bf16.mxu0 0
  %413 = vmatpush1.bf16.msra.mxu0 0
  %414 = vmatprep.subr.bf16.mxu0 0
  %415 = vmatpush1.bf16.msra.mxu0 0
  %416 = vmatprep.mubr.bf16.mxu0 0
  %417 = vmatmul.mubr.bf16.gmra.mrb[0].mxu0 %v285
  %v418 = vpop.f32.mrb[0].mxu0
  %v419 = vadd.f32 0.0, %v418
  %v420 = vpop.f32.mrb[0].mxu0
  %v421 = vpop.f32.mrb[0].mxu0
  %v422 = vadd.f32 0.0, %v421
  %v423 = vpop.f32.mrb[0].mxu0
  %424 = vmatprep.mubr.bf16.mxu0 0
  %425 = vmatmul.mubr.bf16.gmra.mrb[0].mxu0 %v288
  %v426 = vpop.f32.mrb[0].mxu0
  %v427 = vadd.f32 0.0, %v426
  %v428 = vpop.f32.mrb[0].mxu0
  %v429 = vpop.f32.mrb[0].mxu0
  %v430 = vadd.f32 0.0, %v429
  %v431 = vpop.f32.mrb[0].mxu0
  %432 = vmatprep.mubr.bf16.mxu0 0
  %433 = vmatmul.mubr.bf16.gmra.mrb[0].mxu0 %v291
  %v434 = vpop.f32.mrb[0].mxu0
  %v435 = vadd.f32 0.0, %v434
  %v436 = vpop.f32.mrb[0].mxu0
  %v437 = vpop.f32.mrb[0].mxu0
  %v438 = vadd.f32 0.0, %v437
  %v439 = vpop.f32.mrb[0].mxu0
  %440 = vmatprep.mubr.bf16.mxu0 0
  %441 = vmatmul.mubr.bf16.gmra.mrb[0].mxu0 %v294
  %v442 = vpop.f32.mrb[0].mxu0
  %v443 = vadd.f32 0.0, %v442
  %v444 = vpop.f32.mrb[0].mxu0
  %v445 = vpop.f32.mrb[0].mxu0
  %v446 = vadd.f32 0.0, %v445
  %v447 = vpop.f32.mrb[0].mxu0
  %448 = vmatprep.mubr.bf16.mxu0 0
  %449 = vmatmul.mubr.bf16.gmra.mrb[0].mxu0 %v297
  %v450 = vpop.f32.mrb[0].mxu0
  %v451 = vadd.f32 0.0, %v450
  %v452 = vpop.f32.mrb[0].mxu0
  %v453 = vpop.f32.mrb[0].mxu0
  %v454 = vadd.f32 0.0, %v453
  %v455 = vpop.f32.mrb[0].mxu0
  %456 = vmatprep.mubr.bf16.mxu0 0
  %457 = vmatmul.mubr.bf16.gmra.mrb[0].mxu0 %v300
  %v458 = vpop.f32.mrb[0].mxu0
  %v459 = vadd.f32 0.0, %v458
  %v460 = vpop.f32.mrb[0].mxu0
  %v461 = vpop.f32.mrb[0].mxu0
  %v462 = vadd.f32 0.0, %v461
  %v463 = vpop.f32.mrb[0].mxu0
  %464 = vmatprep.mubr.bf16.mxu0 0
  %465 = vmatmul.mubr.bf16.gmra.mrb[0].mxu0 %v303
  %v466 = vpop.f32.mrb[0].mxu0
  %v467 = vadd.f32 0.0, %v466
  %v468 = vpop.f32.mrb[0].mxu0
  %v469 = vpop.f32.mrb[0].mxu0
  %v470 = vadd.f32 0.0, %v469
  %v471 = vpop.f32.mrb[0].mxu0
  %472 = vmatprep.mubr.bf16.mxu0 0
  %473 = vmatmul.mubr.bf16.gmra.mrb[0].mxu0 %v306
  %v474 = vpop.f32.mrb[0].mxu0
  %v475 = vadd.f32 0.0, %v474
  %v476 = vpop.f32.mrb[0].mxu0
  %v477 = vpop.f32.mrb[0].mxu0
  %v478 = vadd.f32 0.0, %v477
  %v479 = vpop.f32.mrb[0].mxu0
  %480 = vmatprep.mubr.bf16.mxu0 0
  %481 = vmatmul.mubr.bf16.gmra.mrb[0].mxu0 %v309
  %v482 = vpop.f32.mrb[0].mxu0
  %v483 = vadd.f32 0.0, %v482
  %v484 = vpop.f32.mrb[0].mxu0
  %v485 = vpop.f32.mrb[0].mxu0
  %v486 = vadd.f32 0.0, %v485
  %v487 = vpop.f32.mrb[0].mxu0
  %488 = vmatprep.mubr.bf16.mxu0 0
  %489 = vmatmul.mubr.bf16.gmra.mrb[0].mxu0 %v312
  %v490 = vpop.f32.mrb[0].mxu0
  %v491 = vadd.f32 0.0, %v490
  %v492 = vpop.f32.mrb[0].mxu0
  %v493 = vpop.f32.mrb[0].mxu0
  %v494 = vadd.f32 0.0, %v493
  %v495 = vpop.f32.mrb[0].mxu0
  %496 = vmatprep.mubr.bf16.mxu0 0
  %497 = vmatmul.mubr.bf16.gmra.mrb[0].mxu0 %v315
  %v498 = vpop.f32.mrb[0].mxu0
  %v499 = vadd.f32 0.0, %v498
  %v500 = vpop.f32.mrb[0].mxu0
  %v501 = vpop.f32.mrb[0].mxu0
  %v502 = vadd.f32 0.0, %v501
  %v503 = vpop.f32.mrb[0].mxu0
  %504 = vmatprep.mubr.bf16.mxu0 0
  %505 = vmatmul.mubr.bf16.gmra.mrb[0].mxu0 %v318
  %v506 = vpop.f32.mrb[0].mxu0
  %v507 = vadd.f32 0.0, %v506
  %v508 = vpop.f32.mrb[0].mxu0
  %v509 = vpop.f32.mrb[0].mxu0
  %v510 = vadd.f32 0.0, %v509
  %v511 = vpop.f32.mrb[0].mxu0
  %512 = vmatprep.mubr.bf16.mxu0 0
  %513 = vmatmul.mubr.bf16.gmra.mrb[0].mxu0 %v321
  %v514 = vpop.f32.mrb[0].mxu0
  %v515 = vadd.f32 0.0, %v514
  %v516 = vpop.f32.mrb[0].mxu0
  %v517 = vpop.f32.mrb[0].mxu0
  %v518 = vadd.f32 0.0, %v517
  %v519 = vpop.f32.mrb[0].mxu0
  %520 = vmatprep.mubr.bf16.mxu0 0
  %521 = vmatmul.mubr.bf16.gmra.mrb[0].mxu0 %v324
  %v522 = vpop.f32.mrb[0].mxu0
  %v523 = vadd.f32 0.0, %v522
  %v524 = vpop.f32.mrb[0].mxu0
  %v525 = vpop.f32.mrb[0].mxu0
  %v526 = vadd.f32 0.0, %v525
  %v527 = vpop.f32.mrb[0].mxu0
  %528 = vmatprep.mubr.bf16.mxu0 0
  %529 = vmatmul.mubr.bf16.gmra.mrb[0].mxu0 %v327
  %v530 = vpop.f32.mrb[0].mxu0
  %v531 = vadd.f32 0.0, %v530
  %v532 = vpop.f32.mrb[0].mxu0
  %v533 = vpop.f32.mrb[0].mxu0
  %v534 = vadd.f32 0.0, %v533
  %v535 = vpop.f32.mrb[0].mxu0
  %536 = vmatprep.mubr.bf16.mxu0 0
  %537 = vmatmul.mubr.bf16.gmra.mrb[0].mxu0 %v330
  %v538 = vpop.f32.mrb[0].mxu0
  %v539 = vadd.f32 0.0, %v538
  %v540 = vpop.f32.mrb[0].mxu0
  %v541 = vpop.f32.mrb[0].mxu0
  %v542 = vadd.f32 0.0, %v541
  %v543 = vpop.f32.mrb[0].mxu0
  %544 = vmatprep.mubr.bf16.mxu0 0
  %545 = vmatmul.mubr.bf16.gmra.mrb[0].mxu0 %v333
  %v546 = vpop.f32.mrb[0].mxu0
  %v547 = vadd.f32 0.0, %v546
  %v548 = vpop.f32.mrb[0].mxu0
  %v549 = vpop.f32.mrb[0].mxu0
  %v550 = vadd.f32 0.0, %v549
  %v551 = vpop.f32.mrb[0].mxu0
  %552 = vmatprep.mubr.bf16.mxu0 0
  %553 = vmatmul.mubr.bf16.gmra.mrb[0].mxu0 %v336
  %v554 = vpop.f32.mrb[0].mxu0
  %v555 = vadd.f32 0.0, %v554
  %v556 = vpop.f32.mrb[0].mxu0
  %v557 = vpop.f32.mrb[0].mxu0
  %v558 = vadd.f32 0.0, %v557
  %v559 = vpop.f32.mrb[0].mxu0
  %560 = vmatprep.mubr.bf16.mxu0 0
  %561 = vmatmul.mubr.bf16.gmra.mrb[0].mxu0 %v339
  %v562 = vpop.f32.mrb[0].mxu0
  %v563 = vadd.f32 0.0, %v562
  %v564 = vpop.f32.mrb[0].mxu0
  %v565 = vpop.f32.mrb[0].mxu0
  %v566 = vadd.f32 0.0, %v565
  %v567 = vpop.f32.mrb[0].mxu0
  %568 = vmatprep.mubr.bf16.mxu0 0
  %569 = vmatmul.mubr.bf16.gmra.mrb[0].mxu0 %v342
  %v570 = vpop.f32.mrb[0].mxu0
  %v571 = vadd.f32 0.0, %v570
  %v572 = vpop.f32.mrb[0].mxu0
  %v573 = vpop.f32.mrb[0].mxu0
  %v574 = vadd.f32 0.0, %v573
  %v575 = vpop.f32.mrb[0].mxu0
  %576 = vmatprep.mubr.bf16.mxu0 0
  %577 = vmatmul.mubr.bf16.gmra.mrb[0].mxu0 %v345
  %v578 = vpop.f32.mrb[0].mxu0
  %v579 = vadd.f32 0.0, %v578
  %v580 = vpop.f32.mrb[0].mxu0
  %v581 = vpop.f32.mrb[0].mxu0
  %v582 = vadd.f32 0.0, %v581
  %v583 = vpop.f32.mrb[0].mxu0
  %584 = vmatprep.mubr.bf16.mxu0 0
  %585 = vmatmul.mubr.bf16.gmra.mrb[0].mxu0 %v348
  %v586 = vpop.f32.mrb[0].mxu0
  %v587 = vadd.f32 0.0, %v586
  %v588 = vpop.f32.mrb[0].mxu0
  %v589 = vpop.f32.mrb[0].mxu0
  %v590 = vadd.f32 0.0, %v589
  %v591 = vpop.f32.mrb[0].mxu0
  %592 = vmatprep.mubr.bf16.mxu0 0
  %593 = vmatmul.mubr.bf16.gmra.mrb[0].mxu0 %v351
  %v594 = vpop.f32.mrb[0].mxu0
  %v595 = vadd.f32 0.0, %v594
  %v596 = vpop.f32.mrb[0].mxu0
  %v597 = vpop.f32.mrb[0].mxu0
  %v598 = vadd.f32 0.0, %v597
  %v599 = vpop.f32.mrb[0].mxu0
  %600 = vmatprep.mubr.bf16.mxu0 0
  %601 = vmatmul.mubr.bf16.gmra.mrb[0].mxu0 %v354
  %v602 = vpop.f32.mrb[0].mxu0
  %v603 = vadd.f32 0.0, %v602
  %v604 = vpop.f32.mrb[0].mxu0
  %v605 = vpop.f32.mrb[0].mxu0
  %v606 = vadd.f32 0.0, %v605
  %v607 = vpop.f32.mrb[0].mxu0
  %608 = vmatprep.mubr.bf16.mxu0 0
  %609 = vmatmul.mubr.bf16.gmra.mrb[0].mxu0 %v357
  %v610 = vpop.f32.mrb[0].mxu0
  %v611 = vadd.f32 0.0, %v610
  %v612 = vpop.f32.mrb[0].mxu0
  %v613 = vpop.f32.mrb[0].mxu0
  %v614 = vadd.f32 0.0, %v613
  %v615 = vpop.f32.mrb[0].mxu0
  %616 = vmatprep.mubr.bf16.mxu0 0
  %617 = vmatmul.mubr.bf16.gmra.mrb[0].mxu0 %v360
  %v618 = vpop.f32.mrb[0].mxu0
  %v619 = vadd.f32 0.0, %v618
  %v620 = vpop.f32.mrb[0].mxu0
  %v621 = vpop.f32.mrb[0].mxu0
  %v622 = vadd.f32 0.0, %v621
  %v623 = vpop.f32.mrb[0].mxu0
  %624 = vmatprep.mubr.bf16.mxu0 0
  %625 = vmatmul.mubr.bf16.gmra.mrb[0].mxu0 %v363
  %v626 = vpop.f32.mrb[0].mxu0
  %v627 = vadd.f32 0.0, %v626
  %v628 = vpop.f32.mrb[0].mxu0
  %v629 = vpop.f32.mrb[0].mxu0
  %v630 = vadd.f32 0.0, %v629
  %v631 = vpop.f32.mrb[0].mxu0
  %632 = vmatprep.mubr.bf16.mxu0 0
  %633 = vmatmul.mubr.bf16.gmra.mrb[0].mxu0 %v366
  %v634 = vpop.f32.mrb[0].mxu0
  %v635 = vadd.f32 0.0, %v634
  %v636 = vpop.f32.mrb[0].mxu0
  %v637 = vpop.f32.mrb[0].mxu0
  %v638 = vadd.f32 0.0, %v637
  %v639 = vpop.f32.mrb[0].mxu0
  %640 = vmatprep.mubr.bf16.mxu0 0
  %641 = vmatmul.mubr.bf16.gmra.mrb[0].mxu0 %v369
  %v642 = vpop.f32.mrb[0].mxu0
  %v643 = vadd.f32 0.0, %v642
  %v644 = vpop.f32.mrb[0].mxu0
  %v645 = vpop.f32.mrb[0].mxu0
  %v646 = vadd.f32 0.0, %v645
  %v647 = vpop.f32.mrb[0].mxu0
  %648 = vmatprep.mubr.bf16.mxu0 0
  %649 = vmatmul.mubr.bf16.gmra.mrb[0].mxu0 %v372
  %v650 = vpop.f32.mrb[0].mxu0
  %v651 = vadd.f32 0.0, %v650
  %v652 = vpop.f32.mrb[0].mxu0
  %v653 = vpop.f32.mrb[0].mxu0
  %v654 = vadd.f32 0.0, %v653
  %v655 = vpop.f32.mrb[0].mxu0
  %656 = vmatprep.mubr.bf16.mxu0 0
  %657 = vmatmul.mubr.bf16.gmra.mrb[0].mxu0 %v375
  %v658 = vpop.f32.mrb[0].mxu0
  %v659 = vadd.f32 0.0, %v658
  %v660 = vpop.f32.mrb[0].mxu0
  %v661 = vpop.f32.mrb[0].mxu0
  %v662 = vadd.f32 0.0, %v661
  %v663 = vpop.f32.mrb[0].mxu0
  %664 = vmatprep.mubr.bf16.mxu0 0
  %665 = vmatmul.mubr.bf16.gmra.mrb[0].mxu0 %v378
  %v666 = vpop.f32.mrb[0].mxu0
  %v667 = vadd.f32 0.0, %v666
  %v668 = vpop.f32.mrb[0].mxu0
  %v669 = vpop.f32.mrb[0].mxu0
  %v670 = vadd.f32 0.0, %v669
  %v671 = vpop.f32.mrb[0].mxu0
  %672 = vdwg.mxu0
  %v673 = vld [vmem:[%s2] sm:$0x1]
  %v675 = vlaneseq
  %v676 = vshrl.u32 %v675, 7
  %v677 = vsub.s32 0, %v676
  %v678 = vrot.slane %v673, %v677
  %v680 = vmul.f32 %v419, %v678
  %v681 = vmul.f32 %v422, %v678
  %v682 = vmul.f32 %v427, %v678
  %v683 = vmul.f32 %v430, %v678
  %v684 = vmul.f32 %v435, %v678
  %v685 = vmul.f32 %v438, %v678
  %v686 = vmul.f32 %v443, %v678
  %v687 = vmul.f32 %v446, %v678
  %v688 = vmul.f32 %v451, %v678
  %v689 = vmul.f32 %v454, %v678
  %v690 = vmul.f32 %v459, %v678
  %v691 = vmul.f32 %v462, %v678
  %v692 = vmul.f32 %v467, %v678
  %v693 = vmul.f32 %v470, %v678
  %v694 = vmul.f32 %v475, %v678
  %v695 = vmul.f32 %v478, %v678
  %v696 = vmul.f32 %v483, %v678
  %v697 = vmul.f32 %v486, %v678
  %v698 = vmul.f32 %v491, %v678
  %v699 = vmul.f32 %v494, %v678
  %v700 = vmul.f32 %v499, %v678
  %v701 = vmul.f32 %v502, %v678
  %v702 = vmul.f32 %v507, %v678
  %v703 = vmul.f32 %v510, %v678
  %v704 = vmul.f32 %v515, %v678
  %v705 = vmul.f32 %v518, %v678
  %v706 = vmul.f32 %v523, %v678
  %v707 = vmul.f32 %v526, %v678
  %v708 = vmul.f32 %v531, %v678
  %v709 = vmul.f32 %v534, %v678
  %v710 = vmul.f32 %v539, %v678
  %v711 = vmul.f32 %v542, %v678
  %v712 = vmul.f32 %v547, %v678
  %v713 = vmul.f32 %v550, %v678
  %v714 = vmul.f32 %v555, %v678
  %v715 = vmul.f32 %v558, %v678
  %v716 = vmul.f32 %v563, %v678
  %v717 = vmul.f32 %v566, %v678
  %v718 = vmul.f32 %v571, %v678
  %v719 = vmul.f32 %v574, %v678
  %v720 = vmul.f32 %v579, %v678
  %v721 = vmul.f32 %v582, %v678
  %v722 = vmul.f32 %v587, %v678
  %v723 = vmul.f32 %v590, %v678
  %v724 = vmul.f32 %v595, %v678
  %v725 = vmul.f32 %v598, %v678
  %v726 = vmul.f32 %v603, %v678
  %v727 = vmul.f32 %v606, %v678
  %v728 = vmul.f32 %v611, %v678
  %v729 = vmul.f32 %v614, %v678
  %v730 = vmul.f32 %v619, %v678
  %v731 = vmul.f32 %v622, %v678
  %v732 = vmul.f32 %v627, %v678
  %v733 = vmul.f32 %v630, %v678
  %v734 = vmul.f32 %v635, %v678
  %v735 = vmul.f32 %v638, %v678
  %v736 = vmul.f32 %v643, %v678
  %v737 = vmul.f32 %v646, %v678
  %v738 = vmul.f32 %v651, %v678
  %v739 = vmul.f32 %v654, %v678
  %v740 = vmul.f32 %v659, %v678
  %v741 = vmul.f32 %v662, %v678
  %v742 = vmul.f32 %v667, %v678
  %v743 = vmul.f32 %v670, %v678
  %v744 = vld [vmem:[%s3] sm:$0x1]
  %v746 = vlaneseq
  %v747 = vshrl.u32 %v746, 7
  %v748 = vsub.s32 0, %v747
  %v749 = vrot.slane %v744, %v748
  %v751 = vadd.f32 %v680, %v749
  %v752 = vadd.f32 %v681, %v749
  %v753 = vadd.f32 %v682, %v749
  %v754 = vadd.f32 %v683, %v749
  %v755 = vadd.f32 %v684, %v749
  %v756 = vadd.f32 %v685, %v749
  %v757 = vadd.f32 %v686, %v749
  %v758 = vadd.f32 %v687, %v749
  %v759 = vadd.f32 %v688, %v749
  %v760 = vadd.f32 %v689, %v749
  %v761 = vadd.f32 %v690, %v749
  %v762 = vadd.f32 %v691, %v749
  %v763 = vadd.f32 %v692, %v749
  %v764 = vadd.f32 %v693, %v749
  %v765 = vadd.f32 %v694, %v749
  %v766 = vadd.f32 %v695, %v749
  %v767 = vadd.f32 %v696, %v749
  %v768 = vadd.f32 %v697, %v749
  %v769 = vadd.f32 %v698, %v749
  %v770 = vadd.f32 %v699, %v749
  %v771 = vadd.f32 %v700, %v749
  %v772 = vadd.f32 %v701, %v749
  %v773 = vadd.f32 %v702, %v749
  %v774 = vadd.f32 %v703, %v749
  %v775 = vadd.f32 %v704, %v749
  %v776 = vadd.f32 %v705, %v749
  %v777 = vadd.f32 %v706, %v749
  %v778 = vadd.f32 %v707, %v749
  %v779 = vadd.f32 %v708, %v749
  %v780 = vadd.f32 %v709, %v749
  %v781 = vadd.f32 %v710, %v749
  %v782 = vadd.f32 %v711, %v749
  %v783 = vadd.f32 %v712, %v749
  %v784 = vadd.f32 %v713, %v749
  %v785 = vadd.f32 %v714, %v749
  %v786 = vadd.f32 %v715, %v749
  %v787 = vadd.f32 %v716, %v749
  %v788 = vadd.f32 %v717, %v749
  %v789 = vadd.f32 %v718, %v749
  %v790 = vadd.f32 %v719, %v749
  %v791 = vadd.f32 %v720, %v749
  %v792 = vadd.f32 %v721, %v749
  %v793 = vadd.f32 %v722, %v749
  %v794 = vadd.f32 %v723, %v749
  %v795 = vadd.f32 %v724, %v749
  %v796 = vadd.f32 %v725, %v749
  %v797 = vadd.f32 %v726, %v749
  %v798 = vadd.f32 %v727, %v749
  %v799 = vadd.f32 %v728, %v749
  %v800 = vadd.f32 %v729, %v749
  %v801 = vadd.f32 %v730, %v749
  %v802 = vadd.f32 %v731, %v749
  %v803 = vadd.f32 %v732, %v749
  %v804 = vadd.f32 %v733, %v749
  %v805 = vadd.f32 %v734, %v749
  %v806 = vadd.f32 %v735, %v749
  %v807 = vadd.f32 %v736, %v749
  %v808 = vadd.f32 %v737, %v749
  %v809 = vadd.f32 %v738, %v749
  %v810 = vadd.f32 %v739, %v749
  %v811 = vadd.f32 %v740, %v749
  %v812 = vadd.f32 %v741, %v749
  %v813 = vadd.f32 %v742, %v749
  %v814 = vadd.f32 %v743, %v749
  %vm815 = vcmp.gt.f32.partialorder %v751, 0.0
  %vm816 = vcmp.gt.f32.partialorder %v752, 0.0
  %vm817 = vcmp.gt.f32.partialorder %v753, 0.0
  %vm818 = vcmp.gt.f32.partialorder %v754, 0.0
  %vm819 = vcmp.gt.f32.partialorder %v755, 0.0
  %vm820 = vcmp.gt.f32.partialorder %v756, 0.0
  %vm821 = vcmp.gt.f32.partialorder %v757, 0.0
  %vm822 = vcmp.gt.f32.partialorder %v758, 0.0
  %vm823 = vcmp.gt.f32.partialorder %v759, 0.0
  %vm824 = vcmp.gt.f32.partialorder %v760, 0.0
  %vm825 = vcmp.gt.f32.partialorder %v761, 0.0
  %vm826 = vcmp.gt.f32.partialorder %v762, 0.0
  %vm827 = vcmp.gt.f32.partialorder %v763, 0.0
  %vm828 = vcmp.gt.f32.partialorder %v764, 0.0
  %vm829 = vcmp.gt.f32.partialorder %v765, 0.0
  %vm830 = vcmp.gt.f32.partialorder %v766, 0.0
  %vm831 = vcmp.gt.f32.partialorder %v767, 0.0
  %vm832 = vcmp.gt.f32.partialorder %v768, 0.0
  %vm833 = vcmp.gt.f32.partialorder %v769, 0.0
  %vm834 = vcmp.gt.f32.partialorder %v770, 0.0
  %vm835 = vcmp.gt.f32.partialorder %v771, 0.0
  %vm836 = vcmp.gt.f32.partialorder %v772, 0.0
  %vm837 = vcmp.gt.f32.partialorder %v773, 0.0
  %vm838 = vcmp.gt.f32.partialorder %v774, 0.0
  %vm839 = vcmp.gt.f32.partialorder %v775, 0.0
  %vm840 = vcmp.gt.f32.partialorder %v776, 0.0
  %vm841 = vcmp.gt.f32.partialorder %v777, 0.0
  %vm842 = vcmp.gt.f32.partialorder %v778, 0.0
  %vm843 = vcmp.gt.f32.partialorder %v779, 0.0
  %vm844 = vcmp.gt.f32.partialorder %v780, 0.0
  %vm845 = vcmp.gt.f32.partialorder %v781, 0.0
  %vm846 = vcmp.gt.f32.partialorder %v782, 0.0
  %vm847 = vcmp.gt.f32.partialorder %v783, 0.0
  %vm848 = vcmp.gt.f32.partialorder %v784, 0.0
  %vm849 = vcmp.gt.f32.partialorder %v785, 0.0
  %vm850 = vcmp.gt.f32.partialorder %v786, 0.0
  %vm851 = vcmp.gt.f32.partialorder %v787, 0.0
  %vm852 = vcmp.gt.f32.partialorder %v788, 0.0
  %vm853 = vcmp.gt.f32.partialorder %v789, 0.0
  %vm854 = vcmp.gt.f32.partialorder %v790, 0.0
  %vm855 = vcmp.gt.f32.partialorder %v791, 0.0
  %vm856 = vcmp.gt.f32.partialorder %v792, 0.0
  %vm857 = vcmp.gt.f32.partialorder %v793, 0.0
  %vm858 = vcmp.gt.f32.partialorder %v794, 0.0
  %vm859 = vcmp.gt.f32.partialorder %v795, 0.0
  %vm860 = vcmp.gt.f32.partialorder %v796, 0.0
  %vm861 = vcmp.gt.f32.partialorder %v797, 0.0
  %vm862 = vcmp.gt.f32.partialorder %v798, 0.0
  %vm863 = vcmp.gt.f32.partialorder %v799, 0.0
  %vm864 = vcmp.gt.f32.partialorder %v800, 0.0
  %vm865 = vcmp.gt.f32.partialorder %v801, 0.0
  %vm866 = vcmp.gt.f32.partialorder %v802, 0.0
  %vm867 = vcmp.gt.f32.partialorder %v803, 0.0
  %vm868 = vcmp.gt.f32.partialorder %v804, 0.0
  %vm869 = vcmp.gt.f32.partialorder %v805, 0.0
  %vm870 = vcmp.gt.f32.partialorder %v806, 0.0
  %vm871 = vcmp.gt.f32.partialorder %v807, 0.0
  %vm872 = vcmp.gt.f32.partialorder %v808, 0.0
  %vm873 = vcmp.gt.f32.partialorder %v809, 0.0
  %vm874 = vcmp.gt.f32.partialorder %v810, 0.0
  %vm875 = vcmp.gt.f32.partialorder %v811, 0.0
  %vm876 = vcmp.gt.f32.partialorder %v812, 0.0
  %vm877 = vcmp.gt.f32.partialorder %v813, 0.0
  %vm878 = vcmp.gt.f32.partialorder %v814, 0.0
  %v879 = vmul.f32 %v751, 0.01
  %v880 = vmul.f32 %v752, 0.01
  %v881 = vmul.f32 %v753, 0.01
  %v882 = vmul.f32 %v754, 0.01
  %v883 = vmul.f32 %v755, 0.01
  %v884 = vmul.f32 %v756, 0.01
  %v885 = vmul.f32 %v757, 0.01
  %v886 = vmul.f32 %v758, 0.01
  %v887 = vmul.f32 %v759, 0.01
  %v888 = vmul.f32 %v760, 0.01
  %v889 = vmul.f32 %v761, 0.01
  %v890 = vmul.f32 %v762, 0.01
  %v891 = vmul.f32 %v763, 0.01
  %v892 = vmul.f32 %v764, 0.01
  %v893 = vmul.f32 %v765, 0.01
  %v894 = vmul.f32 %v766, 0.01
  %v895 = vmul.f32 %v767, 0.01
  %v896 = vmul.f32 %v768, 0.01
  %v897 = vmul.f32 %v769, 0.01
  %v898 = vmul.f32 %v770, 0.01
  %v899 = vmul.f32 %v771, 0.01
  %v900 = vmul.f32 %v772, 0.01
  %v901 = vmul.f32 %v773, 0.01
  %v902 = vmul.f32 %v774, 0.01
  %v903 = vmul.f32 %v775, 0.01
  %v904 = vmul.f32 %v776, 0.01
  %v905 = vmul.f32 %v777, 0.01
  %v906 = vmul.f32 %v778, 0.01
  %v907 = vmul.f32 %v779, 0.01
  %v908 = vmul.f32 %v780, 0.01
  %v909 = vmul.f32 %v781, 0.01
  %v910 = vmul.f32 %v782, 0.01
  %v911 = vmul.f32 %v783, 0.01
  %v912 = vmul.f32 %v784, 0.01
  %v913 = vmul.f32 %v785, 0.01
  %v914 = vmul.f32 %v786, 0.01
  %v915 = vmul.f32 %v787, 0.01
  %v916 = vmul.f32 %v788, 0.01
  %v917 = vmul.f32 %v789, 0.01
  %v918 = vmul.f32 %v790, 0.01
  %v919 = vmul.f32 %v791, 0.01
  %v920 = vmul.f32 %v792, 0.01
  %v921 = vmul.f32 %v793, 0.01
  %v922 = vmul.f32 %v794, 0.01
  %v923 = vmul.f32 %v795, 0.01
  %v924 = vmul.f32 %v796, 0.01
  %v925 = vmul.f32 %v797, 0.01
  %v926 = vmul.f32 %v798, 0.01
  %v927 = vmul.f32 %v799, 0.01
  %v928 = vmul.f32 %v800, 0.01
  %v929 = vmul.f32 %v801, 0.01
  %v930 = vmul.f32 %v802, 0.01
  %v931 = vmul.f32 %v803, 0.01
  %v932 = vmul.f32 %v804, 0.01
  %v933 = vmul.f32 %v805, 0.01
  %v934 = vmul.f32 %v806, 0.01
  %v935 = vmul.f32 %v807, 0.01
  %v936 = vmul.f32 %v808, 0.01
  %v937 = vmul.f32 %v809, 0.01
  %v938 = vmul.f32 %v810, 0.01
  %v939 = vmul.f32 %v811, 0.01
  %v940 = vmul.f32 %v812, 0.01
  %v941 = vmul.f32 %v813, 0.01
  %v942 = vmul.f32 %v814, 0.01
  %v943 = vsel %vm815, %v751, %v879
  %v944 = vsel %vm816, %v752, %v880
  %v945 = vsel %vm817, %v753, %v881
  %v946 = vsel %vm818, %v754, %v882
  %v947 = vsel %vm819, %v755, %v883
  %v948 = vsel %vm820, %v756, %v884
  %v949 = vsel %vm821, %v757, %v885
  %v950 = vsel %vm822, %v758, %v886
  %v951 = vsel %vm823, %v759, %v887
  %v952 = vsel %vm824, %v760, %v888
  %v953 = vsel %vm825, %v761, %v889
  %v954 = vsel %vm826, %v762, %v890
  %v955 = vsel %vm827, %v763, %v891
  %v956 = vsel %vm828, %v764, %v892
  %v957 = vsel %vm829, %v765, %v893
  %v958 = vsel %vm830, %v766, %v894
  %v959 = vsel %vm831, %v767, %v895
  %v960 = vsel %vm832, %v768, %v896
  %v961 = vsel %vm833, %v769, %v897
  %v962 = vsel %vm834, %v770, %v898
  %v963 = vsel %vm835, %v771, %v899
  %v964 = vsel %vm836, %v772, %v900
  %v965 = vsel %vm837, %v773, %v901
  %v966 = vsel %vm838, %v774, %v902
  %v967 = vsel %vm839, %v775, %v903
  %v968 = vsel %vm840, %v776, %v904
  %v969 = vsel %vm841, %v777, %v905
  %v970 = vsel %vm842, %v778, %v906
  %v971 = vsel %vm843, %v779, %v907
  %v972 = vsel %vm844, %v780, %v908
  %v973 = vsel %vm845, %v781, %v909
  %v974 = vsel %vm846, %v782, %v910
  %v975 = vsel %vm847, %v783, %v911
  %v976 = vsel %vm848, %v784, %v912
  %v977 = vsel %vm849, %v785, %v913
  %v978 = vsel %vm850, %v786, %v914
  %v979 = vsel %vm851, %v787, %v915
  %v980 = vsel %vm852, %v788, %v916
  %v981 = vsel %vm853, %v789, %v917
  %v982 = vsel %vm854, %v790, %v918
  %v983 = vsel %vm855, %v791, %v919
  %v984 = vsel %vm856, %v792, %v920
  %v985 = vsel %vm857, %v793, %v921
  %v986 = vsel %vm858, %v794, %v922
  %v987 = vsel %vm859, %v795, %v923
  %v988 = vsel %vm860, %v796, %v924
  %v989 = vsel %vm861, %v797, %v925
  %v990 = vsel %vm862, %v798, %v926
  %v991 = vsel %vm863, %v799, %v927
  %v992 = vsel %vm864, %v800, %v928
  %v993 = vsel %vm865, %v801, %v929
  %v994 = vsel %vm866, %v802, %v930
  %v995 = vsel %vm867, %v803, %v931
  %v996 = vsel %vm868, %v804, %v932
  %v997 = vsel %vm869, %v805, %v933
  %v998 = vsel %vm870, %v806, %v934
  %v999 = vsel %vm871, %v807, %v935
  %v1000 = vsel %vm872, %v808, %v936
  %v1001 = vsel %vm873, %v809, %v937
  %v1002 = vsel %vm874, %v810, %v938
  %v1003 = vsel %vm875, %v811, %v939
  %v1004 = vsel %vm876, %v812, %v940
  %v1005 = vsel %vm877, %v813, %v941
  %v1006 = vsel %vm878, %v814, %v942
  %vm1007 = vcmask 257024
  %1008 = vst.msk [vmem:[#allocation2] sm:$0xf] %vm1007, 0
  %1009 = vst.msk [vmem:[#allocation2 + $0x4] sm:$0xf] %vm1007, 0
  %vm1010 = vcmask 253952
  %1011 = vst.msk [vmem:[#allocation2 + $0x8] sm:$0x1] %vm1010, 0
  %1012 = vst.msk [vmem:[#allocation2 + $0xd8] sm:$0xf] %vm1007, 0
  %1013 = vst.msk [vmem:[#allocation2 + $0xdc] sm:$0xf] %vm1007, 0
  %1014 = vst.msk [vmem:[#allocation2 + $0xe0] sm:$0x1] %vm1010, 0
  %s1015 = scalar_lea.vmem [#allocation2], 204
  %1016 = vst.msk [vmem:[%s1015] sm:$0xf] %vm1007, 0
  %1017 = vst.msk [vmem:[%s1015 + $0x4] sm:$0xf] %vm1007, 0
  %1018 = vst.msk [vmem:[%s1015 + $0x8] sm:$0x1] %vm1010, 0
  %1019 = vst.msk [vmem:[%s1015 + $0xd8] sm:$0xf] %vm1007, 0
  %1020 = vst.msk [vmem:[%s1015 + $0xdc] sm:$0xf] %vm1007, 0
  %1021 = vst.msk [vmem:[%s1015 + $0xe0] sm:$0x1] %vm1010, 0
  %s1022 = scalar_lea.vmem [#allocation2], 12
  %vm1023 = vcmask 253952
  %vm1024 = vsmask.f32 256
  %vm1025 = vmand %vm1023, %vm1024
  %v1026 = vld [vmem:[%s1022] sm:$0x1]
  %v1027 = vsel %vm1025, 0, %v1026
  %1028 = vst [vmem:[%s1022] sm:$0x1] %v1027
  %v1029 = vld [vmem:[%s1022 + $0xc] sm:$0x1]
  %v1030 = vsel %vm1025, 0, %v1029
  %1031 = vst [vmem:[%s1022 + $0xc] sm:$0x1] %v1030
  %v1032 = vld [vmem:[%s1022 + $0x18] sm:$0x1]
  %v1033 = vsel %vm1025, 0, %v1032
  %1034 = vst [vmem:[%s1022 + $0x18] sm:$0x1] %v1033
  %v1035 = vld [vmem:[%s1022 + $0x24] sm:$0x1]
  %v1036 = vsel %vm1025, 0, %v1035
  %1037 = vst [vmem:[%s1022 + $0x24] sm:$0x1] %v1036
  %v1038 = vld [vmem:[%s1022 + $0x30] sm:$0x1]
  %v1039 = vsel %vm1025, 0, %v1038
  %1040 = vst [vmem:[%s1022 + $0x30] sm:$0x1] %v1039
  %v1041 = vld [vmem:[%s1022 + $0x3c] sm:$0x1]
  %v1042 = vsel %vm1025, 0, %v1041
  %1043 = vst [vmem:[%s1022 + $0x3c] sm:$0x1] %v1042
  %v1044 = vld [vmem:[%s1022 + $0x48] sm:$0x1]
  %v1045 = vsel %vm1025, 0, %v1044
  %1046 = vst [vmem:[%s1022 + $0x48] sm:$0x1] %v1045
  %v1047 = vld [vmem:[%s1022 + $0x54] sm:$0x1]
  %v1048 = vsel %vm1025, 0, %v1047
  %1049 = vst [vmem:[%s1022 + $0x54] sm:$0x1] %v1048
  %v1050 = vld [vmem:[%s1022 + $0x60] sm:$0x1]
  %v1051 = vsel %vm1025, 0, %v1050
  %1052 = vst [vmem:[%s1022 + $0x60] sm:$0x1] %v1051
  %v1053 = vld [vmem:[%s1022 + $0x6c] sm:$0x1]
  %v1054 = vsel %vm1025, 0, %v1053
  %1055 = vst [vmem:[%s1022 + $0x6c] sm:$0x1] %v1054
  %v1056 = vld [vmem:[%s1022 + $0x78] sm:$0x1]
  %v1057 = vsel %vm1025, 0, %v1056
  %1058 = vst [vmem:[%s1022 + $0x78] sm:$0x1] %v1057
  %v1059 = vld [vmem:[%s1022 + $0x84] sm:$0x1]
  %v1060 = vsel %vm1025, 0, %v1059
  %1061 = vst [vmem:[%s1022 + $0x84] sm:$0x1] %v1060
  %v1062 = vld [vmem:[%s1022 + $0x90] sm:$0x1]
  %v1063 = vsel %vm1025, 0, %v1062
  %1064 = vst [vmem:[%s1022 + $0x90] sm:$0x1] %v1063
  %v1065 = vld [vmem:[%s1022 + $0x9c] sm:$0x1]
  %v1066 = vsel %vm1025, 0, %v1065
  %1067 = vst [vmem:[%s1022 + $0x9c] sm:$0x1] %v1066
  %v1068 = vld [vmem:[%s1022 + $0xa8] sm:$0x1]
  %v1069 = vsel %vm1025, 0, %v1068
  %1070 = vst [vmem:[%s1022 + $0xa8] sm:$0x1] %v1069
  %v1071 = vld [vmem:[%s1022 + $0xb4] sm:$0x1]
  %v1072 = vsel %vm1025, 0, %v1071
  %1073 = vst [vmem:[%s1022 + $0xb4] sm:$0x1] %v1072
  %v1074 = vld [vmem:[%s1022 + $0xd8] sm:$0x1]
  %v1075 = vsel %vm1025, 0, %v1074
  %1076 = vst [vmem:[%s1022 + $0xd8] sm:$0x1] %v1075
  %v1077 = vld [vmem:[%s1022 + $0xe4] sm:$0x1]
  %v1078 = vsel %vm1025, 0, %v1077
  %1079 = vst [vmem:[%s1022 + $0xe4] sm:$0x1] %v1078
  %v1080 = vld [vmem:[%s1022 + $0xf0] sm:$0x1]
  %v1081 = vsel %vm1025, 0, %v1080
  %1082 = vst [vmem:[%s1022 + $0xf0] sm:$0x1] %v1081
  %v1083 = vld [vmem:[%s1022 + $0xfc] sm:$0x1]
  %v1084 = vsel %vm1025, 0, %v1083
  %1085 = vst [vmem:[%s1022 + $0xfc] sm:$0x1] %v1084
  %v1086 = vld [vmem:[%s1022 + $0x108] sm:$0x1]
  %v1087 = vsel %vm1025, 0, %v1086
  %1088 = vst [vmem:[%s1022 + $0x108] sm:$0x1] %v1087
  %v1089 = vld [vmem:[%s1022 + $0x114] sm:$0x1]
  %v1090 = vsel %vm1025, 0, %v1089
  %1091 = vst [vmem:[%s1022 + $0x114] sm:$0x1] %v1090
  %v1092 = vld [vmem:[%s1022 + $0x120] sm:$0x1]
  %v1093 = vsel %vm1025, 0, %v1092
  %1094 = vst [vmem:[%s1022 + $0x120] sm:$0x1] %v1093
  %v1095 = vld [vmem:[%s1022 + $0x12c] sm:$0x1]
  %v1096 = vsel %vm1025, 0, %v1095
  %1097 = vst [vmem:[%s1022 + $0x12c] sm:$0x1] %v1096
  %v1098 = vld [vmem:[%s1022 + $0x138] sm:$0x1]
  %v1099 = vsel %vm1025, 0, %v1098
  %1100 = vst [vmem:[%s1022 + $0x138] sm:$0x1] %v1099
  %v1101 = vld [vmem:[%s1022 + $0x144] sm:$0x1]
  %v1102 = vsel %vm1025, 0, %v1101
  %1103 = vst [vmem:[%s1022 + $0x144] sm:$0x1] %v1102
  %v1104 = vld [vmem:[%s1022 + $0x150] sm:$0x1]
  %v1105 = vsel %vm1025, 0, %v1104
  %1106 = vst [vmem:[%s1022 + $0x150] sm:$0x1] %v1105
  %v1107 = vld [vmem:[%s1022 + $0x15c] sm:$0x1]
  %v1108 = vsel %vm1025, 0, %v1107
  %1109 = vst [vmem:[%s1022 + $0x15c] sm:$0x1] %v1108
  %v1110 = vld [vmem:[%s1022 + $0x168] sm:$0x1]
  %v1111 = vsel %vm1025, 0, %v1110
  %1112 = vst [vmem:[%s1022 + $0x168] sm:$0x1] %v1111
  %v1113 = vld [vmem:[%s1022 + $0x174] sm:$0x1]
  %v1114 = vsel %vm1025, 0, %v1113
  %1115 = vst [vmem:[%s1022 + $0x174] sm:$0x1] %v1114
  %v1116 = vld [vmem:[%s1022 + $0x180] sm:$0x1]
  %v1117 = vsel %vm1025, 0, %v1116
  %1118 = vst [vmem:[%s1022 + $0x180] sm:$0x1] %v1117
  %v1119 = vld [vmem:[%s1022 + $0x18c] sm:$0x1]
  %v1120 = vsel %vm1025, 0, %v1119
  %1121 = vst [vmem:[%s1022 + $0x18c] sm:$0x1] %v1120
  %vm1122 = vsmask.f32 7938
  %vm1123 = vmand %vm1023, %vm1122
  %v1124 = vld [vmem:[%s1022 + $0x8] sm:$0x1]
  %v1125 = vsel %vm1123, 0, %v1124
  %1126 = vst [vmem:[%s1022 + $0x8] sm:$0x1] %v1125
  %v1127 = vld [vmem:[%s1022 + $0x14] sm:$0x1]
  %v1128 = vsel %vm1123, 0, %v1127
  %1129 = vst [vmem:[%s1022 + $0x14] sm:$0x1] %v1128
  %v1130 = vld [vmem:[%s1022 + $0x20] sm:$0x1]
  %v1131 = vsel %vm1123, 0, %v1130
  %1132 = vst [vmem:[%s1022 + $0x20] sm:$0x1] %v1131
  %v1133 = vld [vmem:[%s1022 + $0x2c] sm:$0x1]
  %v1134 = vsel %vm1123, 0, %v1133
  %1135 = vst [vmem:[%s1022 + $0x2c] sm:$0x1] %v1134
  %v1136 = vld [vmem:[%s1022 + $0x38] sm:$0x1]
  %v1137 = vsel %vm1123, 0, %v1136
  %1138 = vst [vmem:[%s1022 + $0x38] sm:$0x1] %v1137
  %v1139 = vld [vmem:[%s1022 + $0x44] sm:$0x1]
  %v1140 = vsel %vm1123, 0, %v1139
  %1141 = vst [vmem:[%s1022 + $0x44] sm:$0x1] %v1140
  %v1142 = vld [vmem:[%s1022 + $0x50] sm:$0x1]
  %v1143 = vsel %vm1123, 0, %v1142
  %1144 = vst [vmem:[%s1022 + $0x50] sm:$0x1] %v1143
  %v1145 = vld [vmem:[%s1022 + $0x5c] sm:$0x1]
  %v1146 = vsel %vm1123, 0, %v1145
  %1147 = vst [vmem:[%s1022 + $0x5c] sm:$0x1] %v1146
  %v1148 = vld [vmem:[%s1022 + $0x68] sm:$0x1]
  %v1149 = vsel %vm1123, 0, %v1148
  %1150 = vst [vmem:[%s1022 + $0x68] sm:$0x1] %v1149
  %v1151 = vld [vmem:[%s1022 + $0x74] sm:$0x1]
  %v1152 = vsel %vm1123, 0, %v1151
  %1153 = vst [vmem:[%s1022 + $0x74] sm:$0x1] %v1152
  %v1154 = vld [vmem:[%s1022 + $0x80] sm:$0x1]
  %v1155 = vsel %vm1123, 0, %v1154
  %1156 = vst [vmem:[%s1022 + $0x80] sm:$0x1] %v1155
  %v1157 = vld [vmem:[%s1022 + $0x8c] sm:$0x1]
  %v1158 = vsel %vm1123, 0, %v1157
  %1159 = vst [vmem:[%s1022 + $0x8c] sm:$0x1] %v1158
  %v1160 = vld [vmem:[%s1022 + $0x98] sm:$0x1]
  %v1161 = vsel %vm1123, 0, %v1160
  %1162 = vst [vmem:[%s1022 + $0x98] sm:$0x1] %v1161
  %v1163 = vld [vmem:[%s1022 + $0xa4] sm:$0x1]
  %v1164 = vsel %vm1123, 0, %v1163
  %1165 = vst [vmem:[%s1022 + $0xa4] sm:$0x1] %v1164
  %v1166 = vld [vmem:[%s1022 + $0xb0] sm:$0x1]
  %v1167 = vsel %vm1123, 0, %v1166
  %1168 = vst [vmem:[%s1022 + $0xb0] sm:$0x1] %v1167
  %v1169 = vld [vmem:[%s1022 + $0xbc] sm:$0x1]
  %v1170 = vsel %vm1123, 0, %v1169
  %1171 = vst [vmem:[%s1022 + $0xbc] sm:$0x1] %v1170
  %v1172 = vld [vmem:[%s1022 + $0xe0] sm:$0x1]
  %v1173 = vsel %vm1123, 0, %v1172
  %1174 = vst [vmem:[%s1022 + $0xe0] sm:$0x1] %v1173
  %v1175 = vld [vmem:[%s1022 + $0xec] sm:$0x1]
  %v1176 = vsel %vm1123, 0, %v1175
  %1177 = vst [vmem:[%s1022 + $0xec] sm:$0x1] %v1176
  %v1178 = vld [vmem:[%s1022 + $0xf8] sm:$0x1]
  %v1179 = vsel %vm1123, 0, %v1178
  %1180 = vst [vmem:[%s1022 + $0xf8] sm:$0x1] %v1179
  %v1181 = vld [vmem:[%s1022 + $0x104] sm:$0x1]
  %v1182 = vsel %vm1123, 0, %v1181
  %1183 = vst [vmem:[%s1022 + $0x104] sm:$0x1] %v1182
  %v1184 = vld [vmem:[%s1022 + $0x110] sm:$0x1]
  %v1185 = vsel %vm1123, 0, %v1184
  %1186 = vst [vmem:[%s1022 + $0x110] sm:$0x1] %v1185
  %v1187 = vld [vmem:[%s1022 + $0x11c] sm:$0x1]
  %v1188 = vsel %vm1123, 0, %v1187
  %1189 = vst [vmem:[%s1022 + $0x11c] sm:$0x1] %v1188
  %v1190 = vld [vmem:[%s1022 + $0x128] sm:$0x1]
  %v1191 = vsel %vm1123, 0, %v1190
  %1192 = vst [vmem:[%s1022 + $0x128] sm:$0x1] %v1191
  %v1193 = vld [vmem:[%s1022 + $0x134] sm:$0x1]
  %v1194 = vsel %vm1123, 0, %v1193
  %1195 = vst [vmem:[%s1022 + $0x134] sm:$0x1] %v1194
  %v1196 = vld [vmem:[%s1022 + $0x140] sm:$0x1]
  %v1197 = vsel %vm1123, 0, %v1196
  %1198 = vst [vmem:[%s1022 + $0x140] sm:$0x1] %v1197
  %v1199 = vld [vmem:[%s1022 + $0x14c] sm:$0x1]
  %v1200 = vsel %vm1123, 0, %v1199
  %1201 = vst [vmem:[%s1022 + $0x14c] sm:$0x1] %v1200
  %v1202 = vld [vmem:[%s1022 + $0x158] sm:$0x1]
  %v1203 = vsel %vm1123, 0, %v1202
  %1204 = vst [vmem:[%s1022 + $0x158] sm:$0x1] %v1203
  %v1205 = vld [vmem:[%s1022 + $0x164] sm:$0x1]
  %v1206 = vsel %vm1123, 0, %v1205
  %1207 = vst [vmem:[%s1022 + $0x164] sm:$0x1] %v1206
  %v1208 = vld [vmem:[%s1022 + $0x170] sm:$0x1]
  %v1209 = vsel %vm1123, 0, %v1208
  %1210 = vst [vmem:[%s1022 + $0x170] sm:$0x1] %v1209
  %v1211 = vld [vmem:[%s1022 + $0x17c] sm:$0x1]
  %v1212 = vsel %vm1123, 0, %v1211
  %1213 = vst [vmem:[%s1022 + $0x17c] sm:$0x1] %v1212
  %v1214 = vld [vmem:[%s1022 + $0x188] sm:$0x1]
  %v1215 = vsel %vm1123, 0, %v1214
  %1216 = vst [vmem:[%s1022 + $0x188] sm:$0x1] %v1215
  %v1217 = vld [vmem:[%s1022 + $0x194] sm:$0x1]
  %v1218 = vsel %vm1123, 0, %v1217
  %1219 = vst [vmem:[%s1022 + $0x194] sm:$0x1] %v1218
  %v1220 = vpack.c.bf16 %v944, %v943
  %v1221 = vpack.c.bf16 %v946, %v945
  %v1222 = vpack.c.bf16 %v948, %v947
  %v1223 = vpack.c.bf16 %v950, %v949
  %v1224 = vpack.c.bf16 %v952, %v951
  %v1225 = vpack.c.bf16 %v954, %v953
  %v1226 = vpack.c.bf16 %v956, %v955
  %v1227 = vpack.c.bf16 %v958, %v957
  %v1228 = vpack.c.bf16 %v960, %v959
  %v1229 = vpack.c.bf16 %v962, %v961
  %v1230 = vpack.c.bf16 %v964, %v963
  %v1231 = vpack.c.bf16 %v966, %v965
  %v1232 = vpack.c.bf16 %v968, %v967
  %v1233 = vpack.c.bf16 %v970, %v969
  %v1234 = vpack.c.bf16 %v972, %v971
  %v1235 = vpack.c.bf16 %v974, %v973
  %v1236 = vpack.c.bf16 %v976, %v975
  %v1237 = vpack.c.bf16 %v978, %v977
  %v1238 = vpack.c.bf16 %v980, %v979
  %v1239 = vpack.c.bf16 %v982, %v981
  %v1240 = vpack.c.bf16 %v984, %v983
  %v1241 = vpack.c.bf16 %v986, %v985
  %v1242 = vpack.c.bf16 %v988, %v987
  %v1243 = vpack.c.bf16 %v990, %v989
  %v1244 = vpack.c.bf16 %v992, %v991
  %v1245 = vpack.c.bf16 %v994, %v993
  %v1246 = vpack.c.bf16 %v996, %v995
  %v1247 = vpack.c.bf16 %v998, %v997
  %v1248 = vpack.c.bf16 %v1000, %v999
  %v1249 = vpack.c.bf16 %v1002, %v1001
  %v1250 = vpack.c.bf16 %v1004, %v1003
  %v1251 = vpack.c.bf16 %v1006, %v1005
  %v1284 = vunpack.c.l.b16 %v1220
  %v1285 = vunpack.c.h.b16 %v1220
  %v1286 = vunpack.c.l.b16 %v1221
  %v1287 = vunpack.c.h.b16 %v1221
  %v1288 = vunpack.c.l.b16 %v1222
  %v1289 = vunpack.c.h.b16 %v1222
  %v1290 = vunpack.c.l.b16 %v1223
  %v1291 = vunpack.c.h.b16 %v1223
  %v1292 = vunpack.c.l.b16 %v1224
  %v1293 = vunpack.c.h.b16 %v1224
  %v1294 = vunpack.c.l.b16 %v1225
  %v1295 = vunpack.c.h.b16 %v1225
  %v1296 = vunpack.c.l.b16 %v1226
  %v1297 = vunpack.c.h.b16 %v1226
  %v1298 = vunpack.c.l.b16 %v1227
  %v1299 = vunpack.c.h.b16 %v1227
  %v1300 = vunpack.c.l.b16 %v1228
  %v1301 = vunpack.c.h.b16 %v1228
  %v1302 = vunpack.c.l.b16 %v1229
  %v1303 = vunpack.c.h.b16 %v1229
  %v1304 = vunpack.c.l.b16 %v1230
  %v1305 = vunpack.c.h.b16 %v1230
  %v1306 = vunpack.c.l.b16 %v1231
  %v1307 = vunpack.c.h.b16 %v1231
  %v1308 = vunpack.c.l.b16 %v1232
  %v1309 = vunpack.c.h.b16 %v1232
  %v1310 = vunpack.c.l.b16 %v1233
  %v1311 = vunpack.c.h.b16 %v1233
  %v1312 = vunpack.c.l.b16 %v1234
  %v1313 = vunpack.c.h.b16 %v1234
  %v1314 = vunpack.c.l.b16 %v1235
  %v1315 = vunpack.c.h.b16 %v1235
  %v1316 = vunpack.c.l.b16 %v1236
  %v1317 = vunpack.c.h.b16 %v1236
  %v1318 = vunpack.c.l.b16 %v1237
  %v1319 = vunpack.c.h.b16 %v1237
  %v1320 = vunpack.c.l.b16 %v1238
  %v1321 = vunpack.c.h.b16 %v1238
  %v1322 = vunpack.c.l.b16 %v1239
  %v1323 = vunpack.c.h.b16 %v1239
  %v1324 = vunpack.c.l.b16 %v1240
  %v1325 = vunpack.c.h.b16 %v1240
  %v1326 = vunpack.c.l.b16 %v1241
  %v1327 = vunpack.c.h.b16 %v1241
  %v1328 = vunpack.c.l.b16 %v1242
  %v1329 = vunpack.c.h.b16 %v1242
  %v1330 = vunpack.c.l.b16 %v1243
  %v1331 = vunpack.c.h.b16 %v1243
  %v1332 = vunpack.c.l.b16 %v1244
  %v1333 = vunpack.c.h.b16 %v1244
  %v1334 = vunpack.c.l.b16 %v1245
  %v1335 = vunpack.c.h.b16 %v1245
  %v1336 = vunpack.c.l.b16 %v1246
  %v1337 = vunpack.c.h.b16 %v1246
  %v1338 = vunpack.c.l.b16 %v1247
  %v1339 = vunpack.c.h.b16 %v1247
  %v1340 = vunpack.c.l.b16 %v1248
  %v1341 = vunpack.c.h.b16 %v1248
  %v1342 = vunpack.c.l.b16 %v1249
  %v1343 = vunpack.c.h.b16 %v1249
  %v1344 = vunpack.c.l.b16 %v1250
  %v1345 = vunpack.c.h.b16 %v1250
  %v1346 = vunpack.c.l.b16 %v1251
  %v1347 = vunpack.c.h.b16 %v1251
  %v1348 = vpack.c.b16 %v1284, %v1284
  %v1349 = vpack.c.b16 %v1285, %v1285
  %v1350 = vpack.c.b16 %v1286, %v1286
  %v1351 = vpack.c.b16 %v1287, %v1287
  %v1352 = vpack.c.b16 %v1288, %v1288
  %v1353 = vpack.c.b16 %v1289, %v1289
  %v1354 = vpack.c.b16 %v1290, %v1290
  %v1355 = vpack.c.b16 %v1291, %v1291
  %v1356 = vpack.c.b16 %v1292, %v1292
  %v1357 = vpack.c.b16 %v1293, %v1293
  %v1358 = vpack.c.b16 %v1294, %v1294
  %v1359 = vpack.c.b16 %v1295, %v1295
  %v1360 = vpack.c.b16 %v1296, %v1296
  %v1361 = vpack.c.b16 %v1297, %v1297
  %v1362 = vpack.c.b16 %v1298, %v1298
  %v1363 = vpack.c.b16 %v1299, %v1299
  %v1364 = vpack.c.b16 %v1300, %v1300
  %v1365 = vpack.c.b16 %v1301, %v1301
  %v1366 = vpack.c.b16 %v1302, %v1302
  %v1367 = vpack.c.b16 %v1303, %v1303
  %v1368 = vpack.c.b16 %v1304, %v1304
  %v1369 = vpack.c.b16 %v1305, %v1305
  %v1370 = vpack.c.b16 %v1306, %v1306
  %v1371 = vpack.c.b16 %v1307, %v1307
  %v1372 = vpack.c.b16 %v1308, %v1308
  %v1373 = vpack.c.b16 %v1309, %v1309
  %v1374 = vpack.c.b16 %v1310, %v1310
  %v1375 = vpack.c.b16 %v1311, %v1311
  %v1376 = vpack.c.b16 %v1312, %v1312
  %v1377 = vpack.c.b16 %v1313, %v1313
  %v1378 = vpack.c.b16 %v1314, %v1314
  %v1379 = vpack.c.b16 %v1315, %v1315
  %v1380 = vpack.c.b16 %v1316, %v1316
  %v1381 = vpack.c.b16 %v1317, %v1317
  %v1382 = vpack.c.b16 %v1318, %v1318
  %v1383 = vpack.c.b16 %v1319, %v1319
  %v1384 = vpack.c.b16 %v1320, %v1320
  %v1385 = vpack.c.b16 %v1321, %v1321
  %v1386 = vpack.c.b16 %v1322, %v1322
  %v1387 = vpack.c.b16 %v1323, %v1323
  %v1388 = vpack.c.b16 %v1324, %v1324
  %v1389 = vpack.c.b16 %v1325, %v1325
  %v1390 = vpack.c.b16 %v1326, %v1326
  %v1391 = vpack.c.b16 %v1327, %v1327
  %v1392 = vpack.c.b16 %v1328, %v1328
  %v1393 = vpack.c.b16 %v1329, %v1329
  %v1394 = vpack.c.b16 %v1330, %v1330
  %v1395 = vpack.c.b16 %v1331, %v1331
  %v1396 = vpack.c.b16 %v1332, %v1332
  %v1397 = vpack.c.b16 %v1333, %v1333
  %v1398 = vpack.c.b16 %v1334, %v1334
  %v1399 = vpack.c.b16 %v1335, %v1335
  %v1400 = vpack.c.b16 %v1336, %v1336
  %v1401 = vpack.c.b16 %v1337, %v1337
  %v1402 = vpack.c.b16 %v1338, %v1338
  %v1403 = vpack.c.b16 %v1339, %v1339
  %v1404 = vpack.c.b16 %v1340, %v1340
  %v1405 = vpack.c.b16 %v1341, %v1341
  %v1406 = vpack.c.b16 %v1342, %v1342
  %v1407 = vpack.c.b16 %v1343, %v1343
  %v1408 = vpack.c.b16 %v1344, %v1344
  %v1409 = vpack.c.b16 %v1345, %v1345
  %v1410 = vpack.c.b16 %v1346, %v1346
  %v1411 = vpack.c.b16 %v1347, %v1347
  %vm1412 = vsmask.f32 4368
  %vm1413 = vmor %vm1024, %vm1412
  %v1415 = vshrl.u32 %v1348, 16
  %v1417 = vrot.slane %v1415, 7
  %v1418 = vshll.u32 %v1348, 16
  %v1420 = vor.u32 %v1417, %v1418
  %v1421 = vrot.slane %v1417, 4
  %v1423 = vshrl.u32 %v1349, 16
  %v1425 = vrot.slane %v1423, 7
  %v1426 = vshll.u32 %v1349, 16
  %v1428 = vor.u32 %v1425, %v1426
  %v1429 = vsel %vm1413, %v1421, %v1428
  %v1430 = vrot.slane %v1425, 4
  %v1432 = vshrl.u32 %v1350, 16
  %v1434 = vrot.slane %v1432, 7
  %v1435 = vshll.u32 %v1350, 16
  %v1437 = vor.u32 %v1434, %v1435
  %v1438 = vrot.slane %v1434, 4
  %v1440 = vshrl.u32 %v1351, 16
  %v1442 = vrot.slane %v1440, 7
  %v1443 = vshll.u32 %v1351, 16
  %v1445 = vor.u32 %v1442, %v1443
  %v1446 = vsel %vm1413, %v1438, %v1445
  %v1447 = vrot.slane %v1442, 4
  %v1449 = vshrl.u32 %v1352, 16
  %v1451 = vrot.slane %v1449, 7
  %v1452 = vshll.u32 %v1352, 16
  %v1454 = vor.u32 %v1451, %v1452
  %v1455 = vrot.slane %v1451, 4
  %v1457 = vshrl.u32 %v1353, 16
  %v1459 = vrot.slane %v1457, 7
  %v1460 = vshll.u32 %v1353, 16
  %v1462 = vor.u32 %v1459, %v1460
  %v1463 = vsel %vm1413, %v1455, %v1462
  %v1464 = vrot.slane %v1459, 4
  %v1466 = vshrl.u32 %v1354, 16
  %v1468 = vrot.slane %v1466, 7
  %v1469 = vshll.u32 %v1354, 16
  %v1471 = vor.u32 %v1468, %v1469
  %v1472 = vrot.slane %v1468, 4
  %v1474 = vshrl.u32 %v1355, 16
  %v1476 = vrot.slane %v1474, 7
  %v1477 = vshll.u32 %v1355, 16
  %v1479 = vor.u32 %v1476, %v1477
  %v1480 = vsel %vm1413, %v1472, %v1479
  %v1481 = vrot.slane %v1476, 4
  %v1483 = vshrl.u32 %v1356, 16
  %v1485 = vrot.slane %v1483, 7
  %v1486 = vshll.u32 %v1356, 16
  %v1488 = vor.u32 %v1485, %v1486
  %v1489 = vrot.slane %v1485, 4
  %v1491 = vshrl.u32 %v1357, 16
  %v1493 = vrot.slane %v1491, 7
  %v1494 = vshll.u32 %v1357, 16
  %v1496 = vor.u32 %v1493, %v1494
  %v1497 = vsel %vm1413, %v1489, %v1496
  %v1498 = vrot.slane %v1493, 4
  %v1500 = vshrl.u32 %v1358, 16
  %v1502 = vrot.slane %v1500, 7
  %v1503 = vshll.u32 %v1358, 16
  %v1505 = vor.u32 %v1502, %v1503
  %v1506 = vrot.slane %v1502, 4
  %v1508 = vshrl.u32 %v1359, 16
  %v1510 = vrot.slane %v1508, 7
  %v1511 = vshll.u32 %v1359, 16
  %v1513 = vor.u32 %v1510, %v1511
  %v1514 = vsel %vm1413, %v1506, %v1513
  %v1515 = vrot.slane %v1510, 4
  %v1517 = vshrl.u32 %v1360, 16
  %v1519 = vrot.slane %v1517, 7
  %v1520 = vshll.u32 %v1360, 16
  %v1522 = vor.u32 %v1519, %v1520
  %v1523 = vrot.slane %v1519, 4
  %v1525 = vshrl.u32 %v1361, 16
  %v1527 = vrot.slane %v1525, 7
  %v1528 = vshll.u32 %v1361, 16
  %v1530 = vor.u32 %v1527, %v1528
  %v1531 = vsel %vm1413, %v1523, %v1530
  %v1532 = vrot.slane %v1527, 4
  %v1534 = vshrl.u32 %v1362, 16
  %v1536 = vrot.slane %v1534, 7
  %v1537 = vshll.u32 %v1362, 16
  %v1539 = vor.u32 %v1536, %v1537
  %v1540 = vrot.slane %v1536, 4
  %v1542 = vshrl.u32 %v1363, 16
  %v1544 = vrot.slane %v1542, 7
  %v1545 = vshll.u32 %v1363, 16
  %v1547 = vor.u32 %v1544, %v1545
  %v1548 = vsel %vm1413, %v1540, %v1547
  %v1549 = vrot.slane %v1544, 4
  %v1551 = vshrl.u32 %v1364, 16
  %v1553 = vrot.slane %v1551, 7
  %v1554 = vshll.u32 %v1364, 16
  %v1556 = vor.u32 %v1553, %v1554
  %v1557 = vrot.slane %v1553, 4
  %v1559 = vshrl.u32 %v1365, 16
  %v1561 = vrot.slane %v1559, 7
  %v1562 = vshll.u32 %v1365, 16
  %v1564 = vor.u32 %v1561, %v1562
  %v1565 = vsel %vm1413, %v1557, %v1564
  %v1566 = vrot.slane %v1561, 4
  %v1568 = vshrl.u32 %v1366, 16
  %v1570 = vrot.slane %v1568, 7
  %v1571 = vshll.u32 %v1366, 16
  %v1573 = vor.u32 %v1570, %v1571
  %v1574 = vrot.slane %v1570, 4
  %v1576 = vshrl.u32 %v1367, 16
  %v1578 = vrot.slane %v1576, 7
  %v1579 = vshll.u32 %v1367, 16
  %v1581 = vor.u32 %v1578, %v1579
  %v1582 = vsel %vm1413, %v1574, %v1581
  %v1583 = vrot.slane %v1578, 4
  %v1585 = vshrl.u32 %v1368, 16
  %v1587 = vrot.slane %v1585, 7
  %v1588 = vshll.u32 %v1368, 16
  %v1590 = vor.u32 %v1587, %v1588
  %v1591 = vrot.slane %v1587, 4
  %v1593 = vshrl.u32 %v1369, 16
  %v1595 = vrot.slane %v1593, 7
  %v1596 = vshll.u32 %v1369, 16
  %v1598 = vor.u32 %v1595, %v1596
  %v1599 = vsel %vm1413, %v1591, %v1598
  %v1600 = vrot.slane %v1595, 4
  %v1602 = vshrl.u32 %v1370, 16
  %v1604 = vrot.slane %v1602, 7
  %v1605 = vshll.u32 %v1370, 16
  %v1607 = vor.u32 %v1604, %v1605
  %v1608 = vrot.slane %v1604, 4
  %v1610 = vshrl.u32 %v1371, 16
  %v1612 = vrot.slane %v1610, 7
  %v1613 = vshll.u32 %v1371, 16
  %v1615 = vor.u32 %v1612, %v1613
  %v1616 = vsel %vm1413, %v1608, %v1615
  %v1617 = vrot.slane %v1612, 4
  %v1619 = vshrl.u32 %v1372, 16
  %v1621 = vrot.slane %v1619, 7
  %v1622 = vshll.u32 %v1372, 16
  %v1624 = vor.u32 %v1621, %v1622
  %v1625 = vrot.slane %v1621, 4
  %v1627 = vshrl.u32 %v1373, 16
  %v1629 = vrot.slane %v1627, 7
  %v1630 = vshll.u32 %v1373, 16
  %v1632 = vor.u32 %v1629, %v1630
  %v1633 = vsel %vm1413, %v1625, %v1632
  %v1634 = vrot.slane %v1629, 4
  %v1636 = vshrl.u32 %v1374, 16
  %v1638 = vrot.slane %v1636, 7
  %v1639 = vshll.u32 %v1374, 16
  %v1641 = vor.u32 %v1638, %v1639
  %v1642 = vrot.slane %v1638, 4
  %v1644 = vshrl.u32 %v1375, 16
  %v1646 = vrot.slane %v1644, 7
  %v1647 = vshll.u32 %v1375, 16
  %v1649 = vor.u32 %v1646, %v1647
  %v1650 = vsel %vm1413, %v1642, %v1649
  %v1651 = vrot.slane %v1646, 4
  %v1653 = vshrl.u32 %v1376, 16
  %v1655 = vrot.slane %v1653, 7
  %v1656 = vshll.u32 %v1376, 16
  %v1658 = vor.u32 %v1655, %v1656
  %v1659 = vrot.slane %v1655, 4
  %v1661 = vshrl.u32 %v1377, 16
  %v1663 = vrot.slane %v1661, 7
  %v1664 = vshll.u32 %v1377, 16
  %v1666 = vor.u32 %v1663, %v1664
  %v1667 = vsel %vm1413, %v1659, %v1666
  %v1668 = vrot.slane %v1663, 4
  %v1670 = vshrl.u32 %v1378, 16
  %v1672 = vrot.slane %v1670, 7
  %v1673 = vshll.u32 %v1378, 16
  %v1675 = vor.u32 %v1672, %v1673
  %v1676 = vrot.slane %v1672, 4
  %v1678 = vshrl.u32 %v1379, 16
  %v1680 = vrot.slane %v1678, 7
  %v1681 = vshll.u32 %v1379, 16
  %v1683 = vor.u32 %v1680, %v1681
  %v1684 = vsel %vm1413, %v1676, %v1683
  %v1685 = vrot.slane %v1680, 4
  %v1687 = vshrl.u32 %v1380, 16
  %v1689 = vrot.slane %v1687, 7
  %v1690 = vshll.u32 %v1380, 16
  %v1692 = vor.u32 %v1689, %v1690
  %v1693 = vrot.slane %v1689, 4
  %v1695 = vshrl.u32 %v1381, 16
  %v1697 = vrot.slane %v1695, 7
  %v1698 = vshll.u32 %v1381, 16
  %v1700 = vor.u32 %v1697, %v1698
  %v1701 = vsel %vm1413, %v1693, %v1700
  %v1702 = vrot.slane %v1697, 4
  %v1704 = vshrl.u32 %v1382, 16
  %v1706 = vrot.slane %v1704, 7
  %v1707 = vshll.u32 %v1382, 16
  %v1709 = vor.u32 %v1706, %v1707
  %v1710 = vrot.slane %v1706, 4
  %v1712 = vshrl.u32 %v1383, 16
  %v1714 = vrot.slane %v1712, 7
  %v1715 = vshll.u32 %v1383, 16
  %v1717 = vor.u32 %v1714, %v1715
  %v1718 = vsel %vm1413, %v1710, %v1717
  %v1719 = vrot.slane %v1714, 4
  %v1721 = vshrl.u32 %v1384, 16
  %v1723 = vrot.slane %v1721, 7
  %v1724 = vshll.u32 %v1384, 16
  %v1726 = vor.u32 %v1723, %v1724
  %v1727 = vrot.slane %v1723, 4
  %v1729 = vshrl.u32 %v1385, 16
  %v1731 = vrot.slane %v1729, 7
  %v1732 = vshll.u32 %v1385, 16
  %v1734 = vor.u32 %v1731, %v1732
  %v1735 = vsel %vm1413, %v1727, %v1734
  %v1736 = vrot.slane %v1731, 4
  %v1738 = vshrl.u32 %v1386, 16
  %v1740 = vrot.slane %v1738, 7
  %v1741 = vshll.u32 %v1386, 16
  %v1743 = vor.u32 %v1740, %v1741
  %v1744 = vrot.slane %v1740, 4
  %v1746 = vshrl.u32 %v1387, 16
  %v1748 = vrot.slane %v1746, 7
  %v1749 = vshll.u32 %v1387, 16
  %v1751 = vor.u32 %v1748, %v1749
  %v1752 = vsel %vm1413, %v1744, %v1751
  %v1753 = vrot.slane %v1748, 4
  %v1755 = vshrl.u32 %v1388, 16
  %v1757 = vrot.slane %v1755, 7
  %v1758 = vshll.u32 %v1388, 16
  %v1760 = vor.u32 %v1757, %v1758
  %v1761 = vrot.slane %v1757, 4
  %v1763 = vshrl.u32 %v1389, 16
  %v1765 = vrot.slane %v1763, 7
  %v1766 = vshll.u32 %v1389, 16
  %v1768 = vor.u32 %v1765, %v1766
  %v1769 = vsel %vm1413, %v1761, %v1768
  %v1770 = vrot.slane %v1765, 4
  %v1772 = vshrl.u32 %v1390, 16
  %v1774 = vrot.slane %v1772, 7
  %v1775 = vshll.u32 %v1390, 16
  %v1777 = vor.u32 %v1774, %v1775
  %v1778 = vrot.slane %v1774, 4
  %v1780 = vshrl.u32 %v1391, 16
  %v1782 = vrot.slane %v1780, 7
  %v1783 = vshll.u32 %v1391, 16
  %v1785 = vor.u32 %v1782, %v1783
  %v1786 = vsel %vm1413, %v1778, %v1785
  %v1787 = vrot.slane %v1782, 4
  %v1789 = vshrl.u32 %v1392, 16
  %v1791 = vrot.slane %v1789, 7
  %v1792 = vshll.u32 %v1392, 16
  %v1794 = vor.u32 %v1791, %v1792
  %v1795 = vrot.slane %v1791, 4
  %v1797 = vshrl.u32 %v1393, 16
  %v1799 = vrot.slane %v1797, 7
  %v1800 = vshll.u32 %v1393, 16
  %v1802 = vor.u32 %v1799, %v1800
  %v1803 = vsel %vm1413, %v1795, %v1802
  %v1804 = vrot.slane %v1799, 4
  %v1806 = vshrl.u32 %v1394, 16
  %v1808 = vrot.slane %v1806, 7
  %v1809 = vshll.u32 %v1394, 16
  %v1811 = vor.u32 %v1808, %v1809
  %v1812 = vrot.slane %v1808, 4
  %v1814 = vshrl.u32 %v1395, 16
  %v1816 = vrot.slane %v1814, 7
  %v1817 = vshll.u32 %v1395, 16
  %v1819 = vor.u32 %v1816, %v1817
  %v1820 = vsel %vm1413, %v1812, %v1819
  %v1821 = vrot.slane %v1816, 4
  %v1823 = vshrl.u32 %v1396, 16
  %v1825 = vrot.slane %v1823, 7
  %v1826 = vshll.u32 %v1396, 16
  %v1828 = vor.u32 %v1825, %v1826
  %v1829 = vrot.slane %v1825, 4
  %v1831 = vshrl.u32 %v1397, 16
  %v1833 = vrot.slane %v1831, 7
  %v1834 = vshll.u32 %v1397, 16
  %v1836 = vor.u32 %v1833, %v1834
  %v1837 = vsel %vm1413, %v1829, %v1836
  %v1838 = vrot.slane %v1833, 4
  %v1840 = vshrl.u32 %v1398, 16
  %v1842 = vrot.slane %v1840, 7
  %v1843 = vshll.u32 %v1398, 16
  %v1845 = vor.u32 %v1842, %v1843
  %v1846 = vrot.slane %v1842, 4
  %v1848 = vshrl.u32 %v1399, 16
  %v1850 = vrot.slane %v1848, 7
  %v1851 = vshll.u32 %v1399, 16
  %v1853 = vor.u32 %v1850, %v1851
  %v1854 = vsel %vm1413, %v1846, %v1853
  %v1855 = vrot.slane %v1850, 4
  %v1857 = vshrl.u32 %v1400, 16
  %v1859 = vrot.slane %v1857, 7
  %v1860 = vshll.u32 %v1400, 16
  %v1862 = vor.u32 %v1859, %v1860
  %v1863 = vrot.slane %v1859, 4
  %v1865 = vshrl.u32 %v1401, 16
  %v1867 = vrot.slane %v1865, 7
  %v1868 = vshll.u32 %v1401, 16
  %v1870 = vor.u32 %v1867, %v1868
  %v1871 = vsel %vm1413, %v1863, %v1870
  %v1872 = vrot.slane %v1867, 4
  %v1874 = vshrl.u32 %v1402, 16
  %v1876 = vrot.slane %v1874, 7
  %v1877 = vshll.u32 %v1402, 16
  %v1879 = vor.u32 %v1876, %v1877
  %v1880 = vrot.slane %v1876, 4
  %v1882 = vshrl.u32 %v1403, 16
  %v1884 = vrot.slane %v1882, 7
  %v1885 = vshll.u32 %v1403, 16
  %v1887 = vor.u32 %v1884, %v1885
  %v1888 = vsel %vm1413, %v1880, %v1887
  %v1889 = vrot.slane %v1884, 4
  %v1891 = vshrl.u32 %v1404, 16
  %v1893 = vrot.slane %v1891, 7
  %v1894 = vshll.u32 %v1404, 16
  %v1896 = vor.u32 %v1893, %v1894
  %v1897 = vrot.slane %v1893, 4
  %v1899 = vshrl.u32 %v1405, 16
  %v1901 = vrot.slane %v1899, 7
  %v1902 = vshll.u32 %v1405, 16
  %v1904 = vor.u32 %v1901, %v1902
  %v1905 = vsel %vm1413, %v1897, %v1904
  %v1906 = vrot.slane %v1901, 4
  %v1908 = vshrl.u32 %v1406, 16
  %v1910 = vrot.slane %v1908, 7
  %v1911 = vshll.u32 %v1406, 16
  %v1913 = vor.u32 %v1910, %v1911
  %v1914 = vrot.slane %v1910, 4
  %v1916 = vshrl.u32 %v1407, 16
  %v1918 = vrot.slane %v1916, 7
  %v1919 = vshll.u32 %v1407, 16
  %v1921 = vor.u32 %v1918, %v1919
  %v1922 = vsel %vm1413, %v1914, %v1921
  %v1923 = vrot.slane %v1918, 4
  %v1925 = vshrl.u32 %v1408, 16
  %v1927 = vrot.slane %v1925, 7
  %v1928 = vshll.u32 %v1408, 16
  %v1930 = vor.u32 %v1927, %v1928
  %v1931 = vrot.slane %v1927, 4
  %v1933 = vshrl.u32 %v1409, 16
  %v1935 = vrot.slane %v1933, 7
  %v1936 = vshll.u32 %v1409, 16
  %v1938 = vor.u32 %v1935, %v1936
  %v1939 = vsel %vm1413, %v1931, %v1938
  %v1940 = vrot.slane %v1935, 4
  %v1942 = vshrl.u32 %v1410, 16
  %v1944 = vrot.slane %v1942, 7
  %v1945 = vshll.u32 %v1410, 16
  %v1947 = vor.u32 %v1944, %v1945
  %v1948 = vrot.slane %v1944, 4
  %v1950 = vshrl.u32 %v1411, 16
  %v1952 = vrot.slane %v1950, 7
  %v1953 = vshll.u32 %v1411, 16
  %v1955 = vor.u32 %v1952, %v1953
  %v1956 = vsel %vm1413, %v1948, %v1955
  %v1957 = vrot.slane %v1952, 4
  %vm2054 = vcmask 257024
  %vm2055 = vmand %vm2054, %vm1122
  %v2056 = vld [vmem:[%s1022] sm:$0xf]
  %v2057 = vsel %vm2055, %v1420, %v2056
  %2058 = vst [vmem:[%s1022] sm:$0xf] %v2057
  %2059 = vst.msk [vmem:[%s1022 + $0x4] sm:$0xf] %vm1007, %v1429
  %v2060 = vld [vmem:[%s1022 + $0x8] sm:$0x1]
  %v2061 = vsel %vm1025, %v1430, %v2060
  %2062 = vst [vmem:[%s1022 + $0x8] sm:$0x1] %v2061
  %v2063 = vld [vmem:[%s1022 + $0xc] sm:$0xf]
  %v2064 = vsel %vm2055, %v1437, %v2063
  %2065 = vst [vmem:[%s1022 + $0xc] sm:$0xf] %v2064
  %2066 = vst.msk [vmem:[%s1022 + $0x10] sm:$0xf] %vm1007, %v1446
  %v2067 = vld [vmem:[%s1022 + $0x14] sm:$0x1]
  %v2068 = vsel %vm1025, %v1447, %v2067
  %2069 = vst [vmem:[%s1022 + $0x14] sm:$0x1] %v2068
  %v2070 = vld [vmem:[%s1022 + $0x18] sm:$0xf]
  %v2071 = vsel %vm2055, %v1454, %v2070
  %2072 = vst [vmem:[%s1022 + $0x18] sm:$0xf] %v2071
  %2073 = vst.msk [vmem:[%s1022 + $0x1c] sm:$0xf] %vm1007, %v1463
  %v2074 = vld [vmem:[%s1022 + $0x20] sm:$0x1]
  %v2075 = vsel %vm1025, %v1464, %v2074
  %2076 = vst [vmem:[%s1022 + $0x20] sm:$0x1] %v2075
  %v2077 = vld [vmem:[%s1022 + $0x24] sm:$0xf]
  %v2078 = vsel %vm2055, %v1471, %v2077
  %2079 = vst [vmem:[%s1022 + $0x24] sm:$0xf] %v2078
  %2080 = vst.msk [vmem:[%s1022 + $0x28] sm:$0xf] %vm1007, %v1480
  %v2081 = vld [vmem:[%s1022 + $0x2c] sm:$0x1]
  %v2082 = vsel %vm1025, %v1481, %v2081
  %2083 = vst [vmem:[%s1022 + $0x2c] sm:$0x1] %v2082
  %v2084 = vld [vmem:[%s1022 + $0x30] sm:$0xf]
  %v2085 = vsel %vm2055, %v1488, %v2084
  %2086 = vst [vmem:[%s1022 + $0x30] sm:$0xf] %v2085
  %2087 = vst.msk [vmem:[%s1022 + $0x34] sm:$0xf] %vm1007, %v1497
  %v2088 = vld [vmem:[%s1022 + $0x38] sm:$0x1]
  %v2089 = vsel %vm1025, %v1498, %v2088
  %2090 = vst [vmem:[%s1022 + $0x38] sm:$0x1] %v2089
  %v2091 = vld [vmem:[%s1022 + $0x3c] sm:$0xf]
  %v2092 = vsel %vm2055, %v1505, %v2091
  %2093 = vst [vmem:[%s1022 + $0x3c] sm:$0xf] %v2092
  %2094 = vst.msk [vmem:[%s1022 + $0x40] sm:$0xf] %vm1007, %v1514
  %v2095 = vld [vmem:[%s1022 + $0x44] sm:$0x1]
  %v2096 = vsel %vm1025, %v1515, %v2095
  %2097 = vst [vmem:[%s1022 + $0x44] sm:$0x1] %v2096
  %v2098 = vld [vmem:[%s1022 + $0x48] sm:$0xf]
  %v2099 = vsel %vm2055, %v1522, %v2098
  %2100 = vst [vmem:[%s1022 + $0x48] sm:$0xf] %v2099
  %2101 = vst.msk [vmem:[%s1022 + $0x4c] sm:$0xf] %vm1007, %v1531
  %v2102 = vld [vmem:[%s1022 + $0x50] sm:$0x1]
  %v2103 = vsel %vm1025, %v1532, %v2102
  %2104 = vst [vmem:[%s1022 + $0x50] sm:$0x1] %v2103
  %v2105 = vld [vmem:[%s1022 + $0x54] sm:$0xf]
  %v2106 = vsel %vm2055, %v1539, %v2105
  %2107 = vst [vmem:[%s1022 + $0x54] sm:$0xf] %v2106
  %2108 = vst.msk [vmem:[%s1022 + $0x58] sm:$0xf] %vm1007, %v1548
  %v2109 = vld [vmem:[%s1022 + $0x5c] sm:$0x1]
  %v2110 = vsel %vm1025, %v1549, %v2109
  %2111 = vst [vmem:[%s1022 + $0x5c] sm:$0x1] %v2110
  %v2112 = vld [vmem:[%s1022 + $0x60] sm:$0xf]
  %v2113 = vsel %vm2055, %v1556, %v2112
  %2114 = vst [vmem:[%s1022 + $0x60] sm:$0xf] %v2113
  %2115 = vst.msk [vmem:[%s1022 + $0x64] sm:$0xf] %vm1007, %v1565
  %v2116 = vld [vmem:[%s1022 + $0x68] sm:$0x1]
  %v2117 = vsel %vm1025, %v1566, %v2116
  %2118 = vst [vmem:[%s1022 + $0x68] sm:$0x1] %v2117
  %v2119 = vld [vmem:[%s1022 + $0x6c] sm:$0xf]
  %v2120 = vsel %vm2055, %v1573, %v2119
  %2121 = vst [vmem:[%s1022 + $0x6c] sm:$0xf] %v2120
  %2122 = vst.msk [vmem:[%s1022 + $0x70] sm:$0xf] %vm1007, %v1582
  %v2123 = vld [vmem:[%s1022 + $0x74] sm:$0x1]
  %v2124 = vsel %vm1025, %v1583, %v2123
  %2125 = vst [vmem:[%s1022 + $0x74] sm:$0x1] %v2124
  %v2126 = vld [vmem:[%s1022 + $0x78] sm:$0xf]
  %v2127 = vsel %vm2055, %v1590, %v2126
  %2128 = vst [vmem:[%s1022 + $0x78] sm:$0xf] %v2127
  %2129 = vst.msk [vmem:[%s1022 + $0x7c] sm:$0xf] %vm1007, %v1599
  %v2130 = vld [vmem:[%s1022 + $0x80] sm:$0x1]
  %v2131 = vsel %vm1025, %v1600, %v2130
  %2132 = vst [vmem:[%s1022 + $0x80] sm:$0x1] %v2131
  %v2133 = vld [vmem:[%s1022 + $0x84] sm:$0xf]
  %v2134 = vsel %vm2055, %v1607, %v2133
  %2135 = vst [vmem:[%s1022 + $0x84] sm:$0xf] %v2134
  %2136 = vst.msk [vmem:[%s1022 + $0x88] sm:$0xf] %vm1007, %v1616
  %v2137 = vld [vmem:[%s1022 + $0x8c] sm:$0x1]
  %v2138 = vsel %vm1025, %v1617, %v2137
  %2139 = vst [vmem:[%s1022 + $0x8c] sm:$0x1] %v2138
  %v2140 = vld [vmem:[%s1022 + $0x90] sm:$0xf]
  %v2141 = vsel %vm2055, %v1624, %v2140
  %2142 = vst [vmem:[%s1022 + $0x90] sm:$0xf] %v2141
  %2143 = vst.msk [vmem:[%s1022 + $0x94] sm:$0xf] %vm1007, %v1633
  %v2144 = vld [vmem:[%s1022 + $0x98] sm:$0x1]
  %v2145 = vsel %vm1025, %v1634, %v2144
  %2146 = vst [vmem:[%s1022 + $0x98] sm:$0x1] %v2145
  %v2147 = vld [vmem:[%s1022 + $0x9c] sm:$0xf]
  %v2148 = vsel %vm2055, %v1641, %v2147
  %2149 = vst [vmem:[%s1022 + $0x9c] sm:$0xf] %v2148
  %2150 = vst.msk [vmem:[%s1022 + $0xa0] sm:$0xf] %vm1007, %v1650
  %v2151 = vld [vmem:[%s1022 + $0xa4] sm:$0x1]
  %v2152 = vsel %vm1025, %v1651, %v2151
  %2153 = vst [vmem:[%s1022 + $0xa4] sm:$0x1] %v2152
  %v2154 = vld [vmem:[%s1022 + $0xa8] sm:$0xf]
  %v2155 = vsel %vm2055, %v1658, %v2154
  %2156 = vst [vmem:[%s1022 + $0xa8] sm:$0xf] %v2155
  %2157 = vst.msk [vmem:[%s1022 + $0xac] sm:$0xf] %vm1007, %v1667
  %v2158 = vld [vmem:[%s1022 + $0xb0] sm:$0x1]
  %v2159 = vsel %vm1025, %v1668, %v2158
  %2160 = vst [vmem:[%s1022 + $0xb0] sm:$0x1] %v2159
  %v2161 = vld [vmem:[%s1022 + $0xb4] sm:$0xf]
  %v2162 = vsel %vm2055, %v1675, %v2161
  %2163 = vst [vmem:[%s1022 + $0xb4] sm:$0xf] %v2162
  %2164 = vst.msk [vmem:[%s1022 + $0xb8] sm:$0xf] %vm1007, %v1684
  %v2165 = vld [vmem:[%s1022 + $0xbc] sm:$0x1]
  %v2166 = vsel %vm1025, %v1685, %v2165
  %2167 = vst [vmem:[%s1022 + $0xbc] sm:$0x1] %v2166
  %v2168 = vld [vmem:[%s1022 + $0xd8] sm:$0xf]
  %v2169 = vsel %vm2055, %v1692, %v2168
  %2170 = vst [vmem:[%s1022 + $0xd8] sm:$0xf] %v2169
  %2171 = vst.msk [vmem:[%s1022 + $0xdc] sm:$0xf] %vm1007, %v1701
  %v2172 = vld [vmem:[%s1022 + $0xe0] sm:$0x1]
  %v2173 = vsel %vm1025, %v1702, %v2172
  %2174 = vst [vmem:[%s1022 + $0xe0] sm:$0x1] %v2173
  %v2175 = vld [vmem:[%s1022 + $0xe4] sm:$0xf]
  %v2176 = vsel %vm2055, %v1709, %v2175
  %2177 = vst [vmem:[%s1022 + $0xe4] sm:$0xf] %v2176
  %2178 = vst.msk [vmem:[%s1022 + $0xe8] sm:$0xf] %vm1007, %v1718
  %v2179 = vld [vmem:[%s1022 + $0xec] sm:$0x1]
  %v2180 = vsel %vm1025, %v1719, %v2179
  %2181 = vst [vmem:[%s1022 + $0xec] sm:$0x1] %v2180
  %v2182 = vld [vmem:[%s1022 + $0xf0] sm:$0xf]
  %v2183 = vsel %vm2055, %v1726, %v2182
  %2184 = vst [vmem:[%s1022 + $0xf0] sm:$0xf] %v2183
  %2185 = vst.msk [vmem:[%s1022 + $0xf4] sm:$0xf] %vm1007, %v1735
  %v2186 = vld [vmem:[%s1022 + $0xf8] sm:$0x1]
  %v2187 = vsel %vm1025, %v1736, %v2186
  %2188 = vst [vmem:[%s1022 + $0xf8] sm:$0x1] %v2187
  %v2189 = vld [vmem:[%s1022 + $0xfc] sm:$0xf]
  %v2190 = vsel %vm2055, %v1743, %v2189
  %2191 = vst [vmem:[%s1022 + $0xfc] sm:$0xf] %v2190
  %2192 = vst.msk [vmem:[%s1022 + $0x100] sm:$0xf] %vm1007, %v1752
  %v2193 = vld [vmem:[%s1022 + $0x104] sm:$0x1]
  %v2194 = vsel %vm1025, %v1753, %v2193
  %2195 = vst [vmem:[%s1022 + $0x104] sm:$0x1] %v2194
  %v2196 = vld [vmem:[%s1022 + $0x108] sm:$0xf]
  %v2197 = vsel %vm2055, %v1760, %v2196
  %2198 = vst [vmem:[%s1022 + $0x108] sm:$0xf] %v2197
  %2199 = vst.msk [vmem:[%s1022 + $0x10c] sm:$0xf] %vm1007, %v1769
  %v2200 = vld [vmem:[%s1022 + $0x110] sm:$0x1]
  %v2201 = vsel %vm1025, %v1770, %v2200
  %2202 = vst [vmem:[%s1022 + $0x110] sm:$0x1] %v2201
  %v2203 = vld [vmem:[%s1022 + $0x114] sm:$0xf]
  %v2204 = vsel %vm2055, %v1777, %v2203
  %2205 = vst [vmem:[%s1022 + $0x114] sm:$0xf] %v2204
  %2206 = vst.msk [vmem:[%s1022 + $0x118] sm:$0xf] %vm1007, %v1786
  %v2207 = vld [vmem:[%s1022 + $0x11c] sm:$0x1]
  %v2208 = vsel %vm1025, %v1787, %v2207
  %2209 = vst [vmem:[%s1022 + $0x11c] sm:$0x1] %v2208
  %v2210 = vld [vmem:[%s1022 + $0x120] sm:$0xf]
  %v2211 = vsel %vm2055, %v1794, %v2210
  %2212 = vst [vmem:[%s1022 + $0x120] sm:$0xf] %v2211
  %2213 = vst.msk [vmem:[%s1022 + $0x124] sm:$0xf] %vm1007, %v1803
  %v2214 = vld [vmem:[%s1022 + $0x128] sm:$0x1]
  %v2215 = vsel %vm1025, %v1804, %v2214
  %2216 = vst [vmem:[%s1022 + $0x128] sm:$0x1] %v2215
  %v2217 = vld [vmem:[%s1022 + $0x12c] sm:$0xf]
  %v2218 = vsel %vm2055, %v1811, %v2217
  %2219 = vst [vmem:[%s1022 + $0x12c] sm:$0xf] %v2218
  %2220 = vst.msk [vmem:[%s1022 + $0x130] sm:$0xf] %vm1007, %v1820
  %v2221 = vld [vmem:[%s1022 + $0x134] sm:$0x1]
  %v2222 = vsel %vm1025, %v1821, %v2221
  %2223 = vst [vmem:[%s1022 + $0x134] sm:$0x1] %v2222
  %v2224 = vld [vmem:[%s1022 + $0x138] sm:$0xf]
  %v2225 = vsel %vm2055, %v1828, %v2224
  %2226 = vst [vmem:[%s1022 + $0x138] sm:$0xf] %v2225
  %2227 = vst.msk [vmem:[%s1022 + $0x13c] sm:$0xf] %vm1007, %v1837
  %v2228 = vld [vmem:[%s1022 + $0x140] sm:$0x1]
  %v2229 = vsel %vm1025, %v1838, %v2228
  %2230 = vst [vmem:[%s1022 + $0x140] sm:$0x1] %v2229
  %v2231 = vld [vmem:[%s1022 + $0x144] sm:$0xf]
  %v2232 = vsel %vm2055, %v1845, %v2231
  %2233 = vst [vmem:[%s1022 + $0x144] sm:$0xf] %v2232
  %2234 = vst.msk [vmem:[%s1022 + $0x148] sm:$0xf] %vm1007, %v1854
  %v2235 = vld [vmem:[%s1022 + $0x14c] sm:$0x1]
  %v2236 = vsel %vm1025, %v1855, %v2235
  %2237 = vst [vmem:[%s1022 + $0x14c] sm:$0x1] %v2236
  %v2238 = vld [vmem:[%s1022 + $0x150] sm:$0xf]
  %v2239 = vsel %vm2055, %v1862, %v2238
  %2240 = vst [vmem:[%s1022 + $0x150] sm:$0xf] %v2239
  %2241 = vst.msk [vmem:[%s1022 + $0x154] sm:$0xf] %vm1007, %v1871
  %v2242 = vld [vmem:[%s1022 + $0x158] sm:$0x1]
  %v2243 = vsel %vm1025, %v1872, %v2242
  %2244 = vst [vmem:[%s1022 + $0x158] sm:$0x1] %v2243
  %v2245 = vld [vmem:[%s1022 + $0x15c] sm:$0xf]
  %v2246 = vsel %vm2055, %v1879, %v2245
  %2247 = vst [vmem:[%s1022 + $0x15c] sm:$0xf] %v2246
  %2248 = vst.msk [vmem:[%s1022 + $0x160] sm:$0xf] %vm1007, %v1888
  %v2249 = vld [vmem:[%s1022 + $0x164] sm:$0x1]
  %v2250 = vsel %vm1025, %v1889, %v2249
  %2251 = vst [vmem:[%s1022 + $0x164] sm:$0x1] %v2250
  %v2252 = vld [vmem:[%s1022 + $0x168] sm:$0xf]
  %v2253 = vsel %vm2055, %v1896, %v2252
  %2254 = vst [vmem:[%s1022 + $0x168] sm:$0xf] %v2253
  %2255 = vst.msk [vmem:[%s1022 + $0x16c] sm:$0xf] %vm1007, %v1905
  %v2256 = vld [vmem:[%s1022 + $0x170] sm:$0x1]
  %v2257 = vsel %vm1025, %v1906, %v2256
  %2258 = vst [vmem:[%s1022 + $0x170] sm:$0x1] %v2257
  %v2259 = vld [vmem:[%s1022 + $0x174] sm:$0xf]
  %v2260 = vsel %vm2055, %v1913, %v2259
  %2261 = vst [vmem:[%s1022 + $0x174] sm:$0xf] %v2260
  %2262 = vst.msk [vmem:[%s1022 + $0x178] sm:$0xf] %vm1007, %v1922
  %v2263 = vld [vmem:[%s1022 + $0x17c] sm:$0x1]
  %v2264 = vsel %vm1025, %v1923, %v2263
  %2265 = vst [vmem:[%s1022 + $0x17c] sm:$0x1] %v2264
  %v2266 = vld [vmem:[%s1022 + $0x180] sm:$0xf]
  %v2267 = vsel %vm2055, %v1930, %v2266
  %2268 = vst [vmem:[%s1022 + $0x180] sm:$0xf] %v2267
  %2269 = vst.msk [vmem:[%s1022 + $0x184] sm:$0xf] %vm1007, %v1939
  %v2270 = vld [vmem:[%s1022 + $0x188] sm:$0x1]
  %v2271 = vsel %vm1025, %v1940, %v2270
  %2272 = vst [vmem:[%s1022 + $0x188] sm:$0x1] %v2271
  %v2273 = vld [vmem:[%s1022 + $0x18c] sm:$0xf]
  %v2274 = vsel %vm2055, %v1947, %v2273
  %2275 = vst [vmem:[%s1022 + $0x18c] sm:$0xf] %v2274
  %2276 = vst.msk [vmem:[%s1022 + $0x190] sm:$0xf] %vm1007, %v1956
  %v2277 = vld [vmem:[%s1022 + $0x194] sm:$0x1]
  %v2278 = vsel %vm1025, %v1957, %v2277
  %2279 = vst [vmem:[%s1022 + $0x194] sm:$0x1] %v2278
  %v2280 = vld [vmem:[#allocation2] sm:$0xf]
  %v2281 = vld [vmem:[#allocation2 + $0x4] sm:$0xf]
  %v2282 = vld [vmem:[#allocation2 + $0xc] sm:$0xf]
  %v2283 = vld [vmem:[#allocation2 + $0x10] sm:$0xf]
  %v2284 = vld [vmem:[#allocation2 + $0x18] sm:$0xf]
  %v2285 = vld [vmem:[#allocation2 + $0x1c] sm:$0xf]
  %v2286 = vld [vmem:[#allocation2 + $0x24] sm:$0xf]
  %v2287 = vld [vmem:[#allocation2 + $0x28] sm:$0xf]
  %v2288 = vld [vmem:[#allocation2 + $0x30] sm:$0xf]
  %v2289 = vld [vmem:[#allocation2 + $0x34] sm:$0xf]
  %v2290 = vld [vmem:[#allocation2 + $0x3c] sm:$0xf]
  %v2291 = vld [vmem:[#allocation2 + $0x40] sm:$0xf]
  %v2292 = vld [vmem:[#allocation2 + $0x48] sm:$0xf]
  %v2293 = vld [vmem:[#allocation2 + $0x4c] sm:$0xf]
  %v2294 = vld [vmem:[#allocation2 + $0x54] sm:$0xf]
  %v2295 = vld [vmem:[#allocation2 + $0x58] sm:$0xf]
  %v2296 = vld [vmem:[#allocation2 + $0x60] sm:$0xf]
  %v2297 = vld [vmem:[#allocation2 + $0x64] sm:$0xf]
  %v2298 = vld [vmem:[#allocation2 + $0x6c] sm:$0xf]
  %v2299 = vld [vmem:[#allocation2 + $0x70] sm:$0xf]
  %v2300 = vld [vmem:[#allocation2 + $0x78] sm:$0xf]
  %v2301 = vld [vmem:[#allocation2 + $0x7c] sm:$0xf]
  %v2302 = vld [vmem:[#allocation2 + $0x84] sm:$0xf]
  %v2303 = vld [vmem:[#allocation2 + $0x88] sm:$0xf]
  %v2304 = vld [vmem:[#allocation2 + $0x90] sm:$0xf]
  %v2305 = vld [vmem:[#allocation2 + $0x94] sm:$0xf]
  %v2306 = vld [vmem:[#allocation2 + $0x9c] sm:$0xf]
  %v2307 = vld [vmem:[#allocation2 + $0xa0] sm:$0xf]
  %v2308 = vld [vmem:[#allocation2 + $0xa8] sm:$0xf]
  %v2309 = vld [vmem:[#allocation2 + $0xac] sm:$0xf]
  %v2310 = vld [vmem:[#allocation2 + $0xb4] sm:$0xf]
  %v2311 = vld [vmem:[#allocation2 + $0xb8] sm:$0xf]
  %v2312 = vld [vmem:[#allocation2 + $0xd8] sm:$0xf]
  %v2313 = vld [vmem:[#allocation2 + $0xdc] sm:$0xf]
  %v2314 = vld [vmem:[#allocation2 + $0xe4] sm:$0xf]
  %v2315 = vld [vmem:[#allocation2 + $0xe8] sm:$0xf]
  %v2316 = vld [vmem:[#allocation2 + $0xf0] sm:$0xf]
  %v2317 = vld [vmem:[#allocation2 + $0xf4] sm:$0xf]
  %v2318 = vld [vmem:[#allocation2 + $0xfc] sm:$0xf]
  %v2319 = vld [vmem:[#allocation2 + $0x100] sm:$0xf]
  %v2320 = vld [vmem:[#allocation2 + $0x108] sm:$0xf]
  %v2321 = vld [vmem:[#allocation2 + $0x10c] sm:$0xf]
  %v2322 = vld [vmem:[#allocation2 + $0x114] sm:$0xf]
  %v2323 = vld [vmem:[#allocation2 + $0x118] sm:$0xf]
  %v2324 = vld [vmem:[#allocation2 + $0x120] sm:$0xf]
  %v2325 = vld [vmem:[#allocation2 + $0x124] sm:$0xf]
  %v2326 = vld [vmem:[#allocation2 + $0x12c] sm:$0xf]
  %v2327 = vld [vmem:[#allocation2 + $0x130] sm:$0xf]
  %v2328 = vld [vmem:[#allocation2 + $0x138] sm:$0xf]
  %v2329 = vld [vmem:[#allocation2 + $0x13c] sm:$0xf]
  %v2330 = vld [vmem:[#allocation2 + $0x144] sm:$0xf]
  %v2331 = vld [vmem:[#allocation2 + $0x148] sm:$0xf]
  %v2332 = vld [vmem:[#allocation2 + $0x150] sm:$0xf]
  %v2333 = vld [vmem:[#allocation2 + $0x154] sm:$0xf]
  %v2334 = vld [vmem:[#allocation2 + $0x15c] sm:$0xf]
  %v2335 = vld [vmem:[#allocation2 + $0x160] sm:$0xf]
  %v2336 = vld [vmem:[#allocation2 + $0x168] sm:$0xf]
  %v2337 = vld [vmem:[#allocation2 + $0x16c] sm:$0xf]
  %v2338 = vld [vmem:[#allocation2 + $0x174] sm:$0xf]
  %v2339 = vld [vmem:[#allocation2 + $0x178] sm:$0xf]
  %v2340 = vld [vmem:[#allocation2 + $0x180] sm:$0xf]
  %v2341 = vld [vmem:[#allocation2 + $0x184] sm:$0xf]
  %v2342 = vld [vmem:[#allocation2 + $0x18c] sm:$0xf]
  %v2343 = vld [vmem:[#allocation2 + $0x190] sm:$0xf]
  %v2344 = vld [vmem:[%s4] sm:$0xf]
  %v2345 = vld [vmem:[%s4 + $0x4] sm:$0xf]
  %v2346 = vld [vmem:[%s4 + $0x8] sm:$0xf]
  %v2347 = vld [vmem:[%s4 + $0xc] sm:$0xf]
  %v2348 = vld [vmem:[#allocation2 + $0x8] sm:$0x1]
  %v2349 = vld [vmem:[#allocation2 + $0x14] sm:$0x1]
  %v2350 = vld [vmem:[#allocation2 + $0x20] sm:$0x1]
  %v2351 = vld [vmem:[#allocation2 + $0x2c] sm:$0x1]
  %v2352 = vld [vmem:[#allocation2 + $0x38] sm:$0x1]
  %v2353 = vld [vmem:[#allocation2 + $0x44] sm:$0x1]
  %v2354 = vld [vmem:[#allocation2 + $0x50] sm:$0x1]
  %v2355 = vld [vmem:[#allocation2 + $0x5c] sm:$0x1]
  %v2356 = vld [vmem:[#allocation2 + $0x68] sm:$0x1]
  %v2357 = vld [vmem:[#allocation2 + $0x74] sm:$0x1]
  %v2358 = vld [vmem:[#allocation2 + $0x80] sm:$0x1]
  %v2359 = vld [vmem:[#allocation2 + $0x8c] sm:$0x1]
  %v2360 = vld [vmem:[#allocation2 + $0x98] sm:$0x1]
  %v2361 = vld [vmem:[#allocation2 + $0xa4] sm:$0x1]
  %v2362 = vld [vmem:[#allocation2 + $0xb0] sm:$0x1]
  %v2363 = vld [vmem:[#allocation2 + $0xbc] sm:$0x1]
  %v2364 = vld [vmem:[#allocation2 + $0xe0] sm:$0x1]
  %v2365 = vld [vmem:[#allocation2 + $0xec] sm:$0x1]
  %v2366 = vld [vmem:[#allocation2 + $0xf8] sm:$0x1]
  %v2367 = vld [vmem:[#allocation2 + $0x104] sm:$0x1]
  %v2368 = vld [vmem:[#allocation2 + $0x110] sm:$0x1]
  %v2369 = vld [vmem:[#allocation2 + $0x11c] sm:$0x1]
  %v2370 = vld [vmem:[#allocation2 + $0x128] sm:$0x1]
  %v2371 = vld [vmem:[#allocation2 + $0x134] sm:$0x1]
  %v2372 = vld [vmem:[#allocation2 + $0x140] sm:$0x1]
  %v2373 = vld [vmem:[#allocation2 + $0x14c] sm:$0x1]
  %v2374 = vld [vmem:[#allocation2 + $0x158] sm:$0x1]
  %v2375 = vld [vmem:[#allocation2 + $0x164] sm:$0x1]
  %v2376 = vld [vmem:[#allocation2 + $0x170] sm:$0x1]
  %v2377 = vld [vmem:[#allocation2 + $0x17c] sm:$0x1]
  %v2378 = vld [vmem:[#allocation2 + $0x188] sm:$0x1]
  %v2379 = vld [vmem:[#allocation2 + $0x194] sm:$0x1]
  %vm2380 = vsmask.f32 3328
  %vm2381 = vsmask.f32 7440
  %vm2382 = vmor %vm2380, %vm2381
  %v2384 = vshrl.u32 %v2280, 16
  %v2386 = vrot.slane %v2384, 4
  %v2387 = vshll.u32 %v2280, 16
  %v2389 = vrot.slane %v2387, 5
  %v2390 = vor.u32 %v2386, %v2389
  %v2391 = vrot.slane %v2390, 4
  %v2393 = vshll.u32 %v2281, 16
  %v2395 = vrot.slane %v2393, 5
  %v2396 = vsel %vm2382, %v2391, %v2395
  %v2397 = vshrl.u32 %v2281, 16
  %v2399 = vrot.slane %v2397, 4
  %v2400 = vor.u32 %v2399, %v2395
  %v2401 = vrot.slane %v2400, 4
  %v2403 = vshll.u32 %v2348, 16
  %v2405 = vrot.slane %v2403, 5
  %v2406 = vsel %vm2382, %v2401, %v2405
  %v2408 = vshrl.u32 %v2282, 16
  %v2410 = vrot.slane %v2408, 4
  %v2411 = vshll.u32 %v2282, 16
  %v2413 = vrot.slane %v2411, 5
  %v2414 = vor.u32 %v2410, %v2413
  %v2415 = vrot.slane %v2414, 4
  %v2417 = vshll.u32 %v2283, 16
  %v2419 = vrot.slane %v2417, 5
  %v2420 = vsel %vm2382, %v2415, %v2419
  %v2421 = vshrl.u32 %v2283, 16
  %v2423 = vrot.slane %v2421, 4
  %v2424 = vor.u32 %v2423, %v2419
  %v2425 = vrot.slane %v2424, 4
  %v2427 = vshll.u32 %v2349, 16
  %v2429 = vrot.slane %v2427, 5
  %v2430 = vsel %vm2382, %v2425, %v2429
  %v2432 = vshrl.u32 %v2284, 16
  %v2434 = vrot.slane %v2432, 4
  %v2435 = vshll.u32 %v2284, 16
  %v2437 = vrot.slane %v2435, 5
  %v2438 = vor.u32 %v2434, %v2437
  %v2439 = vrot.slane %v2438, 4
  %v2441 = vshll.u32 %v2285, 16
  %v2443 = vrot.slane %v2441, 5
  %v2444 = vsel %vm2382, %v2439, %v2443
  %v2445 = vshrl.u32 %v2285, 16
  %v2447 = vrot.slane %v2445, 4
  %v2448 = vor.u32 %v2447, %v2443
  %v2449 = vrot.slane %v2448, 4
  %v2451 = vshll.u32 %v2350, 16
  %v2453 = vrot.slane %v2451, 5
  %v2454 = vsel %vm2382, %v2449, %v2453
  %v2456 = vshrl.u32 %v2286, 16
  %v2458 = vrot.slane %v2456, 4
  %v2459 = vshll.u32 %v2286, 16
  %v2461 = vrot.slane %v2459, 5
  %v2462 = vor.u32 %v2458, %v2461
  %v2463 = vrot.slane %v2462, 4
  %v2465 = vshll.u32 %v2287, 16
  %v2467 = vrot.slane %v2465, 5
  %v2468 = vsel %vm2382, %v2463, %v2467
  %v2469 = vshrl.u32 %v2287, 16
  %v2471 = vrot.slane %v2469, 4
  %v2472 = vor.u32 %v2471, %v2467
  %v2473 = vrot.slane %v2472, 4
  %v2475 = vshll.u32 %v2351, 16
  %v2477 = vrot.slane %v2475, 5
  %v2478 = vsel %vm2382, %v2473, %v2477
  %v2480 = vshrl.u32 %v2288, 16
  %v2482 = vrot.slane %v2480, 4
  %v2483 = vshll.u32 %v2288, 16
  %v2485 = vrot.slane %v2483, 5
  %v2486 = vor.u32 %v2482, %v2485
  %v2487 = vrot.slane %v2486, 4
  %v2489 = vshll.u32 %v2289, 16
  %v2491 = vrot.slane %v2489, 5
  %v2492 = vsel %vm2382, %v2487, %v2491
  %v2493 = vshrl.u32 %v2289, 16
  %v2495 = vrot.slane %v2493, 4
  %v2496 = vor.u32 %v2495, %v2491
  %v2497 = vrot.slane %v2496, 4
  %v2499 = vshll.u32 %v2352, 16
  %v2501 = vrot.slane %v2499, 5
  %v2502 = vsel %vm2382, %v2497, %v2501
  %v2504 = vshrl.u32 %v2290, 16
  %v2506 = vrot.slane %v2504, 4
  %v2507 = vshll.u32 %v2290, 16
  %v2509 = vrot.slane %v2507, 5
  %v2510 = vor.u32 %v2506, %v2509
  %v2511 = vrot.slane %v2510, 4
  %v2513 = vshll.u32 %v2291, 16
  %v2515 = vrot.slane %v2513, 5
  %v2516 = vsel %vm2382, %v2511, %v2515
  %v2517 = vshrl.u32 %v2291, 16
  %v2519 = vrot.slane %v2517, 4
  %v2520 = vor.u32 %v2519, %v2515
  %v2521 = vrot.slane %v2520, 4
  %v2523 = vshll.u32 %v2353, 16
  %v2525 = vrot.slane %v2523, 5
  %v2526 = vsel %vm2382, %v2521, %v2525
  %v2528 = vshrl.u32 %v2292, 16
  %v2530 = vrot.slane %v2528, 4
  %v2531 = vshll.u32 %v2292, 16
  %v2533 = vrot.slane %v2531, 5
  %v2534 = vor.u32 %v2530, %v2533
  %v2535 = vrot.slane %v2534, 4
  %v2537 = vshll.u32 %v2293, 16
  %v2539 = vrot.slane %v2537, 5
  %v2540 = vsel %vm2382, %v2535, %v2539
  %v2541 = vshrl.u32 %v2293, 16
  %v2543 = vrot.slane %v2541, 4
  %v2544 = vor.u32 %v2543, %v2539
  %v2545 = vrot.slane %v2544, 4
  %v2547 = vshll.u32 %v2354, 16
  %v2549 = vrot.slane %v2547, 5
  %v2550 = vsel %vm2382, %v2545, %v2549
  %v2552 = vshrl.u32 %v2294, 16
  %v2554 = vrot.slane %v2552, 4
  %v2555 = vshll.u32 %v2294, 16
  %v2557 = vrot.slane %v2555, 5
  %v2558 = vor.u32 %v2554, %v2557
  %v2559 = vrot.slane %v2558, 4
  %v2561 = vshll.u32 %v2295, 16
  %v2563 = vrot.slane %v2561, 5
  %v2564 = vsel %vm2382, %v2559, %v2563
  %v2565 = vshrl.u32 %v2295, 16
  %v2567 = vrot.slane %v2565, 4
  %v2568 = vor.u32 %v2567, %v2563
  %v2569 = vrot.slane %v2568, 4
  %v2571 = vshll.u32 %v2355, 16
  %v2573 = vrot.slane %v2571, 5
  %v2574 = vsel %vm2382, %v2569, %v2573
  %v2576 = vshrl.u32 %v2296, 16
  %v2578 = vrot.slane %v2576, 4
  %v2579 = vshll.u32 %v2296, 16
  %v2581 = vrot.slane %v2579, 5
  %v2582 = vor.u32 %v2578, %v2581
  %v2583 = vrot.slane %v2582, 4
  %v2585 = vshll.u32 %v2297, 16
  %v2587 = vrot.slane %v2585, 5
  %v2588 = vsel %vm2382, %v2583, %v2587
  %v2589 = vshrl.u32 %v2297, 16
  %v2591 = vrot.slane %v2589, 4
  %v2592 = vor.u32 %v2591, %v2587
  %v2593 = vrot.slane %v2592, 4
  %v2595 = vshll.u32 %v2356, 16
  %v2597 = vrot.slane %v2595, 5
  %v2598 = vsel %vm2382, %v2593, %v2597
  %v2600 = vshrl.u32 %v2298, 16
  %v2602 = vrot.slane %v2600, 4
  %v2603 = vshll.u32 %v2298, 16
  %v2605 = vrot.slane %v2603, 5
  %v2606 = vor.u32 %v2602, %v2605
  %v2607 = vrot.slane %v2606, 4
  %v2609 = vshll.u32 %v2299, 16
  %v2611 = vrot.slane %v2609, 5
  %v2612 = vsel %vm2382, %v2607, %v2611
  %v2613 = vshrl.u32 %v2299, 16
  %v2615 = vrot.slane %v2613, 4
  %v2616 = vor.u32 %v2615, %v2611
  %v2617 = vrot.slane %v2616, 4
  %v2619 = vshll.u32 %v2357, 16
  %v2621 = vrot.slane %v2619, 5
  %v2622 = vsel %vm2382, %v2617, %v2621
  %v2624 = vshrl.u32 %v2300, 16
  %v2626 = vrot.slane %v2624, 4
  %v2627 = vshll.u32 %v2300, 16
  %v2629 = vrot.slane %v2627, 5
  %v2630 = vor.u32 %v2626, %v2629
  %v2631 = vrot.slane %v2630, 4
  %v2633 = vshll.u32 %v2301, 16
  %v2635 = vrot.slane %v2633, 5
  %v2636 = vsel %vm2382, %v2631, %v2635
  %v2637 = vshrl.u32 %v2301, 16
  %v2639 = vrot.slane %v2637, 4
  %v2640 = vor.u32 %v2639, %v2635
  %v2641 = vrot.slane %v2640, 4
  %v2643 = vshll.u32 %v2358, 16
  %v2645 = vrot.slane %v2643, 5
  %v2646 = vsel %vm2382, %v2641, %v2645
  %v2648 = vshrl.u32 %v2302, 16
  %v2650 = vrot.slane %v2648, 4
  %v2651 = vshll.u32 %v2302, 16
  %v2653 = vrot.slane %v2651, 5
  %v2654 = vor.u32 %v2650, %v2653
  %v2655 = vrot.slane %v2654, 4
  %v2657 = vshll.u32 %v2303, 16
  %v2659 = vrot.slane %v2657, 5
  %v2660 = vsel %vm2382, %v2655, %v2659
  %v2661 = vshrl.u32 %v2303, 16
  %v2663 = vrot.slane %v2661, 4
  %v2664 = vor.u32 %v2663, %v2659
  %v2665 = vrot.slane %v2664, 4
  %v2667 = vshll.u32 %v2359, 16
  %v2669 = vrot.slane %v2667, 5
  %v2670 = vsel %vm2382, %v2665, %v2669
  %v2672 = vshrl.u32 %v2304, 16
  %v2674 = vrot.slane %v2672, 4
  %v2675 = vshll.u32 %v2304, 16
  %v2677 = vrot.slane %v2675, 5
  %v2678 = vor.u32 %v2674, %v2677
  %v2679 = vrot.slane %v2678, 4
  %v2681 = vshll.u32 %v2305, 16
  %v2683 = vrot.slane %v2681, 5
  %v2684 = vsel %vm2382, %v2679, %v2683
  %v2685 = vshrl.u32 %v2305, 16
  %v2687 = vrot.slane %v2685, 4
  %v2688 = vor.u32 %v2687, %v2683
  %v2689 = vrot.slane %v2688, 4
  %v2691 = vshll.u32 %v2360, 16
  %v2693 = vrot.slane %v2691, 5
  %v2694 = vsel %vm2382, %v2689, %v2693
  %v2696 = vshrl.u32 %v2306, 16
  %v2698 = vrot.slane %v2696, 4
  %v2699 = vshll.u32 %v2306, 16
  %v2701 = vrot.slane %v2699, 5
  %v2702 = vor.u32 %v2698, %v2701
  %v2703 = vrot.slane %v2702, 4
  %v2705 = vshll.u32 %v2307, 16
  %v2707 = vrot.slane %v2705, 5
  %v2708 = vsel %vm2382, %v2703, %v2707
  %v2709 = vshrl.u32 %v2307, 16
  %v2711 = vrot.slane %v2709, 4
  %v2712 = vor.u32 %v2711, %v2707
  %v2713 = vrot.slane %v2712, 4
  %v2715 = vshll.u32 %v2361, 16
  %v2717 = vrot.slane %v2715, 5
  %v2718 = vsel %vm2382, %v2713, %v2717
  %v2720 = vshrl.u32 %v2308, 16
  %v2722 = vrot.slane %v2720, 4
  %v2723 = vshll.u32 %v2308, 16
  %v2725 = vrot.slane %v2723, 5
  %v2726 = vor.u32 %v2722, %v2725
  %v2727 = vrot.slane %v2726, 4
  %v2729 = vshll.u32 %v2309, 16
  %v2731 = vrot.slane %v2729, 5
  %v2732 = vsel %vm2382, %v2727, %v2731
  %v2733 = vshrl.u32 %v2309, 16
  %v2735 = vrot.slane %v2733, 4
  %v2736 = vor.u32 %v2735, %v2731
  %v2737 = vrot.slane %v2736, 4
  %v2739 = vshll.u32 %v2362, 16
  %v2741 = vrot.slane %v2739, 5
  %v2742 = vsel %vm2382, %v2737, %v2741
  %v2744 = vshrl.u32 %v2310, 16
  %v2746 = vrot.slane %v2744, 4
  %v2747 = vshll.u32 %v2310, 16
  %v2749 = vrot.slane %v2747, 5
  %v2750 = vor.u32 %v2746, %v2749
  %v2751 = vrot.slane %v2750, 4
  %v2753 = vshll.u32 %v2311, 16
  %v2755 = vrot.slane %v2753, 5
  %v2756 = vsel %vm2382, %v2751, %v2755
  %v2757 = vshrl.u32 %v2311, 16
  %v2759 = vrot.slane %v2757, 4
  %v2760 = vor.u32 %v2759, %v2755
  %v2761 = vrot.slane %v2760, 4
  %v2763 = vshll.u32 %v2363, 16
  %v2765 = vrot.slane %v2763, 5
  %v2766 = vsel %vm2382, %v2761, %v2765
  %v2768 = vshrl.u32 %v2312, 16
  %v2770 = vrot.slane %v2768, 4
  %v2771 = vshll.u32 %v2312, 16
  %v2773 = vrot.slane %v2771, 5
  %v2774 = vor.u32 %v2770, %v2773
  %v2775 = vrot.slane %v2774, 4
  %v2777 = vshll.u32 %v2313, 16
  %v2779 = vrot.slane %v2777, 5
  %v2780 = vsel %vm2382, %v2775, %v2779
  %v2781 = vshrl.u32 %v2313, 16
  %v2783 = vrot.slane %v2781, 4
  %v2784 = vor.u32 %v2783, %v2779
  %v2785 = vrot.slane %v2784, 4
  %v2787 = vshll.u32 %v2364, 16
  %v2789 = vrot.slane %v2787, 5
  %v2790 = vsel %vm2382, %v2785, %v2789
  %v2792 = vshrl.u32 %v2314, 16
  %v2794 = vrot.slane %v2792, 4
  %v2795 = vshll.u32 %v2314, 16
  %v2797 = vrot.slane %v2795, 5
  %v2798 = vor.u32 %v2794, %v2797
  %v2799 = vrot.slane %v2798, 4
  %v2801 = vshll.u32 %v2315, 16
  %v2803 = vrot.slane %v2801, 5
  %v2804 = vsel %vm2382, %v2799, %v2803
  %v2805 = vshrl.u32 %v2315, 16
  %v2807 = vrot.slane %v2805, 4
  %v2808 = vor.u32 %v2807, %v2803
  %v2809 = vrot.slane %v2808, 4
  %v2811 = vshll.u32 %v2365, 16
  %v2813 = vrot.slane %v2811, 5
  %v2814 = vsel %vm2382, %v2809, %v2813
  %v2816 = vshrl.u32 %v2316, 16
  %v2818 = vrot.slane %v2816, 4
  %v2819 = vshll.u32 %v2316, 16
  %v2821 = vrot.slane %v2819, 5
  %v2822 = vor.u32 %v2818, %v2821
  %v2823 = vrot.slane %v2822, 4
  %v2825 = vshll.u32 %v2317, 16
  %v2827 = vrot.slane %v2825, 5
  %v2828 = vsel %vm2382, %v2823, %v2827
  %v2829 = vshrl.u32 %v2317, 16
  %v2831 = vrot.slane %v2829, 4
  %v2832 = vor.u32 %v2831, %v2827
  %v2833 = vrot.slane %v2832, 4
  %v2835 = vshll.u32 %v2366, 16
  %v2837 = vrot.slane %v2835, 5
  %v2838 = vsel %vm2382, %v2833, %v2837
  %v2840 = vshrl.u32 %v2318, 16
  %v2842 = vrot.slane %v2840, 4
  %v2843 = vshll.u32 %v2318, 16
  %v2845 = vrot.slane %v2843, 5
  %v2846 = vor.u32 %v2842, %v2845
  %v2847 = vrot.slane %v2846, 4
  %v2849 = vshll.u32 %v2319, 16
  %v2851 = vrot.slane %v2849, 5
  %v2852 = vsel %vm2382, %v2847, %v2851
  %v2853 = vshrl.u32 %v2319, 16
  %v2855 = vrot.slane %v2853, 4
  %v2856 = vor.u32 %v2855, %v2851
  %v2857 = vrot.slane %v2856, 4
  %v2859 = vshll.u32 %v2367, 16
  %v2861 = vrot.slane %v2859, 5
  %v2862 = vsel %vm2382, %v2857, %v2861
  %v2864 = vshrl.u32 %v2320, 16
  %v2866 = vrot.slane %v2864, 4
  %v2867 = vshll.u32 %v2320, 16
  %v2869 = vrot.slane %v2867, 5
  %v2870 = vor.u32 %v2866, %v2869
  %v2871 = vrot.slane %v2870, 4
  %v2873 = vshll.u32 %v2321, 16
  %v2875 = vrot.slane %v2873, 5
  %v2876 = vsel %vm2382, %v2871, %v2875
  %v2877 = vshrl.u32 %v2321, 16
  %v2879 = vrot.slane %v2877, 4
  %v2880 = vor.u32 %v2879, %v2875
  %v2881 = vrot.slane %v2880, 4
  %v2883 = vshll.u32 %v2368, 16
  %v2885 = vrot.slane %v2883, 5
  %v2886 = vsel %vm2382, %v2881, %v2885
  %v2888 = vshrl.u32 %v2322, 16
  %v2890 = vrot.slane %v2888, 4
  %v2891 = vshll.u32 %v2322, 16
  %v2893 = vrot.slane %v2891, 5
  %v2894 = vor.u32 %v2890, %v2893
  %v2895 = vrot.slane %v2894, 4
  %v2897 = vshll.u32 %v2323, 16
  %v2899 = vrot.slane %v2897, 5
  %v2900 = vsel %vm2382, %v2895, %v2899
  %v2901 = vshrl.u32 %v2323, 16
  %v2903 = vrot.slane %v2901, 4
  %v2904 = vor.u32 %v2903, %v2899
  %v2905 = vrot.slane %v2904, 4
  %v2907 = vshll.u32 %v2369, 16
  %v2909 = vrot.slane %v2907, 5
  %v2910 = vsel %vm2382, %v2905, %v2909
  %v2912 = vshrl.u32 %v2324, 16
  %v2914 = vrot.slane %v2912, 4
  %v2915 = vshll.u32 %v2324, 16
  %v2917 = vrot.slane %v2915, 5
  %v2918 = vor.u32 %v2914, %v2917
  %v2919 = vrot.slane %v2918, 4
  %v2921 = vshll.u32 %v2325, 16
  %v2923 = vrot.slane %v2921, 5
  %v2924 = vsel %vm2382, %v2919, %v2923
  %v2925 = vshrl.u32 %v2325, 16
  %v2927 = vrot.slane %v2925, 4
  %v2928 = vor.u32 %v2927, %v2923
  %v2929 = vrot.slane %v2928, 4
  %v2931 = vshll.u32 %v2370, 16
  %v2933 = vrot.slane %v2931, 5
  %v2934 = vsel %vm2382, %v2929, %v2933
  %v2936 = vshrl.u32 %v2326, 16
  %v2938 = vrot.slane %v2936, 4
  %v2939 = vshll.u32 %v2326, 16
  %v2941 = vrot.slane %v2939, 5
  %v2942 = vor.u32 %v2938, %v2941
  %v2943 = vrot.slane %v2942, 4
  %v2945 = vshll.u32 %v2327, 16
  %v2947 = vrot.slane %v2945, 5
  %v2948 = vsel %vm2382, %v2943, %v2947
  %v2949 = vshrl.u32 %v2327, 16
  %v2951 = vrot.slane %v2949, 4
  %v2952 = vor.u32 %v2951, %v2947
  %v2953 = vrot.slane %v2952, 4
  %v2955 = vshll.u32 %v2371, 16
  %v2957 = vrot.slane %v2955, 5
  %v2958 = vsel %vm2382, %v2953, %v2957
  %v2960 = vshrl.u32 %v2328, 16
  %v2962 = vrot.slane %v2960, 4
  %v2963 = vshll.u32 %v2328, 16
  %v2965 = vrot.slane %v2963, 5
  %v2966 = vor.u32 %v2962, %v2965
  %v2967 = vrot.slane %v2966, 4
  %v2969 = vshll.u32 %v2329, 16
  %v2971 = vrot.slane %v2969, 5
  %v2972 = vsel %vm2382, %v2967, %v2971
  %v2973 = vshrl.u32 %v2329, 16
  %v2975 = vrot.slane %v2973, 4
  %v2976 = vor.u32 %v2975, %v2971
  %v2977 = vrot.slane %v2976, 4
  %v2979 = vshll.u32 %v2372, 16
  %v2981 = vrot.slane %v2979, 5
  %v2982 = vsel %vm2382, %v2977, %v2981
  %v2984 = vshrl.u32 %v2330, 16
  %v2986 = vrot.slane %v2984, 4
  %v2987 = vshll.u32 %v2330, 16
  %v2989 = vrot.slane %v2987, 5
  %v2990 = vor.u32 %v2986, %v2989
  %v2991 = vrot.slane %v2990, 4
  %v2993 = vshll.u32 %v2331, 16
  %v2995 = vrot.slane %v2993, 5
  %v2996 = vsel %vm2382, %v2991, %v2995
  %v2997 = vshrl.u32 %v2331, 16
  %v2999 = vrot.slane %v2997, 4
  %v3000 = vor.u32 %v2999, %v2995
  %v3001 = vrot.slane %v3000, 4
  %v3003 = vshll.u32 %v2373, 16
  %v3005 = vrot.slane %v3003, 5
  %v3006 = vsel %vm2382, %v3001, %v3005
  %v3008 = vshrl.u32 %v2332, 16
  %v3010 = vrot.slane %v3008, 4
  %v3011 = vshll.u32 %v2332, 16
  %v3013 = vrot.slane %v3011, 5
  %v3014 = vor.u32 %v3010, %v3013
  %v3015 = vrot.slane %v3014, 4
  %v3017 = vshll.u32 %v2333, 16
  %v3019 = vrot.slane %v3017, 5
  %v3020 = vsel %vm2382, %v3015, %v3019
  %v3021 = vshrl.u32 %v2333, 16
  %v3023 = vrot.slane %v3021, 4
  %v3024 = vor.u32 %v3023, %v3019
  %v3025 = vrot.slane %v3024, 4
  %v3027 = vshll.u32 %v2374, 16
  %v3029 = vrot.slane %v3027, 5
  %v3030 = vsel %vm2382, %v3025, %v3029
  %v3032 = vshrl.u32 %v2334, 16
  %v3034 = vrot.slane %v3032, 4
  %v3035 = vshll.u32 %v2334, 16
  %v3037 = vrot.slane %v3035, 5
  %v3038 = vor.u32 %v3034, %v3037
  %v3039 = vrot.slane %v3038, 4
  %v3041 = vshll.u32 %v2335, 16
  %v3043 = vrot.slane %v3041, 5
  %v3044 = vsel %vm2382, %v3039, %v3043
  %v3045 = vshrl.u32 %v2335, 16
  %v3047 = vrot.slane %v3045, 4
  %v3048 = vor.u32 %v3047, %v3043
  %v3049 = vrot.slane %v3048, 4
  %v3051 = vshll.u32 %v2375, 16
  %v3053 = vrot.slane %v3051, 5
  %v3054 = vsel %vm2382, %v3049, %v3053
  %v3056 = vshrl.u32 %v2336, 16
  %v3058 = vrot.slane %v3056, 4
  %v3059 = vshll.u32 %v2336, 16
  %v3061 = vrot.slane %v3059, 5
  %v3062 = vor.u32 %v3058, %v3061
  %v3063 = vrot.slane %v3062, 4
  %v3065 = vshll.u32 %v2337, 16
  %v3067 = vrot.slane %v3065, 5
  %v3068 = vsel %vm2382, %v3063, %v3067
  %v3069 = vshrl.u32 %v2337, 16
  %v3071 = vrot.slane %v3069, 4
  %v3072 = vor.u32 %v3071, %v3067
  %v3073 = vrot.slane %v3072, 4
  %v3075 = vshll.u32 %v2376, 16
  %v3077 = vrot.slane %v3075, 5
  %v3078 = vsel %vm2382, %v3073, %v3077
  %v3080 = vshrl.u32 %v2338, 16
  %v3082 = vrot.slane %v3080, 4
  %v3083 = vshll.u32 %v2338, 16
  %v3085 = vrot.slane %v3083, 5
  %v3086 = vor.u32 %v3082, %v3085
  %v3087 = vrot.slane %v3086, 4
  %v3089 = vshll.u32 %v2339, 16
  %v3091 = vrot.slane %v3089, 5
  %v3092 = vsel %vm2382, %v3087, %v3091
  %v3093 = vshrl.u32 %v2339, 16
  %v3095 = vrot.slane %v3093, 4
  %v3096 = vor.u32 %v3095, %v3091
  %v3097 = vrot.slane %v3096, 4
  %v3099 = vshll.u32 %v2377, 16
  %v3101 = vrot.slane %v3099, 5
  %v3102 = vsel %vm2382, %v3097, %v3101
  %v3104 = vshrl.u32 %v2340, 16
  %v3106 = vrot.slane %v3104, 4
  %v3107 = vshll.u32 %v2340, 16
  %v3109 = vrot.slane %v3107, 5
  %v3110 = vor.u32 %v3106, %v3109
  %v3111 = vrot.slane %v3110, 4
  %v3113 = vshll.u32 %v2341, 16
  %v3115 = vrot.slane %v3113, 5
  %v3116 = vsel %vm2382, %v3111, %v3115
  %v3117 = vshrl.u32 %v2341, 16
  %v3119 = vrot.slane %v3117, 4
  %v3120 = vor.u32 %v3119, %v3115
  %v3121 = vrot.slane %v3120, 4
  %v3123 = vshll.u32 %v2378, 16
  %v3125 = vrot.slane %v3123, 5
  %v3126 = vsel %vm2382, %v3121, %v3125
  %v3128 = vshrl.u32 %v2342, 16
  %v3130 = vrot.slane %v3128, 4
  %v3131 = vshll.u32 %v2342, 16
  %v3133 = vrot.slane %v3131, 5
  %v3134 = vor.u32 %v3130, %v3133
  %v3135 = vrot.slane %v3134, 4
  %v3137 = vshll.u32 %v2343, 16
  %v3139 = vrot.slane %v3137, 5
  %v3140 = vsel %vm2382, %v3135, %v3139
  %v3141 = vshrl.u32 %v2343, 16
  %v3143 = vrot.slane %v3141, 4
  %v3144 = vor.u32 %v3143, %v3139
  %v3145 = vrot.slane %v3144, 4
  %v3147 = vshll.u32 %v2379, 16
  %v3149 = vrot.slane %v3147, 5
  %v3150 = vsel %vm2382, %v3145, %v3149
  %s3151 = scalar_lea.vmem %s4, 16
  %v3152 = vld [vmem:[%s3151] sm:$0xf]
  %v3153 = vld [vmem:[%s3151 + $0x4] sm:$0xf]
  %v3154 = vld [vmem:[%s3151 + $0x8] sm:$0xf]
  %v3155 = vld [vmem:[%s3151 + $0xc] sm:$0xf]
  %v3156 = vunpack.c.l.b16 %v2396
  %v3157 = vunpack.c.l.b16 %v2406
  %v3158 = vunpack.c.l.b16 %v2420
  %v3159 = vunpack.c.l.b16 %v2430
  %v3160 = vunpack.c.l.b16 %v2444
  %v3161 = vunpack.c.l.b16 %v2454
  %v3162 = vunpack.c.l.b16 %v2468
  %v3163 = vunpack.c.l.b16 %v2478
  %v3164 = vunpack.c.l.b16 %v2492
  %v3165 = vunpack.c.l.b16 %v2502
  %v3166 = vunpack.c.l.b16 %v2516
  %v3167 = vunpack.c.l.b16 %v2526
  %v3168 = vunpack.c.l.b16 %v2540
  %v3169 = vunpack.c.l.b16 %v2550
  %v3170 = vunpack.c.l.b16 %v2564
  %v3171 = vunpack.c.l.b16 %v2574
  %v3172 = vunpack.c.l.b16 %v2588
  %v3173 = vunpack.c.l.b16 %v2598
  %v3174 = vunpack.c.l.b16 %v2612
  %v3175 = vunpack.c.l.b16 %v2622
  %v3176 = vunpack.c.l.b16 %v2636
  %v3177 = vunpack.c.l.b16 %v2646
  %v3178 = vunpack.c.l.b16 %v2660
  %v3179 = vunpack.c.l.b16 %v2670
  %v3180 = vunpack.c.l.b16 %v2684
  %v3181 = vunpack.c.l.b16 %v2694
  %v3182 = vunpack.c.l.b16 %v2708
  %v3183 = vunpack.c.l.b16 %v2718
  %v3184 = vunpack.c.l.b16 %v2732
  %v3185 = vunpack.c.l.b16 %v2742
  %v3186 = vunpack.c.l.b16 %v2756
  %v3187 = vunpack.c.l.b16 %v2766
  %v3188 = vunpack.c.l.b16 %v2780
  %v3189 = vunpack.c.l.b16 %v2790
  %v3190 = vunpack.c.l.b16 %v2804
  %v3191 = vunpack.c.l.b16 %v2814
  %v3192 = vunpack.c.l.b16 %v2828
  %v3193 = vunpack.c.l.b16 %v2838
  %v3194 = vunpack.c.l.b16 %v2852
  %v3195 = vunpack.c.l.b16 %v2862
  %v3196 = vunpack.c.l.b16 %v2876
  %v3197 = vunpack.c.l.b16 %v2886
  %v3198 = vunpack.c.l.b16 %v2900
  %v3199 = vunpack.c.l.b16 %v2910
  %v3200 = vunpack.c.l.b16 %v2924
  %v3201 = vunpack.c.l.b16 %v2934
  %v3202 = vunpack.c.l.b16 %v2948
  %v3203 = vunpack.c.l.b16 %v2958
  %v3204 = vunpack.c.l.b16 %v2972
  %v3205 = vunpack.c.l.b16 %v2982
  %v3206 = vunpack.c.l.b16 %v2996
  %v3207 = vunpack.c.l.b16 %v3006
  %v3208 = vunpack.c.l.b16 %v3020
  %v3209 = vunpack.c.l.b16 %v3030
  %v3210 = vunpack.c.l.b16 %v3044
  %v3211 = vunpack.c.l.b16 %v3054
  %v3212 = vunpack.c.l.b16 %v3068
  %v3213 = vunpack.c.l.b16 %v3078
  %v3214 = vunpack.c.l.b16 %v3092
  %v3215 = vunpack.c.l.b16 %v3102
  %v3216 = vunpack.c.l.b16 %v3116
  %v3217 = vunpack.c.l.b16 %v3126
  %v3218 = vunpack.c.l.b16 %v3140
  %v3219 = vunpack.c.l.b16 %v3150
  %v3220 = vpack.c.b16 %v3157, %v3156
  %v3221 = vpack.c.b16 %v3159, %v3158
  %v3222 = vpack.c.b16 %v3161, %v3160
  %v3223 = vpack.c.b16 %v3163, %v3162
  %v3224 = vpack.c.b16 %v3165, %v3164
  %v3225 = vpack.c.b16 %v3167, %v3166
  %v3226 = vpack.c.b16 %v3169, %v3168
  %v3227 = vpack.c.b16 %v3171, %v3170
  %v3228 = vpack.c.b16 %v3173, %v3172
  %v3229 = vpack.c.b16 %v3175, %v3174
  %v3230 = vpack.c.b16 %v3177, %v3176
  %v3231 = vpack.c.b16 %v3179, %v3178
  %v3232 = vpack.c.b16 %v3181, %v3180
  %v3233 = vpack.c.b16 %v3183, %v3182
  %v3234 = vpack.c.b16 %v3185, %v3184
  %v3235 = vpack.c.b16 %v3187, %v3186
  %v3236 = vpack.c.b16 %v3189, %v3188
  %v3237 = vpack.c.b16 %v3191, %v3190
  %v3238 = vpack.c.b16 %v3193, %v3192
  %v3239 = vpack.c.b16 %v3195, %v3194
  %v3240 = vpack.c.b16 %v3197, %v3196
  %v3241 = vpack.c.b16 %v3199, %v3198
  %v3242 = vpack.c.b16 %v3201, %v3200
  %v3243 = vpack.c.b16 %v3203, %v3202
  %v3244 = vpack.c.b16 %v3205, %v3204
  %v3245 = vpack.c.b16 %v3207, %v3206
  %v3246 = vpack.c.b16 %v3209, %v3208
  %v3247 = vpack.c.b16 %v3211, %v3210
  %v3248 = vpack.c.b16 %v3213, %v3212
  %v3249 = vpack.c.b16 %v3215, %v3214
  %v3250 = vpack.c.b16 %v3217, %v3216
  %v3251 = vpack.c.b16 %v3219, %v3218
  %v3256 = vunpack.c.l.b16 %v3152
  %v3257 = vunpack.c.l.b16 %v3153
  %v3258 = vunpack.c.l.b16 %v3154
  %v3259 = vunpack.c.l.b16 %v3155
  %v3260 = vpack.c.b16 %v3257, %v3256
  %v3261 = vpack.c.b16 %v3259, %v3258
  %vm3264 = vcmask 261120
  %v3266 = vsel %vm3264, %v3220, 0
  %v3269 = vsel %vm3264, %v3221, 0
  %v3272 = vsel %vm3264, %v3222, 0
  %v3275 = vsel %vm3264, %v3223, 0
  %v3278 = vsel %vm3264, %v3224, 0
  %v3281 = vsel %vm3264, %v3225, 0
  %v3284 = vsel %vm3264, %v3226, 0
  %v3287 = vsel %vm3264, %v3227, 0
  %v3290 = vsel %vm3264, %v3228, 0
  %v3293 = vsel %vm3264, %v3229, 0
  %v3296 = vsel %vm3264, %v3230, 0
  %v3299 = vsel %vm3264, %v3231, 0
  %v3302 = vsel %vm3264, %v3232, 0
  %v3305 = vsel %vm3264, %v3233, 0
  %v3308 = vsel %vm3264, %v3234, 0
  %v3311 = vsel %vm3264, %v3235, 0
  %v3314 = vsel %vm3264, %v3236, 0
  %v3317 = vsel %vm3264, %v3237, 0
  %v3320 = vsel %vm3264, %v3238, 0
  %v3323 = vsel %vm3264, %v3239, 0
  %v3326 = vsel %vm3264, %v3240, 0
  %v3329 = vsel %vm3264, %v3241, 0
  %v3332 = vsel %vm3264, %v3242, 0
  %v3335 = vsel %vm3264, %v3243, 0
  %v3338 = vsel %vm3264, %v3244, 0
  %v3341 = vsel %vm3264, %v3245, 0
  %v3344 = vsel %vm3264, %v3246, 0
  %v3347 = vsel %vm3264, %v3247, 0
  %v3350 = vsel %vm3264, %v3248, 0
  %v3353 = vsel %vm3264, %v3249, 0
  %v3356 = vsel %vm3264, %v3250, 0
  %v3359 = vsel %vm3264, %v3251, 0
  %3361 = vmatprep.subr.bf16.mxu0 0
  %3362 = vmatpush1.bf16.msra.mxu0 %v3260
  %3363 = vmatprep.subr.bf16.mxu0 0
  %3364 = vmatpush1.bf16.msra.mxu0 %v3261
  %3365 = vmatprep.subr.bf16.mxu0 0
  %3366 = vmatpush1.bf16.msra.mxu0 0
  %3367 = vmatprep.subr.bf16.mxu0 0
  %3368 = vmatpush1.bf16.msra.mxu0 0
  %3369 = vmatprep.subr.bf16.mxu0 0
  %3370 = vmatpush1.bf16.msra.mxu0 0
  %3371 = vmatprep.subr.bf16.mxu0 0
  %3372 = vmatpush1.bf16.msra.mxu0 0
  %3373 = vmatprep.subr.bf16.mxu0 0
  %3374 = vmatpush1.bf16.msra.mxu0 0
  %3375 = vmatprep.subr.bf16.mxu0 0
  %3376 = vmatpush1.bf16.msra.mxu0 0
  %3377 = vmatprep.subr.bf16.mxu0 0
  %3378 = vmatpush1.bf16.msra.mxu0 0
  %3379 = vmatprep.subr.bf16.mxu0 0
  %3380 = vmatpush1.bf16.msra.mxu0 0
  %3381 = vmatprep.subr.bf16.mxu0 0
  %3382 = vmatpush1.bf16.msra.mxu0 0
  %3383 = vmatprep.subr.bf16.mxu0 0
  %3384 = vmatpush1.bf16.msra.mxu0 0
  %3385 = vmatprep.subr.bf16.mxu0 0
  %3386 = vmatpush1.bf16.msra.mxu0 0
  %3387 = vmatprep.subr.bf16.mxu0 0
  %3388 = vmatpush1.bf16.msra.mxu0 0
  %3389 = vmatprep.subr.bf16.mxu0 0
  %3390 = vmatpush1.bf16.msra.mxu0 0
  %3391 = vmatprep.subr.bf16.mxu0 0
  %3392 = vmatpush1.bf16.msra.mxu0 0
  %3393 = vmatprep.mubr.bf16.mxu0 0
  %3394 = vmatmul.mubr.bf16.gmra.mrb[0].mxu0 %v3266
  %v3395 = vpop.f32.mrb[0].mxu0
  %v3396 = vadd.f32 0.0, %v3395
  %v3397 = vpop.f32.mrb[0].mxu0
  %v3398 = vpop.f32.mrb[0].mxu0
  %v3399 = vadd.f32 0.0, %v3398
  %v3400 = vpop.f32.mrb[0].mxu0
  %3401 = vmatprep.mubr.bf16.mxu0 0
  %3402 = vmatmul.mubr.bf16.gmra.mrb[0].mxu0 %v3269
  %v3403 = vpop.f32.mrb[0].mxu0
  %v3404 = vadd.f32 0.0, %v3403
  %v3405 = vpop.f32.mrb[0].mxu0
  %v3406 = vpop.f32.mrb[0].mxu0
  %v3407 = vadd.f32 0.0, %v3406
  %v3408 = vpop.f32.mrb[0].mxu0
  %3409 = vmatprep.mubr.bf16.mxu0 0
  %3410 = vmatmul.mubr.bf16.gmra.mrb[0].mxu0 %v3272
  %v3411 = vpop.f32.mrb[0].mxu0
  %v3412 = vadd.f32 0.0, %v3411
  %v3413 = vpop.f32.mrb[0].mxu0
  %v3414 = vpop.f32.mrb[0].mxu0
  %v3415 = vadd.f32 0.0, %v3414
  %v3416 = vpop.f32.mrb[0].mxu0
  %3417 = vmatprep.mubr.bf16.mxu0 0
  %3418 = vmatmul.mubr.bf16.gmra.mrb[0].mxu0 %v3275
  %v3419 = vpop.f32.mrb[0].mxu0
  %v3420 = vadd.f32 0.0, %v3419
  %v3421 = vpop.f32.mrb[0].mxu0
  %v3422 = vpop.f32.mrb[0].mxu0
  %v3423 = vadd.f32 0.0, %v3422
  %v3424 = vpop.f32.mrb[0].mxu0
  %3425 = vmatprep.mubr.bf16.mxu0 0
  %3426 = vmatmul.mubr.bf16.gmra.mrb[0].mxu0 %v3278
  %v3427 = vpop.f32.mrb[0].mxu0
  %v3428 = vadd.f32 0.0, %v3427
  %v3429 = vpop.f32.mrb[0].mxu0
  %v3430 = vpop.f32.mrb[0].mxu0
  %v3431 = vadd.f32 0.0, %v3430
  %v3432 = vpop.f32.mrb[0].mxu0
  %3433 = vmatprep.mubr.bf16.mxu0 0
  %3434 = vmatmul.mubr.bf16.gmra.mrb[0].mxu0 %v3281
  %v3435 = vpop.f32.mrb[0].mxu0
  %v3436 = vadd.f32 0.0, %v3435
  %v3437 = vpop.f32.mrb[0].mxu0
  %v3438 = vpop.f32.mrb[0].mxu0
  %v3439 = vadd.f32 0.0, %v3438
  %v3440 = vpop.f32.mrb[0].mxu0
  %3441 = vmatprep.mubr.bf16.mxu0 0
  %3442 = vmatmul.mubr.bf16.gmra.mrb[0].mxu0 %v3284
  %v3443 = vpop.f32.mrb[0].mxu0
  %v3444 = vadd.f32 0.0, %v3443
  %v3445 = vpop.f32.mrb[0].mxu0
  %v3446 = vpop.f32.mrb[0].mxu0
  %v3447 = vadd.f32 0.0, %v3446
  %v3448 = vpop.f32.mrb[0].mxu0
  %3449 = vmatprep.mubr.bf16.mxu0 0
  %3450 = vmatmul.mubr.bf16.gmra.mrb[0].mxu0 %v3287
  %v3451 = vpop.f32.mrb[0].mxu0
  %v3452 = vadd.f32 0.0, %v3451
  %v3453 = vpop.f32.mrb[0].mxu0
  %v3454 = vpop.f32.mrb[0].mxu0
  %v3455 = vadd.f32 0.0, %v3454
  %v3456 = vpop.f32.mrb[0].mxu0
  %3457 = vmatprep.mubr.bf16.mxu0 0
  %3458 = vmatmul.mubr.bf16.gmra.mrb[0].mxu0 %v3290
  %v3459 = vpop.f32.mrb[0].mxu0
  %v3460 = vadd.f32 0.0, %v3459
  %v3461 = vpop.f32.mrb[0].mxu0
  %v3462 = vpop.f32.mrb[0].mxu0
  %v3463 = vadd.f32 0.0, %v3462
  %v3464 = vpop.f32.mrb[0].mxu0
  %3465 = vmatprep.mubr.bf16.mxu0 0
  %3466 = vmatmul.mubr.bf16.gmra.mrb[0].mxu0 %v3293
  %v3467 = vpop.f32.mrb[0].mxu0
  %v3468 = vadd.f32 0.0, %v3467
  %v3469 = vpop.f32.mrb[0].mxu0
  %v3470 = vpop.f32.mrb[0].mxu0
  %v3471 = vadd.f32 0.0, %v3470
  %v3472 = vpop.f32.mrb[0].mxu0
  %3473 = vmatprep.mubr.bf16.mxu0 0
  %3474 = vmatmul.mubr.bf16.gmra.mrb[0].mxu0 %v3296
  %v3475 = vpop.f32.mrb[0].mxu0
  %v3476 = vadd.f32 0.0, %v3475
  %v3477 = vpop.f32.mrb[0].mxu0
  %v3478 = vpop.f32.mrb[0].mxu0
  %v3479 = vadd.f32 0.0, %v3478
  %v3480 = vpop.f32.mrb[0].mxu0
  %3481 = vmatprep.mubr.bf16.mxu0 0
  %3482 = vmatmul.mubr.bf16.gmra.mrb[0].mxu0 %v3299
  %v3483 = vpop.f32.mrb[0].mxu0
  %v3484 = vadd.f32 0.0, %v3483
  %v3485 = vpop.f32.mrb[0].mxu0
  %v3486 = vpop.f32.mrb[0].mxu0
  %v3487 = vadd.f32 0.0, %v3486
  %v3488 = vpop.f32.mrb[0].mxu0
  %3489 = vmatprep.mubr.bf16.mxu0 0
  %3490 = vmatmul.mubr.bf16.gmra.mrb[0].mxu0 %v3302
  %v3491 = vpop.f32.mrb[0].mxu0
  %v3492 = vadd.f32 0.0, %v3491
  %v3493 = vpop.f32.mrb[0].mxu0
  %v3494 = vpop.f32.mrb[0].mxu0
  %v3495 = vadd.f32 0.0, %v3494
  %v3496 = vpop.f32.mrb[0].mxu0
  %3497 = vmatprep.mubr.bf16.mxu0 0
  %3498 = vmatmul.mubr.bf16.gmra.mrb[0].mxu0 %v3305
  %v3499 = vpop.f32.mrb[0].mxu0
  %v3500 = vadd.f32 0.0, %v3499
  %v3501 = vpop.f32.mrb[0].mxu0
  %v3502 = vpop.f32.mrb[0].mxu0
  %v3503 = vadd.f32 0.0, %v3502
  %v3504 = vpop.f32.mrb[0].mxu0
  %3505 = vmatprep.mubr.bf16.mxu0 0
  %3506 = vmatmul.mubr.bf16.gmra.mrb[0].mxu0 %v3308
  %v3507 = vpop.f32.mrb[0].mxu0
  %v3508 = vadd.f32 0.0, %v3507
  %v3509 = vpop.f32.mrb[0].mxu0
  %v3510 = vpop.f32.mrb[0].mxu0
  %v3511 = vadd.f32 0.0, %v3510
  %v3512 = vpop.f32.mrb[0].mxu0
  %3513 = vmatprep.mubr.bf16.mxu0 0
  %3514 = vmatmul.mubr.bf16.gmra.mrb[0].mxu0 %v3311
  %v3515 = vpop.f32.mrb[0].mxu0
  %v3516 = vadd.f32 0.0, %v3515
  %v3517 = vpop.f32.mrb[0].mxu0
  %v3518 = vpop.f32.mrb[0].mxu0
  %v3519 = vadd.f32 0.0, %v3518
  %v3520 = vpop.f32.mrb[0].mxu0
  %3521 = vmatprep.mubr.bf16.mxu0 0
  %3522 = vmatmul.mubr.bf16.gmra.mrb[0].mxu0 %v3314
  %v3523 = vpop.f32.mrb[0].mxu0
  %v3524 = vadd.f32 0.0, %v3523
  %v3525 = vpop.f32.mrb[0].mxu0
  %v3526 = vpop.f32.mrb[0].mxu0
  %v3527 = vadd.f32 0.0, %v3526
  %v3528 = vpop.f32.mrb[0].mxu0
  %3529 = vmatprep.mubr.bf16.mxu0 0
  %3530 = vmatmul.mubr.bf16.gmra.mrb[0].mxu0 %v3317
  %v3531 = vpop.f32.mrb[0].mxu0
  %v3532 = vadd.f32 0.0, %v3531
  %v3533 = vpop.f32.mrb[0].mxu0
  %v3534 = vpop.f32.mrb[0].mxu0
  %v3535 = vadd.f32 0.0, %v3534
  %v3536 = vpop.f32.mrb[0].mxu0
  %3537 = vmatprep.mubr.bf16.mxu0 0
  %3538 = vmatmul.mubr.bf16.gmra.mrb[0].mxu0 %v3320
  %v3539 = vpop.f32.mrb[0].mxu0
  %v3540 = vadd.f32 0.0, %v3539
  %v3541 = vpop.f32.mrb[0].mxu0
  %v3542 = vpop.f32.mrb[0].mxu0
  %v3543 = vadd.f32 0.0, %v3542
  %v3544 = vpop.f32.mrb[0].mxu0
  %3545 = vmatprep.mubr.bf16.mxu0 0
  %3546 = vmatmul.mubr.bf16.gmra.mrb[0].mxu0 %v3323
  %v3547 = vpop.f32.mrb[0].mxu0
  %v3548 = vadd.f32 0.0, %v3547
  %v3549 = vpop.f32.mrb[0].mxu0
  %v3550 = vpop.f32.mrb[0].mxu0
  %v3551 = vadd.f32 0.0, %v3550
  %v3552 = vpop.f32.mrb[0].mxu0
  %3553 = vmatprep.mubr.bf16.mxu0 0
  %3554 = vmatmul.mubr.bf16.gmra.mrb[0].mxu0 %v3326
  %v3555 = vpop.f32.mrb[0].mxu0
  %v3556 = vadd.f32 0.0, %v3555
  %v3557 = vpop.f32.mrb[0].mxu0
  %v3558 = vpop.f32.mrb[0].mxu0
  %v3559 = vadd.f32 0.0, %v3558
  %v3560 = vpop.f32.mrb[0].mxu0
  %3561 = vmatprep.mubr.bf16.mxu0 0
  %3562 = vmatmul.mubr.bf16.gmra.mrb[0].mxu0 %v3329
  %v3563 = vpop.f32.mrb[0].mxu0
  %v3564 = vadd.f32 0.0, %v3563
  %v3565 = vpop.f32.mrb[0].mxu0
  %v3566 = vpop.f32.mrb[0].mxu0
  %v3567 = vadd.f32 0.0, %v3566
  %v3568 = vpop.f32.mrb[0].mxu0
  %3569 = vmatprep.mubr.bf16.mxu0 0
  %3570 = vmatmul.mubr.bf16.gmra.mrb[0].mxu0 %v3332
  %v3571 = vpop.f32.mrb[0].mxu0
  %v3572 = vadd.f32 0.0, %v3571
  %v3573 = vpop.f32.mrb[0].mxu0
  %v3574 = vpop.f32.mrb[0].mxu0
  %v3575 = vadd.f32 0.0, %v3574
  %v3576 = vpop.f32.mrb[0].mxu0
  %3577 = vmatprep.mubr.bf16.mxu0 0
  %3578 = vmatmul.mubr.bf16.gmra.mrb[0].mxu0 %v3335
  %v3579 = vpop.f32.mrb[0].mxu0
  %v3580 = vadd.f32 0.0, %v3579
  %v3581 = vpop.f32.mrb[0].mxu0
  %v3582 = vpop.f32.mrb[0].mxu0
  %v3583 = vadd.f32 0.0, %v3582
  %v3584 = vpop.f32.mrb[0].mxu0
  %3585 = vmatprep.mubr.bf16.mxu0 0
  %3586 = vmatmul.mubr.bf16.gmra.mrb[0].mxu0 %v3338
  %v3587 = vpop.f32.mrb[0].mxu0
  %v3588 = vadd.f32 0.0, %v3587
  %v3589 = vpop.f32.mrb[0].mxu0
  %v3590 = vpop.f32.mrb[0].mxu0
  %v3591 = vadd.f32 0.0, %v3590
  %v3592 = vpop.f32.mrb[0].mxu0
  %3593 = vmatprep.mubr.bf16.mxu0 0
  %3594 = vmatmul.mubr.bf16.gmra.mrb[0].mxu0 %v3341
  %v3595 = vpop.f32.mrb[0].mxu0
  %v3596 = vadd.f32 0.0, %v3595
  %v3597 = vpop.f32.mrb[0].mxu0
  %v3598 = vpop.f32.mrb[0].mxu0
  %v3599 = vadd.f32 0.0, %v3598
  %v3600 = vpop.f32.mrb[0].mxu0
  %3601 = vmatprep.mubr.bf16.mxu0 0
  %3602 = vmatmul.mubr.bf16.gmra.mrb[0].mxu0 %v3344
  %v3603 = vpop.f32.mrb[0].mxu0
  %v3604 = vadd.f32 0.0, %v3603
  %v3605 = vpop.f32.mrb[0].mxu0
  %v3606 = vpop.f32.mrb[0].mxu0
  %v3607 = vadd.f32 0.0, %v3606
  %v3608 = vpop.f32.mrb[0].mxu0
  %3609 = vmatprep.mubr.bf16.mxu0 0
  %3610 = vmatmul.mubr.bf16.gmra.mrb[0].mxu0 %v3347
  %v3611 = vpop.f32.mrb[0].mxu0
  %v3612 = vadd.f32 0.0, %v3611
  %v3613 = vpop.f32.mrb[0].mxu0
  %v3614 = vpop.f32.mrb[0].mxu0
  %v3615 = vadd.f32 0.0, %v3614
  %v3616 = vpop.f32.mrb[0].mxu0
  %3617 = vmatprep.mubr.bf16.mxu0 0
  %3618 = vmatmul.mubr.bf16.gmra.mrb[0].mxu0 %v3350
  %v3619 = vpop.f32.mrb[0].mxu0
  %v3620 = vadd.f32 0.0, %v3619
  %v3621 = vpop.f32.mrb[0].mxu0
  %v3622 = vpop.f32.mrb[0].mxu0
  %v3623 = vadd.f32 0.0, %v3622
  %v3624 = vpop.f32.mrb[0].mxu0
  %3625 = vmatprep.mubr.bf16.mxu0 0
  %3626 = vmatmul.mubr.bf16.gmra.mrb[0].mxu0 %v3353
  %v3627 = vpop.f32.mrb[0].mxu0
  %v3628 = vadd.f32 0.0, %v3627
  %v3629 = vpop.f32.mrb[0].mxu0
  %v3630 = vpop.f32.mrb[0].mxu0
  %v3631 = vadd.f32 0.0, %v3630
  %v3632 = vpop.f32.mrb[0].mxu0
  %3633 = vmatprep.mubr.bf16.mxu0 0
  %3634 = vmatmul.mubr.bf16.gmra.mrb[0].mxu0 %v3356
  %v3635 = vpop.f32.mrb[0].mxu0
  %v3636 = vadd.f32 0.0, %v3635
  %v3637 = vpop.f32.mrb[0].mxu0
  %v3638 = vpop.f32.mrb[0].mxu0
  %v3639 = vadd.f32 0.0, %v3638
  %v3640 = vpop.f32.mrb[0].mxu0
  %3641 = vmatprep.mubr.bf16.mxu0 0
  %3642 = vmatmul.mubr.bf16.gmra.mrb[0].mxu0 %v3359
  %v3643 = vpop.f32.mrb[0].mxu0
  %v3644 = vadd.f32 0.0, %v3643
  %v3645 = vpop.f32.mrb[0].mxu0
  %v3646 = vpop.f32.mrb[0].mxu0
  %v3647 = vadd.f32 0.0, %v3646
  %v3648 = vpop.f32.mrb[0].mxu0
  %3649 = vdwg.mxu0
  %v3714 = vunpack.c.l.b16 %v2280
  %v3715 = vunpack.c.l.b16 %v2281
  %v3716 = vunpack.c.l.b16 %v2282
  %v3717 = vunpack.c.l.b16 %v2283
  %v3718 = vunpack.c.l.b16 %v2284
  %v3719 = vunpack.c.l.b16 %v2285
  %v3720 = vunpack.c.l.b16 %v2286
  %v3721 = vunpack.c.l.b16 %v2287
  %v3722 = vunpack.c.l.b16 %v2288
  %v3723 = vunpack.c.l.b16 %v2289
  %v3724 = vunpack.c.l.b16 %v2290
  %v3725 = vunpack.c.l.b16 %v2291
  %v3726 = vunpack.c.l.b16 %v2292
  %v3727 = vunpack.c.l.b16 %v2293
  %v3728 = vunpack.c.l.b16 %v2294
  %v3729 = vunpack.c.l.b16 %v2295
  %v3730 = vunpack.c.l.b16 %v2296
  %v3731 = vunpack.c.l.b16 %v2297
  %v3732 = vunpack.c.l.b16 %v2298
  %v3733 = vunpack.c.l.b16 %v2299
  %v3734 = vunpack.c.l.b16 %v2300
  %v3735 = vunpack.c.l.b16 %v2301
  %v3736 = vunpack.c.l.b16 %v2302
  %v3737 = vunpack.c.l.b16 %v2303
  %v3738 = vunpack.c.l.b16 %v2304
  %v3739 = vunpack.c.l.b16 %v2305
  %v3740 = vunpack.c.l.b16 %v2306
  %v3741 = vunpack.c.l.b16 %v2307
  %v3742 = vunpack.c.l.b16 %v2308
  %v3743 = vunpack.c.l.b16 %v2309
  %v3744 = vunpack.c.l.b16 %v2310
  %v3745 = vunpack.c.l.b16 %v2311
  %v3746 = vunpack.c.l.b16 %v2312
  %v3747 = vunpack.c.l.b16 %v2313
  %v3748 = vunpack.c.l.b16 %v2314
  %v3749 = vunpack.c.l.b16 %v2315
  %v3750 = vunpack.c.l.b16 %v2316
  %v3751 = vunpack.c.l.b16 %v2317
  %v3752 = vunpack.c.l.b16 %v2318
  %v3753 = vunpack.c.l.b16 %v2319
  %v3754 = vunpack.c.l.b16 %v2320
  %v3755 = vunpack.c.l.b16 %v2321
  %v3756 = vunpack.c.l.b16 %v2322
  %v3757 = vunpack.c.l.b16 %v2323
  %v3758 = vunpack.c.l.b16 %v2324
  %v3759 = vunpack.c.l.b16 %v2325
  %v3760 = vunpack.c.l.b16 %v2326
  %v3761 = vunpack.c.l.b16 %v2327
  %v3762 = vunpack.c.l.b16 %v2328
  %v3763 = vunpack.c.l.b16 %v2329
  %v3764 = vunpack.c.l.b16 %v2330
  %v3765 = vunpack.c.l.b16 %v2331
  %v3766 = vunpack.c.l.b16 %v2332
  %v3767 = vunpack.c.l.b16 %v2333
  %v3768 = vunpack.c.l.b16 %v2334
  %v3769 = vunpack.c.l.b16 %v2335
  %v3770 = vunpack.c.l.b16 %v2336
  %v3771 = vunpack.c.l.b16 %v2337
  %v3772 = vunpack.c.l.b16 %v2338
  %v3773 = vunpack.c.l.b16 %v2339
  %v3774 = vunpack.c.l.b16 %v2340
  %v3775 = vunpack.c.l.b16 %v2341
  %v3776 = vunpack.c.l.b16 %v2342
  %v3777 = vunpack.c.l.b16 %v2343
  %v3778 = vpack.c.b16 %v3715, %v3714
  %v3779 = vpack.c.b16 %v3717, %v3716
  %v3780 = vpack.c.b16 %v3719, %v3718
  %v3781 = vpack.c.b16 %v3721, %v3720
  %v3782 = vpack.c.b16 %v3723, %v3722
  %v3783 = vpack.c.b16 %v3725, %v3724
  %v3784 = vpack.c.b16 %v3727, %v3726
  %v3785 = vpack.c.b16 %v3729, %v3728
  %v3786 = vpack.c.b16 %v3731, %v3730
  %v3787 = vpack.c.b16 %v3733, %v3732
  %v3788 = vpack.c.b16 %v3735, %v3734
  %v3789 = vpack.c.b16 %v3737, %v3736
  %v3790 = vpack.c.b16 %v3739, %v3738
  %v3791 = vpack.c.b16 %v3741, %v3740
  %v3792 = vpack.c.b16 %v3743, %v3742
  %v3793 = vpack.c.b16 %v3745, %v3744
  %v3794 = vpack.c.b16 %v3747, %v3746
  %v3795 = vpack.c.b16 %v3749, %v3748
  %v3796 = vpack.c.b16 %v3751, %v3750
  %v3797 = vpack.c.b16 %v3753, %v3752
  %v3798 = vpack.c.b16 %v3755, %v3754
  %v3799 = vpack.c.b16 %v3757, %v3756
  %v3800 = vpack.c.b16 %v3759, %v3758
  %v3801 = vpack.c.b16 %v3761, %v3760
  %v3802 = vpack.c.b16 %v3763, %v3762
  %v3803 = vpack.c.b16 %v3765, %v3764
  %v3804 = vpack.c.b16 %v3767, %v3766
  %v3805 = vpack.c.b16 %v3769, %v3768
  %v3806 = vpack.c.b16 %v3771, %v3770
  %v3807 = vpack.c.b16 %v3773, %v3772
  %v3808 = vpack.c.b16 %v3775, %v3774
  %v3809 = vpack.c.b16 %v3777, %v3776
  %v3814 = vunpack.c.l.b16 %v2344
  %v3815 = vunpack.c.l.b16 %v2345
  %v3816 = vunpack.c.l.b16 %v2346
  %v3817 = vunpack.c.l.b16 %v2347
  %v3818 = vpack.c.b16 %v3815, %v3814
  %v3819 = vpack.c.b16 %v3817, %v3816
  %v3823 = vsel %vm3264, %v3778, 0
  %v3826 = vsel %vm3264, %v3779, 0
  %v3829 = vsel %vm3264, %v3780, 0
  %v3832 = vsel %vm3264, %v3781, 0
  %v3835 = vsel %vm3264, %v3782, 0
  %v3838 = vsel %vm3264, %v3783, 0
  %v3841 = vsel %vm3264, %v3784, 0
  %v3844 = vsel %vm3264, %v3785, 0
  %v3847 = vsel %vm3264, %v3786, 0
  %v3850 = vsel %vm3264, %v3787, 0
  %v3853 = vsel %vm3264, %v3788, 0
  %v3856 = vsel %vm3264, %v3789, 0
  %v3859 = vsel %vm3264, %v3790, 0
  %v3862 = vsel %vm3264, %v3791, 0
  %v3865 = vsel %vm3264, %v3792, 0
  %v3868 = vsel %vm3264, %v3793, 0
  %v3871 = vsel %vm3264, %v3794, 0
  %v3874 = vsel %vm3264, %v3795, 0
  %v3877 = vsel %vm3264, %v3796, 0
  %v3880 = vsel %vm3264, %v3797, 0
  %v3883 = vsel %vm3264, %v3798, 0
  %v3886 = vsel %vm3264, %v3799, 0
  %v3889 = vsel %vm3264, %v3800, 0
  %v3892 = vsel %vm3264, %v3801, 0
  %v3895 = vsel %vm3264, %v3802, 0
  %v3898 = vsel %vm3264, %v3803, 0
  %v3901 = vsel %vm3264, %v3804, 0
  %v3904 = vsel %vm3264, %v3805, 0
  %v3907 = vsel %vm3264, %v3806, 0
  %v3910 = vsel %vm3264, %v3807, 0
  %v3913 = vsel %vm3264, %v3808, 0
  %v3916 = vsel %vm3264, %v3809, 0
  %3918 = vmatprep.subr.bf16.mxu0 0
  %3919 = vmatpush1.bf16.msra.mxu0 %v3818
  %3920 = vmatprep.subr.bf16.mxu0 0
  %3921 = vmatpush1.bf16.msra.mxu0 %v3819
  %3922 = vmatprep.subr.bf16.mxu0 0
  %3923 = vmatpush1.bf16.msra.mxu0 0
  %3924 = vmatprep.subr.bf16.mxu0 0
  %3925 = vmatpush1.bf16.msra.mxu0 0
  %3926 = vmatprep.subr.bf16.mxu0 0
  %3927 = vmatpush1.bf16.msra.mxu0 0
  %3928 = vmatprep.subr.bf16.mxu0 0
  %3929 = vmatpush1.bf16.msra.mxu0 0
  %3930 = vmatprep.subr.bf16.mxu0 0
  %3931 = vmatpush1.bf16.msra.mxu0 0
  %3932 = vmatprep.subr.bf16.mxu0 0
  %3933 = vmatpush1.bf16.msra.mxu0 0
  %3934 = vmatprep.subr.bf16.mxu0 0
  %3935 = vmatpush1.bf16.msra.mxu0 0
  %3936 = vmatprep.subr.bf16.mxu0 0
  %3937 = vmatpush1.bf16.msra.mxu0 0
  %3938 = vmatprep.subr.bf16.mxu0 0
  %3939 = vmatpush1.bf16.msra.mxu0 0
  %3940 = vmatprep.subr.bf16.mxu0 0
  %3941 = vmatpush1.bf16.msra.mxu0 0
  %3942 = vmatprep.subr.bf16.mxu0 0
  %3943 = vmatpush1.bf16.msra.mxu0 0
  %3944 = vmatprep.subr.bf16.mxu0 0
  %3945 = vmatpush1.bf16.msra.mxu0 0
  %3946 = vmatprep.subr.bf16.mxu0 0
  %3947 = vmatpush1.bf16.msra.mxu0 0
  %3948 = vmatprep.subr.bf16.mxu0 0
  %3949 = vmatpush1.bf16.msra.mxu0 0
  %3950 = vmatprep.mubr.bf16.mxu0 0
  %3951 = vmatmul.mubr.bf16.gmra.mrb[0].mxu0 %v3823
  %v3952 = vpop.f32.mrb[0].mxu0
  %v3953 = vadd.f32 %v3396, %v3952
  %v3954 = vpop.f32.mrb[0].mxu0
  %v3955 = vpop.f32.mrb[0].mxu0
  %v3956 = vadd.f32 %v3399, %v3955
  %v3957 = vpop.f32.mrb[0].mxu0
  %3958 = vmatprep.mubr.bf16.mxu0 0
  %3959 = vmatmul.mubr.bf16.gmra.mrb[0].mxu0 %v3826
  %v3960 = vpop.f32.mrb[0].mxu0
  %v3961 = vadd.f32 %v3404, %v3960
  %v3962 = vpop.f32.mrb[0].mxu0
  %v3963 = vpop.f32.mrb[0].mxu0
  %v3964 = vadd.f32 %v3407, %v3963
  %v3965 = vpop.f32.mrb[0].mxu0
  %3966 = vmatprep.mubr.bf16.mxu0 0
  %3967 = vmatmul.mubr.bf16.gmra.mrb[0].mxu0 %v3829
  %v3968 = vpop.f32.mrb[0].mxu0
  %v3969 = vadd.f32 %v3412, %v3968
  %v3970 = vpop.f32.mrb[0].mxu0
  %v3971 = vpop.f32.mrb[0].mxu0
  %v3972 = vadd.f32 %v3415, %v3971
  %v3973 = vpop.f32.mrb[0].mxu0
  %3974 = vmatprep.mubr.bf16.mxu0 0
  %3975 = vmatmul.mubr.bf16.gmra.mrb[0].mxu0 %v3832
  %v3976 = vpop.f32.mrb[0].mxu0
  %v3977 = vadd.f32 %v3420, %v3976
  %v3978 = vpop.f32.mrb[0].mxu0
  %v3979 = vpop.f32.mrb[0].mxu0
  %v3980 = vadd.f32 %v3423, %v3979
  %v3981 = vpop.f32.mrb[0].mxu0
  %3982 = vmatprep.mubr.bf16.mxu0 0
  %3983 = vmatmul.mubr.bf16.gmra.mrb[0].mxu0 %v3835
  %v3984 = vpop.f32.mrb[0].mxu0
  %v3985 = vadd.f32 %v3428, %v3984
  %v3986 = vpop.f32.mrb[0].mxu0
  %v3987 = vpop.f32.mrb[0].mxu0
  %v3988 = vadd.f32 %v3431, %v3987
  %v3989 = vpop.f32.mrb[0].mxu0
  %3990 = vmatprep.mubr.bf16.mxu0 0
  %3991 = vmatmul.mubr.bf16.gmra.mrb[0].mxu0 %v3838
  %v3992 = vpop.f32.mrb[0].mxu0
  %v3993 = vadd.f32 %v3436, %v3992
  %v3994 = vpop.f32.mrb[0].mxu0
  %v3995 = vpop.f32.mrb[0].mxu0
  %v3996 = vadd.f32 %v3439, %v3995
  %v3997 = vpop.f32.mrb[0].mxu0
  %3998 = vmatprep.mubr.bf16.mxu0 0
  %3999 = vmatmul.mubr.bf16.gmra.mrb[0].mxu0 %v3841
  %v4000 = vpop.f32.mrb[0].mxu0
  %v4001 = vadd.f32 %v3444, %v4000
  %v4002 = vpop.f32.mrb[0].mxu0
  %v4003 = vpop.f32.mrb[0].mxu0
  %v4004 = vadd.f32 %v3447, %v4003
  %v4005 = vpop.f32.mrb[0].mxu0
  %4006 = vmatprep.mubr.bf16.mxu0 0
  %4007 = vmatmul.mubr.bf16.gmra.mrb[0].mxu0 %v3844
  %v4008 = vpop.f32.mrb[0].mxu0
  %v4009 = vadd.f32 %v3452, %v4008
  %v4010 = vpop.f32.mrb[0].mxu0
  %v4011 = vpop.f32.mrb[0].mxu0
  %v4012 = vadd.f32 %v3455, %v4011
  %v4013 = vpop.f32.mrb[0].mxu0
  %4014 = vmatprep.mubr.bf16.mxu0 0
  %4015 = vmatmul.mubr.bf16.gmra.mrb[0].mxu0 %v3847
  %v4016 = vpop.f32.mrb[0].mxu0
  %v4017 = vadd.f32 %v3460, %v4016
  %v4018 = vpop.f32.mrb[0].mxu0
  %v4019 = vpop.f32.mrb[0].mxu0
  %v4020 = vadd.f32 %v3463, %v4019
  %v4021 = vpop.f32.mrb[0].mxu0
  %4022 = vmatprep.mubr.bf16.mxu0 0
  %4023 = vmatmul.mubr.bf16.gmra.mrb[0].mxu0 %v3850
  %v4024 = vpop.f32.mrb[0].mxu0
  %v4025 = vadd.f32 %v3468, %v4024
  %v4026 = vpop.f32.mrb[0].mxu0
  %v4027 = vpop.f32.mrb[0].mxu0
  %v4028 = vadd.f32 %v3471, %v4027
  %v4029 = vpop.f32.mrb[0].mxu0
  %4030 = vmatprep.mubr.bf16.mxu0 0
  %4031 = vmatmul.mubr.bf16.gmra.mrb[0].mxu0 %v3853
  %v4032 = vpop.f32.mrb[0].mxu0
  %v4033 = vadd.f32 %v3476, %v4032
  %v4034 = vpop.f32.mrb[0].mxu0
  %v4035 = vpop.f32.mrb[0].mxu0
  %v4036 = vadd.f32 %v3479, %v4035
  %v4037 = vpop.f32.mrb[0].mxu0
  %4038 = vmatprep.mubr.bf16.mxu0 0
  %4039 = vmatmul.mubr.bf16.gmra.mrb[0].mxu0 %v3856
  %v4040 = vpop.f32.mrb[0].mxu0
  %v4041 = vadd.f32 %v3484, %v4040
  %v4042 = vpop.f32.mrb[0].mxu0
  %v4043 = vpop.f32.mrb[0].mxu0
  %v4044 = vadd.f32 %v3487, %v4043
  %v4045 = vpop.f32.mrb[0].mxu0
  %4046 = vmatprep.mubr.bf16.mxu0 0
  %4047 = vmatmul.mubr.bf16.gmra.mrb[0].mxu0 %v3859
  %v4048 = vpop.f32.mrb[0].mxu0
  %v4049 = vadd.f32 %v3492, %v4048
  %v4050 = vpop.f32.mrb[0].mxu0
  %v4051 = vpop.f32.mrb[0].mxu0
  %v4052 = vadd.f32 %v3495, %v4051
  %v4053 = vpop.f32.mrb[0].mxu0
  %4054 = vmatprep.mubr.bf16.mxu0 0
  %4055 = vmatmul.mubr.bf16.gmra.mrb[0].mxu0 %v3862
  %v4056 = vpop.f32.mrb[0].mxu0
  %v4057 = vadd.f32 %v3500, %v4056
  %v4058 = vpop.f32.mrb[0].mxu0
  %v4059 = vpop.f32.mrb[0].mxu0
  %v4060 = vadd.f32 %v3503, %v4059
  %v4061 = vpop.f32.mrb[0].mxu0
  %4062 = vmatprep.mubr.bf16.mxu0 0
  %4063 = vmatmul.mubr.bf16.gmra.mrb[0].mxu0 %v3865
  %v4064 = vpop.f32.mrb[0].mxu0
  %v4065 = vadd.f32 %v3508, %v4064
  %v4066 = vpop.f32.mrb[0].mxu0
  %v4067 = vpop.f32.mrb[0].mxu0
  %v4068 = vadd.f32 %v3511, %v4067
  %v4069 = vpop.f32.mrb[0].mxu0
  %4070 = vmatprep.mubr.bf16.mxu0 0
  %4071 = vmatmul.mubr.bf16.gmra.mrb[0].mxu0 %v3868
  %v4072 = vpop.f32.mrb[0].mxu0
  %v4073 = vadd.f32 %v3516, %v4072
  %v4074 = vpop.f32.mrb[0].mxu0
  %v4075 = vpop.f32.mrb[0].mxu0
  %v4076 = vadd.f32 %v3519, %v4075
  %v4077 = vpop.f32.mrb[0].mxu0
  %4078 = vmatprep.mubr.bf16.mxu0 0
  %4079 = vmatmul.mubr.bf16.gmra.mrb[0].mxu0 %v3871
  %v4080 = vpop.f32.mrb[0].mxu0
  %v4081 = vadd.f32 %v3524, %v4080
  %v4082 = vpop.f32.mrb[0].mxu0
  %v4083 = vpop.f32.mrb[0].mxu0
  %v4084 = vadd.f32 %v3527, %v4083
  %v4085 = vpop.f32.mrb[0].mxu0
  %4086 = vmatprep.mubr.bf16.mxu0 0
  %4087 = vmatmul.mubr.bf16.gmra.mrb[0].mxu0 %v3874
  %v4088 = vpop.f32.mrb[0].mxu0
  %v4089 = vadd.f32 %v3532, %v4088
  %v4090 = vpop.f32.mrb[0].mxu0
  %v4091 = vpop.f32.mrb[0].mxu0
  %v4092 = vadd.f32 %v3535, %v4091
  %v4093 = vpop.f32.mrb[0].mxu0
  %4094 = vmatprep.mubr.bf16.mxu0 0
  %4095 = vmatmul.mubr.bf16.gmra.mrb[0].mxu0 %v3877
  %v4096 = vpop.f32.mrb[0].mxu0
  %v4097 = vadd.f32 %v3540, %v4096
  %v4098 = vpop.f32.mrb[0].mxu0
  %v4099 = vpop.f32.mrb[0].mxu0
  %v4100 = vadd.f32 %v3543, %v4099
  %v4101 = vpop.f32.mrb[0].mxu0
  %4102 = vmatprep.mubr.bf16.mxu0 0
  %4103 = vmatmul.mubr.bf16.gmra.mrb[0].mxu0 %v3880
  %v4104 = vpop.f32.mrb[0].mxu0
  %v4105 = vadd.f32 %v3548, %v4104
  %v4106 = vpop.f32.mrb[0].mxu0
  %v4107 = vpop.f32.mrb[0].mxu0
  %v4108 = vadd.f32 %v3551, %v4107
  %v4109 = vpop.f32.mrb[0].mxu0
  %4110 = vmatprep.mubr.bf16.mxu0 0
  %4111 = vmatmul.mubr.bf16.gmra.mrb[0].mxu0 %v3883
  %v4112 = vpop.f32.mrb[0].mxu0
  %v4113 = vadd.f32 %v3556, %v4112
  %v4114 = vpop.f32.mrb[0].mxu0
  %v4115 = vpop.f32.mrb[0].mxu0
  %v4116 = vadd.f32 %v3559, %v4115
  %v4117 = vpop.f32.mrb[0].mxu0
  %4118 = vmatprep.mubr.bf16.mxu0 0
  %4119 = vmatmul.mubr.bf16.gmra.mrb[0].mxu0 %v3886
  %v4120 = vpop.f32.mrb[0].mxu0
  %v4121 = vadd.f32 %v3564, %v4120
  %v4122 = vpop.f32.mrb[0].mxu0
  %v4123 = vpop.f32.mrb[0].mxu0
  %v4124 = vadd.f32 %v3567, %v4123
  %v4125 = vpop.f32.mrb[0].mxu0
  %4126 = vmatprep.mubr.bf16.mxu0 0
  %4127 = vmatmul.mubr.bf16.gmra.mrb[0].mxu0 %v3889
  %v4128 = vpop.f32.mrb[0].mxu0
  %v4129 = vadd.f32 %v3572, %v4128
  %v4130 = vpop.f32.mrb[0].mxu0
  %v4131 = vpop.f32.mrb[0].mxu0
  %v4132 = vadd.f32 %v3575, %v4131
  %v4133 = vpop.f32.mrb[0].mxu0
  %4134 = vmatprep.mubr.bf16.mxu0 0
  %4135 = vmatmul.mubr.bf16.gmra.mrb[0].mxu0 %v3892
  %v4136 = vpop.f32.mrb[0].mxu0
  %v4137 = vadd.f32 %v3580, %v4136
  %v4138 = vpop.f32.mrb[0].mxu0
  %v4139 = vpop.f32.mrb[0].mxu0
  %v4140 = vadd.f32 %v3583, %v4139
  %v4141 = vpop.f32.mrb[0].mxu0
  %4142 = vmatprep.mubr.bf16.mxu0 0
  %4143 = vmatmul.mubr.bf16.gmra.mrb[0].mxu0 %v3895
  %v4144 = vpop.f32.mrb[0].mxu0
  %v4145 = vadd.f32 %v3588, %v4144
  %v4146 = vpop.f32.mrb[0].mxu0
  %v4147 = vpop.f32.mrb[0].mxu0
  %v4148 = vadd.f32 %v3591, %v4147
  %v4149 = vpop.f32.mrb[0].mxu0
  %4150 = vmatprep.mubr.bf16.mxu0 0
  %4151 = vmatmul.mubr.bf16.gmra.mrb[0].mxu0 %v3898
  %v4152 = vpop.f32.mrb[0].mxu0
  %v4153 = vadd.f32 %v3596, %v4152
  %v4154 = vpop.f32.mrb[0].mxu0
  %v4155 = vpop.f32.mrb[0].mxu0
  %v4156 = vadd.f32 %v3599, %v4155
  %v4157 = vpop.f32.mrb[0].mxu0
  %4158 = vmatprep.mubr.bf16.mxu0 0
  %4159 = vmatmul.mubr.bf16.gmra.mrb[0].mxu0 %v3901
  %v4160 = vpop.f32.mrb[0].mxu0
  %v4161 = vadd.f32 %v3604, %v4160
  %v4162 = vpop.f32.mrb[0].mxu0
  %v4163 = vpop.f32.mrb[0].mxu0
  %v4164 = vadd.f32 %v3607, %v4163
  %v4165 = vpop.f32.mrb[0].mxu0
  %4166 = vmatprep.mubr.bf16.mxu0 0
  %4167 = vmatmul.mubr.bf16.gmra.mrb[0].mxu0 %v3904
  %v4168 = vpop.f32.mrb[0].mxu0
  %v4169 = vadd.f32 %v3612, %v4168
  %v4170 = vpop.f32.mrb[0].mxu0
  %v4171 = vpop.f32.mrb[0].mxu0
  %v4172 = vadd.f32 %v3615, %v4171
  %v4173 = vpop.f32.mrb[0].mxu0
  %4174 = vmatprep.mubr.bf16.mxu0 0
  %4175 = vmatmul.mubr.bf16.gmra.mrb[0].mxu0 %v3907
  %v4176 = vpop.f32.mrb[0].mxu0
  %v4177 = vadd.f32 %v3620, %v4176
  %v4178 = vpop.f32.mrb[0].mxu0
  %v4179 = vpop.f32.mrb[0].mxu0
  %v4180 = vadd.f32 %v3623, %v4179
  %v4181 = vpop.f32.mrb[0].mxu0
  %4182 = vmatprep.mubr.bf16.mxu0 0
  %4183 = vmatmul.mubr.bf16.gmra.mrb[0].mxu0 %v3910
  %v4184 = vpop.f32.mrb[0].mxu0
  %v4185 = vadd.f32 %v3628, %v4184
  %v4186 = vpop.f32.mrb[0].mxu0
  %v4187 = vpop.f32.mrb[0].mxu0
  %v4188 = vadd.f32 %v3631, %v4187
  %v4189 = vpop.f32.mrb[0].mxu0
  %4190 = vmatprep.mubr.bf16.mxu0 0
  %4191 = vmatmul.mubr.bf16.gmra.mrb[0].mxu0 %v3913
  %v4192 = vpop.f32.mrb[0].mxu0
  %v4193 = vadd.f32 %v3636, %v4192
  %v4194 = vpop.f32.mrb[0].mxu0
  %v4195 = vpop.f32.mrb[0].mxu0
  %v4196 = vadd.f32 %v3639, %v4195
  %v4197 = vpop.f32.mrb[0].mxu0
  %4198 = vmatprep.mubr.bf16.mxu0 0
  %4199 = vmatmul.mubr.bf16.gmra.mrb[0].mxu0 %v3916
  %v4200 = vpop.f32.mrb[0].mxu0
  %v4201 = vadd.f32 %v3644, %v4200
  %v4202 = vpop.f32.mrb[0].mxu0
  %v4203 = vpop.f32.mrb[0].mxu0
  %v4204 = vadd.f32 %v3647, %v4203
  %v4205 = vpop.f32.mrb[0].mxu0
  %4206 = vdwg.mxu0
  %v4207 = vld [vmem:[#allocation2] sm:$0xe]
  %v4208 = vld [vmem:[#allocation2 + $0xc] sm:$0xe]
  %v4209 = vld [vmem:[#allocation2 + $0x18] sm:$0xe]
  %v4210 = vld [vmem:[#allocation2 + $0x24] sm:$0xe]
  %v4211 = vld [vmem:[#allocation2 + $0x30] sm:$0xe]
  %v4212 = vld [vmem:[#allocation2 + $0x3c] sm:$0xe]
  %v4213 = vld [vmem:[#allocation2 + $0x48] sm:$0xe]
  %v4214 = vld [vmem:[#allocation2 + $0x54] sm:$0xe]
  %v4215 = vld [vmem:[#allocation2 + $0x60] sm:$0xe]
  %v4216 = vld [vmem:[#allocation2 + $0x6c] sm:$0xe]
  %v4217 = vld [vmem:[#allocation2 + $0x78] sm:$0xe]
  %v4218 = vld [vmem:[#allocation2 + $0x84] sm:$0xe]
  %v4219 = vld [vmem:[#allocation2 + $0x90] sm:$0xe]
  %v4220 = vld [vmem:[#allocation2 + $0x9c] sm:$0xe]
  %v4221 = vld [vmem:[#allocation2 + $0xa8] sm:$0xe]
  %v4222 = vld [vmem:[#allocation2 + $0xb4] sm:$0xe]
  %v4223 = vld [vmem:[#allocation2 + $0xd8] sm:$0xe]
  %v4224 = vld [vmem:[#allocation2 + $0xe4] sm:$0xe]
  %v4225 = vld [vmem:[#allocation2 + $0xf0] sm:$0xe]
  %v4226 = vld [vmem:[#allocation2 + $0xfc] sm:$0xe]
  %v4227 = vld [vmem:[#allocation2 + $0x108] sm:$0xe]
  %v4228 = vld [vmem:[#allocation2 + $0x114] sm:$0xe]
  %v4229 = vld [vmem:[#allocation2 + $0x120] sm:$0xe]
  %v4230 = vld [vmem:[#allocation2 + $0x12c] sm:$0xe]
  %v4231 = vld [vmem:[#allocation2 + $0x138] sm:$0xe]
  %v4232 = vld [vmem:[#allocation2 + $0x144] sm:$0xe]
  %v4233 = vld [vmem:[#allocation2 + $0x150] sm:$0xe]
  %v4234 = vld [vmem:[#allocation2 + $0x15c] sm:$0xe]
  %v4235 = vld [vmem:[#allocation2 + $0x168] sm:$0xe]
  %v4236 = vld [vmem:[#allocation2 + $0x174] sm:$0xe]
  %v4237 = vld [vmem:[#allocation2 + $0x180] sm:$0xe]
  %v4238 = vld [vmem:[#allocation2 + $0x18c] sm:$0xe]
  %vm4303 = vcmask 1042432
  %vm4304 = vcmask 1046532
  %vm4305 = vmor %vm4303, %vm4304
  %v4306 = vrot.slane %v4207, 5
  %v4307 = vrot.slane %v4306, 4
  %v4308 = vrot.slane %v2281, 5
  %v4309 = vsel %vm4305, %v4307, %v4308
  %v4310 = vrot.slane %v4308, 4
  %v4311 = vrot.slane %v2348, 5
  %v4312 = vsel %vm4305, %v4310, %v4311
  %v4313 = vrot.slane %v4208, 5
  %v4314 = vrot.slane %v4313, 4
  %v4315 = vrot.slane %v2283, 5
  %v4316 = vsel %vm4305, %v4314, %v4315
  %v4317 = vrot.slane %v4315, 4
  %v4318 = vrot.slane %v2349, 5
  %v4319 = vsel %vm4305, %v4317, %v4318
  %v4320 = vrot.slane %v4209, 5
  %v4321 = vrot.slane %v4320, 4
  %v4322 = vrot.slane %v2285, 5
  %v4323 = vsel %vm4305, %v4321, %v4322
  %v4324 = vrot.slane %v4322, 4
  %v4325 = vrot.slane %v2350, 5
  %v4326 = vsel %vm4305, %v4324, %v4325
  %v4327 = vrot.slane %v4210, 5
  %v4328 = vrot.slane %v4327, 4
  %v4329 = vrot.slane %v2287, 5
  %v4330 = vsel %vm4305, %v4328, %v4329
  %v4331 = vrot.slane %v4329, 4
  %v4332 = vrot.slane %v2351, 5
  %v4333 = vsel %vm4305, %v4331, %v4332
  %v4334 = vrot.slane %v4211, 5
  %v4335 = vrot.slane %v4334, 4
  %v4336 = vrot.slane %v2289, 5
  %v4337 = vsel %vm4305, %v4335, %v4336
  %v4338 = vrot.slane %v4336, 4
  %v4339 = vrot.slane %v2352, 5
  %v4340 = vsel %vm4305, %v4338, %v4339
  %v4341 = vrot.slane %v4212, 5
  %v4342 = vrot.slane %v4341, 4
  %v4343 = vrot.slane %v2291, 5
  %v4344 = vsel %vm4305, %v4342, %v4343
  %v4345 = vrot.slane %v4343, 4
  %v4346 = vrot.slane %v2353, 5
  %v4347 = vsel %vm4305, %v4345, %v4346
  %v4348 = vrot.slane %v4213, 5
  %v4349 = vrot.slane %v4348, 4
  %v4350 = vrot.slane %v2293, 5
  %v4351 = vsel %vm4305, %v4349, %v4350
  %v4352 = vrot.slane %v4350, 4
  %v4353 = vrot.slane %v2354, 5
  %v4354 = vsel %vm4305, %v4352, %v4353
  %v4355 = vrot.slane %v4214, 5
  %v4356 = vrot.slane %v4355, 4
  %v4357 = vrot.slane %v2295, 5
  %v4358 = vsel %vm4305, %v4356, %v4357
  %v4359 = vrot.slane %v4357, 4
  %v4360 = vrot.slane %v2355, 5
  %v4361 = vsel %vm4305, %v4359, %v4360
  %v4362 = vrot.slane %v4215, 5
  %v4363 = vrot.slane %v4362, 4
  %v4364 = vrot.slane %v2297, 5
  %v4365 = vsel %vm4305, %v4363, %v4364
  %v4366 = vrot.slane %v4364, 4
  %v4367 = vrot.slane %v2356, 5
  %v4368 = vsel %vm4305, %v4366, %v4367
  %v4369 = vrot.slane %v4216, 5
  %v4370 = vrot.slane %v4369, 4
  %v4371 = vrot.slane %v2299, 5
  %v4372 = vsel %vm4305, %v4370, %v4371
  %v4373 = vrot.slane %v4371, 4
  %v4374 = vrot.slane %v2357, 5
  %v4375 = vsel %vm4305, %v4373, %v4374
  %v4376 = vrot.slane %v4217, 5
  %v4377 = vrot.slane %v4376, 4
  %v4378 = vrot.slane %v2301, 5
  %v4379 = vsel %vm4305, %v4377, %v4378
  %v4380 = vrot.slane %v4378, 4
  %v4381 = vrot.slane %v2358, 5
  %v4382 = vsel %vm4305, %v4380, %v4381
  %v4383 = vrot.slane %v4218, 5
  %v4384 = vrot.slane %v4383, 4
  %v4385 = vrot.slane %v2303, 5
  %v4386 = vsel %vm4305, %v4384, %v4385
  %v4387 = vrot.slane %v4385, 4
  %v4388 = vrot.slane %v2359, 5
  %v4389 = vsel %vm4305, %v4387, %v4388
  %v4390 = vrot.slane %v4219, 5
  %v4391 = vrot.slane %v4390, 4
  %v4392 = vrot.slane %v2305, 5
  %v4393 = vsel %vm4305, %v4391, %v4392
  %v4394 = vrot.slane %v4392, 4
  %v4395 = vrot.slane %v2360, 5
  %v4396 = vsel %vm4305, %v4394, %v4395
  %v4397 = vrot.slane %v4220, 5
  %v4398 = vrot.slane %v4397, 4
  %v4399 = vrot.slane %v2307, 5
  %v4400 = vsel %vm4305, %v4398, %v4399
  %v4401 = vrot.slane %v4399, 4
  %v4402 = vrot.slane %v2361, 5
  %v4403 = vsel %vm4305, %v4401, %v4402
  %v4404 = vrot.slane %v4221, 5
  %v4405 = vrot.slane %v4404, 4
  %v4406 = vrot.slane %v2309, 5
  %v4407 = vsel %vm4305, %v4405, %v4406
  %v4408 = vrot.slane %v4406, 4
  %v4409 = vrot.slane %v2362, 5
  %v4410 = vsel %vm4305, %v4408, %v4409
  %v4411 = vrot.slane %v4222, 5
  %v4412 = vrot.slane %v4411, 4
  %v4413 = vrot.slane %v2311, 5
  %v4414 = vsel %vm4305, %v4412, %v4413
  %v4415 = vrot.slane %v4413, 4
  %v4416 = vrot.slane %v2363, 5
  %v4417 = vsel %vm4305, %v4415, %v4416
  %v4418 = vrot.slane %v4223, 5
  %v4419 = vrot.slane %v4418, 4
  %v4420 = vrot.slane %v2313, 5
  %v4421 = vsel %vm4305, %v4419, %v4420
  %v4422 = vrot.slane %v4420, 4
  %v4423 = vrot.slane %v2364, 5
  %v4424 = vsel %vm4305, %v4422, %v4423
  %v4425 = vrot.slane %v4224, 5
  %v4426 = vrot.slane %v4425, 4
  %v4427 = vrot.slane %v2315, 5
  %v4428 = vsel %vm4305, %v4426, %v4427
  %v4429 = vrot.slane %v4427, 4
  %v4430 = vrot.slane %v2365, 5
  %v4431 = vsel %vm4305, %v4429, %v4430
  %v4432 = vrot.slane %v4225, 5
  %v4433 = vrot.slane %v4432, 4
  %v4434 = vrot.slane %v2317, 5
  %v4435 = vsel %vm4305, %v4433, %v4434
  %v4436 = vrot.slane %v4434, 4
  %v4437 = vrot.slane %v2366, 5
  %v4438 = vsel %vm4305, %v4436, %v4437
  %v4439 = vrot.slane %v4226, 5
  %v4440 = vrot.slane %v4439, 4
  %v4441 = vrot.slane %v2319, 5
  %v4442 = vsel %vm4305, %v4440, %v4441
  %v4443 = vrot.slane %v4441, 4
  %v4444 = vrot.slane %v2367, 5
  %v4445 = vsel %vm4305, %v4443, %v4444
  %v4446 = vrot.slane %v4227, 5
  %v4447 = vrot.slane %v4446, 4
  %v4448 = vrot.slane %v2321, 5
  %v4449 = vsel %vm4305, %v4447, %v4448
  %v4450 = vrot.slane %v4448, 4
  %v4451 = vrot.slane %v2368, 5
  %v4452 = vsel %vm4305, %v4450, %v4451
  %v4453 = vrot.slane %v4228, 5
  %v4454 = vrot.slane %v4453, 4
  %v4455 = vrot.slane %v2323, 5
  %v4456 = vsel %vm4305, %v4454, %v4455
  %v4457 = vrot.slane %v4455, 4
  %v4458 = vrot.slane %v2369, 5
  %v4459 = vsel %vm4305, %v4457, %v4458
  %v4460 = vrot.slane %v4229, 5
  %v4461 = vrot.slane %v4460, 4
  %v4462 = vrot.slane %v2325, 5
  %v4463 = vsel %vm4305, %v4461, %v4462
  %v4464 = vrot.slane %v4462, 4
  %v4465 = vrot.slane %v2370, 5
  %v4466 = vsel %vm4305, %v4464, %v4465
  %v4467 = vrot.slane %v4230, 5
  %v4468 = vrot.slane %v4467, 4
  %v4469 = vrot.slane %v2327, 5
  %v4470 = vsel %vm4305, %v4468, %v4469
  %v4471 = vrot.slane %v4469, 4
  %v4472 = vrot.slane %v2371, 5
  %v4473 = vsel %vm4305, %v4471, %v4472
  %v4474 = vrot.slane %v4231, 5
  %v4475 = vrot.slane %v4474, 4
  %v4476 = vrot.slane %v2329, 5
  %v4477 = vsel %vm4305, %v4475, %v4476
  %v4478 = vrot.slane %v4476, 4
  %v4479 = vrot.slane %v2372, 5
  %v4480 = vsel %vm4305, %v4478, %v4479
  %v4481 = vrot.slane %v4232, 5
  %v4482 = vrot.slane %v4481, 4
  %v4483 = vrot.slane %v2331, 5
  %v4484 = vsel %vm4305, %v4482, %v4483
  %v4485 = vrot.slane %v4483, 4
  %v4486 = vrot.slane %v2373, 5
  %v4487 = vsel %vm4305, %v4485, %v4486
  %v4488 = vrot.slane %v4233, 5
  %v4489 = vrot.slane %v4488, 4
  %v4490 = vrot.slane %v2333, 5
  %v4491 = vsel %vm4305, %v4489, %v4490
  %v4492 = vrot.slane %v4490, 4
  %v4493 = vrot.slane %v2374, 5
  %v4494 = vsel %vm4305, %v4492, %v4493
  %v4495 = vrot.slane %v4234, 5
  %v4496 = vrot.slane %v4495, 4
  %v4497 = vrot.slane %v2335, 5
  %v4498 = vsel %vm4305, %v4496, %v4497
  %v4499 = vrot.slane %v4497, 4
  %v4500 = vrot.slane %v2375, 5
  %v4501 = vsel %vm4305, %v4499, %v4500
  %v4502 = vrot.slane %v4235, 5
  %v4503 = vrot.slane %v4502, 4
  %v4504 = vrot.slane %v2337, 5
  %v4505 = vsel %vm4305, %v4503, %v4504
  %v4506 = vrot.slane %v4504, 4
  %v4507 = vrot.slane %v2376, 5
  %v4508 = vsel %vm4305, %v4506, %v4507
  %v4509 = vrot.slane %v4236, 5
  %v4510 = vrot.slane %v4509, 4
  %v4511 = vrot.slane %v2339, 5
  %v4512 = vsel %vm4305, %v4510, %v4511
  %v4513 = vrot.slane %v4511, 4
  %v4514 = vrot.slane %v2377, 5
  %v4515 = vsel %vm4305, %v4513, %v4514
  %v4516 = vrot.slane %v4237, 5
  %v4517 = vrot.slane %v4516, 4
  %v4518 = vrot.slane %v2341, 5
  %v4519 = vsel %vm4305, %v4517, %v4518
  %v4520 = vrot.slane %v4518, 4
  %v4521 = vrot.slane %v2378, 5
  %v4522 = vsel %vm4305, %v4520, %v4521
  %v4523 = vrot.slane %v4238, 5
  %v4524 = vrot.slane %v4523, 4
  %v4525 = vrot.slane %v2343, 5
  %v4526 = vsel %vm4305, %v4524, %v4525
  %v4527 = vrot.slane %v4525, 4
  %v4528 = vrot.slane %v2379, 5
  %v4529 = vsel %vm4305, %v4527, %v4528
  %s4530 = scalar_lea.vmem %s4, 32
  %v4531 = vld [vmem:[%s4530] sm:$0xf]
  %v4532 = vld [vmem:[%s4530 + $0x4] sm:$0xf]
  %v4533 = vld [vmem:[%s4530 + $0x8] sm:$0xf]
  %v4534 = vld [vmem:[%s4530 + $0xc] sm:$0xf]
  %v4535 = vunpack.c.l.b16 %v4309
  %v4536 = vunpack.c.l.b16 %v4312
  %v4537 = vunpack.c.l.b16 %v4316
  %v4538 = vunpack.c.l.b16 %v4319
  %v4539 = vunpack.c.l.b16 %v4323
  %v4540 = vunpack.c.l.b16 %v4326
  %v4541 = vunpack.c.l.b16 %v4330
  %v4542 = vunpack.c.l.b16 %v4333
  %v4543 = vunpack.c.l.b16 %v4337
  %v4544 = vunpack.c.l.b16 %v4340
  %v4545 = vunpack.c.l.b16 %v4344
  %v4546 = vunpack.c.l.b16 %v4347
  %v4547 = vunpack.c.l.b16 %v4351
  %v4548 = vunpack.c.l.b16 %v4354
  %v4549 = vunpack.c.l.b16 %v4358
  %v4550 = vunpack.c.l.b16 %v4361
  %v4551 = vunpack.c.l.b16 %v4365
  %v4552 = vunpack.c.l.b16 %v4368
  %v4553 = vunpack.c.l.b16 %v4372
  %v4554 = vunpack.c.l.b16 %v4375
  %v4555 = vunpack.c.l.b16 %v4379
  %v4556 = vunpack.c.l.b16 %v4382
  %v4557 = vunpack.c.l.b16 %v4386
  %v4558 = vunpack.c.l.b16 %v4389
  %v4559 = vunpack.c.l.b16 %v4393
  %v4560 = vunpack.c.l.b16 %v4396
  %v4561 = vunpack.c.l.b16 %v4400
  %v4562 = vunpack.c.l.b16 %v4403
  %v4563 = vunpack.c.l.b16 %v4407
  %v4564 = vunpack.c.l.b16 %v4410
  %v4565 = vunpack.c.l.b16 %v4414
  %v4566 = vunpack.c.l.b16 %v4417
  %v4567 = vunpack.c.l.b16 %v4421
  %v4568 = vunpack.c.l.b16 %v4424
  %v4569 = vunpack.c.l.b16 %v4428
  %v4570 = vunpack.c.l.b16 %v4431
  %v4571 = vunpack.c.l.b16 %v4435
  %v4572 = vunpack.c.l.b16 %v4438
  %v4573 = vunpack.c.l.b16 %v4442
  %v4574 = vunpack.c.l.b16 %v4445
  %v4575 = vunpack.c.l.b16 %v4449
  %v4576 = vunpack.c.l.b16 %v4452
  %v4577 = vunpack.c.l.b16 %v4456
  %v4578 = vunpack.c.l.b16 %v4459
  %v4579 = vunpack.c.l.b16 %v4463
  %v4580 = vunpack.c.l.b16 %v4466
  %v4581 = vunpack.c.l.b16 %v4470
  %v4582 = vunpack.c.l.b16 %v4473
  %v4583 = vunpack.c.l.b16 %v4477
  %v4584 = vunpack.c.l.b16 %v4480
  %v4585 = vunpack.c.l.b16 %v4484
  %v4586 = vunpack.c.l.b16 %v4487
  %v4587 = vunpack.c.l.b16 %v4491
  %v4588 = vunpack.c.l.b16 %v4494
  %v4589 = vunpack.c.l.b16 %v4498
  %v4590 = vunpack.c.l.b16 %v4501
  %v4591 = vunpack.c.l.b16 %v4505
  %v4592 = vunpack.c.l.b16 %v4508
  %v4593 = vunpack.c.l.b16 %v4512
  %v4594 = vunpack.c.l.b16 %v4515
  %v4595 = vunpack.c.l.b16 %v4519
  %v4596 = vunpack.c.l.b16 %v4522
  %v4597 = vunpack.c.l.b16 %v4526
  %v4598 = vunpack.c.l.b16 %v4529
  %v4599 = vpack.c.b16 %v4536, %v4535
  %v4600 = vpack.c.b16 %v4538, %v4537
  %v4601 = vpack.c.b16 %v4540, %v4539
  %v4602 = vpack.c.b16 %v4542, %v4541
  %v4603 = vpack.c.b16 %v4544, %v4543
  %v4604 = vpack.c.b16 %v4546, %v4545
  %v4605 = vpack.c.b16 %v4548, %v4547
  %v4606 = vpack.c.b16 %v4550, %v4549
  %v4607 = vpack.c.b16 %v4552, %v4551
  %v4608 = vpack.c.b16 %v4554, %v4553
  %v4609 = vpack.c.b16 %v4556, %v4555
  %v4610 = vpack.c.b16 %v4558, %v4557
  %v4611 = vpack.c.b16 %v4560, %v4559
  %v4612 = vpack.c.b16 %v4562, %v4561
  %v4613 = vpack.c.b16 %v4564, %v4563
  %v4614 = vpack.c.b16 %v4566, %v4565
  %v4615 = vpack.c.b16 %v4568, %v4567
  %v4616 = vpack.c.b16 %v4570, %v4569
  %v4617 = vpack.c.b16 %v4572, %v4571
  %v4618 = vpack.c.b16 %v4574, %v4573
  %v4619 = vpack.c.b16 %v4576, %v4575
  %v4620 = vpack.c.b16 %v4578, %v4577
  %v4621 = vpack.c.b16 %v4580, %v4579
  %v4622 = vpack.c.b16 %v4582, %v4581
  %v4623 = vpack.c.b16 %v4584, %v4583
  %v4624 = vpack.c.b16 %v4586, %v4585
  %v4625 = vpack.c.b16 %v4588, %v4587
  %v4626 = vpack.c.b16 %v4590, %v4589
  %v4627 = vpack.c.b16 %v4592, %v4591
  %v4628 = vpack.c.b16 %v4594, %v4593
  %v4629 = vpack.c.b16 %v4596, %v4595
  %v4630 = vpack.c.b16 %v4598, %v4597
  %v4635 = vunpack.c.l.b16 %v4531
  %v4636 = vunpack.c.l.b16 %v4532
  %v4637 = vunpack.c.l.b16 %v4533
  %v4638 = vunpack.c.l.b16 %v4534
  %v4639 = vpack.c.b16 %v4636, %v4635
  %v4640 = vpack.c.b16 %v4638, %v4637
  %v4644 = vsel %vm3264, %v4599, 0
  %v4647 = vsel %vm3264, %v4600, 0
  %v4650 = vsel %vm3264, %v4601, 0
  %v4653 = vsel %vm3264, %v4602, 0
  %v4656 = vsel %vm3264, %v4603, 0
  %v4659 = vsel %vm3264, %v4604, 0
  %v4662 = vsel %vm3264, %v4605, 0
  %v4665 = vsel %vm3264, %v4606, 0
  %v4668 = vsel %vm3264, %v4607, 0
  %v4671 = vsel %vm3264, %v4608, 0
  %v4674 = vsel %vm3264, %v4609, 0
  %v4677 = vsel %vm3264, %v4610, 0
  %v4680 = vsel %vm3264, %v4611, 0
  %v4683 = vsel %vm3264, %v4612, 0
  %v4686 = vsel %vm3264, %v4613, 0
  %v4689 = vsel %vm3264, %v4614, 0
  %v4692 = vsel %vm3264, %v4615, 0
  %v4695 = vsel %vm3264, %v4616, 0
  %v4698 = vsel %vm3264, %v4617, 0
  %v4701 = vsel %vm3264, %v4618, 0
  %v4704 = vsel %vm3264, %v4619, 0
  %v4707 = vsel %vm3264, %v4620, 0
  %v4710 = vsel %vm3264, %v4621, 0
  %v4713 = vsel %vm3264, %v4622, 0
  %v4716 = vsel %vm3264, %v4623, 0
  %v4719 = vsel %vm3264, %v4624, 0
  %v4722 = vsel %vm3264, %v4625, 0
  %v4725 = vsel %vm3264, %v4626, 0
  %v4728 = vsel %vm3264, %v4627, 0
  %v4731 = vsel %vm3264, %v4628, 0
  %v4734 = vsel %vm3264, %v4629, 0
  %v4737 = vsel %vm3264, %v4630, 0
  %4739 = vmatprep.subr.bf16.mxu0 0
  %4740 = vmatpush1.bf16.msra.mxu0 %v4639
  %4741 = vmatprep.subr.bf16.mxu0 0
  %4742 = vmatpush1.bf16.msra.mxu0 %v4640
  %4743 = vmatprep.subr.bf16.mxu0 0
  %4744 = vmatpush1.bf16.msra.mxu0 0
  %4745 = vmatprep.subr.bf16.mxu0 0
  %4746 = vmatpush1.bf16.msra.mxu0 0
  %4747 = vmatprep.subr.bf16.mxu0 0
  %4748 = vmatpush1.bf16.msra.mxu0 0
  %4749 = vmatprep.subr.bf16.mxu0 0
  %4750 = vmatpush1.bf16.msra.mxu0 0
  %4751 = vmatprep.subr.bf16.mxu0 0
  %4752 = vmatpush1.bf16.msra.mxu0 0
  %4753 = vmatprep.subr.bf16.mxu0 0
  %4754 = vmatpush1.bf16.msra.mxu0 0
  %4755 = vmatprep.subr.bf16.mxu0 0
  %4756 = vmatpush1.bf16.msra.mxu0 0
  %4757 = vmatprep.subr.bf16.mxu0 0
  %4758 = vmatpush1.bf16.msra.mxu0 0
  %4759 = vmatprep.subr.bf16.mxu0 0
  %4760 = vmatpush1.bf16.msra.mxu0 0
  %4761 = vmatprep.subr.bf16.mxu0 0
  %4762 = vmatpush1.bf16.msra.mxu0 0
  %4763 = vmatprep.subr.bf16.mxu0 0
  %4764 = vmatpush1.bf16.msra.mxu0 0
  %4765 = vmatprep.subr.bf16.mxu0 0
  %4766 = vmatpush1.bf16.msra.mxu0 0
  %4767 = vmatprep.subr.bf16.mxu0 0
  %4768 = vmatpush1.bf16.msra.mxu0 0
  %4769 = vmatprep.subr.bf16.mxu0 0
  %4770 = vmatpush1.bf16.msra.mxu0 0
  %4771 = vmatprep.mubr.bf16.mxu0 0
  %4772 = vmatmul.mubr.bf16.gmra.mrb[0].mxu0 %v4644
  %v4773 = vpop.f32.mrb[0].mxu0
  %v4774 = vadd.f32 0.0, %v4773
  %v4775 = vpop.f32.mrb[0].mxu0
  %v4776 = vpop.f32.mrb[0].mxu0
  %v4777 = vadd.f32 0.0, %v4776
  %v4778 = vpop.f32.mrb[0].mxu0
  %4779 = vmatprep.mubr.bf16.mxu0 0
  %4780 = vmatmul.mubr.bf16.gmra.mrb[0].mxu0 %v4647
  %v4781 = vpop.f32.mrb[0].mxu0
  %v4782 = vadd.f32 0.0, %v4781
  %v4783 = vpop.f32.mrb[0].mxu0
  %v4784 = vpop.f32.mrb[0].mxu0
  %v4785 = vadd.f32 0.0, %v4784
  %v4786 = vpop.f32.mrb[0].mxu0
  %4787 = vmatprep.mubr.bf16.mxu0 0
  %4788 = vmatmul.mubr.bf16.gmra.mrb[0].mxu0 %v4650
  %v4789 = vpop.f32.mrb[0].mxu0
  %v4790 = vadd.f32 0.0, %v4789
  %v4791 = vpop.f32.mrb[0].mxu0
  %v4792 = vpop.f32.mrb[0].mxu0
  %v4793 = vadd.f32 0.0, %v4792
  %v4794 = vpop.f32.mrb[0].mxu0
  %4795 = vmatprep.mubr.bf16.mxu0 0
  %4796 = vmatmul.mubr.bf16.gmra.mrb[0].mxu0 %v4653
  %v4797 = vpop.f32.mrb[0].mxu0
  %v4798 = vadd.f32 0.0, %v4797
  %v4799 = vpop.f32.mrb[0].mxu0
  %v4800 = vpop.f32.mrb[0].mxu0
  %v4801 = vadd.f32 0.0, %v4800
  %v4802 = vpop.f32.mrb[0].mxu0
  %4803 = vmatprep.mubr.bf16.mxu0 0
  %4804 = vmatmul.mubr.bf16.gmra.mrb[0].mxu0 %v4656
  %v4805 = vpop.f32.mrb[0].mxu0
  %v4806 = vadd.f32 0.0, %v4805
  %v4807 = vpop.f32.mrb[0].mxu0
  %v4808 = vpop.f32.mrb[0].mxu0
  %v4809 = vadd.f32 0.0, %v4808
  %v4810 = vpop.f32.mrb[0].mxu0
  %4811 = vmatprep.mubr.bf16.mxu0 0
  %4812 = vmatmul.mubr.bf16.gmra.mrb[0].mxu0 %v4659
  %v4813 = vpop.f32.mrb[0].mxu0
  %v4814 = vadd.f32 0.0, %v4813
  %v4815 = vpop.f32.mrb[0].mxu0
  %v4816 = vpop.f32.mrb[0].mxu0
  %v4817 = vadd.f32 0.0, %v4816
  %v4818 = vpop.f32.mrb[0].mxu0
  %4819 = vmatprep.mubr.bf16.mxu0 0
  %4820 = vmatmul.mubr.bf16.gmra.mrb[0].mxu0 %v4662
  %v4821 = vpop.f32.mrb[0].mxu0
  %v4822 = vadd.f32 0.0, %v4821
  %v4823 = vpop.f32.mrb[0].mxu0
  %v4824 = vpop.f32.mrb[0].mxu0
  %v4825 = vadd.f32 0.0, %v4824
  %v4826 = vpop.f32.mrb[0].mxu0
  %4827 = vmatprep.mubr.bf16.mxu0 0
  %4828 = vmatmul.mubr.bf16.gmra.mrb[0].mxu0 %v4665
  %v4829 = vpop.f32.mrb[0].mxu0
  %v4830 = vadd.f32 0.0, %v4829
  %v4831 = vpop.f32.mrb[0].mxu0
  %v4832 = vpop.f32.mrb[0].mxu0
  %v4833 = vadd.f32 0.0, %v4832
  %v4834 = vpop.f32.mrb[0].mxu0
  %4835 = vmatprep.mubr.bf16.mxu0 0
  %4836 = vmatmul.mubr.bf16.gmra.mrb[0].mxu0 %v4668
  %v4837 = vpop.f32.mrb[0].mxu0
  %v4838 = vadd.f32 0.0, %v4837
  %v4839 = vpop.f32.mrb[0].mxu0
  %v4840 = vpop.f32.mrb[0].mxu0
  %v4841 = vadd.f32 0.0, %v4840
  %v4842 = vpop.f32.mrb[0].mxu0
  %4843 = vmatprep.mubr.bf16.mxu0 0
  %4844 = vmatmul.mubr.bf16.gmra.mrb[0].mxu0 %v4671
  %v4845 = vpop.f32.mrb[0].mxu0
  %v4846 = vadd.f32 0.0, %v4845
  %v4847 = vpop.f32.mrb[0].mxu0
  %v4848 = vpop.f32.mrb[0].mxu0
  %v4849 = vadd.f32 0.0, %v4848
  %v4850 = vpop.f32.mrb[0].mxu0
  %4851 = vmatprep.mubr.bf16.mxu0 0
  %4852 = vmatmul.mubr.bf16.gmra.mrb[0].mxu0 %v4674
  %v4853 = vpop.f32.mrb[0].mxu0
  %v4854 = vadd.f32 0.0, %v4853
  %v4855 = vpop.f32.mrb[0].mxu0
  %v4856 = vpop.f32.mrb[0].mxu0
  %v4857 = vadd.f32 0.0, %v4856
  %v4858 = vpop.f32.mrb[0].mxu0
  %4859 = vmatprep.mubr.bf16.mxu0 0
  %4860 = vmatmul.mubr.bf16.gmra.mrb[0].mxu0 %v4677
  %v4861 = vpop.f32.mrb[0].mxu0
  %v4862 = vadd.f32 0.0, %v4861
  %v4863 = vpop.f32.mrb[0].mxu0
  %v4864 = vpop.f32.mrb[0].mxu0
  %v4865 = vadd.f32 0.0, %v4864
  %v4866 = vpop.f32.mrb[0].mxu0
  %4867 = vmatprep.mubr.bf16.mxu0 0
  %4868 = vmatmul.mubr.bf16.gmra.mrb[0].mxu0 %v4680
  %v4869 = vpop.f32.mrb[0].mxu0
  %v4870 = vadd.f32 0.0, %v4869
  %v4871 = vpop.f32.mrb[0].mxu0
  %v4872 = vpop.f32.mrb[0].mxu0
  %v4873 = vadd.f32 0.0, %v4872
  %v4874 = vpop.f32.mrb[0].mxu0
  %4875 = vmatprep.mubr.bf16.mxu0 0
  %4876 = vmatmul.mubr.bf16.gmra.mrb[0].mxu0 %v4683
  %v4877 = vpop.f32.mrb[0].mxu0
  %v4878 = vadd.f32 0.0, %v4877
  %v4879 = vpop.f32.mrb[0].mxu0
  %v4880 = vpop.f32.mrb[0].mxu0
  %v4881 = vadd.f32 0.0, %v4880
  %v4882 = vpop.f32.mrb[0].mxu0
  %4883 = vmatprep.mubr.bf16.mxu0 0
  %4884 = vmatmul.mubr.bf16.gmra.mrb[0].mxu0 %v4686
  %v4885 = vpop.f32.mrb[0].mxu0
  %v4886 = vadd.f32 0.0, %v4885
  %v4887 = vpop.f32.mrb[0].mxu0
  %v4888 = vpop.f32.mrb[0].mxu0
  %v4889 = vadd.f32 0.0, %v4888
  %v4890 = vpop.f32.mrb[0].mxu0
  %4891 = vmatprep.mubr.bf16.mxu0 0
  %4892 = vmatmul.mubr.bf16.gmra.mrb[0].mxu0 %v4689
  %v4893 = vpop.f32.mrb[0].mxu0
  %v4894 = vadd.f32 0.0, %v4893
  %v4895 = vpop.f32.mrb[0].mxu0
  %v4896 = vpop.f32.mrb[0].mxu0
  %v4897 = vadd.f32 0.0, %v4896
  %v4898 = vpop.f32.mrb[0].mxu0
  %4899 = vmatprep.mubr.bf16.mxu0 0
  %4900 = vmatmul.mubr.bf16.gmra.mrb[0].mxu0 %v4692
  %v4901 = vpop.f32.mrb[0].mxu0
  %v4902 = vadd.f32 0.0, %v4901
  %v4903 = vpop.f32.mrb[0].mxu0
  %v4904 = vpop.f32.mrb[0].mxu0
  %v4905 = vadd.f32 0.0, %v4904
  %v4906 = vpop.f32.mrb[0].mxu0
  %4907 = vmatprep.mubr.bf16.mxu0 0
  %4908 = vmatmul.mubr.bf16.gmra.mrb[0].mxu0 %v4695
  %v4909 = vpop.f32.mrb[0].mxu0
  %v4910 = vadd.f32 0.0, %v4909
  %v4911 = vpop.f32.mrb[0].mxu0
  %v4912 = vpop.f32.mrb[0].mxu0
  %v4913 = vadd.f32 0.0, %v4912
  %v4914 = vpop.f32.mrb[0].mxu0
  %4915 = vmatprep.mubr.bf16.mxu0 0
  %4916 = vmatmul.mubr.bf16.gmra.mrb[0].mxu0 %v4698
  %v4917 = vpop.f32.mrb[0].mxu0
  %v4918 = vadd.f32 0.0, %v4917
  %v4919 = vpop.f32.mrb[0].mxu0
  %v4920 = vpop.f32.mrb[0].mxu0
  %v4921 = vadd.f32 0.0, %v4920
  %v4922 = vpop.f32.mrb[0].mxu0
  %4923 = vmatprep.mubr.bf16.mxu0 0
  %4924 = vmatmul.mubr.bf16.gmra.mrb[0].mxu0 %v4701
  %v4925 = vpop.f32.mrb[0].mxu0
  %v4926 = vadd.f32 0.0, %v4925
  %v4927 = vpop.f32.mrb[0].mxu0
  %v4928 = vpop.f32.mrb[0].mxu0
  %v4929 = vadd.f32 0.0, %v4928
  %v4930 = vpop.f32.mrb[0].mxu0
  %4931 = vmatprep.mubr.bf16.mxu0 0
  %4932 = vmatmul.mubr.bf16.gmra.mrb[0].mxu0 %v4704
  %v4933 = vpop.f32.mrb[0].mxu0
  %v4934 = vadd.f32 0.0, %v4933
  %v4935 = vpop.f32.mrb[0].mxu0
  %v4936 = vpop.f32.mrb[0].mxu0
  %v4937 = vadd.f32 0.0, %v4936
  %v4938 = vpop.f32.mrb[0].mxu0
  %4939 = vmatprep.mubr.bf16.mxu0 0
  %4940 = vmatmul.mubr.bf16.gmra.mrb[0].mxu0 %v4707
  %v4941 = vpop.f32.mrb[0].mxu0
  %v4942 = vadd.f32 0.0, %v4941
  %v4943 = vpop.f32.mrb[0].mxu0
  %v4944 = vpop.f32.mrb[0].mxu0
  %v4945 = vadd.f32 0.0, %v4944
  %v4946 = vpop.f32.mrb[0].mxu0
  %4947 = vmatprep.mubr.bf16.mxu0 0
  %4948 = vmatmul.mubr.bf16.gmra.mrb[0].mxu0 %v4710
  %v4949 = vpop.f32.mrb[0].mxu0
  %v4950 = vadd.f32 0.0, %v4949
  %v4951 = vpop.f32.mrb[0].mxu0
  %v4952 = vpop.f32.mrb[0].mxu0
  %v4953 = vadd.f32 0.0, %v4952
  %v4954 = vpop.f32.mrb[0].mxu0
  %4955 = vmatprep.mubr.bf16.mxu0 0
  %4956 = vmatmul.mubr.bf16.gmra.mrb[0].mxu0 %v4713
  %v4957 = vpop.f32.mrb[0].mxu0
  %v4958 = vadd.f32 0.0, %v4957
  %v4959 = vpop.f32.mrb[0].mxu0
  %v4960 = vpop.f32.mrb[0].mxu0
  %v4961 = vadd.f32 0.0, %v4960
  %v4962 = vpop.f32.mrb[0].mxu0
  %4963 = vmatprep.mubr.bf16.mxu0 0
  %4964 = vmatmul.mubr.bf16.gmra.mrb[0].mxu0 %v4716
  %v4965 = vpop.f32.mrb[0].mxu0
  %v4966 = vadd.f32 0.0, %v4965
  %v4967 = vpop.f32.mrb[0].mxu0
  %v4968 = vpop.f32.mrb[0].mxu0
  %v4969 = vadd.f32 0.0, %v4968
  %v4970 = vpop.f32.mrb[0].mxu0
  %4971 = vmatprep.mubr.bf16.mxu0 0
  %4972 = vmatmul.mubr.bf16.gmra.mrb[0].mxu0 %v4719
  %v4973 = vpop.f32.mrb[0].mxu0
  %v4974 = vadd.f32 0.0, %v4973
  %v4975 = vpop.f32.mrb[0].mxu0
  %v4976 = vpop.f32.mrb[0].mxu0
  %v4977 = vadd.f32 0.0, %v4976
  %v4978 = vpop.f32.mrb[0].mxu0
  %4979 = vmatprep.mubr.bf16.mxu0 0
  %4980 = vmatmul.mubr.bf16.gmra.mrb[0].mxu0 %v4722
  %v4981 = vpop.f32.mrb[0].mxu0
  %v4982 = vadd.f32 0.0, %v4981
  %v4983 = vpop.f32.mrb[0].mxu0
  %v4984 = vpop.f32.mrb[0].mxu0
  %v4985 = vadd.f32 0.0, %v4984
  %v4986 = vpop.f32.mrb[0].mxu0
  %4987 = vmatprep.mubr.bf16.mxu0 0
  %4988 = vmatmul.mubr.bf16.gmra.mrb[0].mxu0 %v4725
  %v4989 = vpop.f32.mrb[0].mxu0
  %v4990 = vadd.f32 0.0, %v4989
  %v4991 = vpop.f32.mrb[0].mxu0
  %v4992 = vpop.f32.mrb[0].mxu0
  %v4993 = vadd.f32 0.0, %v4992
  %v4994 = vpop.f32.mrb[0].mxu0
  %4995 = vmatprep.mubr.bf16.mxu0 0
  %4996 = vmatmul.mubr.bf16.gmra.mrb[0].mxu0 %v4728
  %v4997 = vpop.f32.mrb[0].mxu0
  %v4998 = vadd.f32 0.0, %v4997
  %v4999 = vpop.f32.mrb[0].mxu0
  %v5000 = vpop.f32.mrb[0].mxu0
  %v5001 = vadd.f32 0.0, %v5000
  %v5002 = vpop.f32.mrb[0].mxu0
  %5003 = vmatprep.mubr.bf16.mxu0 0
  %5004 = vmatmul.mubr.bf16.gmra.mrb[0].mxu0 %v4731
  %v5005 = vpop.f32.mrb[0].mxu0
  %v5006 = vadd.f32 0.0, %v5005
  %v5007 = vpop.f32.mrb[0].mxu0
  %v5008 = vpop.f32.mrb[0].mxu0
  %v5009 = vadd.f32 0.0, %v5008
  %v5010 = vpop.f32.mrb[0].mxu0
  %5011 = vmatprep.mubr.bf16.mxu0 0
  %5012 = vmatmul.mubr.bf16.gmra.mrb[0].mxu0 %v4734
  %v5013 = vpop.f32.mrb[0].mxu0
  %v5014 = vadd.f32 0.0, %v5013
  %v5015 = vpop.f32.mrb[0].mxu0
  %v5016 = vpop.f32.mrb[0].mxu0
  %v5017 = vadd.f32 0.0, %v5016
  %v5018 = vpop.f32.mrb[0].mxu0
  %5019 = vmatprep.mubr.bf16.mxu0 0
  %5020 = vmatmul.mubr.bf16.gmra.mrb[0].mxu0 %v4737
  %v5021 = vpop.f32.mrb[0].mxu0
  %v5022 = vadd.f32 0.0, %v5021
  %v5023 = vpop.f32.mrb[0].mxu0
  %v5024 = vpop.f32.mrb[0].mxu0
  %v5025 = vadd.f32 0.0, %v5024
  %v5026 = vpop.f32.mrb[0].mxu0
  %5027 = vdwg.mxu0
  %v5028 = vadd.f32 %v3953, %v4774
  %v5029 = vadd.f32 %v3956, %v4777
  %v5030 = vadd.f32 %v3961, %v4782
  %v5031 = vadd.f32 %v3964, %v4785
  %v5032 = vadd.f32 %v3969, %v4790
  %v5033 = vadd.f32 %v3972, %v4793
  %v5034 = vadd.f32 %v3977, %v4798
  %v5035 = vadd.f32 %v3980, %v4801
  %v5036 = vadd.f32 %v3985, %v4806
  %v5037 = vadd.f32 %v3988, %v4809
  %v5038 = vadd.f32 %v3993, %v4814
  %v5039 = vadd.f32 %v3996, %v4817
  %v5040 = vadd.f32 %v4001, %v4822
  %v5041 = vadd.f32 %v4004, %v4825
  %v5042 = vadd.f32 %v4009, %v4830
  %v5043 = vadd.f32 %v4012, %v4833
  %v5044 = vadd.f32 %v4017, %v4838
  %v5045 = vadd.f32 %v4020, %v4841
  %v5046 = vadd.f32 %v4025, %v4846
  %v5047 = vadd.f32 %v4028, %v4849
  %v5048 = vadd.f32 %v4033, %v4854
  %v5049 = vadd.f32 %v4036, %v4857
  %v5050 = vadd.f32 %v4041, %v4862
  %v5051 = vadd.f32 %v4044, %v4865
  %v5052 = vadd.f32 %v4049, %v4870
  %v5053 = vadd.f32 %v4052, %v4873
  %v5054 = vadd.f32 %v4057, %v4878
  %v5055 = vadd.f32 %v4060, %v4881
  %v5056 = vadd.f32 %v4065, %v4886
  %v5057 = vadd.f32 %v4068, %v4889
  %v5058 = vadd.f32 %v4073, %v4894
  %v5059 = vadd.f32 %v4076, %v4897
  %v5060 = vadd.f32 %v4081, %v4902
  %v5061 = vadd.f32 %v4084, %v4905
  %v5062 = vadd.f32 %v4089, %v4910
  %v5063 = vadd.f32 %v4092, %v4913
  %v5064 = vadd.f32 %v4097, %v4918
  %v5065 = vadd.f32 %v4100, %v4921
  %v5066 = vadd.f32 %v4105, %v4926
  %v5067 = vadd.f32 %v4108, %v4929
  %v5068 = vadd.f32 %v4113, %v4934
  %v5069 = vadd.f32 %v4116, %v4937
  %v5070 = vadd.f32 %v4121, %v4942
  %v5071 = vadd.f32 %v4124, %v4945
  %v5072 = vadd.f32 %v4129, %v4950
  %v5073 = vadd.f32 %v4132, %v4953
  %v5074 = vadd.f32 %v4137, %v4958
  %v5075 = vadd.f32 %v4140, %v4961
  %v5076 = vadd.f32 %v4145, %v4966
  %v5077 = vadd.f32 %v4148, %v4969
  %v5078 = vadd.f32 %v4153, %v4974
  %v5079 = vadd.f32 %v4156, %v4977
  %v5080 = vadd.f32 %v4161, %v4982
  %v5081 = vadd.f32 %v4164, %v4985
  %v5082 = vadd.f32 %v4169, %v4990
  %v5083 = vadd.f32 %v4172, %v4993
  %v5084 = vadd.f32 %v4177, %v4998
  %v5085 = vadd.f32 %v4180, %v5001
  %v5086 = vadd.f32 %v4185, %v5006
  %v5087 = vadd.f32 %v4188, %v5009
  %v5088 = vadd.f32 %v4193, %v5014
  %v5089 = vadd.f32 %v4196, %v5017
  %v5090 = vadd.f32 %v4201, %v5022
  %v5091 = vadd.f32 %v4204, %v5025
  %v5092 = vld [vmem:[%s1022] sm:$0xf]
  %v5093 = vld [vmem:[%s1022 + $0x4] sm:$0xf]
  %v5094 = vld [vmem:[%s1022 + $0xc] sm:$0xf]
  %v5095 = vld [vmem:[%s1022 + $0x10] sm:$0xf]
  %v5096 = vld [vmem:[%s1022 + $0x18] sm:$0xf]
  %v5097 = vld [vmem:[%s1022 + $0x1c] sm:$0xf]
  %v5098 = vld [vmem:[%s1022 + $0x24] sm:$0xf]
  %v5099 = vld [vmem:[%s1022 + $0x28] sm:$0xf]
  %v5100 = vld [vmem:[%s1022 + $0x30] sm:$0xf]
  %v5101 = vld [vmem:[%s1022 + $0x34] sm:$0xf]
  %v5102 = vld [vmem:[%s1022 + $0x3c] sm:$0xf]
  %v5103 = vld [vmem:[%s1022 + $0x40] sm:$0xf]
  %v5104 = vld [vmem:[%s1022 + $0x48] sm:$0xf]
  %v5105 = vld [vmem:[%s1022 + $0x4c] sm:$0xf]
  %v5106 = vld [vmem:[%s1022 + $0x54] sm:$0xf]
  %v5107 = vld [vmem:[%s1022 + $0x58] sm:$0xf]
  %v5108 = vld [vmem:[%s1022 + $0x60] sm:$0xf]
  %v5109 = vld [vmem:[%s1022 + $0x64] sm:$0xf]
  %v5110 = vld [vmem:[%s1022 + $0x6c] sm:$0xf]
  %v5111 = vld [vmem:[%s1022 + $0x70] sm:$0xf]
  %v5112 = vld [vmem:[%s1022 + $0x78] sm:$0xf]
  %v5113 = vld [vmem:[%s1022 + $0x7c] sm:$0xf]
  %v5114 = vld [vmem:[%s1022 + $0x84] sm:$0xf]
  %v5115 = vld [vmem:[%s1022 + $0x88] sm:$0xf]
  %v5116 = vld [vmem:[%s1022 + $0x90] sm:$0xf]
  %v5117 = vld [vmem:[%s1022 + $0x94] sm:$0xf]
  %v5118 = vld [vmem:[%s1022 + $0x9c] sm:$0xf]
  %v5119 = vld [vmem:[%s1022 + $0xa0] sm:$0xf]
  %v5120 = vld [vmem:[%s1022 + $0xa8] sm:$0xf]
  %v5121 = vld [vmem:[%s1022 + $0xac] sm:$0xf]
  %v5122 = vld [vmem:[%s1022 + $0xb4] sm:$0xf]
  %v5123 = vld [vmem:[%s1022 + $0xb8] sm:$0xf]
  %v5124 = vld [vmem:[%s1022 + $0xd8] sm:$0xf]
  %v5125 = vld [vmem:[%s1022 + $0xdc] sm:$0xf]
  %v5126 = vld [vmem:[%s1022 + $0xe4] sm:$0xf]
  %v5127 = vld [vmem:[%s1022 + $0xe8] sm:$0xf]
  %v5128 = vld [vmem:[%s1022 + $0xf0] sm:$0xf]
  %v5129 = vld [vmem:[%s1022 + $0xf4] sm:$0xf]
  %v5130 = vld [vmem:[%s1022 + $0xfc] sm:$0xf]
  %v5131 = vld [vmem:[%s1022 + $0x100] sm:$0xf]
  %v5132 = vld [vmem:[%s1022 + $0x108] sm:$0xf]
  %v5133 = vld [vmem:[%s1022 + $0x10c] sm:$0xf]
  %v5134 = vld [vmem:[%s1022 + $0x114] sm:$0xf]
  %v5135 = vld [vmem:[%s1022 + $0x118] sm:$0xf]
  %v5136 = vld [vmem:[%s1022 + $0x120] sm:$0xf]
  %v5137 = vld [vmem:[%s1022 + $0x124] sm:$0xf]
  %v5138 = vld [vmem:[%s1022 + $0x12c] sm:$0xf]
  %v5139 = vld [vmem:[%s1022 + $0x130] sm:$0xf]
  %v5140 = vld [vmem:[%s1022 + $0x138] sm:$0xf]
  %v5141 = vld [vmem:[%s1022 + $0x13c] sm:$0xf]
  %v5142 = vld [vmem:[%s1022 + $0x144] sm:$0xf]
  %v5143 = vld [vmem:[%s1022 + $0x148] sm:$0xf]
  %v5144 = vld [vmem:[%s1022 + $0x150] sm:$0xf]
  %v5145 = vld [vmem:[%s1022 + $0x154] sm:$0xf]
  %v5146 = vld [vmem:[%s1022 + $0x15c] sm:$0xf]
  %v5147 = vld [vmem:[%s1022 + $0x160] sm:$0xf]
  %v5148 = vld [vmem:[%s1022 + $0x168] sm:$0xf]
  %v5149 = vld [vmem:[%s1022 + $0x16c] sm:$0xf]
  %v5150 = vld [vmem:[%s1022 + $0x174] sm:$0xf]
  %v5151 = vld [vmem:[%s1022 + $0x178] sm:$0xf]
  %v5152 = vld [vmem:[%s1022 + $0x180] sm:$0xf]
  %v5153 = vld [vmem:[%s1022 + $0x184] sm:$0xf]
  %v5154 = vld [vmem:[%s1022 + $0x18c] sm:$0xf]
  %v5155 = vld [vmem:[%s1022 + $0x190] sm:$0xf]
  %s5156 = scalar_lea.vmem %s4, 48
  %v5157 = vld [vmem:[%s5156] sm:$0xf]
  %v5158 = vld [vmem:[%s5156 + $0x4] sm:$0xf]
  %v5159 = vld [vmem:[%s5156 + $0x8] sm:$0xf]
  %v5160 = vld [vmem:[%s5156 + $0xc] sm:$0xf]
  %v5225 = vunpack.c.l.b16 %v5092
  %v5226 = vunpack.c.l.b16 %v5093
  %v5227 = vunpack.c.l.b16 %v5094
  %v5228 = vunpack.c.l.b16 %v5095
  %v5229 = vunpack.c.l.b16 %v5096
  %v5230 = vunpack.c.l.b16 %v5097
  %v5231 = vunpack.c.l.b16 %v5098
  %v5232 = vunpack.c.l.b16 %v5099
  %v5233 = vunpack.c.l.b16 %v5100
  %v5234 = vunpack.c.l.b16 %v5101
  %v5235 = vunpack.c.l.b16 %v5102
  %v5236 = vunpack.c.l.b16 %v5103
  %v5237 = vunpack.c.l.b16 %v5104
  %v5238 = vunpack.c.l.b16 %v5105
  %v5239 = vunpack.c.l.b16 %v5106
  %v5240 = vunpack.c.l.b16 %v5107
  %v5241 = vunpack.c.l.b16 %v5108
  %v5242 = vunpack.c.l.b16 %v5109
  %v5243 = vunpack.c.l.b16 %v5110
  %v5244 = vunpack.c.l.b16 %v5111
  %v5245 = vunpack.c.l.b16 %v5112
  %v5246 = vunpack.c.l.b16 %v5113
  %v5247 = vunpack.c.l.b16 %v5114
  %v5248 = vunpack.c.l.b16 %v5115
  %v5249 = vunpack.c.l.b16 %v5116
  %v5250 = vunpack.c.l.b16 %v5117
  %v5251 = vunpack.c.l.b16 %v5118
  %v5252 = vunpack.c.l.b16 %v5119
  %v5253 = vunpack.c.l.b16 %v5120
  %v5254 = vunpack.c.l.b16 %v5121
  %v5255 = vunpack.c.l.b16 %v5122
  %v5256 = vunpack.c.l.b16 %v5123
  %v5257 = vunpack.c.l.b16 %v5124
  %v5258 = vunpack.c.l.b16 %v5125
  %v5259 = vunpack.c.l.b16 %v5126
  %v5260 = vunpack.c.l.b16 %v5127
  %v5261 = vunpack.c.l.b16 %v5128
  %v5262 = vunpack.c.l.b16 %v5129
  %v5263 = vunpack.c.l.b16 %v5130
  %v5264 = vunpack.c.l.b16 %v5131
  %v5265 = vunpack.c.l.b16 %v5132
  %v5266 = vunpack.c.l.b16 %v5133
  %v5267 = vunpack.c.l.b16 %v5134
  %v5268 = vunpack.c.l.b16 %v5135
  %v5269 = vunpack.c.l.b16 %v5136
  %v5270 = vunpack.c.l.b16 %v5137
  %v5271 = vunpack.c.l.b16 %v5138
  %v5272 = vunpack.c.l.b16 %v5139
  %v5273 = vunpack.c.l.b16 %v5140
  %v5274 = vunpack.c.l.b16 %v5141
  %v5275 = vunpack.c.l.b16 %v5142
  %v5276 = vunpack.c.l.b16 %v5143
  %v5277 = vunpack.c.l.b16 %v5144
  %v5278 = vunpack.c.l.b16 %v5145
  %v5279 = vunpack.c.l.b16 %v5146
  %v5280 = vunpack.c.l.b16 %v5147
  %v5281 = vunpack.c.l.b16 %v5148
  %v5282 = vunpack.c.l.b16 %v5149
  %v5283 = vunpack.c.l.b16 %v5150
  %v5284 = vunpack.c.l.b16 %v5151
  %v5285 = vunpack.c.l.b16 %v5152
  %v5286 = vunpack.c.l.b16 %v5153
  %v5287 = vunpack.c.l.b16 %v5154
  %v5288 = vunpack.c.l.b16 %v5155
  %v5289 = vpack.c.b16 %v5226, %v5225
  %v5290 = vpack.c.b16 %v5228, %v5227
  %v5291 = vpack.c.b16 %v5230, %v5229
  %v5292 = vpack.c.b16 %v5232, %v5231
  %v5293 = vpack.c.b16 %v5234, %v5233
  %v5294 = vpack.c.b16 %v5236, %v5235
  %v5295 = vpack.c.b16 %v5238, %v5237
  %v5296 = vpack.c.b16 %v5240, %v5239
  %v5297 = vpack.c.b16 %v5242, %v5241
  %v5298 = vpack.c.b16 %v5244, %v5243
  %v5299 = vpack.c.b16 %v5246, %v5245
  %v5300 = vpack.c.b16 %v5248, %v5247
  %v5301 = vpack.c.b16 %v5250, %v5249
  %v5302 = vpack.c.b16 %v5252, %v5251
  %v5303 = vpack.c.b16 %v5254, %v5253
  %v5304 = vpack.c.b16 %v5256, %v5255
  %v5305 = vpack.c.b16 %v5258, %v5257
  %v5306 = vpack.c.b16 %v5260, %v5259
  %v5307 = vpack.c.b16 %v5262, %v5261
  %v5308 = vpack.c.b16 %v5264, %v5263
  %v5309 = vpack.c.b16 %v5266, %v5265
  %v5310 = vpack.c.b16 %v5268, %v5267
  %v5311 = vpack.c.b16 %v5270, %v5269
  %v5312 = vpack.c.b16 %v5272, %v5271
  %v5313 = vpack.c.b16 %v5274, %v5273
  %v5314 = vpack.c.b16 %v5276, %v5275
  %v5315 = vpack.c.b16 %v5278, %v5277
  %v5316 = vpack.c.b16 %v5280, %v5279
  %v5317 = vpack.c.b16 %v5282, %v5281
  %v5318 = vpack.c.b16 %v5284, %v5283
  %v5319 = vpack.c.b16 %v5286, %v5285
  %v5320 = vpack.c.b16 %v5288, %v5287
  %v5325 = vunpack.c.l.b16 %v5157
  %v5326 = vunpack.c.l.b16 %v5158
  %v5327 = vunpack.c.l.b16 %v5159
  %v5328 = vunpack.c.l.b16 %v5160
  %v5329 = vpack.c.b16 %v5326, %v5325
  %v5330 = vpack.c.b16 %v5328, %v5327
  %v5334 = vsel %vm3264, %v5289, 0
  %v5337 = vsel %vm3264, %v5290, 0
  %v5340 = vsel %vm3264, %v5291, 0
  %v5343 = vsel %vm3264, %v5292, 0
  %v5346 = vsel %vm3264, %v5293, 0
  %v5349 = vsel %vm3264, %v5294, 0
  %v5352 = vsel %vm3264, %v5295, 0
  %v5355 = vsel %vm3264, %v5296, 0
  %v5358 = vsel %vm3264, %v5297, 0
  %v5361 = vsel %vm3264, %v5298, 0
  %v5364 = vsel %vm3264, %v5299, 0
  %v5367 = vsel %vm3264, %v5300, 0
  %v5370 = vsel %vm3264, %v5301, 0
  %v5373 = vsel %vm3264, %v5302, 0
  %v5376 = vsel %vm3264, %v5303, 0
  %v5379 = vsel %vm3264, %v5304, 0
  %v5382 = vsel %vm3264, %v5305, 0
  %v5385 = vsel %vm3264, %v5306, 0
  %v5388 = vsel %vm3264, %v5307, 0
  %v5391 = vsel %vm3264, %v5308, 0
  %v5394 = vsel %vm3264, %v5309, 0
  %v5397 = vsel %vm3264, %v5310, 0
  %v5400 = vsel %vm3264, %v5311, 0
  %v5403 = vsel %vm3264, %v5312, 0
  %v5406 = vsel %vm3264, %v5313, 0
  %v5409 = vsel %vm3264, %v5314, 0
  %v5412 = vsel %vm3264, %v5315, 0
  %v5415 = vsel %vm3264, %v5316, 0
  %v5418 = vsel %vm3264, %v5317, 0
  %v5421 = vsel %vm3264, %v5318, 0
  %v5424 = vsel %vm3264, %v5319, 0
  %v5427 = vsel %vm3264, %v5320, 0
  %5429 = vmatprep.subr.bf16.mxu0 0
  %5430 = vmatpush1.bf16.msra.mxu0 %v5329
  %5431 = vmatprep.subr.bf16.mxu0 0
  %5432 = vmatpush1.bf16.msra.mxu0 %v5330
  %5433 = vmatprep.subr.bf16.mxu0 0
  %5434 = vmatpush1.bf16.msra.mxu0 0
  %5435 = vmatprep.subr.bf16.mxu0 0
  %5436 = vmatpush1.bf16.msra.mxu0 0
  %5437 = vmatprep.subr.bf16.mxu0 0
  %5438 = vmatpush1.bf16.msra.mxu0 0
  %5439 = vmatprep.subr.bf16.mxu0 0
  %5440 = vmatpush1.bf16.msra.mxu0 0
  %5441 = vmatprep.subr.bf16.mxu0 0
  %5442 = vmatpush1.bf16.msra.mxu0 0
  %5443 = vmatprep.subr.bf16.mxu0 0
  %5444 = vmatpush1.bf16.msra.mxu0 0
  %5445 = vmatprep.subr.bf16.mxu0 0
  %5446 = vmatpush1.bf16.msra.mxu0 0
  %5447 = vmatprep.subr.bf16.mxu0 0
  %5448 = vmatpush1.bf16.msra.mxu0 0
  %5449 = vmatprep.subr.bf16.mxu0 0
  %5450 = vmatpush1.bf16.msra.mxu0 0
  %5451 = vmatprep.subr.bf16.mxu0 0
  %5452 = vmatpush1.bf16.msra.mxu0 0
  %5453 = vmatprep.subr.bf16.mxu0 0
  %5454 = vmatpush1.bf16.msra.mxu0 0
  %5455 = vmatprep.subr.bf16.mxu0 0
  %5456 = vmatpush1.bf16.msra.mxu0 0
  %5457 = vmatprep.subr.bf16.mxu0 0
  %5458 = vmatpush1.bf16.msra.mxu0 0
  %5459 = vmatprep.subr.bf16.mxu0 0
  %5460 = vmatpush1.bf16.msra.mxu0 0
  %5461 = vmatprep.mubr.bf16.mxu0 0
  %5462 = vmatmul.mubr.bf16.gmra.mrb[0].mxu0 %v5334
  %v5463 = vpop.f32.mrb[0].mxu0
  %v5464 = vadd.f32 0.0, %v5463
  %v5465 = vpop.f32.mrb[0].mxu0
  %v5466 = vpop.f32.mrb[0].mxu0
  %v5467 = vadd.f32 0.0, %v5466
  %v5468 = vpop.f32.mrb[0].mxu0
  %5469 = vmatprep.mubr.bf16.mxu0 0
  %5470 = vmatmul.mubr.bf16.gmra.mrb[0].mxu0 %v5337
  %v5471 = vpop.f32.mrb[0].mxu0
  %v5472 = vadd.f32 0.0, %v5471
  %v5473 = vpop.f32.mrb[0].mxu0
  %v5474 = vpop.f32.mrb[0].mxu0
  %v5475 = vadd.f32 0.0, %v5474
  %v5476 = vpop.f32.mrb[0].mxu0
  %5477 = vmatprep.mubr.bf16.mxu0 0
  %5478 = vmatmul.mubr.bf16.gmra.mrb[0].mxu0 %v5340
  %v5479 = vpop.f32.mrb[0].mxu0
  %v5480 = vadd.f32 0.0, %v5479
  %v5481 = vpop.f32.mrb[0].mxu0
  %v5482 = vpop.f32.mrb[0].mxu0
  %v5483 = vadd.f32 0.0, %v5482
  %v5484 = vpop.f32.mrb[0].mxu0
  %5485 = vmatprep.mubr.bf16.mxu0 0
  %5486 = vmatmul.mubr.bf16.gmra.mrb[0].mxu0 %v5343
  %v5487 = vpop.f32.mrb[0].mxu0
  %v5488 = vadd.f32 0.0, %v5487
  %v5489 = vpop.f32.mrb[0].mxu0
  %v5490 = vpop.f32.mrb[0].mxu0
  %v5491 = vadd.f32 0.0, %v5490
  %v5492 = vpop.f32.mrb[0].mxu0
  %5493 = vmatprep.mubr.bf16.mxu0 0
  %5494 = vmatmul.mubr.bf16.gmra.mrb[0].mxu0 %v5346
  %v5495 = vpop.f32.mrb[0].mxu0
  %v5496 = vadd.f32 0.0, %v5495
  %v5497 = vpop.f32.mrb[0].mxu0
  %v5498 = vpop.f32.mrb[0].mxu0
  %v5499 = vadd.f32 0.0, %v5498
  %v5500 = vpop.f32.mrb[0].mxu0
  %5501 = vmatprep.mubr.bf16.mxu0 0
  %5502 = vmatmul.mubr.bf16.gmra.mrb[0].mxu0 %v5349
  %v5503 = vpop.f32.mrb[0].mxu0
  %v5504 = vadd.f32 0.0, %v5503
  %v5505 = vpop.f32.mrb[0].mxu0
  %v5506 = vpop.f32.mrb[0].mxu0
  %v5507 = vadd.f32 0.0, %v5506
  %v5508 = vpop.f32.mrb[0].mxu0
  %5509 = vmatprep.mubr.bf16.mxu0 0
  %5510 = vmatmul.mubr.bf16.gmra.mrb[0].mxu0 %v5352
  %v5511 = vpop.f32.mrb[0].mxu0
  %v5512 = vadd.f32 0.0, %v5511
  %v5513 = vpop.f32.mrb[0].mxu0
  %v5514 = vpop.f32.mrb[0].mxu0
  %v5515 = vadd.f32 0.0, %v5514
  %v5516 = vpop.f32.mrb[0].mxu0
  %5517 = vmatprep.mubr.bf16.mxu0 0
  %5518 = vmatmul.mubr.bf16.gmra.mrb[0].mxu0 %v5355
  %v5519 = vpop.f32.mrb[0].mxu0
  %v5520 = vadd.f32 0.0, %v5519
  %v5521 = vpop.f32.mrb[0].mxu0
  %v5522 = vpop.f32.mrb[0].mxu0
  %v5523 = vadd.f32 0.0, %v5522
  %v5524 = vpop.f32.mrb[0].mxu0
  %5525 = vmatprep.mubr.bf16.mxu0 0
  %5526 = vmatmul.mubr.bf16.gmra.mrb[0].mxu0 %v5358
  %v5527 = vpop.f32.mrb[0].mxu0
  %v5528 = vadd.f32 0.0, %v5527
  %v5529 = vpop.f32.mrb[0].mxu0
  %v5530 = vpop.f32.mrb[0].mxu0
  %v5531 = vadd.f32 0.0, %v5530
  %v5532 = vpop.f32.mrb[0].mxu0
  %5533 = vmatprep.mubr.bf16.mxu0 0
  %5534 = vmatmul.mubr.bf16.gmra.mrb[0].mxu0 %v5361
  %v5535 = vpop.f32.mrb[0].mxu0
  %v5536 = vadd.f32 0.0, %v5535
  %v5537 = vpop.f32.mrb[0].mxu0
  %v5538 = vpop.f32.mrb[0].mxu0
  %v5539 = vadd.f32 0.0, %v5538
  %v5540 = vpop.f32.mrb[0].mxu0
  %5541 = vmatprep.mubr.bf16.mxu0 0
  %5542 = vmatmul.mubr.bf16.gmra.mrb[0].mxu0 %v5364
  %v5543 = vpop.f32.mrb[0].mxu0
  %v5544 = vadd.f32 0.0, %v5543
  %v5545 = vpop.f32.mrb[0].mxu0
  %v5546 = vpop.f32.mrb[0].mxu0
  %v5547 = vadd.f32 0.0, %v5546
  %v5548 = vpop.f32.mrb[0].mxu0
  %5549 = vmatprep.mubr.bf16.mxu0 0
  %5550 = vmatmul.mubr.bf16.gmra.mrb[0].mxu0 %v5367
  %v5551 = vpop.f32.mrb[0].mxu0
  %v5552 = vadd.f32 0.0, %v5551
  %v5553 = vpop.f32.mrb[0].mxu0
  %v5554 = vpop.f32.mrb[0].mxu0
  %v5555 = vadd.f32 0.0, %v5554
  %v5556 = vpop.f32.mrb[0].mxu0
  %5557 = vmatprep.mubr.bf16.mxu0 0
  %5558 = vmatmul.mubr.bf16.gmra.mrb[0].mxu0 %v5370
  %v5559 = vpop.f32.mrb[0].mxu0
  %v5560 = vadd.f32 0.0, %v5559
  %v5561 = vpop.f32.mrb[0].mxu0
  %v5562 = vpop.f32.mrb[0].mxu0
  %v5563 = vadd.f32 0.0, %v5562
  %v5564 = vpop.f32.mrb[0].mxu0
  %5565 = vmatprep.mubr.bf16.mxu0 0
  %5566 = vmatmul.mubr.bf16.gmra.mrb[0].mxu0 %v5373
  %v5567 = vpop.f32.mrb[0].mxu0
  %v5568 = vadd.f32 0.0, %v5567
  %v5569 = vpop.f32.mrb[0].mxu0
  %v5570 = vpop.f32.mrb[0].mxu0
  %v5571 = vadd.f32 0.0, %v5570
  %v5572 = vpop.f32.mrb[0].mxu0
  %5573 = vmatprep.mubr.bf16.mxu0 0
  %5574 = vmatmul.mubr.bf16.gmra.mrb[0].mxu0 %v5376
  %v5575 = vpop.f32.mrb[0].mxu0
  %v5576 = vadd.f32 0.0, %v5575
  %v5577 = vpop.f32.mrb[0].mxu0
  %v5578 = vpop.f32.mrb[0].mxu0
  %v5579 = vadd.f32 0.0, %v5578
  %v5580 = vpop.f32.mrb[0].mxu0
  %5581 = vmatprep.mubr.bf16.mxu0 0
  %5582 = vmatmul.mubr.bf16.gmra.mrb[0].mxu0 %v5379
  %v5583 = vpop.f32.mrb[0].mxu0
  %v5584 = vadd.f32 0.0, %v5583
  %v5585 = vpop.f32.mrb[0].mxu0
  %v5586 = vpop.f32.mrb[0].mxu0
  %v5587 = vadd.f32 0.0, %v5586
  %v5588 = vpop.f32.mrb[0].mxu0
  %5589 = vmatprep.mubr.bf16.mxu0 0
  %5590 = vmatmul.mubr.bf16.gmra.mrb[0].mxu0 %v5382
  %v5591 = vpop.f32.mrb[0].mxu0
  %v5592 = vadd.f32 0.0, %v5591
  %v5593 = vpop.f32.mrb[0].mxu0
  %v5594 = vpop.f32.mrb[0].mxu0
  %v5595 = vadd.f32 0.0, %v5594
  %v5596 = vpop.f32.mrb[0].mxu0
  %5597 = vmatprep.mubr.bf16.mxu0 0
  %5598 = vmatmul.mubr.bf16.gmra.mrb[0].mxu0 %v5385
  %v5599 = vpop.f32.mrb[0].mxu0
  %v5600 = vadd.f32 0.0, %v5599
  %v5601 = vpop.f32.mrb[0].mxu0
  %v5602 = vpop.f32.mrb[0].mxu0
  %v5603 = vadd.f32 0.0, %v5602
  %v5604 = vpop.f32.mrb[0].mxu0
  %5605 = vmatprep.mubr.bf16.mxu0 0
  %5606 = vmatmul.mubr.bf16.gmra.mrb[0].mxu0 %v5388
  %v5607 = vpop.f32.mrb[0].mxu0
  %v5608 = vadd.f32 0.0, %v5607
  %v5609 = vpop.f32.mrb[0].mxu0
  %v5610 = vpop.f32.mrb[0].mxu0
  %v5611 = vadd.f32 0.0, %v5610
  %v5612 = vpop.f32.mrb[0].mxu0
  %5613 = vmatprep.mubr.bf16.mxu0 0
  %5614 = vmatmul.mubr.bf16.gmra.mrb[0].mxu0 %v5391
  %v5615 = vpop.f32.mrb[0].mxu0
  %v5616 = vadd.f32 0.0, %v5615
  %v5617 = vpop.f32.mrb[0].mxu0
  %v5618 = vpop.f32.mrb[0].mxu0
  %v5619 = vadd.f32 0.0, %v5618
  %v5620 = vpop.f32.mrb[0].mxu0
  %5621 = vmatprep.mubr.bf16.mxu0 0
  %5622 = vmatmul.mubr.bf16.gmra.mrb[0].mxu0 %v5394
  %v5623 = vpop.f32.mrb[0].mxu0
  %v5624 = vadd.f32 0.0, %v5623
  %v5625 = vpop.f32.mrb[0].mxu0
  %v5626 = vpop.f32.mrb[0].mxu0
  %v5627 = vadd.f32 0.0, %v5626
  %v5628 = vpop.f32.mrb[0].mxu0
  %5629 = vmatprep.mubr.bf16.mxu0 0
  %5630 = vmatmul.mubr.bf16.gmra.mrb[0].mxu0 %v5397
  %v5631 = vpop.f32.mrb[0].mxu0
  %v5632 = vadd.f32 0.0, %v5631
  %v5633 = vpop.f32.mrb[0].mxu0
  %v5634 = vpop.f32.mrb[0].mxu0
  %v5635 = vadd.f32 0.0, %v5634
  %v5636 = vpop.f32.mrb[0].mxu0
  %5637 = vmatprep.mubr.bf16.mxu0 0
  %5638 = vmatmul.mubr.bf16.gmra.mrb[0].mxu0 %v5400
  %v5639 = vpop.f32.mrb[0].mxu0
  %v5640 = vadd.f32 0.0, %v5639
  %v5641 = vpop.f32.mrb[0].mxu0
  %v5642 = vpop.f32.mrb[0].mxu0
  %v5643 = vadd.f32 0.0, %v5642
  %v5644 = vpop.f32.mrb[0].mxu0
  %5645 = vmatprep.mubr.bf16.mxu0 0
  %5646 = vmatmul.mubr.bf16.gmra.mrb[0].mxu0 %v5403
  %v5647 = vpop.f32.mrb[0].mxu0
  %v5648 = vadd.f32 0.0, %v5647
  %v5649 = vpop.f32.mrb[0].mxu0
  %v5650 = vpop.f32.mrb[0].mxu0
  %v5651 = vadd.f32 0.0, %v5650
  %v5652 = vpop.f32.mrb[0].mxu0
  %5653 = vmatprep.mubr.bf16.mxu0 0
  %5654 = vmatmul.mubr.bf16.gmra.mrb[0].mxu0 %v5406
  %v5655 = vpop.f32.mrb[0].mxu0
  %v5656 = vadd.f32 0.0, %v5655
  %v5657 = vpop.f32.mrb[0].mxu0
  %v5658 = vpop.f32.mrb[0].mxu0
  %v5659 = vadd.f32 0.0, %v5658
  %v5660 = vpop.f32.mrb[0].mxu0
  %5661 = vmatprep.mubr.bf16.mxu0 0
  %5662 = vmatmul.mubr.bf16.gmra.mrb[0].mxu0 %v5409
  %v5663 = vpop.f32.mrb[0].mxu0
  %v5664 = vadd.f32 0.0, %v5663
  %v5665 = vpop.f32.mrb[0].mxu0
  %v5666 = vpop.f32.mrb[0].mxu0
  %v5667 = vadd.f32 0.0, %v5666
  %v5668 = vpop.f32.mrb[0].mxu0
  %5669 = vmatprep.mubr.bf16.mxu0 0
  %5670 = vmatmul.mubr.bf16.gmra.mrb[0].mxu0 %v5412
  %v5671 = vpop.f32.mrb[0].mxu0
  %v5672 = vadd.f32 0.0, %v5671
  %v5673 = vpop.f32.mrb[0].mxu0
  %v5674 = vpop.f32.mrb[0].mxu0
  %v5675 = vadd.f32 0.0, %v5674
  %v5676 = vpop.f32.mrb[0].mxu0
  %5677 = vmatprep.mubr.bf16.mxu0 0
  %5678 = vmatmul.mubr.bf16.gmra.mrb[0].mxu0 %v5415
  %v5679 = vpop.f32.mrb[0].mxu0
  %v5680 = vadd.f32 0.0, %v5679
  %v5681 = vpop.f32.mrb[0].mxu0
  %v5682 = vpop.f32.mrb[0].mxu0
  %v5683 = vadd.f32 0.0, %v5682
  %v5684 = vpop.f32.mrb[0].mxu0
  %5685 = vmatprep.mubr.bf16.mxu0 0
  %5686 = vmatmul.mubr.bf16.gmra.mrb[0].mxu0 %v5418
  %v5687 = vpop.f32.mrb[0].mxu0
  %v5688 = vadd.f32 0.0, %v5687
  %v5689 = vpop.f32.mrb[0].mxu0
  %v5690 = vpop.f32.mrb[0].mxu0
  %v5691 = vadd.f32 0.0, %v5690
  %v5692 = vpop.f32.mrb[0].mxu0
  %5693 = vmatprep.mubr.bf16.mxu0 0
  %5694 = vmatmul.mubr.bf16.gmra.mrb[0].mxu0 %v5421
  %v5695 = vpop.f32.mrb[0].mxu0
  %v5696 = vadd.f32 0.0, %v5695
  %v5697 = vpop.f32.mrb[0].mxu0
  %v5698 = vpop.f32.mrb[0].mxu0
  %v5699 = vadd.f32 0.0, %v5698
  %v5700 = vpop.f32.mrb[0].mxu0
  %5701 = vmatprep.mubr.bf16.mxu0 0
  %5702 = vmatmul.mubr.bf16.gmra.mrb[0].mxu0 %v5424
  %v5703 = vpop.f32.mrb[0].mxu0
  %v5704 = vadd.f32 0.0, %v5703
  %v5705 = vpop.f32.mrb[0].mxu0
  %v5706 = vpop.f32.mrb[0].mxu0
  %v5707 = vadd.f32 0.0, %v5706
  %v5708 = vpop.f32.mrb[0].mxu0
  %5709 = vmatprep.mubr.bf16.mxu0 0
  %5710 = vmatmul.mubr.bf16.gmra.mrb[0].mxu0 %v5427
  %v5711 = vpop.f32.mrb[0].mxu0
  %v5712 = vadd.f32 0.0, %v5711
  %v5713 = vpop.f32.mrb[0].mxu0
  %v5714 = vpop.f32.mrb[0].mxu0
  %v5715 = vadd.f32 0.0, %v5714
  %v5716 = vpop.f32.mrb[0].mxu0
  %5717 = vdwg.mxu0
  %v5718 = vadd.f32 %v5028, %v5464
  %v5719 = vadd.f32 %v5029, %v5467
  %v5720 = vadd.f32 %v5030, %v5472
  %v5721 = vadd.f32 %v5031, %v5475
  %v5722 = vadd.f32 %v5032, %v5480
  %v5723 = vadd.f32 %v5033, %v5483
  %v5724 = vadd.f32 %v5034, %v5488
  %v5725 = vadd.f32 %v5035, %v5491
  %v5726 = vadd.f32 %v5036, %v5496
  %v5727 = vadd.f32 %v5037, %v5499
  %v5728 = vadd.f32 %v5038, %v5504
  %v5729 = vadd.f32 %v5039, %v5507
  %v5730 = vadd.f32 %v5040, %v5512
  %v5731 = vadd.f32 %v5041, %v5515
  %v5732 = vadd.f32 %v5042, %v5520
  %v5733 = vadd.f32 %v5043, %v5523
  %v5734 = vadd.f32 %v5044, %v5528
  %v5735 = vadd.f32 %v5045, %v5531
  %v5736 = vadd.f32 %v5046, %v5536
  %v5737 = vadd.f32 %v5047, %v5539
  %v5738 = vadd.f32 %v5048, %v5544
  %v5739 = vadd.f32 %v5049, %v5547
  %v5740 = vadd.f32 %v5050, %v5552
  %v5741 = vadd.f32 %v5051, %v5555
  %v5742 = vadd.f32 %v5052, %v5560
  %v5743 = vadd.f32 %v5053, %v5563
  %v5744 = vadd.f32 %v5054, %v5568
  %v5745 = vadd.f32 %v5055, %v5571
  %v5746 = vadd.f32 %v5056, %v5576
  %v5747 = vadd.f32 %v5057, %v5579
  %v5748 = vadd.f32 %v5058, %v5584
  %v5749 = vadd.f32 %v5059, %v5587
  %v5750 = vadd.f32 %v5060, %v5592
  %v5751 = vadd.f32 %v5061, %v5595
  %v5752 = vadd.f32 %v5062, %v5600
  %v5753 = vadd.f32 %v5063, %v5603
  %v5754 = vadd.f32 %v5064, %v5608
  %v5755 = vadd.f32 %v5065, %v5611
  %v5756 = vadd.f32 %v5066, %v5616
  %v5757 = vadd.f32 %v5067, %v5619
  %v5758 = vadd.f32 %v5068, %v5624
  %v5759 = vadd.f32 %v5069, %v5627
  %v5760 = vadd.f32 %v5070, %v5632
  %v5761 = vadd.f32 %v5071, %v5635
  %v5762 = vadd.f32 %v5072, %v5640
  %v5763 = vadd.f32 %v5073, %v5643
  %v5764 = vadd.f32 %v5074, %v5648
  %v5765 = vadd.f32 %v5075, %v5651
  %v5766 = vadd.f32 %v5076, %v5656
  %v5767 = vadd.f32 %v5077, %v5659
  %v5768 = vadd.f32 %v5078, %v5664
  %v5769 = vadd.f32 %v5079, %v5667
  %v5770 = vadd.f32 %v5080, %v5672
  %v5771 = vadd.f32 %v5081, %v5675
  %v5772 = vadd.f32 %v5082, %v5680
  %v5773 = vadd.f32 %v5083, %v5683
  %v5774 = vadd.f32 %v5084, %v5688
  %v5775 = vadd.f32 %v5085, %v5691
  %v5776 = vadd.f32 %v5086, %v5696
  %v5777 = vadd.f32 %v5087, %v5699
  %v5778 = vadd.f32 %v5088, %v5704
  %v5779 = vadd.f32 %v5089, %v5707
  %v5780 = vadd.f32 %v5090, %v5712
  %v5781 = vadd.f32 %v5091, %v5715
  %v5782 = vld [vmem:[%s1022] sm:$0xf]
  %v5783 = vld [vmem:[%s1022 + $0x4] sm:$0xf]
  %v5784 = vld [vmem:[%s1022 + $0x8] sm:$0x1]
  %v5785 = vld [vmem:[%s1022 + $0xc] sm:$0xf]
  %v5786 = vld [vmem:[%s1022 + $0x10] sm:$0xf]
  %v5787 = vld [vmem:[%s1022 + $0x14] sm:$0x1]
  %v5788 = vld [vmem:[%s1022 + $0x18] sm:$0xf]
  %v5789 = vld [vmem:[%s1022 + $0x1c] sm:$0xf]
  %v5790 = vld [vmem:[%s1022 + $0x20] sm:$0x1]
  %v5791 = vld [vmem:[%s1022 + $0x24] sm:$0xf]
  %v5792 = vld [vmem:[%s1022 + $0x28] sm:$0xf]
  %v5793 = vld [vmem:[%s1022 + $0x2c] sm:$0x1]
  %v5794 = vld [vmem:[%s1022 + $0x30] sm:$0xf]
  %v5795 = vld [vmem:[%s1022 + $0x34] sm:$0xf]
  %v5796 = vld [vmem:[%s1022 + $0x38] sm:$0x1]
  %v5797 = vld [vmem:[%s1022 + $0x3c] sm:$0xf]
  %v5798 = vld [vmem:[%s1022 + $0x40] sm:$0xf]
  %v5799 = vld [vmem:[%s1022 + $0x44] sm:$0x1]
  %v5800 = vld [vmem:[%s1022 + $0x48] sm:$0xf]
  %v5801 = vld [vmem:[%s1022 + $0x4c] sm:$0xf]
  %v5802 = vld [vmem:[%s1022 + $0x50] sm:$0x1]
  %v5803 = vld [vmem:[%s1022 + $0x54] sm:$0xf]
  %v5804 = vld [vmem:[%s1022 + $0x58] sm:$0xf]
  %v5805 = vld [vmem:[%s1022 + $0x5c] sm:$0x1]
  %v5806 = vld [vmem:[%s1022 + $0x60] sm:$0xf]
  %v5807 = vld [vmem:[%s1022 + $0x64] sm:$0xf]
  %v5808 = vld [vmem:[%s1022 + $0x68] sm:$0x1]
  %v5809 = vld [vmem:[%s1022 + $0x6c] sm:$0xf]
  %v5810 = vld [vmem:[%s1022 + $0x70] sm:$0xf]
  %v5811 = vld [vmem:[%s1022 + $0x74] sm:$0x1]
  %v5812 = vld [vmem:[%s1022 + $0x78] sm:$0xf]
  %v5813 = vld [vmem:[%s1022 + $0x7c] sm:$0xf]
  %v5814 = vld [vmem:[%s1022 + $0x80] sm:$0x1]
  %v5815 = vld [vmem:[%s1022 + $0x84] sm:$0xf]
  %v5816 = vld [vmem:[%s1022 + $0x88] sm:$0xf]
  %v5817 = vld [vmem:[%s1022 + $0x8c] sm:$0x1]
  %v5818 = vld [vmem:[%s1022 + $0x90] sm:$0xf]
  %v5819 = vld [vmem:[%s1022 + $0x94] sm:$0xf]
  %v5820 = vld [vmem:[%s1022 + $0x98] sm:$0x1]
  %v5821 = vld [vmem:[%s1022 + $0x9c] sm:$0xf]
  %v5822 = vld [vmem:[%s1022 + $0xa0] sm:$0xf]
  %v5823 = vld [vmem:[%s1022 + $0xa4] sm:$0x1]
  %v5824 = vld [vmem:[%s1022 + $0xa8] sm:$0xf]
  %v5825 = vld [vmem:[%s1022 + $0xac] sm:$0xf]
  %v5826 = vld [vmem:[%s1022 + $0xb0] sm:$0x1]
  %v5827 = vld [vmem:[%s1022 + $0xb4] sm:$0xf]
  %v5828 = vld [vmem:[%s1022 + $0xb8] sm:$0xf]
  %v5829 = vld [vmem:[%s1022 + $0xbc] sm:$0x1]
  %v5830 = vld [vmem:[%s1022 + $0xd8] sm:$0xf]
  %v5831 = vld [vmem:[%s1022 + $0xdc] sm:$0xf]
  %v5832 = vld [vmem:[%s1022 + $0xe0] sm:$0x1]
  %v5833 = vld [vmem:[%s1022 + $0xe4] sm:$0xf]
  %v5834 = vld [vmem:[%s1022 + $0xe8] sm:$0xf]
  %v5835 = vld [vmem:[%s1022 + $0xec] sm:$0x1]
  %v5836 = vld [vmem:[%s1022 + $0xf0] sm:$0xf]
  %v5837 = vld [vmem:[%s1022 + $0xf4] sm:$0xf]
  %v5838 = vld [vmem:[%s1022 + $0xf8] sm:$0x1]
  %v5839 = vld [vmem:[%s1022 + $0xfc] sm:$0xf]
  %v5840 = vld [vmem:[%s1022 + $0x100] sm:$0xf]
  %v5841 = vld [vmem:[%s1022 + $0x104] sm:$0x1]
  %v5842 = vld [vmem:[%s1022 + $0x108] sm:$0xf]
  %v5843 = vld [vmem:[%s1022 + $0x10c] sm:$0xf]
  %v5844 = vld [vmem:[%s1022 + $0x110] sm:$0x1]
  %v5845 = vld [vmem:[%s1022 + $0x114] sm:$0xf]
  %v5846 = vld [vmem:[%s1022 + $0x118] sm:$0xf]
  %v5847 = vld [vmem:[%s1022 + $0x11c] sm:$0x1]
  %v5848 = vld [vmem:[%s1022 + $0x120] sm:$0xf]
  %v5849 = vld [vmem:[%s1022 + $0x124] sm:$0xf]
  %v5850 = vld [vmem:[%s1022 + $0x128] sm:$0x1]
  %v5851 = vld [vmem:[%s1022 + $0x12c] sm:$0xf]
  %v5852 = vld [vmem:[%s1022 + $0x130] sm:$0xf]
  %v5853 = vld [vmem:[%s1022 + $0x134] sm:$0x1]
  %v5854 = vld [vmem:[%s1022 + $0x138] sm:$0xf]
  %v5855 = vld [vmem:[%s1022 + $0x13c] sm:$0xf]
  %v5856 = vld [vmem:[%s1022 + $0x140] sm:$0x1]
  %v5857 = vld [vmem:[%s1022 + $0x144] sm:$0xf]
  %v5858 = vld [vmem:[%s1022 + $0x148] sm:$0xf]
  %v5859 = vld [vmem:[%s1022 + $0x14c] sm:$0x1]
  %v5860 = vld [vmem:[%s1022 + $0x150] sm:$0xf]
  %v5861 = vld [vmem:[%s1022 + $0x154] sm:$0xf]
  %v5862 = vld [vmem:[%s1022 + $0x158] sm:$0x1]
  %v5863 = vld [vmem:[%s1022 + $0x15c] sm:$0xf]
  %v5864 = vld [vmem:[%s1022 + $0x160] sm:$0xf]
  %v5865 = vld [vmem:[%s1022 + $0x164] sm:$0x1]
  %v5866 = vld [vmem:[%s1022 + $0x168] sm:$0xf]
  %v5867 = vld [vmem:[%s1022 + $0x16c] sm:$0xf]
  %v5868 = vld [vmem:[%s1022 + $0x170] sm:$0x1]
  %v5869 = vld [vmem:[%s1022 + $0x174] sm:$0xf]
  %v5870 = vld [vmem:[%s1022 + $0x178] sm:$0xf]
  %v5871 = vld [vmem:[%s1022 + $0x17c] sm:$0x1]
  %v5872 = vld [vmem:[%s1022 + $0x180] sm:$0xf]
  %v5873 = vld [vmem:[%s1022 + $0x184] sm:$0xf]
  %v5874 = vld [vmem:[%s1022 + $0x188] sm:$0x1]
  %v5875 = vld [vmem:[%s1022 + $0x18c] sm:$0xf]
  %v5876 = vld [vmem:[%s1022 + $0x190] sm:$0xf]
  %v5877 = vld [vmem:[%s1022 + $0x194] sm:$0x1]
  %v5879 = vshrl.u32 %v5782, 16
  %v5881 = vrot.slane %v5879, 4
  %v5882 = vshll.u32 %v5782, 16
  %v5884 = vrot.slane %v5882, 5
  %v5885 = vor.u32 %v5881, %v5884
  %v5886 = vrot.slane %v5885, 4
  %v5888 = vshll.u32 %v5783, 16
  %v5890 = vrot.slane %v5888, 5
  %v5891 = vsel %vm2382, %v5886, %v5890
  %v5892 = vshrl.u32 %v5783, 16
  %v5894 = vrot.slane %v5892, 4
  %v5895 = vor.u32 %v5894, %v5890
  %v5896 = vrot.slane %v5895, 4
  %v5898 = vshll.u32 %v5784, 16
  %v5900 = vrot.slane %v5898, 5
  %v5901 = vsel %vm2382, %v5896, %v5900
  %v5903 = vshrl.u32 %v5785, 16
  %v5905 = vrot.slane %v5903, 4
  %v5906 = vshll.u32 %v5785, 16
  %v5908 = vrot.slane %v5906, 5
  %v5909 = vor.u32 %v5905, %v5908
  %v5910 = vrot.slane %v5909, 4
  %v5912 = vshll.u32 %v5786, 16
  %v5914 = vrot.slane %v5912, 5
  %v5915 = vsel %vm2382, %v5910, %v5914
  %v5916 = vshrl.u32 %v5786, 16
  %v5918 = vrot.slane %v5916, 4
  %v5919 = vor.u32 %v5918, %v5914
  %v5920 = vrot.slane %v5919, 4
  %v5922 = vshll.u32 %v5787, 16
  %v5924 = vrot.slane %v5922, 5
  %v5925 = vsel %vm2382, %v5920, %v5924
  %v5927 = vshrl.u32 %v5788, 16
  %v5929 = vrot.slane %v5927, 4
  %v5930 = vshll.u32 %v5788, 16
  %v5932 = vrot.slane %v5930, 5
  %v5933 = vor.u32 %v5929, %v5932
  %v5934 = vrot.slane %v5933, 4
  %v5936 = vshll.u32 %v5789, 16
  %v5938 = vrot.slane %v5936, 5
  %v5939 = vsel %vm2382, %v5934, %v5938
  %v5940 = vshrl.u32 %v5789, 16
  %v5942 = vrot.slane %v5940, 4
  %v5943 = vor.u32 %v5942, %v5938
  %v5944 = vrot.slane %v5943, 4
  %v5946 = vshll.u32 %v5790, 16
  %v5948 = vrot.slane %v5946, 5
  %v5949 = vsel %vm2382, %v5944, %v5948
  %v5951 = vshrl.u32 %v5791, 16
  %v5953 = vrot.slane %v5951, 4
  %v5954 = vshll.u32 %v5791, 16
  %v5956 = vrot.slane %v5954, 5
  %v5957 = vor.u32 %v5953, %v5956
  %v5958 = vrot.slane %v5957, 4
  %v5960 = vshll.u32 %v5792, 16
  %v5962 = vrot.slane %v5960, 5
  %v5963 = vsel %vm2382, %v5958, %v5962
  %v5964 = vshrl.u32 %v5792, 16
  %v5966 = vrot.slane %v5964, 4
  %v5967 = vor.u32 %v5966, %v5962
  %v5968 = vrot.slane %v5967, 4
  %v5970 = vshll.u32 %v5793, 16
  %v5972 = vrot.slane %v5970, 5
  %v5973 = vsel %vm2382, %v5968, %v5972
  %v5975 = vshrl.u32 %v5794, 16
  %v5977 = vrot.slane %v5975, 4
  %v5978 = vshll.u32 %v5794, 16
  %v5980 = vrot.slane %v5978, 5
  %v5981 = vor.u32 %v5977, %v5980
  %v5982 = vrot.slane %v5981, 4
  %v5984 = vshll.u32 %v5795, 16
  %v5986 = vrot.slane %v5984, 5
  %v5987 = vsel %vm2382, %v5982, %v5986
  %v5988 = vshrl.u32 %v5795, 16
  %v5990 = vrot.slane %v5988, 4
  %v5991 = vor.u32 %v5990, %v5986
  %v5992 = vrot.slane %v5991, 4
  %v5994 = vshll.u32 %v5796, 16
  %v5996 = vrot.slane %v5994, 5
  %v5997 = vsel %vm2382, %v5992, %v5996
  %v5999 = vshrl.u32 %v5797, 16
  %v6001 = vrot.slane %v5999, 4
  %v6002 = vshll.u32 %v5797, 16
  %v6004 = vrot.slane %v6002, 5
  %v6005 = vor.u32 %v6001, %v6004
  %v6006 = vrot.slane %v6005, 4
  %v6008 = vshll.u32 %v5798, 16
  %v6010 = vrot.slane %v6008, 5
  %v6011 = vsel %vm2382, %v6006, %v6010
  %v6012 = vshrl.u32 %v5798, 16
  %v6014 = vrot.slane %v6012, 4
  %v6015 = vor.u32 %v6014, %v6010
  %v6016 = vrot.slane %v6015, 4
  %v6018 = vshll.u32 %v5799, 16
  %v6020 = vrot.slane %v6018, 5
  %v6021 = vsel %vm2382, %v6016, %v6020
  %v6023 = vshrl.u32 %v5800, 16
  %v6025 = vrot.slane %v6023, 4
  %v6026 = vshll.u32 %v5800, 16
  %v6028 = vrot.slane %v6026, 5
  %v6029 = vor.u32 %v6025, %v6028
  %v6030 = vrot.slane %v6029, 4
  %v6032 = vshll.u32 %v5801, 16
  %v6034 = vrot.slane %v6032, 5
  %v6035 = vsel %vm2382, %v6030, %v6034
  %v6036 = vshrl.u32 %v5801, 16
  %v6038 = vrot.slane %v6036, 4
  %v6039 = vor.u32 %v6038, %v6034
  %v6040 = vrot.slane %v6039, 4
  %v6042 = vshll.u32 %v5802, 16
  %v6044 = vrot.slane %v6042, 5
  %v6045 = vsel %vm2382, %v6040, %v6044
  %v6047 = vshrl.u32 %v5803, 16
  %v6049 = vrot.slane %v6047, 4
  %v6050 = vshll.u32 %v5803, 16
  %v6052 = vrot.slane %v6050, 5
  %v6053 = vor.u32 %v6049, %v6052
  %v6054 = vrot.slane %v6053, 4
  %v6056 = vshll.u32 %v5804, 16
  %v6058 = vrot.slane %v6056, 5
  %v6059 = vsel %vm2382, %v6054, %v6058
  %v6060 = vshrl.u32 %v5804, 16
  %v6062 = vrot.slane %v6060, 4
  %v6063 = vor.u32 %v6062, %v6058
  %v6064 = vrot.slane %v6063, 4
  %v6066 = vshll.u32 %v5805, 16
  %v6068 = vrot.slane %v6066, 5
  %v6069 = vsel %vm2382, %v6064, %v6068
  %v6071 = vshrl.u32 %v5806, 16
  %v6073 = vrot.slane %v6071, 4
  %v6074 = vshll.u32 %v5806, 16
  %v6076 = vrot.slane %v6074, 5
  %v6077 = vor.u32 %v6073, %v6076
  %v6078 = vrot.slane %v6077, 4
  %v6080 = vshll.u32 %v5807, 16
  %v6082 = vrot.slane %v6080, 5
  %v6083 = vsel %vm2382, %v6078, %v6082
  %v6084 = vshrl.u32 %v5807, 16
  %v6086 = vrot.slane %v6084, 4
  %v6087 = vor.u32 %v6086, %v6082
  %v6088 = vrot.slane %v6087, 4
  %v6090 = vshll.u32 %v5808, 16
  %v6092 = vrot.slane %v6090, 5
  %v6093 = vsel %vm2382, %v6088, %v6092
  %v6095 = vshrl.u32 %v5809, 16
  %v6097 = vrot.slane %v6095, 4
  %v6098 = vshll.u32 %v5809, 16
  %v6100 = vrot.slane %v6098, 5
  %v6101 = vor.u32 %v6097, %v6100
  %v6102 = vrot.slane %v6101, 4
  %v6104 = vshll.u32 %v5810, 16
  %v6106 = vrot.slane %v6104, 5
  %v6107 = vsel %vm2382, %v6102, %v6106
  %v6108 = vshrl.u32 %v5810, 16
  %v6110 = vrot.slane %v6108, 4
  %v6111 = vor.u32 %v6110, %v6106
  %v6112 = vrot.slane %v6111, 4
  %v6114 = vshll.u32 %v5811, 16
  %v6116 = vrot.slane %v6114, 5
  %v6117 = vsel %vm2382, %v6112, %v6116
  %v6119 = vshrl.u32 %v5812, 16
  %v6121 = vrot.slane %v6119, 4
  %v6122 = vshll.u32 %v5812, 16
  %v6124 = vrot.slane %v6122, 5
  %v6125 = vor.u32 %v6121, %v6124
  %v6126 = vrot.slane %v6125, 4
  %v6128 = vshll.u32 %v5813, 16
  %v6130 = vrot.slane %v6128, 5
  %v6131 = vsel %vm2382, %v6126, %v6130
  %v6132 = vshrl.u32 %v5813, 16
  %v6134 = vrot.slane %v6132, 4
  %v6135 = vor.u32 %v6134, %v6130
  %v6136 = vrot.slane %v6135, 4
  %v6138 = vshll.u32 %v5814, 16
  %v6140 = vrot.slane %v6138, 5
  %v6141 = vsel %vm2382, %v6136, %v6140
  %v6143 = vshrl.u32 %v5815, 16
  %v6145 = vrot.slane %v6143, 4
  %v6146 = vshll.u32 %v5815, 16
  %v6148 = vrot.slane %v6146, 5
  %v6149 = vor.u32 %v6145, %v6148
  %v6150 = vrot.slane %v6149, 4
  %v6152 = vshll.u32 %v5816, 16
  %v6154 = vrot.slane %v6152, 5
  %v6155 = vsel %vm2382, %v6150, %v6154
  %v6156 = vshrl.u32 %v5816, 16
  %v6158 = vrot.slane %v6156, 4
  %v6159 = vor.u32 %v6158, %v6154
  %v6160 = vrot.slane %v6159, 4
  %v6162 = vshll.u32 %v5817, 16
  %v6164 = vrot.slane %v6162, 5
  %v6165 = vsel %vm2382, %v6160, %v6164
  %v6167 = vshrl.u32 %v5818, 16
  %v6169 = vrot.slane %v6167, 4
  %v6170 = vshll.u32 %v5818, 16
  %v6172 = vrot.slane %v6170, 5
  %v6173 = vor.u32 %v6169, %v6172
  %v6174 = vrot.slane %v6173, 4
  %v6176 = vshll.u32 %v5819, 16
  %v6178 = vrot.slane %v6176, 5
  %v6179 = vsel %vm2382, %v6174, %v6178
  %v6180 = vshrl.u32 %v5819, 16
  %v6182 = vrot.slane %v6180, 4
  %v6183 = vor.u32 %v6182, %v6178
  %v6184 = vrot.slane %v6183, 4
  %v6186 = vshll.u32 %v5820, 16
  %v6188 = vrot.slane %v6186, 5
  %v6189 = vsel %vm2382, %v6184, %v6188
  %v6191 = vshrl.u32 %v5821, 16
  %v6193 = vrot.slane %v6191, 4
  %v6194 = vshll.u32 %v5821, 16
  %v6196 = vrot.slane %v6194, 5
  %v6197 = vor.u32 %v6193, %v6196
  %v6198 = vrot.slane %v6197, 4
  %v6200 = vshll.u32 %v5822, 16
  %v6202 = vrot.slane %v6200, 5
  %v6203 = vsel %vm2382, %v6198, %v6202
  %v6204 = vshrl.u32 %v5822, 16
  %v6206 = vrot.slane %v6204, 4
  %v6207 = vor.u32 %v6206, %v6202
  %v6208 = vrot.slane %v6207, 4
  %v6210 = vshll.u32 %v5823, 16
  %v6212 = vrot.slane %v6210, 5
  %v6213 = vsel %vm2382, %v6208, %v6212
  %v6215 = vshrl.u32 %v5824, 16
  %v6217 = vrot.slane %v6215, 4
  %v6218 = vshll.u32 %v5824, 16
  %v6220 = vrot.slane %v6218, 5
  %v6221 = vor.u32 %v6217, %v6220
  %v6222 = vrot.slane %v6221, 4
  %v6224 = vshll.u32 %v5825, 16
  %v6226 = vrot.slane %v6224, 5
  %v6227 = vsel %vm2382, %v6222, %v6226
  %v6228 = vshrl.u32 %v5825, 16
  %v6230 = vrot.slane %v6228, 4
  %v6231 = vor.u32 %v6230, %v6226
  %v6232 = vrot.slane %v6231, 4
  %v6234 = vshll.u32 %v5826, 16
  %v6236 = vrot.slane %v6234, 5
  %v6237 = vsel %vm2382, %v6232, %v6236
  %v6239 = vshrl.u32 %v5827, 16
  %v6241 = vrot.slane %v6239, 4
  %v6242 = vshll.u32 %v5827, 16
  %v6244 = vrot.slane %v6242, 5
  %v6245 = vor.u32 %v6241, %v6244
  %v6246 = vrot.slane %v6245, 4
  %v6248 = vshll.u32 %v5828, 16
  %v6250 = vrot.slane %v6248, 5
  %v6251 = vsel %vm2382, %v6246, %v6250
  %v6252 = vshrl.u32 %v5828, 16
  %v6254 = vrot.slane %v6252, 4
  %v6255 = vor.u32 %v6254, %v6250
  %v6256 = vrot.slane %v6255, 4
  %v6258 = vshll.u32 %v5829, 16
  %v6260 = vrot.slane %v6258, 5
  %v6261 = vsel %vm2382, %v6256, %v6260
  %v6263 = vshrl.u32 %v5830, 16
  %v6265 = vrot.slane %v6263, 4
  %v6266 = vshll.u32 %v5830, 16
  %v6268 = vrot.slane %v6266, 5
  %v6269 = vor.u32 %v6265, %v6268
  %v6270 = vrot.slane %v6269, 4
  %v6272 = vshll.u32 %v5831, 16
  %v6274 = vrot.slane %v6272, 5
  %v6275 = vsel %vm2382, %v6270, %v6274
  %v6276 = vshrl.u32 %v5831, 16
  %v6278 = vrot.slane %v6276, 4
  %v6279 = vor.u32 %v6278, %v6274
  %v6280 = vrot.slane %v6279, 4
  %v6282 = vshll.u32 %v5832, 16
  %v6284 = vrot.slane %v6282, 5
  %v6285 = vsel %vm2382, %v6280, %v6284
  %v6287 = vshrl.u32 %v5833, 16
  %v6289 = vrot.slane %v6287, 4
  %v6290 = vshll.u32 %v5833, 16
  %v6292 = vrot.slane %v6290, 5
  %v6293 = vor.u32 %v6289, %v6292
  %v6294 = vrot.slane %v6293, 4
  %v6296 = vshll.u32 %v5834, 16
  %v6298 = vrot.slane %v6296, 5
  %v6299 = vsel %vm2382, %v6294, %v6298
  %v6300 = vshrl.u32 %v5834, 16
  %v6302 = vrot.slane %v6300, 4
  %v6303 = vor.u32 %v6302, %v6298
  %v6304 = vrot.slane %v6303, 4
  %v6306 = vshll.u32 %v5835, 16
  %v6308 = vrot.slane %v6306, 5
  %v6309 = vsel %vm2382, %v6304, %v6308
  %v6311 = vshrl.u32 %v5836, 16
  %v6313 = vrot.slane %v6311, 4
  %v6314 = vshll.u32 %v5836, 16
  %v6316 = vrot.slane %v6314, 5
  %v6317 = vor.u32 %v6313, %v6316
  %v6318 = vrot.slane %v6317, 4
  %v6320 = vshll.u32 %v5837, 16
  %v6322 = vrot.slane %v6320, 5
  %v6323 = vsel %vm2382, %v6318, %v6322
  %v6324 = vshrl.u32 %v5837, 16
  %v6326 = vrot.slane %v6324, 4
  %v6327 = vor.u32 %v6326, %v6322
  %v6328 = vrot.slane %v6327, 4
  %v6330 = vshll.u32 %v5838, 16
  %v6332 = vrot.slane %v6330, 5
  %v6333 = vsel %vm2382, %v6328, %v6332
  %v6335 = vshrl.u32 %v5839, 16
  %v6337 = vrot.slane %v6335, 4
  %v6338 = vshll.u32 %v5839, 16
  %v6340 = vrot.slane %v6338, 5
  %v6341 = vor.u32 %v6337, %v6340
  %v6342 = vrot.slane %v6341, 4
  %v6344 = vshll.u32 %v5840, 16
  %v6346 = vrot.slane %v6344, 5
  %v6347 = vsel %vm2382, %v6342, %v6346
  %v6348 = vshrl.u32 %v5840, 16
  %v6350 = vrot.slane %v6348, 4
  %v6351 = vor.u32 %v6350, %v6346
  %v6352 = vrot.slane %v6351, 4
  %v6354 = vshll.u32 %v5841, 16
  %v6356 = vrot.slane %v6354, 5
  %v6357 = vsel %vm2382, %v6352, %v6356
  %v6359 = vshrl.u32 %v5842, 16
  %v6361 = vrot.slane %v6359, 4
  %v6362 = vshll.u32 %v5842, 16
  %v6364 = vrot.slane %v6362, 5
  %v6365 = vor.u32 %v6361, %v6364
  %v6366 = vrot.slane %v6365, 4
  %v6368 = vshll.u32 %v5843, 16
  %v6370 = vrot.slane %v6368, 5
  %v6371 = vsel %vm2382, %v6366, %v6370
  %v6372 = vshrl.u32 %v5843, 16
  %v6374 = vrot.slane %v6372, 4
  %v6375 = vor.u32 %v6374, %v6370
  %v6376 = vrot.slane %v6375, 4
  %v6378 = vshll.u32 %v5844, 16
  %v6380 = vrot.slane %v6378, 5
  %v6381 = vsel %vm2382, %v6376, %v6380
  %v6383 = vshrl.u32 %v5845, 16
  %v6385 = vrot.slane %v6383, 4
  %v6386 = vshll.u32 %v5845, 16
  %v6388 = vrot.slane %v6386, 5
  %v6389 = vor.u32 %v6385, %v6388
  %v6390 = vrot.slane %v6389, 4
  %v6392 = vshll.u32 %v5846, 16
  %v6394 = vrot.slane %v6392, 5
  %v6395 = vsel %vm2382, %v6390, %v6394
  %v6396 = vshrl.u32 %v5846, 16
  %v6398 = vrot.slane %v6396, 4
  %v6399 = vor.u32 %v6398, %v6394
  %v6400 = vrot.slane %v6399, 4
  %v6402 = vshll.u32 %v5847, 16
  %v6404 = vrot.slane %v6402, 5
  %v6405 = vsel %vm2382, %v6400, %v6404
  %v6407 = vshrl.u32 %v5848, 16
  %v6409 = vrot.slane %v6407, 4
  %v6410 = vshll.u32 %v5848, 16
  %v6412 = vrot.slane %v6410, 5
  %v6413 = vor.u32 %v6409, %v6412
  %v6414 = vrot.slane %v6413, 4
  %v6416 = vshll.u32 %v5849, 16
  %v6418 = vrot.slane %v6416, 5
  %v6419 = vsel %vm2382, %v6414, %v6418
  %v6420 = vshrl.u32 %v5849, 16
  %v6422 = vrot.slane %v6420, 4
  %v6423 = vor.u32 %v6422, %v6418
  %v6424 = vrot.slane %v6423, 4
  %v6426 = vshll.u32 %v5850, 16
  %v6428 = vrot.slane %v6426, 5
  %v6429 = vsel %vm2382, %v6424, %v6428
  %v6431 = vshrl.u32 %v5851, 16
  %v6433 = vrot.slane %v6431, 4
  %v6434 = vshll.u32 %v5851, 16
  %v6436 = vrot.slane %v6434, 5
  %v6437 = vor.u32 %v6433, %v6436
  %v6438 = vrot.slane %v6437, 4
  %v6440 = vshll.u32 %v5852, 16
  %v6442 = vrot.slane %v6440, 5
  %v6443 = vsel %vm2382, %v6438, %v6442
  %v6444 = vshrl.u32 %v5852, 16
  %v6446 = vrot.slane %v6444, 4
  %v6447 = vor.u32 %v6446, %v6442
  %v6448 = vrot.slane %v6447, 4
  %v6450 = vshll.u32 %v5853, 16
  %v6452 = vrot.slane %v6450, 5
  %v6453 = vsel %vm2382, %v6448, %v6452
  %v6455 = vshrl.u32 %v5854, 16
  %v6457 = vrot.slane %v6455, 4
  %v6458 = vshll.u32 %v5854, 16
  %v6460 = vrot.slane %v6458, 5
  %v6461 = vor.u32 %v6457, %v6460
  %v6462 = vrot.slane %v6461, 4
  %v6464 = vshll.u32 %v5855, 16
  %v6466 = vrot.slane %v6464, 5
  %v6467 = vsel %vm2382, %v6462, %v6466
  %v6468 = vshrl.u32 %v5855, 16
  %v6470 = vrot.slane %v6468, 4
  %v6471 = vor.u32 %v6470, %v6466
  %v6472 = vrot.slane %v6471, 4
  %v6474 = vshll.u32 %v5856, 16
  %v6476 = vrot.slane %v6474, 5
  %v6477 = vsel %vm2382, %v6472, %v6476
  %v6479 = vshrl.u32 %v5857, 16
  %v6481 = vrot.slane %v6479, 4
  %v6482 = vshll.u32 %v5857, 16
  %v6484 = vrot.slane %v6482, 5
  %v6485 = vor.u32 %v6481, %v6484
  %v6486 = vrot.slane %v6485, 4
  %v6488 = vshll.u32 %v5858, 16
  %v6490 = vrot.slane %v6488, 5
  %v6491 = vsel %vm2382, %v6486, %v6490
  %v6492 = vshrl.u32 %v5858, 16
  %v6494 = vrot.slane %v6492, 4
  %v6495 = vor.u32 %v6494, %v6490
  %v6496 = vrot.slane %v6495, 4
  %v6498 = vshll.u32 %v5859, 16
  %v6500 = vrot.slane %v6498, 5
  %v6501 = vsel %vm2382, %v6496, %v6500
  %v6503 = vshrl.u32 %v5860, 16
  %v6505 = vrot.slane %v6503, 4
  %v6506 = vshll.u32 %v5860, 16
  %v6508 = vrot.slane %v6506, 5
  %v6509 = vor.u32 %v6505, %v6508
  %v6510 = vrot.slane %v6509, 4
  %v6512 = vshll.u32 %v5861, 16
  %v6514 = vrot.slane %v6512, 5
  %v6515 = vsel %vm2382, %v6510, %v6514
  %v6516 = vshrl.u32 %v5861, 16
  %v6518 = vrot.slane %v6516, 4
  %v6519 = vor.u32 %v6518, %v6514
  %v6520 = vrot.slane %v6519, 4
  %v6522 = vshll.u32 %v5862, 16
  %v6524 = vrot.slane %v6522, 5
  %v6525 = vsel %vm2382, %v6520, %v6524
  %v6527 = vshrl.u32 %v5863, 16
  %v6529 = vrot.slane %v6527, 4
  %v6530 = vshll.u32 %v5863, 16
  %v6532 = vrot.slane %v6530, 5
  %v6533 = vor.u32 %v6529, %v6532
  %v6534 = vrot.slane %v6533, 4
  %v6536 = vshll.u32 %v5864, 16
  %v6538 = vrot.slane %v6536, 5
  %v6539 = vsel %vm2382, %v6534, %v6538
  %v6540 = vshrl.u32 %v5864, 16
  %v6542 = vrot.slane %v6540, 4
  %v6543 = vor.u32 %v6542, %v6538
  %v6544 = vrot.slane %v6543, 4
  %v6546 = vshll.u32 %v5865, 16
  %v6548 = vrot.slane %v6546, 5
  %v6549 = vsel %vm2382, %v6544, %v6548
  %v6551 = vshrl.u32 %v5866, 16
  %v6553 = vrot.slane %v6551, 4
  %v6554 = vshll.u32 %v5866, 16
  %v6556 = vrot.slane %v6554, 5
  %v6557 = vor.u32 %v6553, %v6556
  %v6558 = vrot.slane %v6557, 4
  %v6560 = vshll.u32 %v5867, 16
  %v6562 = vrot.slane %v6560, 5
  %v6563 = vsel %vm2382, %v6558, %v6562
  %v6564 = vshrl.u32 %v5867, 16
  %v6566 = vrot.slane %v6564, 4
  %v6567 = vor.u32 %v6566, %v6562
  %v6568 = vrot.slane %v6567, 4
  %v6570 = vshll.u32 %v5868, 16
  %v6572 = vrot.slane %v6570, 5
  %v6573 = vsel %vm2382, %v6568, %v6572
  %v6575 = vshrl.u32 %v5869, 16
  %v6577 = vrot.slane %v6575, 4
  %v6578 = vshll.u32 %v5869, 16
  %v6580 = vrot.slane %v6578, 5
  %v6581 = vor.u32 %v6577, %v6580
  %v6582 = vrot.slane %v6581, 4
  %v6584 = vshll.u32 %v5870, 16
  %v6586 = vrot.slane %v6584, 5
  %v6587 = vsel %vm2382, %v6582, %v6586
  %v6588 = vshrl.u32 %v5870, 16
  %v6590 = vrot.slane %v6588, 4
  %v6591 = vor.u32 %v6590, %v6586
  %v6592 = vrot.slane %v6591, 4
  %v6594 = vshll.u32 %v5871, 16
  %v6596 = vrot.slane %v6594, 5
  %v6597 = vsel %vm2382, %v6592, %v6596
  %v6599 = vshrl.u32 %v5872, 16
  %v6601 = vrot.slane %v6599, 4
  %v6602 = vshll.u32 %v5872, 16
  %v6604 = vrot.slane %v6602, 5
  %v6605 = vor.u32 %v6601, %v6604
  %v6606 = vrot.slane %v6605, 4
  %v6608 = vshll.u32 %v5873, 16
  %v6610 = vrot.slane %v6608, 5
  %v6611 = vsel %vm2382, %v6606, %v6610
  %v6612 = vshrl.u32 %v5873, 16
  %v6614 = vrot.slane %v6612, 4
  %v6615 = vor.u32 %v6614, %v6610
  %v6616 = vrot.slane %v6615, 4
  %v6618 = vshll.u32 %v5874, 16
  %v6620 = vrot.slane %v6618, 5
  %v6621 = vsel %vm2382, %v6616, %v6620
  %v6623 = vshrl.u32 %v5875, 16
  %v6625 = vrot.slane %v6623, 4
  %v6626 = vshll.u32 %v5875, 16
  %v6628 = vrot.slane %v6626, 5
  %v6629 = vor.u32 %v6625, %v6628
  %v6630 = vrot.slane %v6629, 4
  %v6632 = vshll.u32 %v5876, 16
  %v6634 = vrot.slane %v6632, 5
  %v6635 = vsel %vm2382, %v6630, %v6634
  %v6636 = vshrl.u32 %v5876, 16
  %v6638 = vrot.slane %v6636, 4
  %v6639 = vor.u32 %v6638, %v6634
  %v6640 = vrot.slane %v6639, 4
  %v6642 = vshll.u32 %v5877, 16
  %v6644 = vrot.slane %v6642, 5
  %v6645 = vsel %vm2382, %v6640, %v6644
  %s6646 = scalar_lea.vmem %s4, 64
  %v6647 = vld [vmem:[%s6646] sm:$0xf]
  %v6648 = vld [vmem:[%s6646 + $0x4] sm:$0xf]
  %v6649 = vld [vmem:[%s6646 + $0x8] sm:$0xf]
  %v6650 = vld [vmem:[%s6646 + $0xc] sm:$0xf]
  %v6651 = vunpack.c.l.b16 %v5891
  %v6652 = vunpack.c.l.b16 %v5901
  %v6653 = vunpack.c.l.b16 %v5915
  %v6654 = vunpack.c.l.b16 %v5925
  %v6655 = vunpack.c.l.b16 %v5939
  %v6656 = vunpack.c.l.b16 %v5949
  %v6657 = vunpack.c.l.b16 %v5963
  %v6658 = vunpack.c.l.b16 %v5973
  %v6659 = vunpack.c.l.b16 %v5987
  %v6660 = vunpack.c.l.b16 %v5997
  %v6661 = vunpack.c.l.b16 %v6011
  %v6662 = vunpack.c.l.b16 %v6021
  %v6663 = vunpack.c.l.b16 %v6035
  %v6664 = vunpack.c.l.b16 %v6045
  %v6665 = vunpack.c.l.b16 %v6059
  %v6666 = vunpack.c.l.b16 %v6069
  %v6667 = vunpack.c.l.b16 %v6083
  %v6668 = vunpack.c.l.b16 %v6093
  %v6669 = vunpack.c.l.b16 %v6107
  %v6670 = vunpack.c.l.b16 %v6117
  %v6671 = vunpack.c.l.b16 %v6131
  %v6672 = vunpack.c.l.b16 %v6141
  %v6673 = vunpack.c.l.b16 %v6155
  %v6674 = vunpack.c.l.b16 %v6165
  %v6675 = vunpack.c.l.b16 %v6179
  %v6676 = vunpack.c.l.b16 %v6189
  %v6677 = vunpack.c.l.b16 %v6203
  %v6678 = vunpack.c.l.b16 %v6213
  %v6679 = vunpack.c.l.b16 %v6227
  %v6680 = vunpack.c.l.b16 %v6237
  %v6681 = vunpack.c.l.b16 %v6251
  %v6682 = vunpack.c.l.b16 %v6261
  %v6683 = vunpack.c.l.b16 %v6275
  %v6684 = vunpack.c.l.b16 %v6285
  %v6685 = vunpack.c.l.b16 %v6299
  %v6686 = vunpack.c.l.b16 %v6309
  %v6687 = vunpack.c.l.b16 %v6323
  %v6688 = vunpack.c.l.b16 %v6333
  %v6689 = vunpack.c.l.b16 %v6347
  %v6690 = vunpack.c.l.b16 %v6357
  %v6691 = vunpack.c.l.b16 %v6371
  %v6692 = vunpack.c.l.b16 %v6381
  %v6693 = vunpack.c.l.b16 %v6395
  %v6694 = vunpack.c.l.b16 %v6405
  %v6695 = vunpack.c.l.b16 %v6419
  %v6696 = vunpack.c.l.b16 %v6429
  %v6697 = vunpack.c.l.b16 %v6443
  %v6698 = vunpack.c.l.b16 %v6453
  %v6699 = vunpack.c.l.b16 %v6467
  %v6700 = vunpack.c.l.b16 %v6477
  %v6701 = vunpack.c.l.b16 %v6491
  %v6702 = vunpack.c.l.b16 %v6501
  %v6703 = vunpack.c.l.b16 %v6515
  %v6704 = vunpack.c.l.b16 %v6525
  %v6705 = vunpack.c.l.b16 %v6539
  %v6706 = vunpack.c.l.b16 %v6549
  %v6707 = vunpack.c.l.b16 %v6563
  %v6708 = vunpack.c.l.b16 %v6573
  %v6709 = vunpack.c.l.b16 %v6587
  %v6710 = vunpack.c.l.b16 %v6597
  %v6711 = vunpack.c.l.b16 %v6611
  %v6712 = vunpack.c.l.b16 %v6621
  %v6713 = vunpack.c.l.b16 %v6635
  %v6714 = vunpack.c.l.b16 %v6645
  %v6715 = vpack.c.b16 %v6652, %v6651
  %v6716 = vpack.c.b16 %v6654, %v6653
  %v6717 = vpack.c.b16 %v6656, %v6655
  %v6718 = vpack.c.b16 %v6658, %v6657
  %v6719 = vpack.c.b16 %v6660, %v6659
  %v6720 = vpack.c.b16 %v6662, %v6661
  %v6721 = vpack.c.b16 %v6664, %v6663
  %v6722 = vpack.c.b16 %v6666, %v6665
  %v6723 = vpack.c.b16 %v6668, %v6667
  %v6724 = vpack.c.b16 %v6670, %v6669
  %v6725 = vpack.c.b16 %v6672, %v6671
  %v6726 = vpack.c.b16 %v6674, %v6673
  %v6727 = vpack.c.b16 %v6676, %v6675
  %v6728 = vpack.c.b16 %v6678, %v6677
  %v6729 = vpack.c.b16 %v6680, %v6679
  %v6730 = vpack.c.b16 %v6682, %v6681
  %v6731 = vpack.c.b16 %v6684, %v6683
  %v6732 = vpack.c.b16 %v6686, %v6685
  %v6733 = vpack.c.b16 %v6688, %v6687
  %v6734 = vpack.c.b16 %v6690, %v6689
  %v6735 = vpack.c.b16 %v6692, %v6691
  %v6736 = vpack.c.b16 %v6694, %v6693
  %v6737 = vpack.c.b16 %v6696, %v6695
  %v6738 = vpack.c.b16 %v6698, %v6697
  %v6739 = vpack.c.b16 %v6700, %v6699
  %v6740 = vpack.c.b16 %v6702, %v6701
  %v6741 = vpack.c.b16 %v6704, %v6703
  %v6742 = vpack.c.b16 %v6706, %v6705
  %v6743 = vpack.c.b16 %v6708, %v6707
  %v6744 = vpack.c.b16 %v6710, %v6709
  %v6745 = vpack.c.b16 %v6712, %v6711
  %v6746 = vpack.c.b16 %v6714, %v6713
  %v6751 = vunpack.c.l.b16 %v6647
  %v6752 = vunpack.c.l.b16 %v6648
  %v6753 = vunpack.c.l.b16 %v6649
  %v6754 = vunpack.c.l.b16 %v6650
  %v6755 = vpack.c.b16 %v6752, %v6751
  %v6756 = vpack.c.b16 %v6754, %v6753
  %v6760 = vsel %vm3264, %v6715, 0
  %v6763 = vsel %vm3264, %v6716, 0
  %v6766 = vsel %vm3264, %v6717, 0
  %v6769 = vsel %vm3264, %v6718, 0
  %v6772 = vsel %vm3264, %v6719, 0
  %v6775 = vsel %vm3264, %v6720, 0
  %v6778 = vsel %vm3264, %v6721, 0
  %v6781 = vsel %vm3264, %v6722, 0
  %v6784 = vsel %vm3264, %v6723, 0
  %v6787 = vsel %vm3264, %v6724, 0
  %v6790 = vsel %vm3264, %v6725, 0
  %v6793 = vsel %vm3264, %v6726, 0
  %v6796 = vsel %vm3264, %v6727, 0
  %v6799 = vsel %vm3264, %v6728, 0
  %v6802 = vsel %vm3264, %v6729, 0
  %v6805 = vsel %vm3264, %v6730, 0
  %v6808 = vsel %vm3264, %v6731, 0
  %v6811 = vsel %vm3264, %v6732, 0
  %v6814 = vsel %vm3264, %v6733, 0
  %v6817 = vsel %vm3264, %v6734, 0
  %v6820 = vsel %vm3264, %v6735, 0
  %v6823 = vsel %vm3264, %v6736, 0
  %v6826 = vsel %vm3264, %v6737, 0
  %v6829 = vsel %vm3264, %v6738, 0
  %v6832 = vsel %vm3264, %v6739, 0
  %v6835 = vsel %vm3264, %v6740, 0
  %v6838 = vsel %vm3264, %v6741, 0
  %v6841 = vsel %vm3264, %v6742, 0
  %v6844 = vsel %vm3264, %v6743, 0
  %v6847 = vsel %vm3264, %v6744, 0
  %v6850 = vsel %vm3264, %v6745, 0
  %v6853 = vsel %vm3264, %v6746, 0
  %6855 = vmatprep.subr.bf16.mxu0 0
  %6856 = vmatpush1.bf16.msra.mxu0 %v6755
  %6857 = vmatprep.subr.bf16.mxu0 0
  %6858 = vmatpush1.bf16.msra.mxu0 %v6756
  %6859 = vmatprep.subr.bf16.mxu0 0
  %6860 = vmatpush1.bf16.msra.mxu0 0
  %6861 = vmatprep.subr.bf16.mxu0 0
  %6862 = vmatpush1.bf16.msra.mxu0 0
  %6863 = vmatprep.subr.bf16.mxu0 0
  %6864 = vmatpush1.bf16.msra.mxu0 0
  %6865 = vmatprep.subr.bf16.mxu0 0
  %6866 = vmatpush1.bf16.msra.mxu0 0
  %6867 = vmatprep.subr.bf16.mxu0 0
  %6868 = vmatpush1.bf16.msra.mxu0 0
  %6869 = vmatprep.subr.bf16.mxu0 0
  %6870 = vmatpush1.bf16.msra.mxu0 0
  %6871 = vmatprep.subr.bf16.mxu0 0
  %6872 = vmatpush1.bf16.msra.mxu0 0
  %6873 = vmatprep.subr.bf16.mxu0 0
  %6874 = vmatpush1.bf16.msra.mxu0 0
  %6875 = vmatprep.subr.bf16.mxu0 0
  %6876 = vmatpush1.bf16.msra.mxu0 0
  %6877 = vmatprep.subr.bf16.mxu0 0
  %6878 = vmatpush1.bf16.msra.mxu0 0
  %6879 = vmatprep.subr.bf16.mxu0 0
  %6880 = vmatpush1.bf16.msra.mxu0 0
  %6881 = vmatprep.subr.bf16.mxu0 0
  %6882 = vmatpush1.bf16.msra.mxu0 0
  %6883 = vmatprep.subr.bf16.mxu0 0
  %6884 = vmatpush1.bf16.msra.mxu0 0
  %6885 = vmatprep.subr.bf16.mxu0 0
  %6886 = vmatpush1.bf16.msra.mxu0 0
  %6887 = vmatprep.mubr.bf16.mxu0 0
  %6888 = vmatmul.mubr.bf16.gmra.mrb[0].mxu0 %v6760
  %v6889 = vpop.f32.mrb[0].mxu0
  %v6890 = vadd.f32 0.0, %v6889
  %v6891 = vpop.f32.mrb[0].mxu0
  %v6892 = vpop.f32.mrb[0].mxu0
  %v6893 = vadd.f32 0.0, %v6892
  %v6894 = vpop.f32.mrb[0].mxu0
  %6895 = vmatprep.mubr.bf16.mxu0 0
  %6896 = vmatmul.mubr.bf16.gmra.mrb[0].mxu0 %v6763
  %v6897 = vpop.f32.mrb[0].mxu0
  %v6898 = vadd.f32 0.0, %v6897
  %v6899 = vpop.f32.mrb[0].mxu0
  %v6900 = vpop.f32.mrb[0].mxu0
  %v6901 = vadd.f32 0.0, %v6900
  %v6902 = vpop.f32.mrb[0].mxu0
  %6903 = vmatprep.mubr.bf16.mxu0 0
  %6904 = vmatmul.mubr.bf16.gmra.mrb[0].mxu0 %v6766
  %v6905 = vpop.f32.mrb[0].mxu0
  %v6906 = vadd.f32 0.0, %v6905
  %v6907 = vpop.f32.mrb[0].mxu0
  %v6908 = vpop.f32.mrb[0].mxu0
  %v6909 = vadd.f32 0.0, %v6908
  %v6910 = vpop.f32.mrb[0].mxu0
  %6911 = vmatprep.mubr.bf16.mxu0 0
  %6912 = vmatmul.mubr.bf16.gmra.mrb[0].mxu0 %v6769
  %v6913 = vpop.f32.mrb[0].mxu0
  %v6914 = vadd.f32 0.0, %v6913
  %v6915 = vpop.f32.mrb[0].mxu0
  %v6916 = vpop.f32.mrb[0].mxu0
  %v6917 = vadd.f32 0.0, %v6916
  %v6918 = vpop.f32.mrb[0].mxu0
  %6919 = vmatprep.mubr.bf16.mxu0 0
  %6920 = vmatmul.mubr.bf16.gmra.mrb[0].mxu0 %v6772
  %v6921 = vpop.f32.mrb[0].mxu0
  %v6922 = vadd.f32 0.0, %v6921
  %v6923 = vpop.f32.mrb[0].mxu0
  %v6924 = vpop.f32.mrb[0].mxu0
  %v6925 = vadd.f32 0.0, %v6924
  %v6926 = vpop.f32.mrb[0].mxu0
  %6927 = vmatprep.mubr.bf16.mxu0 0
  %6928 = vmatmul.mubr.bf16.gmra.mrb[0].mxu0 %v6775
  %v6929 = vpop.f32.mrb[0].mxu0
  %v6930 = vadd.f32 0.0, %v6929
  %v6931 = vpop.f32.mrb[0].mxu0
  %v6932 = vpop.f32.mrb[0].mxu0
  %v6933 = vadd.f32 0.0, %v6932
  %v6934 = vpop.f32.mrb[0].mxu0
  %6935 = vmatprep.mubr.bf16.mxu0 0
  %6936 = vmatmul.mubr.bf16.gmra.mrb[0].mxu0 %v6778
  %v6937 = vpop.f32.mrb[0].mxu0
  %v6938 = vadd.f32 0.0, %v6937
  %v6939 = vpop.f32.mrb[0].mxu0
  %v6940 = vpop.f32.mrb[0].mxu0
  %v6941 = vadd.f32 0.0, %v6940
  %v6942 = vpop.f32.mrb[0].mxu0
  %6943 = vmatprep.mubr.bf16.mxu0 0
  %6944 = vmatmul.mubr.bf16.gmra.mrb[0].mxu0 %v6781
  %v6945 = vpop.f32.mrb[0].mxu0
  %v6946 = vadd.f32 0.0, %v6945
  %v6947 = vpop.f32.mrb[0].mxu0
  %v6948 = vpop.f32.mrb[0].mxu0
  %v6949 = vadd.f32 0.0, %v6948
  %v6950 = vpop.f32.mrb[0].mxu0
  %6951 = vmatprep.mubr.bf16.mxu0 0
  %6952 = vmatmul.mubr.bf16.gmra.mrb[0].mxu0 %v6784
  %v6953 = vpop.f32.mrb[0].mxu0
  %v6954 = vadd.f32 0.0, %v6953
  %v6955 = vpop.f32.mrb[0].mxu0
  %v6956 = vpop.f32.mrb[0].mxu0
  %v6957 = vadd.f32 0.0, %v6956
  %v6958 = vpop.f32.mrb[0].mxu0
  %6959 = vmatprep.mubr.bf16.mxu0 0
  %6960 = vmatmul.mubr.bf16.gmra.mrb[0].mxu0 %v6787
  %v6961 = vpop.f32.mrb[0].mxu0
  %v6962 = vadd.f32 0.0, %v6961
  %v6963 = vpop.f32.mrb[0].mxu0
  %v6964 = vpop.f32.mrb[0].mxu0
  %v6965 = vadd.f32 0.0, %v6964
  %v6966 = vpop.f32.mrb[0].mxu0
  %6967 = vmatprep.mubr.bf16.mxu0 0
  %6968 = vmatmul.mubr.bf16.gmra.mrb[0].mxu0 %v6790
  %v6969 = vpop.f32.mrb[0].mxu0
  %v6970 = vadd.f32 0.0, %v6969
  %v6971 = vpop.f32.mrb[0].mxu0
  %v6972 = vpop.f32.mrb[0].mxu0
  %v6973 = vadd.f32 0.0, %v6972
  %v6974 = vpop.f32.mrb[0].mxu0
  %6975 = vmatprep.mubr.bf16.mxu0 0
  %6976 = vmatmul.mubr.bf16.gmra.mrb[0].mxu0 %v6793
  %v6977 = vpop.f32.mrb[0].mxu0
  %v6978 = vadd.f32 0.0, %v6977
  %v6979 = vpop.f32.mrb[0].mxu0
  %v6980 = vpop.f32.mrb[0].mxu0
  %v6981 = vadd.f32 0.0, %v6980
  %v6982 = vpop.f32.mrb[0].mxu0
  %6983 = vmatprep.mubr.bf16.mxu0 0
  %6984 = vmatmul.mubr.bf16.gmra.mrb[0].mxu0 %v6796
  %v6985 = vpop.f32.mrb[0].mxu0
  %v6986 = vadd.f32 0.0, %v6985
  %v6987 = vpop.f32.mrb[0].mxu0
  %v6988 = vpop.f32.mrb[0].mxu0
  %v6989 = vadd.f32 0.0, %v6988
  %v6990 = vpop.f32.mrb[0].mxu0
  %6991 = vmatprep.mubr.bf16.mxu0 0
  %6992 = vmatmul.mubr.bf16.gmra.mrb[0].mxu0 %v6799
  %v6993 = vpop.f32.mrb[0].mxu0
  %v6994 = vadd.f32 0.0, %v6993
  %v6995 = vpop.f32.mrb[0].mxu0
  %v6996 = vpop.f32.mrb[0].mxu0
  %v6997 = vadd.f32 0.0, %v6996
  %v6998 = vpop.f32.mrb[0].mxu0
  %6999 = vmatprep.mubr.bf16.mxu0 0
  %7000 = vmatmul.mubr.bf16.gmra.mrb[0].mxu0 %v6802
  %v7001 = vpop.f32.mrb[0].mxu0
  %v7002 = vadd.f32 0.0, %v7001
  %v7003 = vpop.f32.mrb[0].mxu0
  %v7004 = vpop.f32.mrb[0].mxu0
  %v7005 = vadd.f32 0.0, %v7004
  %v7006 = vpop.f32.mrb[0].mxu0
  %7007 = vmatprep.mubr.bf16.mxu0 0
  %7008 = vmatmul.mubr.bf16.gmra.mrb[0].mxu0 %v6805
  %v7009 = vpop.f32.mrb[0].mxu0
  %v7010 = vadd.f32 0.0, %v7009
  %v7011 = vpop.f32.mrb[0].mxu0
  %v7012 = vpop.f32.mrb[0].mxu0
  %v7013 = vadd.f32 0.0, %v7012
  %v7014 = vpop.f32.mrb[0].mxu0
  %7015 = vmatprep.mubr.bf16.mxu0 0
  %7016 = vmatmul.mubr.bf16.gmra.mrb[0].mxu0 %v6808
  %v7017 = vpop.f32.mrb[0].mxu0
  %v7018 = vadd.f32 0.0, %v7017
  %v7019 = vpop.f32.mrb[0].mxu0
  %v7020 = vpop.f32.mrb[0].mxu0
  %v7021 = vadd.f32 0.0, %v7020
  %v7022 = vpop.f32.mrb[0].mxu0
  %7023 = vmatprep.mubr.bf16.mxu0 0
  %7024 = vmatmul.mubr.bf16.gmra.mrb[0].mxu0 %v6811
  %v7025 = vpop.f32.mrb[0].mxu0
  %v7026 = vadd.f32 0.0, %v7025
  %v7027 = vpop.f32.mrb[0].mxu0
  %v7028 = vpop.f32.mrb[0].mxu0
  %v7029 = vadd.f32 0.0, %v7028
  %v7030 = vpop.f32.mrb[0].mxu0
  %7031 = vmatprep.mubr.bf16.mxu0 0
  %7032 = vmatmul.mubr.bf16.gmra.mrb[0].mxu0 %v6814
  %v7033 = vpop.f32.mrb[0].mxu0
  %v7034 = vadd.f32 0.0, %v7033
  %v7035 = vpop.f32.mrb[0].mxu0
  %v7036 = vpop.f32.mrb[0].mxu0
  %v7037 = vadd.f32 0.0, %v7036
  %v7038 = vpop.f32.mrb[0].mxu0
  %7039 = vmatprep.mubr.bf16.mxu0 0
  %7040 = vmatmul.mubr.bf16.gmra.mrb[0].mxu0 %v6817
  %v7041 = vpop.f32.mrb[0].mxu0
  %v7042 = vadd.f32 0.0, %v7041
  %v7043 = vpop.f32.mrb[0].mxu0
  %v7044 = vpop.f32.mrb[0].mxu0
  %v7045 = vadd.f32 0.0, %v7044
  %v7046 = vpop.f32.mrb[0].mxu0
  %7047 = vmatprep.mubr.bf16.mxu0 0
  %7048 = vmatmul.mubr.bf16.gmra.mrb[0].mxu0 %v6820
  %v7049 = vpop.f32.mrb[0].mxu0
  %v7050 = vadd.f32 0.0, %v7049
  %v7051 = vpop.f32.mrb[0].mxu0
  %v7052 = vpop.f32.mrb[0].mxu0
  %v7053 = vadd.f32 0.0, %v7052
  %v7054 = vpop.f32.mrb[0].mxu0
  %7055 = vmatprep.mubr.bf16.mxu0 0
  %7056 = vmatmul.mubr.bf16.gmra.mrb[0].mxu0 %v6823
  %v7057 = vpop.f32.mrb[0].mxu0
  %v7058 = vadd.f32 0.0, %v7057
  %v7059 = vpop.f32.mrb[0].mxu0
  %v7060 = vpop.f32.mrb[0].mxu0
  %v7061 = vadd.f32 0.0, %v7060
  %v7062 = vpop.f32.mrb[0].mxu0
  %7063 = vmatprep.mubr.bf16.mxu0 0
  %7064 = vmatmul.mubr.bf16.gmra.mrb[0].mxu0 %v6826
  %v7065 = vpop.f32.mrb[0].mxu0
  %v7066 = vadd.f32 0.0, %v7065
  %v7067 = vpop.f32.mrb[0].mxu0
  %v7068 = vpop.f32.mrb[0].mxu0
  %v7069 = vadd.f32 0.0, %v7068
  %v7070 = vpop.f32.mrb[0].mxu0
  %7071 = vmatprep.mubr.bf16.mxu0 0
  %7072 = vmatmul.mubr.bf16.gmra.mrb[0].mxu0 %v6829
  %v7073 = vpop.f32.mrb[0].mxu0
  %v7074 = vadd.f32 0.0, %v7073
  %v7075 = vpop.f32.mrb[0].mxu0
  %v7076 = vpop.f32.mrb[0].mxu0
  %v7077 = vadd.f32 0.0, %v7076
  %v7078 = vpop.f32.mrb[0].mxu0
  %7079 = vmatprep.mubr.bf16.mxu0 0
  %7080 = vmatmul.mubr.bf16.gmra.mrb[0].mxu0 %v6832
  %v7081 = vpop.f32.mrb[0].mxu0
  %v7082 = vadd.f32 0.0, %v7081
  %v7083 = vpop.f32.mrb[0].mxu0
  %v7084 = vpop.f32.mrb[0].mxu0
  %v7085 = vadd.f32 0.0, %v7084
  %v7086 = vpop.f32.mrb[0].mxu0
  %7087 = vmatprep.mubr.bf16.mxu0 0
  %7088 = vmatmul.mubr.bf16.gmra.mrb[0].mxu0 %v6835
  %v7089 = vpop.f32.mrb[0].mxu0
  %v7090 = vadd.f32 0.0, %v7089
  %v7091 = vpop.f32.mrb[0].mxu0
  %v7092 = vpop.f32.mrb[0].mxu0
  %v7093 = vadd.f32 0.0, %v7092
  %v7094 = vpop.f32.mrb[0].mxu0
  %7095 = vmatprep.mubr.bf16.mxu0 0
  %7096 = vmatmul.mubr.bf16.gmra.mrb[0].mxu0 %v6838
  %v7097 = vpop.f32.mrb[0].mxu0
  %v7098 = vadd.f32 0.0, %v7097
  %v7099 = vpop.f32.mrb[0].mxu0
  %v7100 = vpop.f32.mrb[0].mxu0
  %v7101 = vadd.f32 0.0, %v7100
  %v7102 = vpop.f32.mrb[0].mxu0
  %7103 = vmatprep.mubr.bf16.mxu0 0
  %7104 = vmatmul.mubr.bf16.gmra.mrb[0].mxu0 %v6841
  %v7105 = vpop.f32.mrb[0].mxu0
  %v7106 = vadd.f32 0.0, %v7105
  %v7107 = vpop.f32.mrb[0].mxu0
  %v7108 = vpop.f32.mrb[0].mxu0
  %v7109 = vadd.f32 0.0, %v7108
  %v7110 = vpop.f32.mrb[0].mxu0
  %7111 = vmatprep.mubr.bf16.mxu0 0
  %7112 = vmatmul.mubr.bf16.gmra.mrb[0].mxu0 %v6844
  %v7113 = vpop.f32.mrb[0].mxu0
  %v7114 = vadd.f32 0.0, %v7113
  %v7115 = vpop.f32.mrb[0].mxu0
  %v7116 = vpop.f32.mrb[0].mxu0
  %v7117 = vadd.f32 0.0, %v7116
  %v7118 = vpop.f32.mrb[0].mxu0
  %7119 = vmatprep.mubr.bf16.mxu0 0
  %7120 = vmatmul.mubr.bf16.gmra.mrb[0].mxu0 %v6847
  %v7121 = vpop.f32.mrb[0].mxu0
  %v7122 = vadd.f32 0.0, %v7121
  %v7123 = vpop.f32.mrb[0].mxu0
  %v7124 = vpop.f32.mrb[0].mxu0
  %v7125 = vadd.f32 0.0, %v7124
  %v7126 = vpop.f32.mrb[0].mxu0
  %7127 = vmatprep.mubr.bf16.mxu0 0
  %7128 = vmatmul.mubr.bf16.gmra.mrb[0].mxu0 %v6850
  %v7129 = vpop.f32.mrb[0].mxu0
  %v7130 = vadd.f32 0.0, %v7129
  %v7131 = vpop.f32.mrb[0].mxu0
  %v7132 = vpop.f32.mrb[0].mxu0
  %v7133 = vadd.f32 0.0, %v7132
  %v7134 = vpop.f32.mrb[0].mxu0
  %7135 = vmatprep.mubr.bf16.mxu0 0
  %7136 = vmatmul.mubr.bf16.gmra.mrb[0].mxu0 %v6853
  %v7137 = vpop.f32.mrb[0].mxu0
  %v7138 = vadd.f32 0.0, %v7137
  %v7139 = vpop.f32.mrb[0].mxu0
  %v7140 = vpop.f32.mrb[0].mxu0
  %v7141 = vadd.f32 0.0, %v7140
  %v7142 = vpop.f32.mrb[0].mxu0
  %7143 = vdwg.mxu0
  %v7144 = vadd.f32 %v5718, %v6890
  %v7145 = vadd.f32 %v5719, %v6893
  %v7146 = vadd.f32 %v5720, %v6898
  %v7147 = vadd.f32 %v5721, %v6901
  %v7148 = vadd.f32 %v5722, %v6906
  %v7149 = vadd.f32 %v5723, %v6909
  %v7150 = vadd.f32 %v5724, %v6914
  %v7151 = vadd.f32 %v5725, %v6917
  %v7152 = vadd.f32 %v5726, %v6922
  %v7153 = vadd.f32 %v5727, %v6925
  %v7154 = vadd.f32 %v5728, %v6930
  %v7155 = vadd.f32 %v5729, %v6933
  %v7156 = vadd.f32 %v5730, %v6938
  %v7157 = vadd.f32 %v5731, %v6941
  %v7158 = vadd.f32 %v5732, %v6946
  %v7159 = vadd.f32 %v5733, %v6949
  %v7160 = vadd.f32 %v5734, %v6954
  %v7161 = vadd.f32 %v5735, %v6957
  %v7162 = vadd.f32 %v5736, %v6962
  %v7163 = vadd.f32 %v5737, %v6965
  %v7164 = vadd.f32 %v5738, %v6970
  %v7165 = vadd.f32 %v5739, %v6973
  %v7166 = vadd.f32 %v5740, %v6978
  %v7167 = vadd.f32 %v5741, %v6981
  %v7168 = vadd.f32 %v5742, %v6986
  %v7169 = vadd.f32 %v5743, %v6989
  %v7170 = vadd.f32 %v5744, %v6994
  %v7171 = vadd.f32 %v5745, %v6997
  %v7172 = vadd.f32 %v5746, %v7002
  %v7173 = vadd.f32 %v5747, %v7005
  %v7174 = vadd.f32 %v5748, %v7010
  %v7175 = vadd.f32 %v5749, %v7013
  %v7176 = vadd.f32 %v5750, %v7018
  %v7177 = vadd.f32 %v5751, %v7021
  %v7178 = vadd.f32 %v5752, %v7026
  %v7179 = vadd.f32 %v5753, %v7029
  %v7180 = vadd.f32 %v5754, %v7034
  %v7181 = vadd.f32 %v5755, %v7037
  %v7182 = vadd.f32 %v5756, %v7042
  %v7183 = vadd.f32 %v5757, %v7045
  %v7184 = vadd.f32 %v5758, %v7050
  %v7185 = vadd.f32 %v5759, %v7053
  %v7186 = vadd.f32 %v5760, %v7058
  %v7187 = vadd.f32 %v5761, %v7061
  %v7188 = vadd.f32 %v5762, %v7066
  %v7189 = vadd.f32 %v5763, %v7069
  %v7190 = vadd.f32 %v5764, %v7074
  %v7191 = vadd.f32 %v5765, %v7077
  %v7192 = vadd.f32 %v5766, %v7082
  %v7193 = vadd.f32 %v5767, %v7085
  %v7194 = vadd.f32 %v5768, %v7090
  %v7195 = vadd.f32 %v5769, %v7093
  %v7196 = vadd.f32 %v5770, %v7098
  %v7197 = vadd.f32 %v5771, %v7101
  %v7198 = vadd.f32 %v5772, %v7106
  %v7199 = vadd.f32 %v5773, %v7109
  %v7200 = vadd.f32 %v5774, %v7114
  %v7201 = vadd.f32 %v5775, %v7117
  %v7202 = vadd.f32 %v5776, %v7122
  %v7203 = vadd.f32 %v5777, %v7125
  %v7204 = vadd.f32 %v5778, %v7130
  %v7205 = vadd.f32 %v5779, %v7133
  %v7206 = vadd.f32 %v5780, %v7138
  %v7207 = vadd.f32 %v5781, %v7141
  %v7208 = vld [vmem:[%s1022] sm:$0xe]
  %v7209 = vld [vmem:[%s1022 + $0xc] sm:$0xe]
  %v7210 = vld [vmem:[%s1022 + $0x18] sm:$0xe]
  %v7211 = vld [vmem:[%s1022 + $0x24] sm:$0xe]
  %v7212 = vld [vmem:[%s1022 + $0x30] sm:$0xe]
  %v7213 = vld [vmem:[%s1022 + $0x3c] sm:$0xe]
  %v7214 = vld [vmem:[%s1022 + $0x48] sm:$0xe]
  %v7215 = vld [vmem:[%s1022 + $0x54] sm:$0xe]
  %v7216 = vld [vmem:[%s1022 + $0x60] sm:$0xe]
  %v7217 = vld [vmem:[%s1022 + $0x6c] sm:$0xe]
  %v7218 = vld [vmem:[%s1022 + $0x78] sm:$0xe]
  %v7219 = vld [vmem:[%s1022 + $0x84] sm:$0xe]
  %v7220 = vld [vmem:[%s1022 + $0x90] sm:$0xe]
  %v7221 = vld [vmem:[%s1022 + $0x9c] sm:$0xe]
  %v7222 = vld [vmem:[%s1022 + $0xa8] sm:$0xe]
  %v7223 = vld [vmem:[%s1022 + $0xb4] sm:$0xe]
  %v7224 = vld [vmem:[%s1022 + $0xd8] sm:$0xe]
  %v7225 = vld [vmem:[%s1022 + $0xe4] sm:$0xe]
  %v7226 = vld [vmem:[%s1022 + $0xf0] sm:$0xe]
  %v7227 = vld [vmem:[%s1022 + $0xfc] sm:$0xe]
  %v7228 = vld [vmem:[%s1022 + $0x108] sm:$0xe]
  %v7229 = vld [vmem:[%s1022 + $0x114] sm:$0xe]
  %v7230 = vld [vmem:[%s1022 + $0x120] sm:$0xe]
  %v7231 = vld [vmem:[%s1022 + $0x12c] sm:$0xe]
  %v7232 = vld [vmem:[%s1022 + $0x138] sm:$0xe]
  %v7233 = vld [vmem:[%s1022 + $0x144] sm:$0xe]
  %v7234 = vld [vmem:[%s1022 + $0x150] sm:$0xe]
  %v7235 = vld [vmem:[%s1022 + $0x15c] sm:$0xe]
  %v7236 = vld [vmem:[%s1022 + $0x168] sm:$0xe]
  %v7237 = vld [vmem:[%s1022 + $0x174] sm:$0xe]
  %v7238 = vld [vmem:[%s1022 + $0x180] sm:$0xe]
  %v7239 = vld [vmem:[%s1022 + $0x18c] sm:$0xe]
  %v7336 = vrot.slane %v7208, 5
  %v7337 = vrot.slane %v7336, 4
  %v7338 = vrot.slane %v5783, 5
  %v7339 = vsel %vm4305, %v7337, %v7338
  %v7340 = vrot.slane %v7338, 4
  %v7341 = vrot.slane %v5784, 5
  %v7342 = vsel %vm4305, %v7340, %v7341
  %v7343 = vrot.slane %v7209, 5
  %v7344 = vrot.slane %v7343, 4
  %v7345 = vrot.slane %v5786, 5
  %v7346 = vsel %vm4305, %v7344, %v7345
  %v7347 = vrot.slane %v7345, 4
  %v7348 = vrot.slane %v5787, 5
  %v7349 = vsel %vm4305, %v7347, %v7348
  %v7350 = vrot.slane %v7210, 5
  %v7351 = vrot.slane %v7350, 4
  %v7352 = vrot.slane %v5789, 5
  %v7353 = vsel %vm4305, %v7351, %v7352
  %v7354 = vrot.slane %v7352, 4
  %v7355 = vrot.slane %v5790, 5
  %v7356 = vsel %vm4305, %v7354, %v7355
  %v7357 = vrot.slane %v7211, 5
  %v7358 = vrot.slane %v7357, 4
  %v7359 = vrot.slane %v5792, 5
  %v7360 = vsel %vm4305, %v7358, %v7359
  %v7361 = vrot.slane %v7359, 4
  %v7362 = vrot.slane %v5793, 5
  %v7363 = vsel %vm4305, %v7361, %v7362
  %v7364 = vrot.slane %v7212, 5
  %v7365 = vrot.slane %v7364, 4
  %v7366 = vrot.slane %v5795, 5
  %v7367 = vsel %vm4305, %v7365, %v7366
  %v7368 = vrot.slane %v7366, 4
  %v7369 = vrot.slane %v5796, 5
  %v7370 = vsel %vm4305, %v7368, %v7369
  %v7371 = vrot.slane %v7213, 5
  %v7372 = vrot.slane %v7371, 4
  %v7373 = vrot.slane %v5798, 5
  %v7374 = vsel %vm4305, %v7372, %v7373
  %v7375 = vrot.slane %v7373, 4
  %v7376 = vrot.slane %v5799, 5
  %v7377 = vsel %vm4305, %v7375, %v7376
  %v7378 = vrot.slane %v7214, 5
  %v7379 = vrot.slane %v7378, 4
  %v7380 = vrot.slane %v5801, 5
  %v7381 = vsel %vm4305, %v7379, %v7380
  %v7382 = vrot.slane %v7380, 4
  %v7383 = vrot.slane %v5802, 5
  %v7384 = vsel %vm4305, %v7382, %v7383
  %v7385 = vrot.slane %v7215, 5
  %v7386 = vrot.slane %v7385, 4
  %v7387 = vrot.slane %v5804, 5
  %v7388 = vsel %vm4305, %v7386, %v7387
  %v7389 = vrot.slane %v7387, 4
  %v7390 = vrot.slane %v5805, 5
  %v7391 = vsel %vm4305, %v7389, %v7390
  %v7392 = vrot.slane %v7216, 5
  %v7393 = vrot.slane %v7392, 4
  %v7394 = vrot.slane %v5807, 5
  %v7395 = vsel %vm4305, %v7393, %v7394
  %v7396 = vrot.slane %v7394, 4
  %v7397 = vrot.slane %v5808, 5
  %v7398 = vsel %vm4305, %v7396, %v7397
  %v7399 = vrot.slane %v7217, 5
  %v7400 = vrot.slane %v7399, 4
  %v7401 = vrot.slane %v5810, 5
  %v7402 = vsel %vm4305, %v7400, %v7401
  %v7403 = vrot.slane %v7401, 4
  %v7404 = vrot.slane %v5811, 5
  %v7405 = vsel %vm4305, %v7403, %v7404
  %v7406 = vrot.slane %v7218, 5
  %v7407 = vrot.slane %v7406, 4
  %v7408 = vrot.slane %v5813, 5
  %v7409 = vsel %vm4305, %v7407, %v7408
  %v7410 = vrot.slane %v7408, 4
  %v7411 = vrot.slane %v5814, 5
  %v7412 = vsel %vm4305, %v7410, %v7411
  %v7413 = vrot.slane %v7219, 5
  %v7414 = vrot.slane %v7413, 4
  %v7415 = vrot.slane %v5816, 5
  %v7416 = vsel %vm4305, %v7414, %v7415
  %v7417 = vrot.slane %v7415, 4
  %v7418 = vrot.slane %v5817, 5
  %v7419 = vsel %vm4305, %v7417, %v7418
  %v7420 = vrot.slane %v7220, 5
  %v7421 = vrot.slane %v7420, 4
  %v7422 = vrot.slane %v5819, 5
  %v7423 = vsel %vm4305, %v7421, %v7422
  %v7424 = vrot.slane %v7422, 4
  %v7425 = vrot.slane %v5820, 5
  %v7426 = vsel %vm4305, %v7424, %v7425
  %v7427 = vrot.slane %v7221, 5
  %v7428 = vrot.slane %v7427, 4
  %v7429 = vrot.slane %v5822, 5
  %v7430 = vsel %vm4305, %v7428, %v7429
  %v7431 = vrot.slane %v7429, 4
  %v7432 = vrot.slane %v5823, 5
  %v7433 = vsel %vm4305, %v7431, %v7432
  %v7434 = vrot.slane %v7222, 5
  %v7435 = vrot.slane %v7434, 4
  %v7436 = vrot.slane %v5825, 5
  %v7437 = vsel %vm4305, %v7435, %v7436
  %v7438 = vrot.slane %v7436, 4
  %v7439 = vrot.slane %v5826, 5
  %v7440 = vsel %vm4305, %v7438, %v7439
  %v7441 = vrot.slane %v7223, 5
  %v7442 = vrot.slane %v7441, 4
  %v7443 = vrot.slane %v5828, 5
  %v7444 = vsel %vm4305, %v7442, %v7443
  %v7445 = vrot.slane %v7443, 4
  %v7446 = vrot.slane %v5829, 5
  %v7447 = vsel %vm4305, %v7445, %v7446
  %v7448 = vrot.slane %v7224, 5
  %v7449 = vrot.slane %v7448, 4
  %v7450 = vrot.slane %v5831, 5
  %v7451 = vsel %vm4305, %v7449, %v7450
  %v7452 = vrot.slane %v7450, 4
  %v7453 = vrot.slane %v5832, 5
  %v7454 = vsel %vm4305, %v7452, %v7453
  %v7455 = vrot.slane %v7225, 5
  %v7456 = vrot.slane %v7455, 4
  %v7457 = vrot.slane %v5834, 5
  %v7458 = vsel %vm4305, %v7456, %v7457
  %v7459 = vrot.slane %v7457, 4
  %v7460 = vrot.slane %v5835, 5
  %v7461 = vsel %vm4305, %v7459, %v7460
  %v7462 = vrot.slane %v7226, 5
  %v7463 = vrot.slane %v7462, 4
  %v7464 = vrot.slane %v5837, 5
  %v7465 = vsel %vm4305, %v7463, %v7464
  %v7466 = vrot.slane %v7464, 4
  %v7467 = vrot.slane %v5838, 5
  %v7468 = vsel %vm4305, %v7466, %v7467
  %v7469 = vrot.slane %v7227, 5
  %v7470 = vrot.slane %v7469, 4
  %v7471 = vrot.slane %v5840, 5
  %v7472 = vsel %vm4305, %v7470, %v7471
  %v7473 = vrot.slane %v7471, 4
  %v7474 = vrot.slane %v5841, 5
  %v7475 = vsel %vm4305, %v7473, %v7474
  %v7476 = vrot.slane %v7228, 5
  %v7477 = vrot.slane %v7476, 4
  %v7478 = vrot.slane %v5843, 5
  %v7479 = vsel %vm4305, %v7477, %v7478
  %v7480 = vrot.slane %v7478, 4
  %v7481 = vrot.slane %v5844, 5
  %v7482 = vsel %vm4305, %v7480, %v7481
  %v7483 = vrot.slane %v7229, 5
  %v7484 = vrot.slane %v7483, 4
  %v7485 = vrot.slane %v5846, 5
  %v7486 = vsel %vm4305, %v7484, %v7485
  %v7487 = vrot.slane %v7485, 4
  %v7488 = vrot.slane %v5847, 5
  %v7489 = vsel %vm4305, %v7487, %v7488
  %v7490 = vrot.slane %v7230, 5
  %v7491 = vrot.slane %v7490, 4
  %v7492 = vrot.slane %v5849, 5
  %v7493 = vsel %vm4305, %v7491, %v7492
  %v7494 = vrot.slane %v7492, 4
  %v7495 = vrot.slane %v5850, 5
  %v7496 = vsel %vm4305, %v7494, %v7495
  %v7497 = vrot.slane %v7231, 5
  %v7498 = vrot.slane %v7497, 4
  %v7499 = vrot.slane %v5852, 5
  %v7500 = vsel %vm4305, %v7498, %v7499
  %v7501 = vrot.slane %v7499, 4
  %v7502 = vrot.slane %v5853, 5
  %v7503 = vsel %vm4305, %v7501, %v7502
  %v7504 = vrot.slane %v7232, 5
  %v7505 = vrot.slane %v7504, 4
  %v7506 = vrot.slane %v5855, 5
  %v7507 = vsel %vm4305, %v7505, %v7506
  %v7508 = vrot.slane %v7506, 4
  %v7509 = vrot.slane %v5856, 5
  %v7510 = vsel %vm4305, %v7508, %v7509
  %v7511 = vrot.slane %v7233, 5
  %v7512 = vrot.slane %v7511, 4
  %v7513 = vrot.slane %v5858, 5
  %v7514 = vsel %vm4305, %v7512, %v7513
  %v7515 = vrot.slane %v7513, 4
  %v7516 = vrot.slane %v5859, 5
  %v7517 = vsel %vm4305, %v7515, %v7516
  %v7518 = vrot.slane %v7234, 5
  %v7519 = vrot.slane %v7518, 4
  %v7520 = vrot.slane %v5861, 5
  %v7521 = vsel %vm4305, %v7519, %v7520
  %v7522 = vrot.slane %v7520, 4
  %v7523 = vrot.slane %v5862, 5
  %v7524 = vsel %vm4305, %v7522, %v7523
  %v7525 = vrot.slane %v7235, 5
  %v7526 = vrot.slane %v7525, 4
  %v7527 = vrot.slane %v5864, 5
  %v7528 = vsel %vm4305, %v7526, %v7527
  %v7529 = vrot.slane %v7527, 4
  %v7530 = vrot.slane %v5865, 5
  %v7531 = vsel %vm4305, %v7529, %v7530
  %v7532 = vrot.slane %v7236, 5
  %v7533 = vrot.slane %v7532, 4
  %v7534 = vrot.slane %v5867, 5
  %v7535 = vsel %vm4305, %v7533, %v7534
  %v7536 = vrot.slane %v7534, 4
  %v7537 = vrot.slane %v5868, 5
  %v7538 = vsel %vm4305, %v7536, %v7537
  %v7539 = vrot.slane %v7237, 5
  %v7540 = vrot.slane %v7539, 4
  %v7541 = vrot.slane %v5870, 5
  %v7542 = vsel %vm4305, %v7540, %v7541
  %v7543 = vrot.slane %v7541, 4
  %v7544 = vrot.slane %v5871, 5
  %v7545 = vsel %vm4305, %v7543, %v7544
  %v7546 = vrot.slane %v7238, 5
  %v7547 = vrot.slane %v7546, 4
  %v7548 = vrot.slane %v5873, 5
  %v7549 = vsel %vm4305, %v7547, %v7548
  %v7550 = vrot.slane %v7548, 4
  %v7551 = vrot.slane %v5874, 5
  %v7552 = vsel %vm4305, %v7550, %v7551
  %v7553 = vrot.slane %v7239, 5
  %v7554 = vrot.slane %v7553, 4
  %v7555 = vrot.slane %v5876, 5
  %v7556 = vsel %vm4305, %v7554, %v7555
  %v7557 = vrot.slane %v7555, 4
  %v7558 = vrot.slane %v5877, 5
  %v7559 = vsel %vm4305, %v7557, %v7558
  %s7560 = scalar_lea.vmem %s4, 80
  %v7561 = vld [vmem:[%s7560] sm:$0xf]
  %v7562 = vld [vmem:[%s7560 + $0x4] sm:$0xf]
  %v7563 = vld [vmem:[%s7560 + $0x8] sm:$0xf]
  %v7564 = vld [vmem:[%s7560 + $0xc] sm:$0xf]
  %v7565 = vunpack.c.l.b16 %v7339
  %v7566 = vunpack.c.l.b16 %v7342
  %v7567 = vunpack.c.l.b16 %v7346
  %v7568 = vunpack.c.l.b16 %v7349
  %v7569 = vunpack.c.l.b16 %v7353
  %v7570 = vunpack.c.l.b16 %v7356
  %v7571 = vunpack.c.l.b16 %v7360
  %v7572 = vunpack.c.l.b16 %v7363
  %v7573 = vunpack.c.l.b16 %v7367
  %v7574 = vunpack.c.l.b16 %v7370
  %v7575 = vunpack.c.l.b16 %v7374
  %v7576 = vunpack.c.l.b16 %v7377
  %v7577 = vunpack.c.l.b16 %v7381
  %v7578 = vunpack.c.l.b16 %v7384
  %v7579 = vunpack.c.l.b16 %v7388
  %v7580 = vunpack.c.l.b16 %v7391
  %v7581 = vunpack.c.l.b16 %v7395
  %v7582 = vunpack.c.l.b16 %v7398
  %v7583 = vunpack.c.l.b16 %v7402
  %v7584 = vunpack.c.l.b16 %v7405
  %v7585 = vunpack.c.l.b16 %v7409
  %v7586 = vunpack.c.l.b16 %v7412
  %v7587 = vunpack.c.l.b16 %v7416
  %v7588 = vunpack.c.l.b16 %v7419
  %v7589 = vunpack.c.l.b16 %v7423
  %v7590 = vunpack.c.l.b16 %v7426
  %v7591 = vunpack.c.l.b16 %v7430
  %v7592 = vunpack.c.l.b16 %v7433
  %v7593 = vunpack.c.l.b16 %v7437
  %v7594 = vunpack.c.l.b16 %v7440
  %v7595 = vunpack.c.l.b16 %v7444
  %v7596 = vunpack.c.l.b16 %v7447
  %v7597 = vunpack.c.l.b16 %v7451
  %v7598 = vunpack.c.l.b16 %v7454
  %v7599 = vunpack.c.l.b16 %v7458
  %v7600 = vunpack.c.l.b16 %v7461
  %v7601 = vunpack.c.l.b16 %v7465
  %v7602 = vunpack.c.l.b16 %v7468
  %v7603 = vunpack.c.l.b16 %v7472
  %v7604 = vunpack.c.l.b16 %v7475
  %v7605 = vunpack.c.l.b16 %v7479
  %v7606 = vunpack.c.l.b16 %v7482
  %v7607 = vunpack.c.l.b16 %v7486
  %v7608 = vunpack.c.l.b16 %v7489
  %v7609 = vunpack.c.l.b16 %v7493
  %v7610 = vunpack.c.l.b16 %v7496
  %v7611 = vunpack.c.l.b16 %v7500
  %v7612 = vunpack.c.l.b16 %v7503
  %v7613 = vunpack.c.l.b16 %v7507
  %v7614 = vunpack.c.l.b16 %v7510
  %v7615 = vunpack.c.l.b16 %v7514
  %v7616 = vunpack.c.l.b16 %v7517
  %v7617 = vunpack.c.l.b16 %v7521
  %v7618 = vunpack.c.l.b16 %v7524
  %v7619 = vunpack.c.l.b16 %v7528
  %v7620 = vunpack.c.l.b16 %v7531
  %v7621 = vunpack.c.l.b16 %v7535
  %v7622 = vunpack.c.l.b16 %v7538
  %v7623 = vunpack.c.l.b16 %v7542
  %v7624 = vunpack.c.l.b16 %v7545
  %v7625 = vunpack.c.l.b16 %v7549
  %v7626 = vunpack.c.l.b16 %v7552
  %v7627 = vunpack.c.l.b16 %v7556
  %v7628 = vunpack.c.l.b16 %v7559
  %v7629 = vpack.c.b16 %v7566, %v7565
  %v7630 = vpack.c.b16 %v7568, %v7567
  %v7631 = vpack.c.b16 %v7570, %v7569
  %v7632 = vpack.c.b16 %v7572, %v7571
  %v7633 = vpack.c.b16 %v7574, %v7573
  %v7634 = vpack.c.b16 %v7576, %v7575
  %v7635 = vpack.c.b16 %v7578, %v7577
  %v7636 = vpack.c.b16 %v7580, %v7579
  %v7637 = vpack.c.b16 %v7582, %v7581
  %v7638 = vpack.c.b16 %v7584, %v7583
  %v7639 = vpack.c.b16 %v7586, %v7585
  %v7640 = vpack.c.b16 %v7588, %v7587
  %v7641 = vpack.c.b16 %v7590, %v7589
  %v7642 = vpack.c.b16 %v7592, %v7591
  %v7643 = vpack.c.b16 %v7594, %v7593
  %v7644 = vpack.c.b16 %v7596, %v7595
  %v7645 = vpack.c.b16 %v7598, %v7597
  %v7646 = vpack.c.b16 %v7600, %v7599
  %v7647 = vpack.c.b16 %v7602, %v7601
  %v7648 = vpack.c.b16 %v7604, %v7603
  %v7649 = vpack.c.b16 %v7606, %v7605
  %v7650 = vpack.c.b16 %v7608, %v7607
  %v7651 = vpack.c.b16 %v7610, %v7609
  %v7652 = vpack.c.b16 %v7612, %v7611
  %v7653 = vpack.c.b16 %v7614, %v7613
  %v7654 = vpack.c.b16 %v7616, %v7615
  %v7655 = vpack.c.b16 %v7618, %v7617
  %v7656 = vpack.c.b16 %v7620, %v7619
  %v7657 = vpack.c.b16 %v7622, %v7621
  %v7658 = vpack.c.b16 %v7624, %v7623
  %v7659 = vpack.c.b16 %v7626, %v7625
  %v7660 = vpack.c.b16 %v7628, %v7627
  %v7665 = vunpack.c.l.b16 %v7561
  %v7666 = vunpack.c.l.b16 %v7562
  %v7667 = vunpack.c.l.b16 %v7563
  %v7668 = vunpack.c.l.b16 %v7564
  %v7669 = vpack.c.b16 %v7666, %v7665
  %v7670 = vpack.c.b16 %v7668, %v7667
  %v7674 = vsel %vm3264, %v7629, 0
  %v7677 = vsel %vm3264, %v7630, 0
  %v7680 = vsel %vm3264, %v7631, 0
  %v7683 = vsel %vm3264, %v7632, 0
  %v7686 = vsel %vm3264, %v7633, 0
  %v7689 = vsel %vm3264, %v7634, 0
  %v7692 = vsel %vm3264, %v7635, 0
  %v7695 = vsel %vm3264, %v7636, 0
  %v7698 = vsel %vm3264, %v7637, 0
  %v7701 = vsel %vm3264, %v7638, 0
  %v7704 = vsel %vm3264, %v7639, 0
  %v7707 = vsel %vm3264, %v7640, 0
  %v7710 = vsel %vm3264, %v7641, 0
  %v7713 = vsel %vm3264, %v7642, 0
  %v7716 = vsel %vm3264, %v7643, 0
  %v7719 = vsel %vm3264, %v7644, 0
  %v7722 = vsel %vm3264, %v7645, 0
  %v7725 = vsel %vm3264, %v7646, 0
  %v7728 = vsel %vm3264, %v7647, 0
  %v7731 = vsel %vm3264, %v7648, 0
  %v7734 = vsel %vm3264, %v7649, 0
  %v7737 = vsel %vm3264, %v7650, 0
  %v7740 = vsel %vm3264, %v7651, 0
  %v7743 = vsel %vm3264, %v7652, 0
  %v7746 = vsel %vm3264, %v7653, 0
  %v7749 = vsel %vm3264, %v7654, 0
  %v7752 = vsel %vm3264, %v7655, 0
  %v7755 = vsel %vm3264, %v7656, 0
  %v7758 = vsel %vm3264, %v7657, 0
  %v7761 = vsel %vm3264, %v7658, 0
  %v7764 = vsel %vm3264, %v7659, 0
  %v7767 = vsel %vm3264, %v7660, 0
  %7769 = vmatprep.subr.bf16.mxu0 0
  %7770 = vmatpush1.bf16.msra.mxu0 %v7669
  %7771 = vmatprep.subr.bf16.mxu0 0
  %7772 = vmatpush1.bf16.msra.mxu0 %v7670
  %7773 = vmatprep.subr.bf16.mxu0 0
  %7774 = vmatpush1.bf16.msra.mxu0 0
  %7775 = vmatprep.subr.bf16.mxu0 0
  %7776 = vmatpush1.bf16.msra.mxu0 0
  %7777 = vmatprep.subr.bf16.mxu0 0
  %7778 = vmatpush1.bf16.msra.mxu0 0
  %7779 = vmatprep.subr.bf16.mxu0 0
  %7780 = vmatpush1.bf16.msra.mxu0 0
  %7781 = vmatprep.subr.bf16.mxu0 0
  %7782 = vmatpush1.bf16.msra.mxu0 0
  %7783 = vmatprep.subr.bf16.mxu0 0
  %7784 = vmatpush1.bf16.msra.mxu0 0
  %7785 = vmatprep.subr.bf16.mxu0 0
  %7786 = vmatpush1.bf16.msra.mxu0 0
  %7787 = vmatprep.subr.bf16.mxu0 0
  %7788 = vmatpush1.bf16.msra.mxu0 0
  %7789 = vmatprep.subr.bf16.mxu0 0
  %7790 = vmatpush1.bf16.msra.mxu0 0
  %7791 = vmatprep.subr.bf16.mxu0 0
  %7792 = vmatpush1.bf16.msra.mxu0 0
  %7793 = vmatprep.subr.bf16.mxu0 0
  %7794 = vmatpush1.bf16.msra.mxu0 0
  %7795 = vmatprep.subr.bf16.mxu0 0
  %7796 = vmatpush1.bf16.msra.mxu0 0
  %7797 = vmatprep.subr.bf16.mxu0 0
  %7798 = vmatpush1.bf16.msra.mxu0 0
  %7799 = vmatprep.subr.bf16.mxu0 0
  %7800 = vmatpush1.bf16.msra.mxu0 0
  %7801 = vmatprep.mubr.bf16.mxu0 0
  %7802 = vmatmul.mubr.bf16.gmra.mrb[0].mxu0 %v7674
  %v7803 = vpop.f32.mrb[0].mxu0
  %v7804 = vadd.f32 0.0, %v7803
  %v7805 = vpop.f32.mrb[0].mxu0
  %v7806 = vpop.f32.mrb[0].mxu0
  %v7807 = vadd.f32 0.0, %v7806
  %v7808 = vpop.f32.mrb[0].mxu0
  %7809 = vmatprep.mubr.bf16.mxu0 0
  %7810 = vmatmul.mubr.bf16.gmra.mrb[0].mxu0 %v7677
  %v7811 = vpop.f32.mrb[0].mxu0
  %v7812 = vadd.f32 0.0, %v7811
  %v7813 = vpop.f32.mrb[0].mxu0
  %v7814 = vpop.f32.mrb[0].mxu0
  %v7815 = vadd.f32 0.0, %v7814
  %v7816 = vpop.f32.mrb[0].mxu0
  %7817 = vmatprep.mubr.bf16.mxu0 0
  %7818 = vmatmul.mubr.bf16.gmra.mrb[0].mxu0 %v7680
  %v7819 = vpop.f32.mrb[0].mxu0
  %v7820 = vadd.f32 0.0, %v7819
  %v7821 = vpop.f32.mrb[0].mxu0
  %v7822 = vpop.f32.mrb[0].mxu0
  %v7823 = vadd.f32 0.0, %v7822
  %v7824 = vpop.f32.mrb[0].mxu0
  %7825 = vmatprep.mubr.bf16.mxu0 0
  %7826 = vmatmul.mubr.bf16.gmra.mrb[0].mxu0 %v7683
  %v7827 = vpop.f32.mrb[0].mxu0
  %v7828 = vadd.f32 0.0, %v7827
  %v7829 = vpop.f32.mrb[0].mxu0
  %v7830 = vpop.f32.mrb[0].mxu0
  %v7831 = vadd.f32 0.0, %v7830
  %v7832 = vpop.f32.mrb[0].mxu0
  %7833 = vmatprep.mubr.bf16.mxu0 0
  %7834 = vmatmul.mubr.bf16.gmra.mrb[0].mxu0 %v7686
  %v7835 = vpop.f32.mrb[0].mxu0
  %v7836 = vadd.f32 0.0, %v7835
  %v7837 = vpop.f32.mrb[0].mxu0
  %v7838 = vpop.f32.mrb[0].mxu0
  %v7839 = vadd.f32 0.0, %v7838
  %v7840 = vpop.f32.mrb[0].mxu0
  %7841 = vmatprep.mubr.bf16.mxu0 0
  %7842 = vmatmul.mubr.bf16.gmra.mrb[0].mxu0 %v7689
  %v7843 = vpop.f32.mrb[0].mxu0
  %v7844 = vadd.f32 0.0, %v7843
  %v7845 = vpop.f32.mrb[0].mxu0
  %v7846 = vpop.f32.mrb[0].mxu0
  %v7847 = vadd.f32 0.0, %v7846
  %v7848 = vpop.f32.mrb[0].mxu0
  %7849 = vmatprep.mubr.bf16.mxu0 0
  %7850 = vmatmul.mubr.bf16.gmra.mrb[0].mxu0 %v7692
  %v7851 = vpop.f32.mrb[0].mxu0
  %v7852 = vadd.f32 0.0, %v7851
  %v7853 = vpop.f32.mrb[0].mxu0
  %v7854 = vpop.f32.mrb[0].mxu0
  %v7855 = vadd.f32 0.0, %v7854
  %v7856 = vpop.f32.mrb[0].mxu0
  %7857 = vmatprep.mubr.bf16.mxu0 0
  %7858 = vmatmul.mubr.bf16.gmra.mrb[0].mxu0 %v7695
  %v7859 = vpop.f32.mrb[0].mxu0
  %v7860 = vadd.f32 0.0, %v7859
  %v7861 = vpop.f32.mrb[0].mxu0
  %v7862 = vpop.f32.mrb[0].mxu0
  %v7863 = vadd.f32 0.0, %v7862
  %v7864 = vpop.f32.mrb[0].mxu0
  %7865 = vmatprep.mubr.bf16.mxu0 0
  %7866 = vmatmul.mubr.bf16.gmra.mrb[0].mxu0 %v7698
  %v7867 = vpop.f32.mrb[0].mxu0
  %v7868 = vadd.f32 0.0, %v7867
  %v7869 = vpop.f32.mrb[0].mxu0
  %v7870 = vpop.f32.mrb[0].mxu0
  %v7871 = vadd.f32 0.0, %v7870
  %v7872 = vpop.f32.mrb[0].mxu0
  %7873 = vmatprep.mubr.bf16.mxu0 0
  %7874 = vmatmul.mubr.bf16.gmra.mrb[0].mxu0 %v7701
  %v7875 = vpop.f32.mrb[0].mxu0
  %v7876 = vadd.f32 0.0, %v7875
  %v7877 = vpop.f32.mrb[0].mxu0
  %v7878 = vpop.f32.mrb[0].mxu0
  %v7879 = vadd.f32 0.0, %v7878
  %v7880 = vpop.f32.mrb[0].mxu0
  %7881 = vmatprep.mubr.bf16.mxu0 0
  %7882 = vmatmul.mubr.bf16.gmra.mrb[0].mxu0 %v7704
  %v7883 = vpop.f32.mrb[0].mxu0
  %v7884 = vadd.f32 0.0, %v7883
  %v7885 = vpop.f32.mrb[0].mxu0
  %v7886 = vpop.f32.mrb[0].mxu0
  %v7887 = vadd.f32 0.0, %v7886
  %v7888 = vpop.f32.mrb[0].mxu0
  %7889 = vmatprep.mubr.bf16.mxu0 0
  %7890 = vmatmul.mubr.bf16.gmra.mrb[0].mxu0 %v7707
  %v7891 = vpop.f32.mrb[0].mxu0
  %v7892 = vadd.f32 0.0, %v7891
  %v7893 = vpop.f32.mrb[0].mxu0
  %v7894 = vpop.f32.mrb[0].mxu0
  %v7895 = vadd.f32 0.0, %v7894
  %v7896 = vpop.f32.mrb[0].mxu0
  %7897 = vmatprep.mubr.bf16.mxu0 0
  %7898 = vmatmul.mubr.bf16.gmra.mrb[0].mxu0 %v7710
  %v7899 = vpop.f32.mrb[0].mxu0
  %v7900 = vadd.f32 0.0, %v7899
  %v7901 = vpop.f32.mrb[0].mxu0
  %v7902 = vpop.f32.mrb[0].mxu0
  %v7903 = vadd.f32 0.0, %v7902
  %v7904 = vpop.f32.mrb[0].mxu0
  %7905 = vmatprep.mubr.bf16.mxu0 0
  %7906 = vmatmul.mubr.bf16.gmra.mrb[0].mxu0 %v7713
  %v7907 = vpop.f32.mrb[0].mxu0
  %v7908 = vadd.f32 0.0, %v7907
  %v7909 = vpop.f32.mrb[0].mxu0
  %v7910 = vpop.f32.mrb[0].mxu0
  %v7911 = vadd.f32 0.0, %v7910
  %v7912 = vpop.f32.mrb[0].mxu0
  %7913 = vmatprep.mubr.bf16.mxu0 0
  %7914 = vmatmul.mubr.bf16.gmra.mrb[0].mxu0 %v7716
  %v7915 = vpop.f32.mrb[0].mxu0
  %v7916 = vadd.f32 0.0, %v7915
  %v7917 = vpop.f32.mrb[0].mxu0
  %v7918 = vpop.f32.mrb[0].mxu0
  %v7919 = vadd.f32 0.0, %v7918
  %v7920 = vpop.f32.mrb[0].mxu0
  %7921 = vmatprep.mubr.bf16.mxu0 0
  %7922 = vmatmul.mubr.bf16.gmra.mrb[0].mxu0 %v7719
  %v7923 = vpop.f32.mrb[0].mxu0
  %v7924 = vadd.f32 0.0, %v7923
  %v7925 = vpop.f32.mrb[0].mxu0
  %v7926 = vpop.f32.mrb[0].mxu0
  %v7927 = vadd.f32 0.0, %v7926
  %v7928 = vpop.f32.mrb[0].mxu0
  %7929 = vmatprep.mubr.bf16.mxu0 0
  %7930 = vmatmul.mubr.bf16.gmra.mrb[0].mxu0 %v7722
  %v7931 = vpop.f32.mrb[0].mxu0
  %v7932 = vadd.f32 0.0, %v7931
  %v7933 = vpop.f32.mrb[0].mxu0
  %v7934 = vpop.f32.mrb[0].mxu0
  %v7935 = vadd.f32 0.0, %v7934
  %v7936 = vpop.f32.mrb[0].mxu0
  %7937 = vmatprep.mubr.bf16.mxu0 0
  %7938 = vmatmul.mubr.bf16.gmra.mrb[0].mxu0 %v7725
  %v7939 = vpop.f32.mrb[0].mxu0
  %v7940 = vadd.f32 0.0, %v7939
  %v7941 = vpop.f32.mrb[0].mxu0
  %v7942 = vpop.f32.mrb[0].mxu0
  %v7943 = vadd.f32 0.0, %v7942
  %v7944 = vpop.f32.mrb[0].mxu0
  %7945 = vmatprep.mubr.bf16.mxu0 0
  %7946 = vmatmul.mubr.bf16.gmra.mrb[0].mxu0 %v7728
  %v7947 = vpop.f32.mrb[0].mxu0
  %v7948 = vadd.f32 0.0, %v7947
  %v7949 = vpop.f32.mrb[0].mxu0
  %v7950 = vpop.f32.mrb[0].mxu0
  %v7951 = vadd.f32 0.0, %v7950
  %v7952 = vpop.f32.mrb[0].mxu0
  %7953 = vmatprep.mubr.bf16.mxu0 0
  %7954 = vmatmul.mubr.bf16.gmra.mrb[0].mxu0 %v7731
  %v7955 = vpop.f32.mrb[0].mxu0
  %v7956 = vadd.f32 0.0, %v7955
  %v7957 = vpop.f32.mrb[0].mxu0
  %v7958 = vpop.f32.mrb[0].mxu0
  %v7959 = vadd.f32 0.0, %v7958
  %v7960 = vpop.f32.mrb[0].mxu0
  %7961 = vmatprep.mubr.bf16.mxu0 0
  %7962 = vmatmul.mubr.bf16.gmra.mrb[0].mxu0 %v7734
  %v7963 = vpop.f32.mrb[0].mxu0
  %v7964 = vadd.f32 0.0, %v7963
  %v7965 = vpop.f32.mrb[0].mxu0
  %v7966 = vpop.f32.mrb[0].mxu0
  %v7967 = vadd.f32 0.0, %v7966
  %v7968 = vpop.f32.mrb[0].mxu0
  %7969 = vmatprep.mubr.bf16.mxu0 0
  %7970 = vmatmul.mubr.bf16.gmra.mrb[0].mxu0 %v7737
  %v7971 = vpop.f32.mrb[0].mxu0
  %v7972 = vadd.f32 0.0, %v7971
  %v7973 = vpop.f32.mrb[0].mxu0
  %v7974 = vpop.f32.mrb[0].mxu0
  %v7975 = vadd.f32 0.0, %v7974
  %v7976 = vpop.f32.mrb[0].mxu0
  %7977 = vmatprep.mubr.bf16.mxu0 0
  %7978 = vmatmul.mubr.bf16.gmra.mrb[0].mxu0 %v7740
  %v7979 = vpop.f32.mrb[0].mxu0
  %v7980 = vadd.f32 0.0, %v7979
  %v7981 = vpop.f32.mrb[0].mxu0
  %v7982 = vpop.f32.mrb[0].mxu0
  %v7983 = vadd.f32 0.0, %v7982
  %v7984 = vpop.f32.mrb[0].mxu0
  %7985 = vmatprep.mubr.bf16.mxu0 0
  %7986 = vmatmul.mubr.bf16.gmra.mrb[0].mxu0 %v7743
  %v7987 = vpop.f32.mrb[0].mxu0
  %v7988 = vadd.f32 0.0, %v7987
  %v7989 = vpop.f32.mrb[0].mxu0
  %v7990 = vpop.f32.mrb[0].mxu0
  %v7991 = vadd.f32 0.0, %v7990
  %v7992 = vpop.f32.mrb[0].mxu0
  %7993 = vmatprep.mubr.bf16.mxu0 0
  %7994 = vmatmul.mubr.bf16.gmra.mrb[0].mxu0 %v7746
  %v7995 = vpop.f32.mrb[0].mxu0
  %v7996 = vadd.f32 0.0, %v7995
  %v7997 = vpop.f32.mrb[0].mxu0
  %v7998 = vpop.f32.mrb[0].mxu0
  %v7999 = vadd.f32 0.0, %v7998
  %v8000 = vpop.f32.mrb[0].mxu0
  %8001 = vmatprep.mubr.bf16.mxu0 0
  %8002 = vmatmul.mubr.bf16.gmra.mrb[0].mxu0 %v7749
  %v8003 = vpop.f32.mrb[0].mxu0
  %v8004 = vadd.f32 0.0, %v8003
  %v8005 = vpop.f32.mrb[0].mxu0
  %v8006 = vpop.f32.mrb[0].mxu0
  %v8007 = vadd.f32 0.0, %v8006
  %v8008 = vpop.f32.mrb[0].mxu0
  %8009 = vmatprep.mubr.bf16.mxu0 0
  %8010 = vmatmul.mubr.bf16.gmra.mrb[0].mxu0 %v7752
  %v8011 = vpop.f32.mrb[0].mxu0
  %v8012 = vadd.f32 0.0, %v8011
  %v8013 = vpop.f32.mrb[0].mxu0
  %v8014 = vpop.f32.mrb[0].mxu0
  %v8015 = vadd.f32 0.0, %v8014
  %v8016 = vpop.f32.mrb[0].mxu0
  %8017 = vmatprep.mubr.bf16.mxu0 0
  %8018 = vmatmul.mubr.bf16.gmra.mrb[0].mxu0 %v7755
  %v8019 = vpop.f32.mrb[0].mxu0
  %v8020 = vadd.f32 0.0, %v8019
  %v8021 = vpop.f32.mrb[0].mxu0
  %v8022 = vpop.f32.mrb[0].mxu0
  %v8023 = vadd.f32 0.0, %v8022
  %v8024 = vpop.f32.mrb[0].mxu0
  %8025 = vmatprep.mubr.bf16.mxu0 0
  %8026 = vmatmul.mubr.bf16.gmra.mrb[0].mxu0 %v7758
  %v8027 = vpop.f32.mrb[0].mxu0
  %v8028 = vadd.f32 0.0, %v8027
  %v8029 = vpop.f32.mrb[0].mxu0
  %v8030 = vpop.f32.mrb[0].mxu0
  %v8031 = vadd.f32 0.0, %v8030
  %v8032 = vpop.f32.mrb[0].mxu0
  %8033 = vmatprep.mubr.bf16.mxu0 0
  %8034 = vmatmul.mubr.bf16.gmra.mrb[0].mxu0 %v7761
  %v8035 = vpop.f32.mrb[0].mxu0
  %v8036 = vadd.f32 0.0, %v8035
  %v8037 = vpop.f32.mrb[0].mxu0
  %v8038 = vpop.f32.mrb[0].mxu0
  %v8039 = vadd.f32 0.0, %v8038
  %v8040 = vpop.f32.mrb[0].mxu0
  %8041 = vmatprep.mubr.bf16.mxu0 0
  %8042 = vmatmul.mubr.bf16.gmra.mrb[0].mxu0 %v7764
  %v8043 = vpop.f32.mrb[0].mxu0
  %v8044 = vadd.f32 0.0, %v8043
  %v8045 = vpop.f32.mrb[0].mxu0
  %v8046 = vpop.f32.mrb[0].mxu0
  %v8047 = vadd.f32 0.0, %v8046
  %v8048 = vpop.f32.mrb[0].mxu0
  %8049 = vmatprep.mubr.bf16.mxu0 0
  %8050 = vmatmul.mubr.bf16.gmra.mrb[0].mxu0 %v7767
  %v8051 = vpop.f32.mrb[0].mxu0
  %v8052 = vadd.f32 0.0, %v8051
  %v8053 = vpop.f32.mrb[0].mxu0
  %v8054 = vpop.f32.mrb[0].mxu0
  %v8055 = vadd.f32 0.0, %v8054
  %v8056 = vpop.f32.mrb[0].mxu0
  %8057 = vdwg.mxu0
  %v8058 = vadd.f32 %v7144, %v7804
  %v8059 = vadd.f32 %v7145, %v7807
  %v8060 = vadd.f32 %v7146, %v7812
  %v8061 = vadd.f32 %v7147, %v7815
  %v8062 = vadd.f32 %v7148, %v7820
  %v8063 = vadd.f32 %v7149, %v7823
  %v8064 = vadd.f32 %v7150, %v7828
  %v8065 = vadd.f32 %v7151, %v7831
  %v8066 = vadd.f32 %v7152, %v7836
  %v8067 = vadd.f32 %v7153, %v7839
  %v8068 = vadd.f32 %v7154, %v7844
  %v8069 = vadd.f32 %v7155, %v7847
  %v8070 = vadd.f32 %v7156, %v7852
  %v8071 = vadd.f32 %v7157, %v7855
  %v8072 = vadd.f32 %v7158, %v7860
  %v8073 = vadd.f32 %v7159, %v7863
  %v8074 = vadd.f32 %v7160, %v7868
  %v8075 = vadd.f32 %v7161, %v7871
  %v8076 = vadd.f32 %v7162, %v7876
  %v8077 = vadd.f32 %v7163, %v7879
  %v8078 = vadd.f32 %v7164, %v7884
  %v8079 = vadd.f32 %v7165, %v7887
  %v8080 = vadd.f32 %v7166, %v7892
  %v8081 = vadd.f32 %v7167, %v7895
  %v8082 = vadd.f32 %v7168, %v7900
  %v8083 = vadd.f32 %v7169, %v7903
  %v8084 = vadd.f32 %v7170, %v7908
  %v8085 = vadd.f32 %v7171, %v7911
  %v8086 = vadd.f32 %v7172, %v7916
  %v8087 = vadd.f32 %v7173, %v7919
  %v8088 = vadd.f32 %v7174, %v7924
  %v8089 = vadd.f32 %v7175, %v7927
  %v8090 = vadd.f32 %v7176, %v7932
  %v8091 = vadd.f32 %v7177, %v7935
  %v8092 = vadd.f32 %v7178, %v7940
  %v8093 = vadd.f32 %v7179, %v7943
  %v8094 = vadd.f32 %v7180, %v7948
  %v8095 = vadd.f32 %v7181, %v7951
  %v8096 = vadd.f32 %v7182, %v7956
  %v8097 = vadd.f32 %v7183, %v7959
  %v8098 = vadd.f32 %v7184, %v7964
  %v8099 = vadd.f32 %v7185, %v7967
  %v8100 = vadd.f32 %v7186, %v7972
  %v8101 = vadd.f32 %v7187, %v7975
  %v8102 = vadd.f32 %v7188, %v7980
  %v8103 = vadd.f32 %v7189, %v7983
  %v8104 = vadd.f32 %v7190, %v7988
  %v8105 = vadd.f32 %v7191, %v7991
  %v8106 = vadd.f32 %v7192, %v7996
  %v8107 = vadd.f32 %v7193, %v7999
  %v8108 = vadd.f32 %v7194, %v8004
  %v8109 = vadd.f32 %v7195, %v8007
  %v8110 = vadd.f32 %v7196, %v8012
  %v8111 = vadd.f32 %v7197, %v8015
  %v8112 = vadd.f32 %v7198, %v8020
  %v8113 = vadd.f32 %v7199, %v8023
  %v8114 = vadd.f32 %v7200, %v8028
  %v8115 = vadd.f32 %v7201, %v8031
  %v8116 = vadd.f32 %v7202, %v8036
  %v8117 = vadd.f32 %v7203, %v8039
  %v8118 = vadd.f32 %v7204, %v8044
  %v8119 = vadd.f32 %v7205, %v8047
  %v8120 = vadd.f32 %v7206, %v8052
  %v8121 = vadd.f32 %v7207, %v8055
  %s8122 = scalar_lea.vmem [#allocation2], 24
  %v8123 = vld [vmem:[%s8122] sm:$0xf]
  %v8124 = vld [vmem:[%s8122 + $0x4] sm:$0xf]
  %v8125 = vld [vmem:[%s8122 + $0xc] sm:$0xf]
  %v8126 = vld [vmem:[%s8122 + $0x10] sm:$0xf]
  %v8127 = vld [vmem:[%s8122 + $0x18] sm:$0xf]
  %v8128 = vld [vmem:[%s8122 + $0x1c] sm:$0xf]
  %v8129 = vld [vmem:[%s8122 + $0x24] sm:$0xf]
  %v8130 = vld [vmem:[%s8122 + $0x28] sm:$0xf]
  %v8131 = vld [vmem:[%s8122 + $0x30] sm:$0xf]
  %v8132 = vld [vmem:[%s8122 + $0x34] sm:$0xf]
  %v8133 = vld [vmem:[%s8122 + $0x3c] sm:$0xf]
  %v8134 = vld [vmem:[%s8122 + $0x40] sm:$0xf]
  %v8135 = vld [vmem:[%s8122 + $0x48] sm:$0xf]
  %v8136 = vld [vmem:[%s8122 + $0x4c] sm:$0xf]
  %v8137 = vld [vmem:[%s8122 + $0x54] sm:$0xf]
  %v8138 = vld [vmem:[%s8122 + $0x58] sm:$0xf]
  %v8139 = vld [vmem:[%s8122 + $0x60] sm:$0xf]
  %v8140 = vld [vmem:[%s8122 + $0x64] sm:$0xf]
  %v8141 = vld [vmem:[%s8122 + $0x6c] sm:$0xf]
  %v8142 = vld [vmem:[%s8122 + $0x70] sm:$0xf]
  %v8143 = vld [vmem:[%s8122 + $0x78] sm:$0xf]
  %v8144 = vld [vmem:[%s8122 + $0x7c] sm:$0xf]
  %v8145 = vld [vmem:[%s8122 + $0x84] sm:$0xf]
  %v8146 = vld [vmem:[%s8122 + $0x88] sm:$0xf]
  %v8147 = vld [vmem:[%s8122 + $0x90] sm:$0xf]
  %v8148 = vld [vmem:[%s8122 + $0x94] sm:$0xf]
  %v8149 = vld [vmem:[%s8122 + $0x9c] sm:$0xf]
  %v8150 = vld [vmem:[%s8122 + $0xa0] sm:$0xf]
  %v8151 = vld [vmem:[%s8122 + $0xa8] sm:$0xf]
  %v8152 = vld [vmem:[%s8122 + $0xac] sm:$0xf]
  %v8153 = vld [vmem:[%s8122 + $0xb4] sm:$0xf]
  %v8154 = vld [vmem:[%s8122 + $0xb8] sm:$0xf]
  %v8155 = vld [vmem:[%s8122 + $0xd8] sm:$0xf]
  %v8156 = vld [vmem:[%s8122 + $0xdc] sm:$0xf]
  %v8157 = vld [vmem:[%s8122 + $0xe4] sm:$0xf]
  %v8158 = vld [vmem:[%s8122 + $0xe8] sm:$0xf]
  %v8159 = vld [vmem:[%s8122 + $0xf0] sm:$0xf]
  %v8160 = vld [vmem:[%s8122 + $0xf4] sm:$0xf]
  %v8161 = vld [vmem:[%s8122 + $0xfc] sm:$0xf]
  %v8162 = vld [vmem:[%s8122 + $0x100] sm:$0xf]
  %v8163 = vld [vmem:[%s8122 + $0x108] sm:$0xf]
  %v8164 = vld [vmem:[%s8122 + $0x10c] sm:$0xf]
  %v8165 = vld [vmem:[%s8122 + $0x114] sm:$0xf]
  %v8166 = vld [vmem:[%s8122 + $0x118] sm:$0xf]
  %v8167 = vld [vmem:[%s8122 + $0x120] sm:$0xf]
  %v8168 = vld [vmem:[%s8122 + $0x124] sm:$0xf]
  %v8169 = vld [vmem:[%s8122 + $0x12c] sm:$0xf]
  %v8170 = vld [vmem:[%s8122 + $0x130] sm:$0xf]
  %v8171 = vld [vmem:[%s8122 + $0x138] sm:$0xf]
  %v8172 = vld [vmem:[%s8122 + $0x13c] sm:$0xf]
  %v8173 = vld [vmem:[%s8122 + $0x144] sm:$0xf]
  %v8174 = vld [vmem:[%s8122 + $0x148] sm:$0xf]
  %v8175 = vld [vmem:[%s8122 + $0x150] sm:$0xf]
  %v8176 = vld [vmem:[%s8122 + $0x154] sm:$0xf]
  %v8177 = vld [vmem:[%s8122 + $0x15c] sm:$0xf]
  %v8178 = vld [vmem:[%s8122 + $0x160] sm:$0xf]
  %v8179 = vld [vmem:[%s8122 + $0x168] sm:$0xf]
  %v8180 = vld [vmem:[%s8122 + $0x16c] sm:$0xf]
  %v8181 = vld [vmem:[%s8122 + $0x174] sm:$0xf]
  %v8182 = vld [vmem:[%s8122 + $0x178] sm:$0xf]
  %v8183 = vld [vmem:[%s8122 + $0x180] sm:$0xf]
  %v8184 = vld [vmem:[%s8122 + $0x184] sm:$0xf]
  %v8185 = vld [vmem:[%s8122 + $0x18c] sm:$0xf]
  %v8186 = vld [vmem:[%s8122 + $0x190] sm:$0xf]
  %s8187 = scalar_lea.vmem %s4, 96
  %v8188 = vld [vmem:[%s8187] sm:$0xf]
  %v8189 = vld [vmem:[%s8187 + $0x4] sm:$0xf]
  %v8190 = vld [vmem:[%s8187 + $0x8] sm:$0xf]
  %v8191 = vld [vmem:[%s8187 + $0xc] sm:$0xf]
  %v8256 = vunpack.c.l.b16 %v8123
  %v8257 = vunpack.c.l.b16 %v8124
  %v8258 = vunpack.c.l.b16 %v8125
  %v8259 = vunpack.c.l.b16 %v8126
  %v8260 = vunpack.c.l.b16 %v8127
  %v8261 = vunpack.c.l.b16 %v8128
  %v8262 = vunpack.c.l.b16 %v8129
  %v8263 = vunpack.c.l.b16 %v8130
  %v8264 = vunpack.c.l.b16 %v8131
  %v8265 = vunpack.c.l.b16 %v8132
  %v8266 = vunpack.c.l.b16 %v8133
  %v8267 = vunpack.c.l.b16 %v8134
  %v8268 = vunpack.c.l.b16 %v8135
  %v8269 = vunpack.c.l.b16 %v8136
  %v8270 = vunpack.c.l.b16 %v8137
  %v8271 = vunpack.c.l.b16 %v8138
  %v8272 = vunpack.c.l.b16 %v8139
  %v8273 = vunpack.c.l.b16 %v8140
  %v8274 = vunpack.c.l.b16 %v8141
  %v8275 = vunpack.c.l.b16 %v8142
  %v8276 = vunpack.c.l.b16 %v8143
  %v8277 = vunpack.c.l.b16 %v8144
  %v8278 = vunpack.c.l.b16 %v8145
  %v8279 = vunpack.c.l.b16 %v8146
  %v8280 = vunpack.c.l.b16 %v8147
  %v8281 = vunpack.c.l.b16 %v8148
  %v8282 = vunpack.c.l.b16 %v8149
  %v8283 = vunpack.c.l.b16 %v8150
  %v8284 = vunpack.c.l.b16 %v8151
  %v8285 = vunpack.c.l.b16 %v8152
  %v8286 = vunpack.c.l.b16 %v8153
  %v8287 = vunpack.c.l.b16 %v8154
  %v8288 = vunpack.c.l.b16 %v8155
  %v8289 = vunpack.c.l.b16 %v8156
  %v8290 = vunpack.c.l.b16 %v8157
  %v8291 = vunpack.c.l.b16 %v8158
  %v8292 = vunpack.c.l.b16 %v8159
  %v8293 = vunpack.c.l.b16 %v8160
  %v8294 = vunpack.c.l.b16 %v8161
  %v8295 = vunpack.c.l.b16 %v8162
  %v8296 = vunpack.c.l.b16 %v8163
  %v8297 = vunpack.c.l.b16 %v8164
  %v8298 = vunpack.c.l.b16 %v8165
  %v8299 = vunpack.c.l.b16 %v8166
  %v8300 = vunpack.c.l.b16 %v8167
  %v8301 = vunpack.c.l.b16 %v8168
  %v8302 = vunpack.c.l.b16 %v8169
  %v8303 = vunpack.c.l.b16 %v8170
  %v8304 = vunpack.c.l.b16 %v8171
  %v8305 = vunpack.c.l.b16 %v8172
  %v8306 = vunpack.c.l.b16 %v8173
  %v8307 = vunpack.c.l.b16 %v8174
  %v8308 = vunpack.c.l.b16 %v8175
  %v8309 = vunpack.c.l.b16 %v8176
  %v8310 = vunpack.c.l.b16 %v8177
  %v8311 = vunpack.c.l.b16 %v8178
  %v8312 = vunpack.c.l.b16 %v8179
  %v8313 = vunpack.c.l.b16 %v8180
  %v8314 = vunpack.c.l.b16 %v8181
  %v8315 = vunpack.c.l.b16 %v8182
  %v8316 = vunpack.c.l.b16 %v8183
  %v8317 = vunpack.c.l.b16 %v8184
  %v8318 = vunpack.c.l.b16 %v8185
  %v8319 = vunpack.c.l.b16 %v8186
  %v8320 = vpack.c.b16 %v8257, %v8256
  %v8321 = vpack.c.b16 %v8259, %v8258
  %v8322 = vpack.c.b16 %v8261, %v8260
  %v8323 = vpack.c.b16 %v8263, %v8262
  %v8324 = vpack.c.b16 %v8265, %v8264
  %v8325 = vpack.c.b16 %v8267, %v8266
  %v8326 = vpack.c.b16 %v8269, %v8268
  %v8327 = vpack.c.b16 %v8271, %v8270
  %v8328 = vpack.c.b16 %v8273, %v8272
  %v8329 = vpack.c.b16 %v8275, %v8274
  %v8330 = vpack.c.b16 %v8277, %v8276
  %v8331 = vpack.c.b16 %v8279, %v8278
  %v8332 = vpack.c.b16 %v8281, %v8280
  %v8333 = vpack.c.b16 %v8283, %v8282
  %v8334 = vpack.c.b16 %v8285, %v8284
  %v8335 = vpack.c.b16 %v8287, %v8286
  %v8336 = vpack.c.b16 %v8289, %v8288
  %v8337 = vpack.c.b16 %v8291, %v8290
  %v8338 = vpack.c.b16 %v8293, %v8292
  %v8339 = vpack.c.b16 %v8295, %v8294
  %v8340 = vpack.c.b16 %v8297, %v8296
  %v8341 = vpack.c.b16 %v8299, %v8298
  %v8342 = vpack.c.b16 %v8301, %v8300
  %v8343 = vpack.c.b16 %v8303, %v8302
  %v8344 = vpack.c.b16 %v8305, %v8304
  %v8345 = vpack.c.b16 %v8307, %v8306
  %v8346 = vpack.c.b16 %v8309, %v8308
  %v8347 = vpack.c.b16 %v8311, %v8310
  %v8348 = vpack.c.b16 %v8313, %v8312
  %v8349 = vpack.c.b16 %v8315, %v8314
  %v8350 = vpack.c.b16 %v8317, %v8316
  %v8351 = vpack.c.b16 %v8319, %v8318
  %v8356 = vunpack.c.l.b16 %v8188
  %v8357 = vunpack.c.l.b16 %v8189
  %v8358 = vunpack.c.l.b16 %v8190
  %v8359 = vunpack.c.l.b16 %v8191
  %v8360 = vpack.c.b16 %v8357, %v8356
  %v8361 = vpack.c.b16 %v8359, %v8358
  %v8365 = vsel %vm3264, %v8320, 0
  %v8368 = vsel %vm3264, %v8321, 0
  %v8371 = vsel %vm3264, %v8322, 0
  %v8374 = vsel %vm3264, %v8323, 0
  %v8377 = vsel %vm3264, %v8324, 0
  %v8380 = vsel %vm3264, %v8325, 0
  %v8383 = vsel %vm3264, %v8326, 0
  %v8386 = vsel %vm3264, %v8327, 0
  %v8389 = vsel %vm3264, %v8328, 0
  %v8392 = vsel %vm3264, %v8329, 0
  %v8395 = vsel %vm3264, %v8330, 0
  %v8398 = vsel %vm3264, %v8331, 0
  %v8401 = vsel %vm3264, %v8332, 0
  %v8404 = vsel %vm3264, %v8333, 0
  %v8407 = vsel %vm3264, %v8334, 0
  %v8410 = vsel %vm3264, %v8335, 0
  %v8413 = vsel %vm3264, %v8336, 0
  %v8416 = vsel %vm3264, %v8337, 0
  %v8419 = vsel %vm3264, %v8338, 0
  %v8422 = vsel %vm3264, %v8339, 0
  %v8425 = vsel %vm3264, %v8340, 0
  %v8428 = vsel %vm3264, %v8341, 0
  %v8431 = vsel %vm3264, %v8342, 0
  %v8434 = vsel %vm3264, %v8343, 0
  %v8437 = vsel %vm3264, %v8344, 0
  %v8440 = vsel %vm3264, %v8345, 0
  %v8443 = vsel %vm3264, %v8346, 0
  %v8446 = vsel %vm3264, %v8347, 0
  %v8449 = vsel %vm3264, %v8348, 0
  %v8452 = vsel %vm3264, %v8349, 0
  %v8455 = vsel %vm3264, %v8350, 0
  %v8458 = vsel %vm3264, %v8351, 0
  %8460 = vmatprep.subr.bf16.mxu0 0
  %8461 = vmatpush1.bf16.msra.mxu0 %v8360
  %8462 = vmatprep.subr.bf16.mxu0 0
  %8463 = vmatpush1.bf16.msra.mxu0 %v8361
  %8464 = vmatprep.subr.bf16.mxu0 0
  %8465 = vmatpush1.bf16.msra.mxu0 0
  %8466 = vmatprep.subr.bf16.mxu0 0
  %8467 = vmatpush1.bf16.msra.mxu0 0
  %8468 = vmatprep.subr.bf16.mxu0 0
  %8469 = vmatpush1.bf16.msra.mxu0 0
  %8470 = vmatprep.subr.bf16.mxu0 0
  %8471 = vmatpush1.bf16.msra.mxu0 0
  %8472 = vmatprep.subr.bf16.mxu0 0
  %8473 = vmatpush1.bf16.msra.mxu0 0
  %8474 = vmatprep.subr.bf16.mxu0 0
  %8475 = vmatpush1.bf16.msra.mxu0 0
  %8476 = vmatprep.subr.bf16.mxu0 0
  %8477 = vmatpush1.bf16.msra.mxu0 0
  %8478 = vmatprep.subr.bf16.mxu0 0
  %8479 = vmatpush1.bf16.msra.mxu0 0
  %8480 = vmatprep.subr.bf16.mxu0 0
  %8481 = vmatpush1.bf16.msra.mxu0 0
  %8482 = vmatprep.subr.bf16.mxu0 0
  %8483 = vmatpush1.bf16.msra.mxu0 0
  %8484 = vmatprep.subr.bf16.mxu0 0
  %8485 = vmatpush1.bf16.msra.mxu0 0
  %8486 = vmatprep.subr.bf16.mxu0 0
  %8487 = vmatpush1.bf16.msra.mxu0 0
  %8488 = vmatprep.subr.bf16.mxu0 0
  %8489 = vmatpush1.bf16.msra.mxu0 0
  %8490 = vmatprep.subr.bf16.mxu0 0
  %8491 = vmatpush1.bf16.msra.mxu0 0
  %8492 = vmatprep.mubr.bf16.mxu0 0
  %8493 = vmatmul.mubr.bf16.gmra.mrb[0].mxu0 %v8365
  %v8494 = vpop.f32.mrb[0].mxu0
  %v8495 = vadd.f32 0.0, %v8494
  %v8496 = vpop.f32.mrb[0].mxu0
  %v8497 = vpop.f32.mrb[0].mxu0
  %v8498 = vadd.f32 0.0, %v8497
  %v8499 = vpop.f32.mrb[0].mxu0
  %8500 = vmatprep.mubr.bf16.mxu0 0
  %8501 = vmatmul.mubr.bf16.gmra.mrb[0].mxu0 %v8368
  %v8502 = vpop.f32.mrb[0].mxu0
  %v8503 = vadd.f32 0.0, %v8502
  %v8504 = vpop.f32.mrb[0].mxu0
  %v8505 = vpop.f32.mrb[0].mxu0
  %v8506 = vadd.f32 0.0, %v8505
  %v8507 = vpop.f32.mrb[0].mxu0
  %8508 = vmatprep.mubr.bf16.mxu0 0
  %8509 = vmatmul.mubr.bf16.gmra.mrb[0].mxu0 %v8371
  %v8510 = vpop.f32.mrb[0].mxu0
  %v8511 = vadd.f32 0.0, %v8510
  %v8512 = vpop.f32.mrb[0].mxu0
  %v8513 = vpop.f32.mrb[0].mxu0
  %v8514 = vadd.f32 0.0, %v8513
  %v8515 = vpop.f32.mrb[0].mxu0
  %8516 = vmatprep.mubr.bf16.mxu0 0
  %8517 = vmatmul.mubr.bf16.gmra.mrb[0].mxu0 %v8374
  %v8518 = vpop.f32.mrb[0].mxu0
  %v8519 = vadd.f32 0.0, %v8518
  %v8520 = vpop.f32.mrb[0].mxu0
  %v8521 = vpop.f32.mrb[0].mxu0
  %v8522 = vadd.f32 0.0, %v8521
  %v8523 = vpop.f32.mrb[0].mxu0
  %8524 = vmatprep.mubr.bf16.mxu0 0
  %8525 = vmatmul.mubr.bf16.gmra.mrb[0].mxu0 %v8377
  %v8526 = vpop.f32.mrb[0].mxu0
  %v8527 = vadd.f32 0.0, %v8526
  %v8528 = vpop.f32.mrb[0].mxu0
  %v8529 = vpop.f32.mrb[0].mxu0
  %v8530 = vadd.f32 0.0, %v8529
  %v8531 = vpop.f32.mrb[0].mxu0
  %8532 = vmatprep.mubr.bf16.mxu0 0
  %8533 = vmatmul.mubr.bf16.gmra.mrb[0].mxu0 %v8380
  %v8534 = vpop.f32.mrb[0].mxu0
  %v8535 = vadd.f32 0.0, %v8534
  %v8536 = vpop.f32.mrb[0].mxu0
  %v8537 = vpop.f32.mrb[0].mxu0
  %v8538 = vadd.f32 0.0, %v8537
  %v8539 = vpop.f32.mrb[0].mxu0
  %8540 = vmatprep.mubr.bf16.mxu0 0
  %8541 = vmatmul.mubr.bf16.gmra.mrb[0].mxu0 %v8383
  %v8542 = vpop.f32.mrb[0].mxu0
  %v8543 = vadd.f32 0.0, %v8542
  %v8544 = vpop.f32.mrb[0].mxu0
  %v8545 = vpop.f32.mrb[0].mxu0
  %v8546 = vadd.f32 0.0, %v8545
  %v8547 = vpop.f32.mrb[0].mxu0
  %8548 = vmatprep.mubr.bf16.mxu0 0
  %8549 = vmatmul.mubr.bf16.gmra.mrb[0].mxu0 %v8386
  %v8550 = vpop.f32.mrb[0].mxu0
  %v8551 = vadd.f32 0.0, %v8550
  %v8552 = vpop.f32.mrb[0].mxu0
  %v8553 = vpop.f32.mrb[0].mxu0
  %v8554 = vadd.f32 0.0, %v8553
  %v8555 = vpop.f32.mrb[0].mxu0
  %8556 = vmatprep.mubr.bf16.mxu0 0
  %8557 = vmatmul.mubr.bf16.gmra.mrb[0].mxu0 %v8389
  %v8558 = vpop.f32.mrb[0].mxu0
  %v8559 = vadd.f32 0.0, %v8558
  %v8560 = vpop.f32.mrb[0].mxu0
  %v8561 = vpop.f32.mrb[0].mxu0
  %v8562 = vadd.f32 0.0, %v8561
  %v8563 = vpop.f32.mrb[0].mxu0
  %8564 = vmatprep.mubr.bf16.mxu0 0
  %8565 = vmatmul.mubr.bf16.gmra.mrb[0].mxu0 %v8392
  %v8566 = vpop.f32.mrb[0].mxu0
  %v8567 = vadd.f32 0.0, %v8566
  %v8568 = vpop.f32.mrb[0].mxu0
  %v8569 = vpop.f32.mrb[0].mxu0
  %v8570 = vadd.f32 0.0, %v8569
  %v8571 = vpop.f32.mrb[0].mxu0
  %8572 = vmatprep.mubr.bf16.mxu0 0
  %8573 = vmatmul.mubr.bf16.gmra.mrb[0].mxu0 %v8395
  %v8574 = vpop.f32.mrb[0].mxu0
  %v8575 = vadd.f32 0.0, %v8574
  %v8576 = vpop.f32.mrb[0].mxu0
  %v8577 = vpop.f32.mrb[0].mxu0
  %v8578 = vadd.f32 0.0, %v8577
  %v8579 = vpop.f32.mrb[0].mxu0
  %8580 = vmatprep.mubr.bf16.mxu0 0
  %8581 = vmatmul.mubr.bf16.gmra.mrb[0].mxu0 %v8398
  %v8582 = vpop.f32.mrb[0].mxu0
  %v8583 = vadd.f32 0.0, %v8582
  %v8584 = vpop.f32.mrb[0].mxu0
  %v8585 = vpop.f32.mrb[0].mxu0
  %v8586 = vadd.f32 0.0, %v8585
  %v8587 = vpop.f32.mrb[0].mxu0
  %8588 = vmatprep.mubr.bf16.mxu0 0
  %8589 = vmatmul.mubr.bf16.gmra.mrb[0].mxu0 %v8401
  %v8590 = vpop.f32.mrb[0].mxu0
  %v8591 = vadd.f32 0.0, %v8590
  %v8592 = vpop.f32.mrb[0].mxu0
  %v8593 = vpop.f32.mrb[0].mxu0
  %v8594 = vadd.f32 0.0, %v8593
  %v8595 = vpop.f32.mrb[0].mxu0
  %8596 = vmatprep.mubr.bf16.mxu0 0
  %8597 = vmatmul.mubr.bf16.gmra.mrb[0].mxu0 %v8404
  %v8598 = vpop.f32.mrb[0].mxu0
  %v8599 = vadd.f32 0.0, %v8598
  %v8600 = vpop.f32.mrb[0].mxu0
  %v8601 = vpop.f32.mrb[0].mxu0
  %v8602 = vadd.f32 0.0, %v8601
  %v8603 = vpop.f32.mrb[0].mxu0
  %8604 = vmatprep.mubr.bf16.mxu0 0
  %8605 = vmatmul.mubr.bf16.gmra.mrb[0].mxu0 %v8407
  %v8606 = vpop.f32.mrb[0].mxu0
  %v8607 = vadd.f32 0.0, %v8606
  %v8608 = vpop.f32.mrb[0].mxu0
  %v8609 = vpop.f32.mrb[0].mxu0
  %v8610 = vadd.f32 0.0, %v8609
  %v8611 = vpop.f32.mrb[0].mxu0
  %8612 = vmatprep.mubr.bf16.mxu0 0
  %8613 = vmatmul.mubr.bf16.gmra.mrb[0].mxu0 %v8410
  %v8614 = vpop.f32.mrb[0].mxu0
  %v8615 = vadd.f32 0.0, %v8614
  %v8616 = vpop.f32.mrb[0].mxu0
  %v8617 = vpop.f32.mrb[0].mxu0
  %v8618 = vadd.f32 0.0, %v8617
  %v8619 = vpop.f32.mrb[0].mxu0
  %8620 = vmatprep.mubr.bf16.mxu0 0
  %8621 = vmatmul.mubr.bf16.gmra.mrb[0].mxu0 %v8413
  %v8622 = vpop.f32.mrb[0].mxu0
  %v8623 = vadd.f32 0.0, %v8622
  %v8624 = vpop.f32.mrb[0].mxu0
  %v8625 = vpop.f32.mrb[0].mxu0
  %v8626 = vadd.f32 0.0, %v8625
  %v8627 = vpop.f32.mrb[0].mxu0
  %8628 = vmatprep.mubr.bf16.mxu0 0
  %8629 = vmatmul.mubr.bf16.gmra.mrb[0].mxu0 %v8416
  %v8630 = vpop.f32.mrb[0].mxu0
  %v8631 = vadd.f32 0.0, %v8630
  %v8632 = vpop.f32.mrb[0].mxu0
  %v8633 = vpop.f32.mrb[0].mxu0
  %v8634 = vadd.f32 0.0, %v8633
  %v8635 = vpop.f32.mrb[0].mxu0
  %8636 = vmatprep.mubr.bf16.mxu0 0
  %8637 = vmatmul.mubr.bf16.gmra.mrb[0].mxu0 %v8419
  %v8638 = vpop.f32.mrb[0].mxu0
  %v8639 = vadd.f32 0.0, %v8638
  %v8640 = vpop.f32.mrb[0].mxu0
  %v8641 = vpop.f32.mrb[0].mxu0
  %v8642 = vadd.f32 0.0, %v8641
  %v8643 = vpop.f32.mrb[0].mxu0
  %8644 = vmatprep.mubr.bf16.mxu0 0
  %8645 = vmatmul.mubr.bf16.gmra.mrb[0].mxu0 %v8422
  %v8646 = vpop.f32.mrb[0].mxu0
  %v8647 = vadd.f32 0.0, %v8646
  %v8648 = vpop.f32.mrb[0].mxu0
  %v8649 = vpop.f32.mrb[0].mxu0
  %v8650 = vadd.f32 0.0, %v8649
  %v8651 = vpop.f32.mrb[0].mxu0
  %8652 = vmatprep.mubr.bf16.mxu0 0
  %8653 = vmatmul.mubr.bf16.gmra.mrb[0].mxu0 %v8425
  %v8654 = vpop.f32.mrb[0].mxu0
  %v8655 = vadd.f32 0.0, %v8654
  %v8656 = vpop.f32.mrb[0].mxu0
  %v8657 = vpop.f32.mrb[0].mxu0
  %v8658 = vadd.f32 0.0, %v8657
  %v8659 = vpop.f32.mrb[0].mxu0
  %8660 = vmatprep.mubr.bf16.mxu0 0
  %8661 = vmatmul.mubr.bf16.gmra.mrb[0].mxu0 %v8428
  %v8662 = vpop.f32.mrb[0].mxu0
  %v8663 = vadd.f32 0.0, %v8662
  %v8664 = vpop.f32.mrb[0].mxu0
  %v8665 = vpop.f32.mrb[0].mxu0
  %v8666 = vadd.f32 0.0, %v8665
  %v8667 = vpop.f32.mrb[0].mxu0
  %8668 = vmatprep.mubr.bf16.mxu0 0
  %8669 = vmatmul.mubr.bf16.gmra.mrb[0].mxu0 %v8431
  %v8670 = vpop.f32.mrb[0].mxu0
  %v8671 = vadd.f32 0.0, %v8670
  %v8672 = vpop.f32.mrb[0].mxu0
  %v8673 = vpop.f32.mrb[0].mxu0
  %v8674 = vadd.f32 0.0, %v8673
  %v8675 = vpop.f32.mrb[0].mxu0
  %8676 = vmatprep.mubr.bf16.mxu0 0
  %8677 = vmatmul.mubr.bf16.gmra.mrb[0].mxu0 %v8434
  %v8678 = vpop.f32.mrb[0].mxu0
  %v8679 = vadd.f32 0.0, %v8678
  %v8680 = vpop.f32.mrb[0].mxu0
  %v8681 = vpop.f32.mrb[0].mxu0
  %v8682 = vadd.f32 0.0, %v8681
  %v8683 = vpop.f32.mrb[0].mxu0
  %8684 = vmatprep.mubr.bf16.mxu0 0
  %8685 = vmatmul.mubr.bf16.gmra.mrb[0].mxu0 %v8437
  %v8686 = vpop.f32.mrb[0].mxu0
  %v8687 = vadd.f32 0.0, %v8686
  %v8688 = vpop.f32.mrb[0].mxu0
  %v8689 = vpop.f32.mrb[0].mxu0
  %v8690 = vadd.f32 0.0, %v8689
  %v8691 = vpop.f32.mrb[0].mxu0
  %8692 = vmatprep.mubr.bf16.mxu0 0
  %8693 = vmatmul.mubr.bf16.gmra.mrb[0].mxu0 %v8440
  %v8694 = vpop.f32.mrb[0].mxu0
  %v8695 = vadd.f32 0.0, %v8694
  %v8696 = vpop.f32.mrb[0].mxu0
  %v8697 = vpop.f32.mrb[0].mxu0
  %v8698 = vadd.f32 0.0, %v8697
  %v8699 = vpop.f32.mrb[0].mxu0
  %8700 = vmatprep.mubr.bf16.mxu0 0
  %8701 = vmatmul.mubr.bf16.gmra.mrb[0].mxu0 %v8443
  %v8702 = vpop.f32.mrb[0].mxu0
  %v8703 = vadd.f32 0.0, %v8702
  %v8704 = vpop.f32.mrb[0].mxu0
  %v8705 = vpop.f32.mrb[0].mxu0
  %v8706 = vadd.f32 0.0, %v8705
  %v8707 = vpop.f32.mrb[0].mxu0
  %8708 = vmatprep.mubr.bf16.mxu0 0
  %8709 = vmatmul.mubr.bf16.gmra.mrb[0].mxu0 %v8446
  %v8710 = vpop.f32.mrb[0].mxu0
  %v8711 = vadd.f32 0.0, %v8710
  %v8712 = vpop.f32.mrb[0].mxu0
  %v8713 = vpop.f32.mrb[0].mxu0
  %v8714 = vadd.f32 0.0, %v8713
  %v8715 = vpop.f32.mrb[0].mxu0
  %8716 = vmatprep.mubr.bf16.mxu0 0
  %8717 = vmatmul.mubr.bf16.gmra.mrb[0].mxu0 %v8449
  %v8718 = vpop.f32.mrb[0].mxu0
  %v8719 = vadd.f32 0.0, %v8718
  %v8720 = vpop.f32.mrb[0].mxu0
  %v8721 = vpop.f32.mrb[0].mxu0
  %v8722 = vadd.f32 0.0, %v8721
  %v8723 = vpop.f32.mrb[0].mxu0
  %8724 = vmatprep.mubr.bf16.mxu0 0
  %8725 = vmatmul.mubr.bf16.gmra.mrb[0].mxu0 %v8452
  %v8726 = vpop.f32.mrb[0].mxu0
  %v8727 = vadd.f32 0.0, %v8726
  %v8728 = vpop.f32.mrb[0].mxu0
  %v8729 = vpop.f32.mrb[0].mxu0
  %v8730 = vadd.f32 0.0, %v8729
  %v8731 = vpop.f32.mrb[0].mxu0
  %8732 = vmatprep.mubr.bf16.mxu0 0
  %8733 = vmatmul.mubr.bf16.gmra.mrb[0].mxu0 %v8455
  %v8734 = vpop.f32.mrb[0].mxu0
  %v8735 = vadd.f32 0.0, %v8734
  %v8736 = vpop.f32.mrb[0].mxu0
  %v8737 = vpop.f32.mrb[0].mxu0
  %v8738 = vadd.f32 0.0, %v8737
  %v8739 = vpop.f32.mrb[0].mxu0
  %8740 = vmatprep.mubr.bf16.mxu0 0
  %8741 = vmatmul.mubr.bf16.gmra.mrb[0].mxu0 %v8458
  %v8742 = vpop.f32.mrb[0].mxu0
  %v8743 = vadd.f32 0.0, %v8742
  %v8744 = vpop.f32.mrb[0].mxu0
  %v8745 = vpop.f32.mrb[0].mxu0
  %v8746 = vadd.f32 0.0, %v8745
  %v8747 = vpop.f32.mrb[0].mxu0
  %8748 = vdwg.mxu0
  %v8749 = vadd.f32 %v8058, %v8495
  %v8750 = vadd.f32 %v8059, %v8498
  %v8751 = vadd.f32 %v8060, %v8503
  %v8752 = vadd.f32 %v8061, %v8506
  %v8753 = vadd.f32 %v8062, %v8511
  %v8754 = vadd.f32 %v8063, %v8514
  %v8755 = vadd.f32 %v8064, %v8519
  %v8756 = vadd.f32 %v8065, %v8522
  %v8757 = vadd.f32 %v8066, %v8527
  %v8758 = vadd.f32 %v8067, %v8530
  %v8759 = vadd.f32 %v8068, %v8535
  %v8760 = vadd.f32 %v8069, %v8538
  %v8761 = vadd.f32 %v8070, %v8543
  %v8762 = vadd.f32 %v8071, %v8546
  %v8763 = vadd.f32 %v8072, %v8551
  %v8764 = vadd.f32 %v8073, %v8554
  %v8765 = vadd.f32 %v8074, %v8559
  %v8766 = vadd.f32 %v8075, %v8562
  %v8767 = vadd.f32 %v8076, %v8567
  %v8768 = vadd.f32 %v8077, %v8570
  %v8769 = vadd.f32 %v8078, %v8575
  %v8770 = vadd.f32 %v8079, %v8578
  %v8771 = vadd.f32 %v8080, %v8583
  %v8772 = vadd.f32 %v8081, %v8586
  %v8773 = vadd.f32 %v8082, %v8591
  %v8774 = vadd.f32 %v8083, %v8594
  %v8775 = vadd.f32 %v8084, %v8599
  %v8776 = vadd.f32 %v8085, %v8602
  %v8777 = vadd.f32 %v8086, %v8607
  %v8778 = vadd.f32 %v8087, %v8610
  %v8779 = vadd.f32 %v8088, %v8615
  %v8780 = vadd.f32 %v8089, %v8618
  %v8781 = vadd.f32 %v8090, %v8623
  %v8782 = vadd.f32 %v8091, %v8626
  %v8783 = vadd.f32 %v8092, %v8631
  %v8784 = vadd.f32 %v8093, %v8634
  %v8785 = vadd.f32 %v8094, %v8639
  %v8786 = vadd.f32 %v8095, %v8642
  %v8787 = vadd.f32 %v8096, %v8647
  %v8788 = vadd.f32 %v8097, %v8650
  %v8789 = vadd.f32 %v8098, %v8655
  %v8790 = vadd.f32 %v8099, %v8658
  %v8791 = vadd.f32 %v8100, %v8663
  %v8792 = vadd.f32 %v8101, %v8666
  %v8793 = vadd.f32 %v8102, %v8671
  %v8794 = vadd.f32 %v8103, %v8674
  %v8795 = vadd.f32 %v8104, %v8679
  %v8796 = vadd.f32 %v8105, %v8682
  %v8797 = vadd.f32 %v8106, %v8687
  %v8798 = vadd.f32 %v8107, %v8690
  %v8799 = vadd.f32 %v8108, %v8695
  %v8800 = vadd.f32 %v8109, %v8698
  %v8801 = vadd.f32 %v8110, %v8703
  %v8802 = vadd.f32 %v8111, %v8706
  %v8803 = vadd.f32 %v8112, %v8711
  %v8804 = vadd.f32 %v8113, %v8714
  %v8805 = vadd.f32 %v8114, %v8719
  %v8806 = vadd.f32 %v8115, %v8722
  %v8807 = vadd.f32 %v8116, %v8727
  %v8808 = vadd.f32 %v8117, %v8730
  %v8809 = vadd.f32 %v8118, %v8735
  %v8810 = vadd.f32 %v8119, %v8738
  %v8811 = vadd.f32 %v8120, %v8743
  %v8812 = vadd.f32 %v8121, %v8746
  %v8813 = vld [vmem:[%s8122] sm:$0xf]
  %v8814 = vld [vmem:[%s8122 + $0x4] sm:$0xf]
  %v8815 = vld [vmem:[%s8122 + $0x8] sm:$0x1]
  %v8816 = vld [vmem:[%s8122 + $0xc] sm:$0xf]
  %v8817 = vld [vmem:[%s8122 + $0x10] sm:$0xf]
  %v8818 = vld [vmem:[%s8122 + $0x14] sm:$0x1]
  %v8819 = vld [vmem:[%s8122 + $0x18] sm:$0xf]
  %v8820 = vld [vmem:[%s8122 + $0x1c] sm:$0xf]
  %v8821 = vld [vmem:[%s8122 + $0x20] sm:$0x1]
  %v8822 = vld [vmem:[%s8122 + $0x24] sm:$0xf]
  %v8823 = vld [vmem:[%s8122 + $0x28] sm:$0xf]
  %v8824 = vld [vmem:[%s8122 + $0x2c] sm:$0x1]
  %v8825 = vld [vmem:[%s8122 + $0x30] sm:$0xf]
  %v8826 = vld [vmem:[%s8122 + $0x34] sm:$0xf]
  %v8827 = vld [vmem:[%s8122 + $0x38] sm:$0x1]
  %v8828 = vld [vmem:[%s8122 + $0x3c] sm:$0xf]
  %v8829 = vld [vmem:[%s8122 + $0x40] sm:$0xf]
  %v8830 = vld [vmem:[%s8122 + $0x44] sm:$0x1]
  %v8831 = vld [vmem:[%s8122 + $0x48] sm:$0xf]
  %v8832 = vld [vmem:[%s8122 + $0x4c] sm:$0xf]
  %v8833 = vld [vmem:[%s8122 + $0x50] sm:$0x1]
  %v8834 = vld [vmem:[%s8122 + $0x54] sm:$0xf]
  %v8835 = vld [vmem:[%s8122 + $0x58] sm:$0xf]
  %v8836 = vld [vmem:[%s8122 + $0x5c] sm:$0x1]
  %v8837 = vld [vmem:[%s8122 + $0x60] sm:$0xf]
  %v8838 = vld [vmem:[%s8122 + $0x64] sm:$0xf]
  %v8839 = vld [vmem:[%s8122 + $0x68] sm:$0x1]
  %v8840 = vld [vmem:[%s8122 + $0x6c] sm:$0xf]
  %v8841 = vld [vmem:[%s8122 + $0x70] sm:$0xf]
  %v8842 = vld [vmem:[%s8122 + $0x74] sm:$0x1]
  %v8843 = vld [vmem:[%s8122 + $0x78] sm:$0xf]
  %v8844 = vld [vmem:[%s8122 + $0x7c] sm:$0xf]
  %v8845 = vld [vmem:[%s8122 + $0x80] sm:$0x1]
  %v8846 = vld [vmem:[%s8122 + $0x84] sm:$0xf]
  %v8847 = vld [vmem:[%s8122 + $0x88] sm:$0xf]
  %v8848 = vld [vmem:[%s8122 + $0x8c] sm:$0x1]
  %v8849 = vld [vmem:[%s8122 + $0x90] sm:$0xf]
  %v8850 = vld [vmem:[%s8122 + $0x94] sm:$0xf]
  %v8851 = vld [vmem:[%s8122 + $0x98] sm:$0x1]
  %v8852 = vld [vmem:[%s8122 + $0x9c] sm:$0xf]
  %v8853 = vld [vmem:[%s8122 + $0xa0] sm:$0xf]
  %v8854 = vld [vmem:[%s8122 + $0xa4] sm:$0x1]
  %v8855 = vld [vmem:[%s8122 + $0xa8] sm:$0xf]
  %v8856 = vld [vmem:[%s8122 + $0xac] sm:$0xf]
  %v8857 = vld [vmem:[%s8122 + $0xb0] sm:$0x1]
  %v8858 = vld [vmem:[%s8122 + $0xb4] sm:$0xf]
  %v8859 = vld [vmem:[%s8122 + $0xb8] sm:$0xf]
  %v8860 = vld [vmem:[%s8122 + $0xbc] sm:$0x1]
  %v8861 = vld [vmem:[%s8122 + $0xd8] sm:$0xf]
  %v8862 = vld [vmem:[%s8122 + $0xdc] sm:$0xf]
  %v8863 = vld [vmem:[%s8122 + $0xe0] sm:$0x1]
  %v8864 = vld [vmem:[%s8122 + $0xe4] sm:$0xf]
  %v8865 = vld [vmem:[%s8122 + $0xe8] sm:$0xf]
  %v8866 = vld [vmem:[%s8122 + $0xec] sm:$0x1]
  %v8867 = vld [vmem:[%s8122 + $0xf0] sm:$0xf]
  %v8868 = vld [vmem:[%s8122 + $0xf4] sm:$0xf]
  %v8869 = vld [vmem:[%s8122 + $0xf8] sm:$0x1]
  %v8870 = vld [vmem:[%s8122 + $0xfc] sm:$0xf]
  %v8871 = vld [vmem:[%s8122 + $0x100] sm:$0xf]
  %v8872 = vld [vmem:[%s8122 + $0x104] sm:$0x1]
  %v8873 = vld [vmem:[%s8122 + $0x108] sm:$0xf]
  %v8874 = vld [vmem:[%s8122 + $0x10c] sm:$0xf]
  %v8875 = vld [vmem:[%s8122 + $0x110] sm:$0x1]
  %v8876 = vld [vmem:[%s8122 + $0x114] sm:$0xf]
  %v8877 = vld [vmem:[%s8122 + $0x118] sm:$0xf]
  %v8878 = vld [vmem:[%s8122 + $0x11c] sm:$0x1]
  %v8879 = vld [vmem:[%s8122 + $0x120] sm:$0xf]
  %v8880 = vld [vmem:[%s8122 + $0x124] sm:$0xf]
  %v8881 = vld [vmem:[%s8122 + $0x128] sm:$0x1]
  %v8882 = vld [vmem:[%s8122 + $0x12c] sm:$0xf]
  %v8883 = vld [vmem:[%s8122 + $0x130] sm:$0xf]
  %v8884 = vld [vmem:[%s8122 + $0x134] sm:$0x1]
  %v8885 = vld [vmem:[%s8122 + $0x138] sm:$0xf]
  %v8886 = vld [vmem:[%s8122 + $0x13c] sm:$0xf]
  %v8887 = vld [vmem:[%s8122 + $0x140] sm:$0x1]
  %v8888 = vld [vmem:[%s8122 + $0x144] sm:$0xf]
  %v8889 = vld [vmem:[%s8122 + $0x148] sm:$0xf]
  %v8890 = vld [vmem:[%s8122 + $0x14c] sm:$0x1]
  %v8891 = vld [vmem:[%s8122 + $0x150] sm:$0xf]
  %v8892 = vld [vmem:[%s8122 + $0x154] sm:$0xf]
  %v8893 = vld [vmem:[%s8122 + $0x158] sm:$0x1]
  %v8894 = vld [vmem:[%s8122 + $0x15c] sm:$0xf]
  %v8895 = vld [vmem:[%s8122 + $0x160] sm:$0xf]
  %v8896 = vld [vmem:[%s8122 + $0x164] sm:$0x1]
  %v8897 = vld [vmem:[%s8122 + $0x168] sm:$0xf]
  %v8898 = vld [vmem:[%s8122 + $0x16c] sm:$0xf]
  %v8899 = vld [vmem:[%s8122 + $0x170] sm:$0x1]
  %v8900 = vld [vmem:[%s8122 + $0x174] sm:$0xf]
  %v8901 = vld [vmem:[%s8122 + $0x178] sm:$0xf]
  %v8902 = vld [vmem:[%s8122 + $0x17c] sm:$0x1]
  %v8903 = vld [vmem:[%s8122 + $0x180] sm:$0xf]
  %v8904 = vld [vmem:[%s8122 + $0x184] sm:$0xf]
  %v8905 = vld [vmem:[%s8122 + $0x188] sm:$0x1]
  %v8906 = vld [vmem:[%s8122 + $0x18c] sm:$0xf]
  %v8907 = vld [vmem:[%s8122 + $0x190] sm:$0xf]
  %v8908 = vld [vmem:[%s8122 + $0x194] sm:$0x1]
  %v8910 = vshrl.u32 %v8813, 16
  %v8912 = vrot.slane %v8910, 4
  %v8913 = vshll.u32 %v8813, 16
  %v8915 = vrot.slane %v8913, 5
  %v8916 = vor.u32 %v8912, %v8915
  %v8917 = vrot.slane %v8916, 4
  %v8919 = vshll.u32 %v8814, 16
  %v8921 = vrot.slane %v8919, 5
  %v8922 = vsel %vm2382, %v8917, %v8921
  %v8923 = vshrl.u32 %v8814, 16
  %v8925 = vrot.slane %v8923, 4
  %v8926 = vor.u32 %v8925, %v8921
  %v8927 = vrot.slane %v8926, 4
  %v8929 = vshll.u32 %v8815, 16
  %v8931 = vrot.slane %v8929, 5
  %v8932 = vsel %vm2382, %v8927, %v8931
  %v8934 = vshrl.u32 %v8816, 16
  %v8936 = vrot.slane %v8934, 4
  %v8937 = vshll.u32 %v8816, 16
  %v8939 = vrot.slane %v8937, 5
  %v8940 = vor.u32 %v8936, %v8939
  %v8941 = vrot.slane %v8940, 4
  %v8943 = vshll.u32 %v8817, 16
  %v8945 = vrot.slane %v8943, 5
  %v8946 = vsel %vm2382, %v8941, %v8945
  %v8947 = vshrl.u32 %v8817, 16
  %v8949 = vrot.slane %v8947, 4
  %v8950 = vor.u32 %v8949, %v8945
  %v8951 = vrot.slane %v8950, 4
  %v8953 = vshll.u32 %v8818, 16
  %v8955 = vrot.slane %v8953, 5
  %v8956 = vsel %vm2382, %v8951, %v8955
  %v8958 = vshrl.u32 %v8819, 16
  %v8960 = vrot.slane %v8958, 4
  %v8961 = vshll.u32 %v8819, 16
  %v8963 = vrot.slane %v8961, 5
  %v8964 = vor.u32 %v8960, %v8963
  %v8965 = vrot.slane %v8964, 4
  %v8967 = vshll.u32 %v8820, 16
  %v8969 = vrot.slane %v8967, 5
  %v8970 = vsel %vm2382, %v8965, %v8969
  %v8971 = vshrl.u32 %v8820, 16
  %v8973 = vrot.slane %v8971, 4
  %v8974 = vor.u32 %v8973, %v8969
  %v8975 = vrot.slane %v8974, 4
  %v8977 = vshll.u32 %v8821, 16
  %v8979 = vrot.slane %v8977, 5
  %v8980 = vsel %vm2382, %v8975, %v8979
  %v8982 = vshrl.u32 %v8822, 16
  %v8984 = vrot.slane %v8982, 4
  %v8985 = vshll.u32 %v8822, 16
  %v8987 = vrot.slane %v8985, 5
  %v8988 = vor.u32 %v8984, %v8987
  %v8989 = vrot.slane %v8988, 4
  %v8991 = vshll.u32 %v8823, 16
  %v8993 = vrot.slane %v8991, 5
  %v8994 = vsel %vm2382, %v8989, %v8993
  %v8995 = vshrl.u32 %v8823, 16
  %v8997 = vrot.slane %v8995, 4
  %v8998 = vor.u32 %v8997, %v8993
  %v8999 = vrot.slane %v8998, 4
  %v9001 = vshll.u32 %v8824, 16
  %v9003 = vrot.slane %v9001, 5
  %v9004 = vsel %vm2382, %v8999, %v9003
  %v9006 = vshrl.u32 %v8825, 16
  %v9008 = vrot.slane %v9006, 4
  %v9009 = vshll.u32 %v8825, 16
  %v9011 = vrot.slane %v9009, 5
  %v9012 = vor.u32 %v9008, %v9011
  %v9013 = vrot.slane %v9012, 4
  %v9015 = vshll.u32 %v8826, 16
  %v9017 = vrot.slane %v9015, 5
  %v9018 = vsel %vm2382, %v9013, %v9017
  %v9019 = vshrl.u32 %v8826, 16
  %v9021 = vrot.slane %v9019, 4
  %v9022 = vor.u32 %v9021, %v9017
  %v9023 = vrot.slane %v9022, 4
  %v9025 = vshll.u32 %v8827, 16
  %v9027 = vrot.slane %v9025, 5
  %v9028 = vsel %vm2382, %v9023, %v9027
  %v9030 = vshrl.u32 %v8828, 16
  %v9032 = vrot.slane %v9030, 4
  %v9033 = vshll.u32 %v8828, 16
  %v9035 = vrot.slane %v9033, 5
  %v9036 = vor.u32 %v9032, %v9035
  %v9037 = vrot.slane %v9036, 4
  %v9039 = vshll.u32 %v8829, 16
  %v9041 = vrot.slane %v9039, 5
  %v9042 = vsel %vm2382, %v9037, %v9041
  %v9043 = vshrl.u32 %v8829, 16
  %v9045 = vrot.slane %v9043, 4
  %v9046 = vor.u32 %v9045, %v9041
  %v9047 = vrot.slane %v9046, 4
  %v9049 = vshll.u32 %v8830, 16
  %v9051 = vrot.slane %v9049, 5
  %v9052 = vsel %vm2382, %v9047, %v9051
  %v9054 = vshrl.u32 %v8831, 16
  %v9056 = vrot.slane %v9054, 4
  %v9057 = vshll.u32 %v8831, 16
  %v9059 = vrot.slane %v9057, 5
  %v9060 = vor.u32 %v9056, %v9059
  %v9061 = vrot.slane %v9060, 4
  %v9063 = vshll.u32 %v8832, 16
  %v9065 = vrot.slane %v9063, 5
  %v9066 = vsel %vm2382, %v9061, %v9065
  %v9067 = vshrl.u32 %v8832, 16
  %v9069 = vrot.slane %v9067, 4
  %v9070 = vor.u32 %v9069, %v9065
  %v9071 = vrot.slane %v9070, 4
  %v9073 = vshll.u32 %v8833, 16
  %v9075 = vrot.slane %v9073, 5
  %v9076 = vsel %vm2382, %v9071, %v9075
  %v9078 = vshrl.u32 %v8834, 16
  %v9080 = vrot.slane %v9078, 4
  %v9081 = vshll.u32 %v8834, 16
  %v9083 = vrot.slane %v9081, 5
  %v9084 = vor.u32 %v9080, %v9083
  %v9085 = vrot.slane %v9084, 4
  %v9087 = vshll.u32 %v8835, 16
  %v9089 = vrot.slane %v9087, 5
  %v9090 = vsel %vm2382, %v9085, %v9089
  %v9091 = vshrl.u32 %v8835, 16
  %v9093 = vrot.slane %v9091, 4
  %v9094 = vor.u32 %v9093, %v9089
  %v9095 = vrot.slane %v9094, 4
  %v9097 = vshll.u32 %v8836, 16
  %v9099 = vrot.slane %v9097, 5
  %v9100 = vsel %vm2382, %v9095, %v9099
  %v9102 = vshrl.u32 %v8837, 16
  %v9104 = vrot.slane %v9102, 4
  %v9105 = vshll.u32 %v8837, 16
  %v9107 = vrot.slane %v9105, 5
  %v9108 = vor.u32 %v9104, %v9107
  %v9109 = vrot.slane %v9108, 4
  %v9111 = vshll.u32 %v8838, 16
  %v9113 = vrot.slane %v9111, 5
  %v9114 = vsel %vm2382, %v9109, %v9113
  %v9115 = vshrl.u32 %v8838, 16
  %v9117 = vrot.slane %v9115, 4
  %v9118 = vor.u32 %v9117, %v9113
  %v9119 = vrot.slane %v9118, 4
  %v9121 = vshll.u32 %v8839, 16
  %v9123 = vrot.slane %v9121, 5
  %v9124 = vsel %vm2382, %v9119, %v9123
  %v9126 = vshrl.u32 %v8840, 16
  %v9128 = vrot.slane %v9126, 4
  %v9129 = vshll.u32 %v8840, 16
  %v9131 = vrot.slane %v9129, 5
  %v9132 = vor.u32 %v9128, %v9131
  %v9133 = vrot.slane %v9132, 4
  %v9135 = vshll.u32 %v8841, 16
  %v9137 = vrot.slane %v9135, 5
  %v9138 = vsel %vm2382, %v9133, %v9137
  %v9139 = vshrl.u32 %v8841, 16
  %v9141 = vrot.slane %v9139, 4
  %v9142 = vor.u32 %v9141, %v9137
  %v9143 = vrot.slane %v9142, 4
  %v9145 = vshll.u32 %v8842, 16
  %v9147 = vrot.slane %v9145, 5
  %v9148 = vsel %vm2382, %v9143, %v9147
  %v9150 = vshrl.u32 %v8843, 16
  %v9152 = vrot.slane %v9150, 4
  %v9153 = vshll.u32 %v8843, 16
  %v9155 = vrot.slane %v9153, 5
  %v9156 = vor.u32 %v9152, %v9155
  %v9157 = vrot.slane %v9156, 4
  %v9159 = vshll.u32 %v8844, 16
  %v9161 = vrot.slane %v9159, 5
  %v9162 = vsel %vm2382, %v9157, %v9161
  %v9163 = vshrl.u32 %v8844, 16
  %v9165 = vrot.slane %v9163, 4
  %v9166 = vor.u32 %v9165, %v9161
  %v9167 = vrot.slane %v9166, 4
  %v9169 = vshll.u32 %v8845, 16
  %v9171 = vrot.slane %v9169, 5
  %v9172 = vsel %vm2382, %v9167, %v9171
  %v9174 = vshrl.u32 %v8846, 16
  %v9176 = vrot.slane %v9174, 4
  %v9177 = vshll.u32 %v8846, 16
  %v9179 = vrot.slane %v9177, 5
  %v9180 = vor.u32 %v9176, %v9179
  %v9181 = vrot.slane %v9180, 4
  %v9183 = vshll.u32 %v8847, 16
  %v9185 = vrot.slane %v9183, 5
  %v9186 = vsel %vm2382, %v9181, %v9185
  %v9187 = vshrl.u32 %v8847, 16
  %v9189 = vrot.slane %v9187, 4
  %v9190 = vor.u32 %v9189, %v9185
  %v9191 = vrot.slane %v9190, 4
  %v9193 = vshll.u32 %v8848, 16
  %v9195 = vrot.slane %v9193, 5
  %v9196 = vsel %vm2382, %v9191, %v9195
  %v9198 = vshrl.u32 %v8849, 16
  %v9200 = vrot.slane %v9198, 4
  %v9201 = vshll.u32 %v8849, 16
  %v9203 = vrot.slane %v9201, 5
  %v9204 = vor.u32 %v9200, %v9203
  %v9205 = vrot.slane %v9204, 4
  %v9207 = vshll.u32 %v8850, 16
  %v9209 = vrot.slane %v9207, 5
  %v9210 = vsel %vm2382, %v9205, %v9209
  %v9211 = vshrl.u32 %v8850, 16
  %v9213 = vrot.slane %v9211, 4
  %v9214 = vor.u32 %v9213, %v9209
  %v9215 = vrot.slane %v9214, 4
  %v9217 = vshll.u32 %v8851, 16
  %v9219 = vrot.slane %v9217, 5
  %v9220 = vsel %vm2382, %v9215, %v9219
  %v9222 = vshrl.u32 %v8852, 16
  %v9224 = vrot.slane %v9222, 4
  %v9225 = vshll.u32 %v8852, 16
  %v9227 = vrot.slane %v9225, 5
  %v9228 = vor.u32 %v9224, %v9227
  %v9229 = vrot.slane %v9228, 4
  %v9231 = vshll.u32 %v8853, 16
  %v9233 = vrot.slane %v9231, 5
  %v9234 = vsel %vm2382, %v9229, %v9233
  %v9235 = vshrl.u32 %v8853, 16
  %v9237 = vrot.slane %v9235, 4
  %v9238 = vor.u32 %v9237, %v9233
  %v9239 = vrot.slane %v9238, 4
  %v9241 = vshll.u32 %v8854, 16
  %v9243 = vrot.slane %v9241, 5
  %v9244 = vsel %vm2382, %v9239, %v9243
  %v9246 = vshrl.u32 %v8855, 16
  %v9248 = vrot.slane %v9246, 4
  %v9249 = vshll.u32 %v8855, 16
  %v9251 = vrot.slane %v9249, 5
  %v9252 = vor.u32 %v9248, %v9251
  %v9253 = vrot.slane %v9252, 4
  %v9255 = vshll.u32 %v8856, 16
  %v9257 = vrot.slane %v9255, 5
  %v9258 = vsel %vm2382, %v9253, %v9257
  %v9259 = vshrl.u32 %v8856, 16
  %v9261 = vrot.slane %v9259, 4
  %v9262 = vor.u32 %v9261, %v9257
  %v9263 = vrot.slane %v9262, 4
  %v9265 = vshll.u32 %v8857, 16
  %v9267 = vrot.slane %v9265, 5
  %v9268 = vsel %vm2382, %v9263, %v9267
  %v9270 = vshrl.u32 %v8858, 16
  %v9272 = vrot.slane %v9270, 4
  %v9273 = vshll.u32 %v8858, 16
  %v9275 = vrot.slane %v9273, 5
  %v9276 = vor.u32 %v9272, %v9275
  %v9277 = vrot.slane %v9276, 4
  %v9279 = vshll.u32 %v8859, 16
  %v9281 = vrot.slane %v9279, 5
  %v9282 = vsel %vm2382, %v9277, %v9281
  %v9283 = vshrl.u32 %v8859, 16
  %v9285 = vrot.slane %v9283, 4
  %v9286 = vor.u32 %v9285, %v9281
  %v9287 = vrot.slane %v9286, 4
  %v9289 = vshll.u32 %v8860, 16
  %v9291 = vrot.slane %v9289, 5
  %v9292 = vsel %vm2382, %v9287, %v9291
  %v9294 = vshrl.u32 %v8861, 16
  %v9296 = vrot.slane %v9294, 4
  %v9297 = vshll.u32 %v8861, 16
  %v9299 = vrot.slane %v9297, 5
  %v9300 = vor.u32 %v9296, %v9299
  %v9301 = vrot.slane %v9300, 4
  %v9303 = vshll.u32 %v8862, 16
  %v9305 = vrot.slane %v9303, 5
  %v9306 = vsel %vm2382, %v9301, %v9305
  %v9307 = vshrl.u32 %v8862, 16
  %v9309 = vrot.slane %v9307, 4
  %v9310 = vor.u32 %v9309, %v9305
  %v9311 = vrot.slane %v9310, 4
  %v9313 = vshll.u32 %v8863, 16
  %v9315 = vrot.slane %v9313, 5
  %v9316 = vsel %vm2382, %v9311, %v9315
  %v9318 = vshrl.u32 %v8864, 16
  %v9320 = vrot.slane %v9318, 4
  %v9321 = vshll.u32 %v8864, 16
  %v9323 = vrot.slane %v9321, 5
  %v9324 = vor.u32 %v9320, %v9323
  %v9325 = vrot.slane %v9324, 4
  %v9327 = vshll.u32 %v8865, 16
  %v9329 = vrot.slane %v9327, 5
  %v9330 = vsel %vm2382, %v9325, %v9329
  %v9331 = vshrl.u32 %v8865, 16
  %v9333 = vrot.slane %v9331, 4
  %v9334 = vor.u32 %v9333, %v9329
  %v9335 = vrot.slane %v9334, 4
  %v9337 = vshll.u32 %v8866, 16
  %v9339 = vrot.slane %v9337, 5
  %v9340 = vsel %vm2382, %v9335, %v9339
  %v9342 = vshrl.u32 %v8867, 16
  %v9344 = vrot.slane %v9342, 4
  %v9345 = vshll.u32 %v8867, 16
  %v9347 = vrot.slane %v9345, 5
  %v9348 = vor.u32 %v9344, %v9347
  %v9349 = vrot.slane %v9348, 4
  %v9351 = vshll.u32 %v8868, 16
  %v9353 = vrot.slane %v9351, 5
  %v9354 = vsel %vm2382, %v9349, %v9353
  %v9355 = vshrl.u32 %v8868, 16
  %v9357 = vrot.slane %v9355, 4
  %v9358 = vor.u32 %v9357, %v9353
  %v9359 = vrot.slane %v9358, 4
  %v9361 = vshll.u32 %v8869, 16
  %v9363 = vrot.slane %v9361, 5
  %v9364 = vsel %vm2382, %v9359, %v9363
  %v9366 = vshrl.u32 %v8870, 16
  %v9368 = vrot.slane %v9366, 4
  %v9369 = vshll.u32 %v8870, 16
  %v9371 = vrot.slane %v9369, 5
  %v9372 = vor.u32 %v9368, %v9371
  %v9373 = vrot.slane %v9372, 4
  %v9375 = vshll.u32 %v8871, 16
  %v9377 = vrot.slane %v9375, 5
  %v9378 = vsel %vm2382, %v9373, %v9377
  %v9379 = vshrl.u32 %v8871, 16
  %v9381 = vrot.slane %v9379, 4
  %v9382 = vor.u32 %v9381, %v9377
  %v9383 = vrot.slane %v9382, 4
  %v9385 = vshll.u32 %v8872, 16
  %v9387 = vrot.slane %v9385, 5
  %v9388 = vsel %vm2382, %v9383, %v9387
  %v9390 = vshrl.u32 %v8873, 16
  %v9392 = vrot.slane %v9390, 4
  %v9393 = vshll.u32 %v8873, 16
  %v9395 = vrot.slane %v9393, 5
  %v9396 = vor.u32 %v9392, %v9395
  %v9397 = vrot.slane %v9396, 4
  %v9399 = vshll.u32 %v8874, 16
  %v9401 = vrot.slane %v9399, 5
  %v9402 = vsel %vm2382, %v9397, %v9401
  %v9403 = vshrl.u32 %v8874, 16
  %v9405 = vrot.slane %v9403, 4
  %v9406 = vor.u32 %v9405, %v9401
  %v9407 = vrot.slane %v9406, 4
  %v9409 = vshll.u32 %v8875, 16
  %v9411 = vrot.slane %v9409, 5
  %v9412 = vsel %vm2382, %v9407, %v9411
  %v9414 = vshrl.u32 %v8876, 16
  %v9416 = vrot.slane %v9414, 4
  %v9417 = vshll.u32 %v8876, 16
  %v9419 = vrot.slane %v9417, 5
  %v9420 = vor.u32 %v9416, %v9419
  %v9421 = vrot.slane %v9420, 4
  %v9423 = vshll.u32 %v8877, 16
  %v9425 = vrot.slane %v9423, 5
  %v9426 = vsel %vm2382, %v9421, %v9425
  %v9427 = vshrl.u32 %v8877, 16
  %v9429 = vrot.slane %v9427, 4
  %v9430 = vor.u32 %v9429, %v9425
  %v9431 = vrot.slane %v9430, 4
  %v9433 = vshll.u32 %v8878, 16
  %v9435 = vrot.slane %v9433, 5
  %v9436 = vsel %vm2382, %v9431, %v9435
  %v9438 = vshrl.u32 %v8879, 16
  %v9440 = vrot.slane %v9438, 4
  %v9441 = vshll.u32 %v8879, 16
  %v9443 = vrot.slane %v9441, 5
  %v9444 = vor.u32 %v9440, %v9443
  %v9445 = vrot.slane %v9444, 4
  %v9447 = vshll.u32 %v8880, 16
  %v9449 = vrot.slane %v9447, 5
  %v9450 = vsel %vm2382, %v9445, %v9449
  %v9451 = vshrl.u32 %v8880, 16
  %v9453 = vrot.slane %v9451, 4
  %v9454 = vor.u32 %v9453, %v9449
  %v9455 = vrot.slane %v9454, 4
  %v9457 = vshll.u32 %v8881, 16
  %v9459 = vrot.slane %v9457, 5
  %v9460 = vsel %vm2382, %v9455, %v9459
  %v9462 = vshrl.u32 %v8882, 16
  %v9464 = vrot.slane %v9462, 4
  %v9465 = vshll.u32 %v8882, 16
  %v9467 = vrot.slane %v9465, 5
  %v9468 = vor.u32 %v9464, %v9467
  %v9469 = vrot.slane %v9468, 4
  %v9471 = vshll.u32 %v8883, 16
  %v9473 = vrot.slane %v9471, 5
  %v9474 = vsel %vm2382, %v9469, %v9473
  %v9475 = vshrl.u32 %v8883, 16
  %v9477 = vrot.slane %v9475, 4
  %v9478 = vor.u32 %v9477, %v9473
  %v9479 = vrot.slane %v9478, 4
  %v9481 = vshll.u32 %v8884, 16
  %v9483 = vrot.slane %v9481, 5
  %v9484 = vsel %vm2382, %v9479, %v9483
  %v9486 = vshrl.u32 %v8885, 16
  %v9488 = vrot.slane %v9486, 4
  %v9489 = vshll.u32 %v8885, 16
  %v9491 = vrot.slane %v9489, 5
  %v9492 = vor.u32 %v9488, %v9491
  %v9493 = vrot.slane %v9492, 4
  %v9495 = vshll.u32 %v8886, 16
  %v9497 = vrot.slane %v9495, 5
  %v9498 = vsel %vm2382, %v9493, %v9497
  %v9499 = vshrl.u32 %v8886, 16
  %v9501 = vrot.slane %v9499, 4
  %v9502 = vor.u32 %v9501, %v9497
  %v9503 = vrot.slane %v9502, 4
  %v9505 = vshll.u32 %v8887, 16
  %v9507 = vrot.slane %v9505, 5
  %v9508 = vsel %vm2382, %v9503, %v9507
  %v9510 = vshrl.u32 %v8888, 16
  %v9512 = vrot.slane %v9510, 4
  %v9513 = vshll.u32 %v8888, 16
  %v9515 = vrot.slane %v9513, 5
  %v9516 = vor.u32 %v9512, %v9515
  %v9517 = vrot.slane %v9516, 4
  %v9519 = vshll.u32 %v8889, 16
  %v9521 = vrot.slane %v9519, 5
  %v9522 = vsel %vm2382, %v9517, %v9521
  %v9523 = vshrl.u32 %v8889, 16
  %v9525 = vrot.slane %v9523, 4
  %v9526 = vor.u32 %v9525, %v9521
  %v9527 = vrot.slane %v9526, 4
  %v9529 = vshll.u32 %v8890, 16
  %v9531 = vrot.slane %v9529, 5
  %v9532 = vsel %vm2382, %v9527, %v9531
  %v9534 = vshrl.u32 %v8891, 16
  %v9536 = vrot.slane %v9534, 4
  %v9537 = vshll.u32 %v8891, 16
  %v9539 = vrot.slane %v9537, 5
  %v9540 = vor.u32 %v9536, %v9539
  %v9541 = vrot.slane %v9540, 4
  %v9543 = vshll.u32 %v8892, 16
  %v9545 = vrot.slane %v9543, 5
  %v9546 = vsel %vm2382, %v9541, %v9545
  %v9547 = vshrl.u32 %v8892, 16
  %v9549 = vrot.slane %v9547, 4
  %v9550 = vor.u32 %v9549, %v9545
  %v9551 = vrot.slane %v9550, 4
  %v9553 = vshll.u32 %v8893, 16
  %v9555 = vrot.slane %v9553, 5
  %v9556 = vsel %vm2382, %v9551, %v9555
  %v9558 = vshrl.u32 %v8894, 16
  %v9560 = vrot.slane %v9558, 4
  %v9561 = vshll.u32 %v8894, 16
  %v9563 = vrot.slane %v9561, 5
  %v9564 = vor.u32 %v9560, %v9563
  %v9565 = vrot.slane %v9564, 4
  %v9567 = vshll.u32 %v8895, 16
  %v9569 = vrot.slane %v9567, 5
  %v9570 = vsel %vm2382, %v9565, %v9569
  %v9571 = vshrl.u32 %v8895, 16
  %v9573 = vrot.slane %v9571, 4
  %v9574 = vor.u32 %v9573, %v9569
  %v9575 = vrot.slane %v9574, 4
  %v9577 = vshll.u32 %v8896, 16
  %v9579 = vrot.slane %v9577, 5
  %v9580 = vsel %vm2382, %v9575, %v9579
  %v9582 = vshrl.u32 %v8897, 16
  %v9584 = vrot.slane %v9582, 4
  %v9585 = vshll.u32 %v8897, 16
  %v9587 = vrot.slane %v9585, 5
  %v9588 = vor.u32 %v9584, %v9587
  %v9589 = vrot.slane %v9588, 4
  %v9591 = vshll.u32 %v8898, 16
  %v9593 = vrot.slane %v9591, 5
  %v9594 = vsel %vm2382, %v9589, %v9593
  %v9595 = vshrl.u32 %v8898, 16
  %v9597 = vrot.slane %v9595, 4
  %v9598 = vor.u32 %v9597, %v9593
  %v9599 = vrot.slane %v9598, 4
  %v9601 = vshll.u32 %v8899, 16
  %v9603 = vrot.slane %v9601, 5
  %v9604 = vsel %vm2382, %v9599, %v9603
  %v9606 = vshrl.u32 %v8900, 16
  %v9608 = vrot.slane %v9606, 4
  %v9609 = vshll.u32 %v8900, 16
  %v9611 = vrot.slane %v9609, 5
  %v9612 = vor.u32 %v9608, %v9611
  %v9613 = vrot.slane %v9612, 4
  %v9615 = vshll.u32 %v8901, 16
  %v9617 = vrot.slane %v9615, 5
  %v9618 = vsel %vm2382, %v9613, %v9617
  %v9619 = vshrl.u32 %v8901, 16
  %v9621 = vrot.slane %v9619, 4
  %v9622 = vor.u32 %v9621, %v9617
  %v9623 = vrot.slane %v9622, 4
  %v9625 = vshll.u32 %v8902, 16
  %v9627 = vrot.slane %v9625, 5
  %v9628 = vsel %vm2382, %v9623, %v9627
  %v9630 = vshrl.u32 %v8903, 16
  %v9632 = vrot.slane %v9630, 4
  %v9633 = vshll.u32 %v8903, 16
  %v9635 = vrot.slane %v9633, 5
  %v9636 = vor.u32 %v9632, %v9635
  %v9637 = vrot.slane %v9636, 4
  %v9639 = vshll.u32 %v8904, 16
  %v9641 = vrot.slane %v9639, 5
  %v9642 = vsel %vm2382, %v9637, %v9641
  %v9643 = vshrl.u32 %v8904, 16
  %v9645 = vrot.slane %v9643, 4
  %v9646 = vor.u32 %v9645, %v9641
  %v9647 = vrot.slane %v9646, 4
  %v9649 = vshll.u32 %v8905, 16
  %v9651 = vrot.slane %v9649, 5
  %v9652 = vsel %vm2382, %v9647, %v9651
  %v9654 = vshrl.u32 %v8906, 16
  %v9656 = vrot.slane %v9654, 4
  %v9657 = vshll.u32 %v8906, 16
  %v9659 = vrot.slane %v9657, 5
  %v9660 = vor.u32 %v9656, %v9659
  %v9661 = vrot.slane %v9660, 4
  %v9663 = vshll.u32 %v8907, 16
  %v9665 = vrot.slane %v9663, 5
  %v9666 = vsel %vm2382, %v9661, %v9665
  %v9667 = vshrl.u32 %v8907, 16
  %v9669 = vrot.slane %v9667, 4
  %v9670 = vor.u32 %v9669, %v9665
  %v9671 = vrot.slane %v9670, 4
  %v9673 = vshll.u32 %v8908, 16
  %v9675 = vrot.slane %v9673, 5
  %v9676 = vsel %vm2382, %v9671, %v9675
  %s9677 = scalar_lea.vmem %s4, 112
  %v9678 = vld [vmem:[%s9677] sm:$0xf]
  %v9679 = vld [vmem:[%s9677 + $0x4] sm:$0xf]
  %v9680 = vld [vmem:[%s9677 + $0x8] sm:$0xf]
  %v9681 = vld [vmem:[%s9677 + $0xc] sm:$0xf]
  %v9682 = vunpack.c.l.b16 %v8922
  %v9683 = vunpack.c.l.b16 %v8932
  %v9684 = vunpack.c.l.b16 %v8946
  %v9685 = vunpack.c.l.b16 %v8956
  %v9686 = vunpack.c.l.b16 %v8970
  %v9687 = vunpack.c.l.b16 %v8980
  %v9688 = vunpack.c.l.b16 %v8994
  %v9689 = vunpack.c.l.b16 %v9004
  %v9690 = vunpack.c.l.b16 %v9018
  %v9691 = vunpack.c.l.b16 %v9028
  %v9692 = vunpack.c.l.b16 %v9042
  %v9693 = vunpack.c.l.b16 %v9052
  %v9694 = vunpack.c.l.b16 %v9066
  %v9695 = vunpack.c.l.b16 %v9076
  %v9696 = vunpack.c.l.b16 %v9090
  %v9697 = vunpack.c.l.b16 %v9100
  %v9698 = vunpack.c.l.b16 %v9114
  %v9699 = vunpack.c.l.b16 %v9124
  %v9700 = vunpack.c.l.b16 %v9138
  %v9701 = vunpack.c.l.b16 %v9148
  %v9702 = vunpack.c.l.b16 %v9162
  %v9703 = vunpack.c.l.b16 %v9172
  %v9704 = vunpack.c.l.b16 %v9186
  %v9705 = vunpack.c.l.b16 %v9196
  %v9706 = vunpack.c.l.b16 %v9210
  %v9707 = vunpack.c.l.b16 %v9220
  %v9708 = vunpack.c.l.b16 %v9234
  %v9709 = vunpack.c.l.b16 %v9244
  %v9710 = vunpack.c.l.b16 %v9258
  %v9711 = vunpack.c.l.b16 %v9268
  %v9712 = vunpack.c.l.b16 %v9282
  %v9713 = vunpack.c.l.b16 %v9292
  %v9714 = vunpack.c.l.b16 %v9306
  %v9715 = vunpack.c.l.b16 %v9316
  %v9716 = vunpack.c.l.b16 %v9330
  %v9717 = vunpack.c.l.b16 %v9340
  %v9718 = vunpack.c.l.b16 %v9354
  %v9719 = vunpack.c.l.b16 %v9364
  %v9720 = vunpack.c.l.b16 %v9378
  %v9721 = vunpack.c.l.b16 %v9388
  %v9722 = vunpack.c.l.b16 %v9402
  %v9723 = vunpack.c.l.b16 %v9412
  %v9724 = vunpack.c.l.b16 %v9426
  %v9725 = vunpack.c.l.b16 %v9436
  %v9726 = vunpack.c.l.b16 %v9450
  %v9727 = vunpack.c.l.b16 %v9460
  %v9728 = vunpack.c.l.b16 %v9474
  %v9729 = vunpack.c.l.b16 %v9484
  %v9730 = vunpack.c.l.b16 %v9498
  %v9731 = vunpack.c.l.b16 %v9508
  %v9732 = vunpack.c.l.b16 %v9522
  %v9733 = vunpack.c.l.b16 %v9532
  %v9734 = vunpack.c.l.b16 %v9546
  %v9735 = vunpack.c.l.b16 %v9556
  %v9736 = vunpack.c.l.b16 %v9570
  %v9737 = vunpack.c.l.b16 %v9580
  %v9738 = vunpack.c.l.b16 %v9594
  %v9739 = vunpack.c.l.b16 %v9604
  %v9740 = vunpack.c.l.b16 %v9618
  %v9741 = vunpack.c.l.b16 %v9628
  %v9742 = vunpack.c.l.b16 %v9642
  %v9743 = vunpack.c.l.b16 %v9652
  %v9744 = vunpack.c.l.b16 %v9666
  %v9745 = vunpack.c.l.b16 %v9676
  %v9746 = vpack.c.b16 %v9683, %v9682
  %v9747 = vpack.c.b16 %v9685, %v9684
  %v9748 = vpack.c.b16 %v9687, %v9686
  %v9749 = vpack.c.b16 %v9689, %v9688
  %v9750 = vpack.c.b16 %v9691, %v9690
  %v9751 = vpack.c.b16 %v9693, %v9692
  %v9752 = vpack.c.b16 %v9695, %v9694
  %v9753 = vpack.c.b16 %v9697, %v9696
  %v9754 = vpack.c.b16 %v9699, %v9698
  %v9755 = vpack.c.b16 %v9701, %v9700
  %v9756 = vpack.c.b16 %v9703, %v9702
  %v9757 = vpack.c.b16 %v9705, %v9704
  %v9758 = vpack.c.b16 %v9707, %v9706
  %v9759 = vpack.c.b16 %v9709, %v9708
  %v9760 = vpack.c.b16 %v9711, %v9710
  %v9761 = vpack.c.b16 %v9713, %v9712
  %v9762 = vpack.c.b16 %v9715, %v9714
  %v9763 = vpack.c.b16 %v9717, %v9716
  %v9764 = vpack.c.b16 %v9719, %v9718
  %v9765 = vpack.c.b16 %v9721, %v9720
  %v9766 = vpack.c.b16 %v9723, %v9722
  %v9767 = vpack.c.b16 %v9725, %v9724
  %v9768 = vpack.c.b16 %v9727, %v9726
  %v9769 = vpack.c.b16 %v9729, %v9728
  %v9770 = vpack.c.b16 %v9731, %v9730
  %v9771 = vpack.c.b16 %v9733, %v9732
  %v9772 = vpack.c.b16 %v9735, %v9734
  %v9773 = vpack.c.b16 %v9737, %v9736
  %v9774 = vpack.c.b16 %v9739, %v9738
  %v9775 = vpack.c.b16 %v9741, %v9740
  %v9776 = vpack.c.b16 %v9743, %v9742
  %v9777 = vpack.c.b16 %v9745, %v9744
  %v9782 = vunpack.c.l.b16 %v9678
  %v9783 = vunpack.c.l.b16 %v9679
  %v9784 = vunpack.c.l.b16 %v9680
  %v9785 = vunpack.c.l.b16 %v9681
  %v9786 = vpack.c.b16 %v9783, %v9782
  %v9787 = vpack.c.b16 %v9785, %v9784
  %v9791 = vsel %vm3264, %v9746, 0
  %v9794 = vsel %vm3264, %v9747, 0
  %v9797 = vsel %vm3264, %v9748, 0
  %v9800 = vsel %vm3264, %v9749, 0
  %v9803 = vsel %vm3264, %v9750, 0
  %v9806 = vsel %vm3264, %v9751, 0
  %v9809 = vsel %vm3264, %v9752, 0
  %v9812 = vsel %vm3264, %v9753, 0
  %v9815 = vsel %vm3264, %v9754, 0
  %v9818 = vsel %vm3264, %v9755, 0
  %v9821 = vsel %vm3264, %v9756, 0
  %v9824 = vsel %vm3264, %v9757, 0
  %v9827 = vsel %vm3264, %v9758, 0
  %v9830 = vsel %vm3264, %v9759, 0
  %v9833 = vsel %vm3264, %v9760, 0
  %v9836 = vsel %vm3264, %v9761, 0
  %v9839 = vsel %vm3264, %v9762, 0
  %v9842 = vsel %vm3264, %v9763, 0
  %v9845 = vsel %vm3264, %v9764, 0
  %v9848 = vsel %vm3264, %v9765, 0
  %v9851 = vsel %vm3264, %v9766, 0
  %v9854 = vsel %vm3264, %v9767, 0
  %v9857 = vsel %vm3264, %v9768, 0
  %v9860 = vsel %vm3264, %v9769, 0
  %v9863 = vsel %vm3264, %v9770, 0
  %v9866 = vsel %vm3264, %v9771, 0
  %v9869 = vsel %vm3264, %v9772, 0
  %v9872 = vsel %vm3264, %v9773, 0
  %v9875 = vsel %vm3264, %v9774, 0
  %v9878 = vsel %vm3264, %v9775, 0
  %v9881 = vsel %vm3264, %v9776, 0
  %v9884 = vsel %vm3264, %v9777, 0
  %9886 = vmatprep.subr.bf16.mxu0 0
  %9887 = vmatpush1.bf16.msra.mxu0 %v9786
  %9888 = vmatprep.subr.bf16.mxu0 0
  %9889 = vmatpush1.bf16.msra.mxu0 %v9787
  %9890 = vmatprep.subr.bf16.mxu0 0
  %9891 = vmatpush1.bf16.msra.mxu0 0
  %9892 = vmatprep.subr.bf16.mxu0 0
  %9893 = vmatpush1.bf16.msra.mxu0 0
  %9894 = vmatprep.subr.bf16.mxu0 0
  %9895 = vmatpush1.bf16.msra.mxu0 0
  %9896 = vmatprep.subr.bf16.mxu0 0
  %9897 = vmatpush1.bf16.msra.mxu0 0
  %9898 = vmatprep.subr.bf16.mxu0 0
  %9899 = vmatpush1.bf16.msra.mxu0 0
  %9900 = vmatprep.subr.bf16.mxu0 0
  %9901 = vmatpush1.bf16.msra.mxu0 0
  %9902 = vmatprep.subr.bf16.mxu0 0
  %9903 = vmatpush1.bf16.msra.mxu0 0
  %9904 = vmatprep.subr.bf16.mxu0 0
  %9905 = vmatpush1.bf16.msra.mxu0 0
  %9906 = vmatprep.subr.bf16.mxu0 0
  %9907 = vmatpush1.bf16.msra.mxu0 0
  %9908 = vmatprep.subr.bf16.mxu0 0
  %9909 = vmatpush1.bf16.msra.mxu0 0
  %9910 = vmatprep.subr.bf16.mxu0 0
  %9911 = vmatpush1.bf16.msra.mxu0 0
  %9912 = vmatprep.subr.bf16.mxu0 0
  %9913 = vmatpush1.bf16.msra.mxu0 0
  %9914 = vmatprep.subr.bf16.mxu0 0
  %9915 = vmatpush1.bf16.msra.mxu0 0
  %9916 = vmatprep.subr.bf16.mxu0 0
  %9917 = vmatpush1.bf16.msra.mxu0 0
  %9918 = vmatprep.mubr.bf16.mxu0 0
  %9919 = vmatmul.mubr.bf16.gmra.mrb[0].mxu0 %v9791
  %v9920 = vpop.f32.mrb[0].mxu0
  %v9921 = vadd.f32 0.0, %v9920
  %v9922 = vpop.f32.mrb[0].mxu0
  %v9923 = vpop.f32.mrb[0].mxu0
  %v9924 = vadd.f32 0.0, %v9923
  %v9925 = vpop.f32.mrb[0].mxu0
  %9926 = vmatprep.mubr.bf16.mxu0 0
  %9927 = vmatmul.mubr.bf16.gmra.mrb[0].mxu0 %v9794
  %v9928 = vpop.f32.mrb[0].mxu0
  %v9929 = vadd.f32 0.0, %v9928
  %v9930 = vpop.f32.mrb[0].mxu0
  %v9931 = vpop.f32.mrb[0].mxu0
  %v9932 = vadd.f32 0.0, %v9931
  %v9933 = vpop.f32.mrb[0].mxu0
  %9934 = vmatprep.mubr.bf16.mxu0 0
  %9935 = vmatmul.mubr.bf16.gmra.mrb[0].mxu0 %v9797
  %v9936 = vpop.f32.mrb[0].mxu0
  %v9937 = vadd.f32 0.0, %v9936
  %v9938 = vpop.f32.mrb[0].mxu0
  %v9939 = vpop.f32.mrb[0].mxu0
  %v9940 = vadd.f32 0.0, %v9939
  %v9941 = vpop.f32.mrb[0].mxu0
  %9942 = vmatprep.mubr.bf16.mxu0 0
  %9943 = vmatmul.mubr.bf16.gmra.mrb[0].mxu0 %v9800
  %v9944 = vpop.f32.mrb[0].mxu0
  %v9945 = vadd.f32 0.0, %v9944
  %v9946 = vpop.f32.mrb[0].mxu0
  %v9947 = vpop.f32.mrb[0].mxu0
  %v9948 = vadd.f32 0.0, %v9947
  %v9949 = vpop.f32.mrb[0].mxu0
  %9950 = vmatprep.mubr.bf16.mxu0 0
  %9951 = vmatmul.mubr.bf16.gmra.mrb[0].mxu0 %v9803
  %v9952 = vpop.f32.mrb[0].mxu0
  %v9953 = vadd.f32 0.0, %v9952
  %v9954 = vpop.f32.mrb[0].mxu0
  %v9955 = vpop.f32.mrb[0].mxu0
  %v9956 = vadd.f32 0.0, %v9955
  %v9957 = vpop.f32.mrb[0].mxu0
  %9958 = vmatprep.mubr.bf16.mxu0 0
  %9959 = vmatmul.mubr.bf16.gmra.mrb[0].mxu0 %v9806
  %v9960 = vpop.f32.mrb[0].mxu0
  %v9961 = vadd.f32 0.0, %v9960
  %v9962 = vpop.f32.mrb[0].mxu0
  %v9963 = vpop.f32.mrb[0].mxu0
  %v9964 = vadd.f32 0.0, %v9963
  %v9965 = vpop.f32.mrb[0].mxu0
  %9966 = vmatprep.mubr.bf16.mxu0 0
  %9967 = vmatmul.mubr.bf16.gmra.mrb[0].mxu0 %v9809
  %v9968 = vpop.f32.mrb[0].mxu0
  %v9969 = vadd.f32 0.0, %v9968
  %v9970 = vpop.f32.mrb[0].mxu0
  %v9971 = vpop.f32.mrb[0].mxu0
  %v9972 = vadd.f32 0.0, %v9971
  %v9973 = vpop.f32.mrb[0].mxu0
  %9974 = vmatprep.mubr.bf16.mxu0 0
  %9975 = vmatmul.mubr.bf16.gmra.mrb[0].mxu0 %v9812
  %v9976 = vpop.f32.mrb[0].mxu0
  %v9977 = vadd.f32 0.0, %v9976
  %v9978 = vpop.f32.mrb[0].mxu0
  %v9979 = vpop.f32.mrb[0].mxu0
  %v9980 = vadd.f32 0.0, %v9979
  %v9981 = vpop.f32.mrb[0].mxu0
  %9982 = vmatprep.mubr.bf16.mxu0 0
  %9983 = vmatmul.mubr.bf16.gmra.mrb[0].mxu0 %v9815
  %v9984 = vpop.f32.mrb[0].mxu0
  %v9985 = vadd.f32 0.0, %v9984
  %v9986 = vpop.f32.mrb[0].mxu0
  %v9987 = vpop.f32.mrb[0].mxu0
  %v9988 = vadd.f32 0.0, %v9987
  %v9989 = vpop.f32.mrb[0].mxu0
  %9990 = vmatprep.mubr.bf16.mxu0 0
  %9991 = vmatmul.mubr.bf16.gmra.mrb[0].mxu0 %v9818
  %v9992 = vpop.f32.mrb[0].mxu0
  %v9993 = vadd.f32 0.0, %v9992
  %v9994 = vpop.f32.mrb[0].mxu0
  %v9995 = vpop.f32.mrb[0].mxu0
  %v9996 = vadd.f32 0.0, %v9995
  %v9997 = vpop.f32.mrb[0].mxu0
  %9998 = vmatprep.mubr.bf16.mxu0 0
  %9999 = vmatmul.mubr.bf16.gmra.mrb[0].mxu0 %v9821
  %v10000 = vpop.f32.mrb[0].mxu0
  %v10001 = vadd.f32 0.0, %v10000
  %v10002 = vpop.f32.mrb[0].mxu0
  %v10003 = vpop.f32.mrb[0].mxu0
  %v10004 = vadd.f32 0.0, %v10003
  %v10005 = vpop.f32.mrb[0].mxu0
  %10006 = vmatprep.mubr.bf16.mxu0 0
  %10007 = vmatmul.mubr.bf16.gmra.mrb[0].mxu0 %v9824
  %v10008 = vpop.f32.mrb[0].mxu0
  %v10009 = vadd.f32 0.0, %v10008
  %v10010 = vpop.f32.mrb[0].mxu0
  %v10011 = vpop.f32.mrb[0].mxu0
  %v10012 = vadd.f32 0.0, %v10011
  %v10013 = vpop.f32.mrb[0].mxu0
  %10014 = vmatprep.mubr.bf16.mxu0 0
  %10015 = vmatmul.mubr.bf16.gmra.mrb[0].mxu0 %v9827
  %v10016 = vpop.f32.mrb[0].mxu0
  %v10017 = vadd.f32 0.0, %v10016
  %v10018 = vpop.f32.mrb[0].mxu0
  %v10019 = vpop.f32.mrb[0].mxu0
  %v10020 = vadd.f32 0.0, %v10019
  %v10021 = vpop.f32.mrb[0].mxu0
  %10022 = vmatprep.mubr.bf16.mxu0 0
  %10023 = vmatmul.mubr.bf16.gmra.mrb[0].mxu0 %v9830
  %v10024 = vpop.f32.mrb[0].mxu0
  %v10025 = vadd.f32 0.0, %v10024
  %v10026 = vpop.f32.mrb[0].mxu0
  %v10027 = vpop.f32.mrb[0].mxu0
  %v10028 = vadd.f32 0.0, %v10027
  %v10029 = vpop.f32.mrb[0].mxu0
  %10030 = vmatprep.mubr.bf16.mxu0 0
  %10031 = vmatmul.mubr.bf16.gmra.mrb[0].mxu0 %v9833
  %v10032 = vpop.f32.mrb[0].mxu0
  %v10033 = vadd.f32 0.0, %v10032
  %v10034 = vpop.f32.mrb[0].mxu0
  %v10035 = vpop.f32.mrb[0].mxu0
  %v10036 = vadd.f32 0.0, %v10035
  %v10037 = vpop.f32.mrb[0].mxu0
  %10038 = vmatprep.mubr.bf16.mxu0 0
  %10039 = vmatmul.mubr.bf16.gmra.mrb[0].mxu0 %v9836
  %v10040 = vpop.f32.mrb[0].mxu0
  %v10041 = vadd.f32 0.0, %v10040
  %v10042 = vpop.f32.mrb[0].mxu0
  %v10043 = vpop.f32.mrb[0].mxu0
  %v10044 = vadd.f32 0.0, %v10043
  %v10045 = vpop.f32.mrb[0].mxu0
  %10046 = vmatprep.mubr.bf16.mxu0 0
  %10047 = vmatmul.mubr.bf16.gmra.mrb[0].mxu0 %v9839
  %v10048 = vpop.f32.mrb[0].mxu0
  %v10049 = vadd.f32 0.0, %v10048
  %v10050 = vpop.f32.mrb[0].mxu0
  %v10051 = vpop.f32.mrb[0].mxu0
  %v10052 = vadd.f32 0.0, %v10051
  %v10053 = vpop.f32.mrb[0].mxu0
  %10054 = vmatprep.mubr.bf16.mxu0 0
  %10055 = vmatmul.mubr.bf16.gmra.mrb[0].mxu0 %v9842
  %v10056 = vpop.f32.mrb[0].mxu0
  %v10057 = vadd.f32 0.0, %v10056
  %v10058 = vpop.f32.mrb[0].mxu0
  %v10059 = vpop.f32.mrb[0].mxu0
  %v10060 = vadd.f32 0.0, %v10059
  %v10061 = vpop.f32.mrb[0].mxu0
  %10062 = vmatprep.mubr.bf16.mxu0 0
  %10063 = vmatmul.mubr.bf16.gmra.mrb[0].mxu0 %v9845
  %v10064 = vpop.f32.mrb[0].mxu0
  %v10065 = vadd.f32 0.0, %v10064
  %v10066 = vpop.f32.mrb[0].mxu0
  %v10067 = vpop.f32.mrb[0].mxu0
  %v10068 = vadd.f32 0.0, %v10067
  %v10069 = vpop.f32.mrb[0].mxu0
  %10070 = vmatprep.mubr.bf16.mxu0 0
  %10071 = vmatmul.mubr.bf16.gmra.mrb[0].mxu0 %v9848
  %v10072 = vpop.f32.mrb[0].mxu0
  %v10073 = vadd.f32 0.0, %v10072
  %v10074 = vpop.f32.mrb[0].mxu0
  %v10075 = vpop.f32.mrb[0].mxu0
  %v10076 = vadd.f32 0.0, %v10075
  %v10077 = vpop.f32.mrb[0].mxu0
  %10078 = vmatprep.mubr.bf16.mxu0 0
  %10079 = vmatmul.mubr.bf16.gmra.mrb[0].mxu0 %v9851
  %v10080 = vpop.f32.mrb[0].mxu0
  %v10081 = vadd.f32 0.0, %v10080
  %v10082 = vpop.f32.mrb[0].mxu0
  %v10083 = vpop.f32.mrb[0].mxu0
  %v10084 = vadd.f32 0.0, %v10083
  %v10085 = vpop.f32.mrb[0].mxu0
  %10086 = vmatprep.mubr.bf16.mxu0 0
  %10087 = vmatmul.mubr.bf16.gmra.mrb[0].mxu0 %v9854
  %v10088 = vpop.f32.mrb[0].mxu0
  %v10089 = vadd.f32 0.0, %v10088
  %v10090 = vpop.f32.mrb[0].mxu0
  %v10091 = vpop.f32.mrb[0].mxu0
  %v10092 = vadd.f32 0.0, %v10091
  %v10093 = vpop.f32.mrb[0].mxu0
  %10094 = vmatprep.mubr.bf16.mxu0 0
  %10095 = vmatmul.mubr.bf16.gmra.mrb[0].mxu0 %v9857
  %v10096 = vpop.f32.mrb[0].mxu0
  %v10097 = vadd.f32 0.0, %v10096
  %v10098 = vpop.f32.mrb[0].mxu0
  %v10099 = vpop.f32.mrb[0].mxu0
  %v10100 = vadd.f32 0.0, %v10099
  %v10101 = vpop.f32.mrb[0].mxu0
  %10102 = vmatprep.mubr.bf16.mxu0 0
  %10103 = vmatmul.mubr.bf16.gmra.mrb[0].mxu0 %v9860
  %v10104 = vpop.f32.mrb[0].mxu0
  %v10105 = vadd.f32 0.0, %v10104
  %v10106 = vpop.f32.mrb[0].mxu0
  %v10107 = vpop.f32.mrb[0].mxu0
  %v10108 = vadd.f32 0.0, %v10107
  %v10109 = vpop.f32.mrb[0].mxu0
  %10110 = vmatprep.mubr.bf16.mxu0 0
  %10111 = vmatmul.mubr.bf16.gmra.mrb[0].mxu0 %v9863
  %v10112 = vpop.f32.mrb[0].mxu0
  %v10113 = vadd.f32 0.0, %v10112
  %v10114 = vpop.f32.mrb[0].mxu0
  %v10115 = vpop.f32.mrb[0].mxu0
  %v10116 = vadd.f32 0.0, %v10115
  %v10117 = vpop.f32.mrb[0].mxu0
  %10118 = vmatprep.mubr.bf16.mxu0 0
  %10119 = vmatmul.mubr.bf16.gmra.mrb[0].mxu0 %v9866
  %v10120 = vpop.f32.mrb[0].mxu0
  %v10121 = vadd.f32 0.0, %v10120
  %v10122 = vpop.f32.mrb[0].mxu0
  %v10123 = vpop.f32.mrb[0].mxu0
  %v10124 = vadd.f32 0.0, %v10123
  %v10125 = vpop.f32.mrb[0].mxu0
  %10126 = vmatprep.mubr.bf16.mxu0 0
  %10127 = vmatmul.mubr.bf16.gmra.mrb[0].mxu0 %v9869
  %v10128 = vpop.f32.mrb[0].mxu0
  %v10129 = vadd.f32 0.0, %v10128
  %v10130 = vpop.f32.mrb[0].mxu0
  %v10131 = vpop.f32.mrb[0].mxu0
  %v10132 = vadd.f32 0.0, %v10131
  %v10133 = vpop.f32.mrb[0].mxu0
  %10134 = vmatprep.mubr.bf16.mxu0 0
  %10135 = vmatmul.mubr.bf16.gmra.mrb[0].mxu0 %v9872
  %v10136 = vpop.f32.mrb[0].mxu0
  %v10137 = vadd.f32 0.0, %v10136
  %v10138 = vpop.f32.mrb[0].mxu0
  %v10139 = vpop.f32.mrb[0].mxu0
  %v10140 = vadd.f32 0.0, %v10139
  %v10141 = vpop.f32.mrb[0].mxu0
  %10142 = vmatprep.mubr.bf16.mxu0 0
  %10143 = vmatmul.mubr.bf16.gmra.mrb[0].mxu0 %v9875
  %v10144 = vpop.f32.mrb[0].mxu0
  %v10145 = vadd.f32 0.0, %v10144
  %v10146 = vpop.f32.mrb[0].mxu0
  %v10147 = vpop.f32.mrb[0].mxu0
  %v10148 = vadd.f32 0.0, %v10147
  %v10149 = vpop.f32.mrb[0].mxu0
  %10150 = vmatprep.mubr.bf16.mxu0 0
  %10151 = vmatmul.mubr.bf16.gmra.mrb[0].mxu0 %v9878
  %v10152 = vpop.f32.mrb[0].mxu0
  %v10153 = vadd.f32 0.0, %v10152
  %v10154 = vpop.f32.mrb[0].mxu0
  %v10155 = vpop.f32.mrb[0].mxu0
  %v10156 = vadd.f32 0.0, %v10155
  %v10157 = vpop.f32.mrb[0].mxu0
  %10158 = vmatprep.mubr.bf16.mxu0 0
  %10159 = vmatmul.mubr.bf16.gmra.mrb[0].mxu0 %v9881
  %v10160 = vpop.f32.mrb[0].mxu0
  %v10161 = vadd.f32 0.0, %v10160
  %v10162 = vpop.f32.mrb[0].mxu0
  %v10163 = vpop.f32.mrb[0].mxu0
  %v10164 = vadd.f32 0.0, %v10163
  %v10165 = vpop.f32.mrb[0].mxu0
  %10166 = vmatprep.mubr.bf16.mxu0 0
  %10167 = vmatmul.mubr.bf16.gmra.mrb[0].mxu0 %v9884
  %v10168 = vpop.f32.mrb[0].mxu0
  %v10169 = vadd.f32 0.0, %v10168
  %v10170 = vpop.f32.mrb[0].mxu0
  %v10171 = vpop.f32.mrb[0].mxu0
  %v10172 = vadd.f32 0.0, %v10171
  %v10173 = vpop.f32.mrb[0].mxu0
  %10174 = vdwg.mxu0
  %v10175 = vadd.f32 %v8749, %v9921
  %v10176 = vadd.f32 %v8750, %v9924
  %v10177 = vadd.f32 %v8751, %v9929
  %v10178 = vadd.f32 %v8752, %v9932
  %v10179 = vadd.f32 %v8753, %v9937
  %v10180 = vadd.f32 %v8754, %v9940
  %v10181 = vadd.f32 %v8755, %v9945
  %v10182 = vadd.f32 %v8756, %v9948
  %v10183 = vadd.f32 %v8757, %v9953
  %v10184 = vadd.f32 %v8758, %v9956
  %v10185 = vadd.f32 %v8759, %v9961
  %v10186 = vadd.f32 %v8760, %v9964
  %v10187 = vadd.f32 %v8761, %v9969
  %v10188 = vadd.f32 %v8762, %v9972
  %v10189 = vadd.f32 %v8763, %v9977
  %v10190 = vadd.f32 %v8764, %v9980
  %v10191 = vadd.f32 %v8765, %v9985
  %v10192 = vadd.f32 %v8766, %v9988
  %v10193 = vadd.f32 %v8767, %v9993
  %v10194 = vadd.f32 %v8768, %v9996
  %v10195 = vadd.f32 %v8769, %v10001
  %v10196 = vadd.f32 %v8770, %v10004
  %v10197 = vadd.f32 %v8771, %v10009
  %v10198 = vadd.f32 %v8772, %v10012
  %v10199 = vadd.f32 %v8773, %v10017
  %v10200 = vadd.f32 %v8774, %v10020
  %v10201 = vadd.f32 %v8775, %v10025
  %v10202 = vadd.f32 %v8776, %v10028
  %v10203 = vadd.f32 %v8777, %v10033
  %v10204 = vadd.f32 %v8778, %v10036
  %v10205 = vadd.f32 %v8779, %v10041
  %v10206 = vadd.f32 %v8780, %v10044
  %v10207 = vadd.f32 %v8781, %v10049
  %v10208 = vadd.f32 %v8782, %v10052
  %v10209 = vadd.f32 %v8783, %v10057
  %v10210 = vadd.f32 %v8784, %v10060
  %v10211 = vadd.f32 %v8785, %v10065
  %v10212 = vadd.f32 %v8786, %v10068
  %v10213 = vadd.f32 %v8787, %v10073
  %v10214 = vadd.f32 %v8788, %v10076
  %v10215 = vadd.f32 %v8789, %v10081
  %v10216 = vadd.f32 %v8790, %v10084
  %v10217 = vadd.f32 %v8791, %v10089
  %v10218 = vadd.f32 %v8792, %v10092
  %v10219 = vadd.f32 %v8793, %v10097
  %v10220 = vadd.f32 %v8794, %v10100
  %v10221 = vadd.f32 %v8795, %v10105
  %v10222 = vadd.f32 %v8796, %v10108
  %v10223 = vadd.f32 %v8797, %v10113
  %v10224 = vadd.f32 %v8798, %v10116
  %v10225 = vadd.f32 %v8799, %v10121
  %v10226 = vadd.f32 %v8800, %v10124
  %v10227 = vadd.f32 %v8801, %v10129
  %v10228 = vadd.f32 %v8802, %v10132
  %v10229 = vadd.f32 %v8803, %v10137
  %v10230 = vadd.f32 %v8804, %v10140
  %v10231 = vadd.f32 %v8805, %v10145
  %v10232 = vadd.f32 %v8806, %v10148
  %v10233 = vadd.f32 %v8807, %v10153
  %v10234 = vadd.f32 %v8808, %v10156
  %v10235 = vadd.f32 %v8809, %v10161
  %v10236 = vadd.f32 %v8810, %v10164
  %v10237 = vadd.f32 %v8811, %v10169
  %v10238 = vadd.f32 %v8812, %v10172
  %v10239 = vld [vmem:[%s8122] sm:$0xe]
  %v10240 = vld [vmem:[%s8122 + $0xc] sm:$0xe]
  %v10241 = vld [vmem:[%s8122 + $0x18] sm:$0xe]
  %v10242 = vld [vmem:[%s8122 + $0x24] sm:$0xe]
  %v10243 = vld [vmem:[%s8122 + $0x30] sm:$0xe]
  %v10244 = vld [vmem:[%s8122 + $0x3c] sm:$0xe]
  %v10245 = vld [vmem:[%s8122 + $0x48] sm:$0xe]
  %v10246 = vld [vmem:[%s8122 + $0x54] sm:$0xe]
  %v10247 = vld [vmem:[%s8122 + $0x60] sm:$0xe]
  %v10248 = vld [vmem:[%s8122 + $0x6c] sm:$0xe]
  %v10249 = vld [vmem:[%s8122 + $0x78] sm:$0xe]
  %v10250 = vld [vmem:[%s8122 + $0x84] sm:$0xe]
  %v10251 = vld [vmem:[%s8122 + $0x90] sm:$0xe]
  %v10252 = vld [vmem:[%s8122 + $0x9c] sm:$0xe]
  %v10253 = vld [vmem:[%s8122 + $0xa8] sm:$0xe]
  %v10254 = vld [vmem:[%s8122 + $0xb4] sm:$0xe]
  %v10255 = vld [vmem:[%s8122 + $0xd8] sm:$0xe]
  %v10256 = vld [vmem:[%s8122 + $0xe4] sm:$0xe]
  %v10257 = vld [vmem:[%s8122 + $0xf0] sm:$0xe]
  %v10258 = vld [vmem:[%s8122 + $0xfc] sm:$0xe]
  %v10259 = vld [vmem:[%s8122 + $0x108] sm:$0xe]
  %v10260 = vld [vmem:[%s8122 + $0x114] sm:$0xe]
  %v10261 = vld [vmem:[%s8122 + $0x120] sm:$0xe]
  %v10262 = vld [vmem:[%s8122 + $0x12c] sm:$0xe]
  %v10263 = vld [vmem:[%s8122 + $0x138] sm:$0xe]
  %v10264 = vld [vmem:[%s8122 + $0x144] sm:$0xe]
  %v10265 = vld [vmem:[%s8122 + $0x150] sm:$0xe]
  %v10266 = vld [vmem:[%s8122 + $0x15c] sm:$0xe]
  %v10267 = vld [vmem:[%s8122 + $0x168] sm:$0xe]
  %v10268 = vld [vmem:[%s8122 + $0x174] sm:$0xe]
  %v10269 = vld [vmem:[%s8122 + $0x180] sm:$0xe]
  %v10270 = vld [vmem:[%s8122 + $0x18c] sm:$0xe]
  %v10367 = vrot.slane %v10239, 5
  %v10368 = vrot.slane %v10367, 4
  %v10369 = vrot.slane %v8814, 5
  %v10370 = vsel %vm4305, %v10368, %v10369
  %v10371 = vrot.slane %v10369, 4
  %v10372 = vrot.slane %v8815, 5
  %v10373 = vsel %vm4305, %v10371, %v10372
  %v10374 = vrot.slane %v10240, 5
  %v10375 = vrot.slane %v10374, 4
  %v10376 = vrot.slane %v8817, 5
  %v10377 = vsel %vm4305, %v10375, %v10376
  %v10378 = vrot.slane %v10376, 4
  %v10379 = vrot.slane %v8818, 5
  %v10380 = vsel %vm4305, %v10378, %v10379
  %v10381 = vrot.slane %v10241, 5
  %v10382 = vrot.slane %v10381, 4
  %v10383 = vrot.slane %v8820, 5
  %v10384 = vsel %vm4305, %v10382, %v10383
  %v10385 = vrot.slane %v10383, 4
  %v10386 = vrot.slane %v8821, 5
  %v10387 = vsel %vm4305, %v10385, %v10386
  %v10388 = vrot.slane %v10242, 5
  %v10389 = vrot.slane %v10388, 4
  %v10390 = vrot.slane %v8823, 5
  %v10391 = vsel %vm4305, %v10389, %v10390
  %v10392 = vrot.slane %v10390, 4
  %v10393 = vrot.slane %v8824, 5
  %v10394 = vsel %vm4305, %v10392, %v10393
  %v10395 = vrot.slane %v10243, 5
  %v10396 = vrot.slane %v10395, 4
  %v10397 = vrot.slane %v8826, 5
  %v10398 = vsel %vm4305, %v10396, %v10397
  %v10399 = vrot.slane %v10397, 4
  %v10400 = vrot.slane %v8827, 5
  %v10401 = vsel %vm4305, %v10399, %v10400
  %v10402 = vrot.slane %v10244, 5
  %v10403 = vrot.slane %v10402, 4
  %v10404 = vrot.slane %v8829, 5
  %v10405 = vsel %vm4305, %v10403, %v10404
  %v10406 = vrot.slane %v10404, 4
  %v10407 = vrot.slane %v8830, 5
  %v10408 = vsel %vm4305, %v10406, %v10407
  %v10409 = vrot.slane %v10245, 5
  %v10410 = vrot.slane %v10409, 4
  %v10411 = vrot.slane %v8832, 5
  %v10412 = vsel %vm4305, %v10410, %v10411
  %v10413 = vrot.slane %v10411, 4
  %v10414 = vrot.slane %v8833, 5
  %v10415 = vsel %vm4305, %v10413, %v10414
  %v10416 = vrot.slane %v10246, 5
  %v10417 = vrot.slane %v10416, 4
  %v10418 = vrot.slane %v8835, 5
  %v10419 = vsel %vm4305, %v10417, %v10418
  %v10420 = vrot.slane %v10418, 4
  %v10421 = vrot.slane %v8836, 5
  %v10422 = vsel %vm4305, %v10420, %v10421
  %v10423 = vrot.slane %v10247, 5
  %v10424 = vrot.slane %v10423, 4
  %v10425 = vrot.slane %v8838, 5
  %v10426 = vsel %vm4305, %v10424, %v10425
  %v10427 = vrot.slane %v10425, 4
  %v10428 = vrot.slane %v8839, 5
  %v10429 = vsel %vm4305, %v10427, %v10428
  %v10430 = vrot.slane %v10248, 5
  %v10431 = vrot.slane %v10430, 4
  %v10432 = vrot.slane %v8841, 5
  %v10433 = vsel %vm4305, %v10431, %v10432
  %v10434 = vrot.slane %v10432, 4
  %v10435 = vrot.slane %v8842, 5
  %v10436 = vsel %vm4305, %v10434, %v10435
  %v10437 = vrot.slane %v10249, 5
  %v10438 = vrot.slane %v10437, 4
  %v10439 = vrot.slane %v8844, 5
  %v10440 = vsel %vm4305, %v10438, %v10439
  %v10441 = vrot.slane %v10439, 4
  %v10442 = vrot.slane %v8845, 5
  %v10443 = vsel %vm4305, %v10441, %v10442
  %v10444 = vrot.slane %v10250, 5
  %v10445 = vrot.slane %v10444, 4
  %v10446 = vrot.slane %v8847, 5
  %v10447 = vsel %vm4305, %v10445, %v10446
  %v10448 = vrot.slane %v10446, 4
  %v10449 = vrot.slane %v8848, 5
  %v10450 = vsel %vm4305, %v10448, %v10449
  %v10451 = vrot.slane %v10251, 5
  %v10452 = vrot.slane %v10451, 4
  %v10453 = vrot.slane %v8850, 5
  %v10454 = vsel %vm4305, %v10452, %v10453
  %v10455 = vrot.slane %v10453, 4
  %v10456 = vrot.slane %v8851, 5
  %v10457 = vsel %vm4305, %v10455, %v10456
  %v10458 = vrot.slane %v10252, 5
  %v10459 = vrot.slane %v10458, 4
  %v10460 = vrot.slane %v8853, 5
  %v10461 = vsel %vm4305, %v10459, %v10460
  %v10462 = vrot.slane %v10460, 4
  %v10463 = vrot.slane %v8854, 5
  %v10464 = vsel %vm4305, %v10462, %v10463
  %v10465 = vrot.slane %v10253, 5
  %v10466 = vrot.slane %v10465, 4
  %v10467 = vrot.slane %v8856, 5
  %v10468 = vsel %vm4305, %v10466, %v10467
  %v10469 = vrot.slane %v10467, 4
  %v10470 = vrot.slane %v8857, 5
  %v10471 = vsel %vm4305, %v10469, %v10470
  %v10472 = vrot.slane %v10254, 5
  %v10473 = vrot.slane %v10472, 4
  %v10474 = vrot.slane %v8859, 5
  %v10475 = vsel %vm4305, %v10473, %v10474
  %v10476 = vrot.slane %v10474, 4
  %v10477 = vrot.slane %v8860, 5
  %v10478 = vsel %vm4305, %v10476, %v10477
  %v10479 = vrot.slane %v10255, 5
  %v10480 = vrot.slane %v10479, 4
  %v10481 = vrot.slane %v8862, 5
  %v10482 = vsel %vm4305, %v10480, %v10481
  %v10483 = vrot.slane %v10481, 4
  %v10484 = vrot.slane %v8863, 5
  %v10485 = vsel %vm4305, %v10483, %v10484
  %v10486 = vrot.slane %v10256, 5
  %v10487 = vrot.slane %v10486, 4
  %v10488 = vrot.slane %v8865, 5
  %v10489 = vsel %vm4305, %v10487, %v10488
  %v10490 = vrot.slane %v10488, 4
  %v10491 = vrot.slane %v8866, 5
  %v10492 = vsel %vm4305, %v10490, %v10491
  %v10493 = vrot.slane %v10257, 5
  %v10494 = vrot.slane %v10493, 4
  %v10495 = vrot.slane %v8868, 5
  %v10496 = vsel %vm4305, %v10494, %v10495
  %v10497 = vrot.slane %v10495, 4
  %v10498 = vrot.slane %v8869, 5
  %v10499 = vsel %vm4305, %v10497, %v10498
  %v10500 = vrot.slane %v10258, 5
  %v10501 = vrot.slane %v10500, 4
  %v10502 = vrot.slane %v8871, 5
  %v10503 = vsel %vm4305, %v10501, %v10502
  %v10504 = vrot.slane %v10502, 4
  %v10505 = vrot.slane %v8872, 5
  %v10506 = vsel %vm4305, %v10504, %v10505
  %v10507 = vrot.slane %v10259, 5
  %v10508 = vrot.slane %v10507, 4
  %v10509 = vrot.slane %v8874, 5
  %v10510 = vsel %vm4305, %v10508, %v10509
  %v10511 = vrot.slane %v10509, 4
  %v10512 = vrot.slane %v8875, 5
  %v10513 = vsel %vm4305, %v10511, %v10512
  %v10514 = vrot.slane %v10260, 5
  %v10515 = vrot.slane %v10514, 4
  %v10516 = vrot.slane %v8877, 5
  %v10517 = vsel %vm4305, %v10515, %v10516
  %v10518 = vrot.slane %v10516, 4
  %v10519 = vrot.slane %v8878, 5
  %v10520 = vsel %vm4305, %v10518, %v10519
  %v10521 = vrot.slane %v10261, 5
  %v10522 = vrot.slane %v10521, 4
  %v10523 = vrot.slane %v8880, 5
  %v10524 = vsel %vm4305, %v10522, %v10523
  %v10525 = vrot.slane %v10523, 4
  %v10526 = vrot.slane %v8881, 5
  %v10527 = vsel %vm4305, %v10525, %v10526
  %v10528 = vrot.slane %v10262, 5
  %v10529 = vrot.slane %v10528, 4
  %v10530 = vrot.slane %v8883, 5
  %v10531 = vsel %vm4305, %v10529, %v10530
  %v10532 = vrot.slane %v10530, 4
  %v10533 = vrot.slane %v8884, 5
  %v10534 = vsel %vm4305, %v10532, %v10533
  %v10535 = vrot.slane %v10263, 5
  %v10536 = vrot.slane %v10535, 4
  %v10537 = vrot.slane %v8886, 5
  %v10538 = vsel %vm4305, %v10536, %v10537
  %v10539 = vrot.slane %v10537, 4
  %v10540 = vrot.slane %v8887, 5
  %v10541 = vsel %vm4305, %v10539, %v10540
  %v10542 = vrot.slane %v10264, 5
  %v10543 = vrot.slane %v10542, 4
  %v10544 = vrot.slane %v8889, 5
  %v10545 = vsel %vm4305, %v10543, %v10544
  %v10546 = vrot.slane %v10544, 4
  %v10547 = vrot.slane %v8890, 5
  %v10548 = vsel %vm4305, %v10546, %v10547
  %v10549 = vrot.slane %v10265, 5
  %v10550 = vrot.slane %v10549, 4
  %v10551 = vrot.slane %v8892, 5
  %v10552 = vsel %vm4305, %v10550, %v10551
  %v10553 = vrot.slane %v10551, 4
  %v10554 = vrot.slane %v8893, 5
  %v10555 = vsel %vm4305, %v10553, %v10554
  %v10556 = vrot.slane %v10266, 5
  %v10557 = vrot.slane %v10556, 4
  %v10558 = vrot.slane %v8895, 5
  %v10559 = vsel %vm4305, %v10557, %v10558
  %v10560 = vrot.slane %v10558, 4
  %v10561 = vrot.slane %v8896, 5
  %v10562 = vsel %vm4305, %v10560, %v10561
  %v10563 = vrot.slane %v10267, 5
  %v10564 = vrot.slane %v10563, 4
  %v10565 = vrot.slane %v8898, 5
  %v10566 = vsel %vm4305, %v10564, %v10565
  %v10567 = vrot.slane %v10565, 4
  %v10568 = vrot.slane %v8899, 5
  %v10569 = vsel %vm4305, %v10567, %v10568
  %v10570 = vrot.slane %v10268, 5
  %v10571 = vrot.slane %v10570, 4
  %v10572 = vrot.slane %v8901, 5
  %v10573 = vsel %vm4305, %v10571, %v10572
  %v10574 = vrot.slane %v10572, 4
  %v10575 = vrot.slane %v8902, 5
  %v10576 = vsel %vm4305, %v10574, %v10575
  %v10577 = vrot.slane %v10269, 5
  %v10578 = vrot.slane %v10577, 4
  %v10579 = vrot.slane %v8904, 5
  %v10580 = vsel %vm4305, %v10578, %v10579
  %v10581 = vrot.slane %v10579, 4
  %v10582 = vrot.slane %v8905, 5
  %v10583 = vsel %vm4305, %v10581, %v10582
  %v10584 = vrot.slane %v10270, 5
  %v10585 = vrot.slane %v10584, 4
  %v10586 = vrot.slane %v8907, 5
  %v10587 = vsel %vm4305, %v10585, %v10586
  %v10588 = vrot.slane %v10586, 4
  %v10589 = vrot.slane %v8908, 5
  %v10590 = vsel %vm4305, %v10588, %v10589
  %s10591 = scalar_lea.vmem %s4, 128
  %v10592 = vld [vmem:[%s10591] sm:$0xf]
  %v10593 = vld [vmem:[%s10591 + $0x4] sm:$0xf]
  %v10594 = vld [vmem:[%s10591 + $0x8] sm:$0xf]
  %v10595 = vld [vmem:[%s10591 + $0xc] sm:$0xf]
  %v10596 = vunpack.c.l.b16 %v10370
  %v10597 = vunpack.c.l.b16 %v10373
  %v10598 = vunpack.c.l.b16 %v10377
  %v10599 = vunpack.c.l.b16 %v10380
  %v10600 = vunpack.c.l.b16 %v10384
  %v10601 = vunpack.c.l.b16 %v10387
  %v10602 = vunpack.c.l.b16 %v10391
  %v10603 = vunpack.c.l.b16 %v10394
  %v10604 = vunpack.c.l.b16 %v10398
  %v10605 = vunpack.c.l.b16 %v10401
  %v10606 = vunpack.c.l.b16 %v10405
  %v10607 = vunpack.c.l.b16 %v10408
  %v10608 = vunpack.c.l.b16 %v10412
  %v10609 = vunpack.c.l.b16 %v10415
  %v10610 = vunpack.c.l.b16 %v10419
  %v10611 = vunpack.c.l.b16 %v10422
  %v10612 = vunpack.c.l.b16 %v10426
  %v10613 = vunpack.c.l.b16 %v10429
  %v10614 = vunpack.c.l.b16 %v10433
  %v10615 = vunpack.c.l.b16 %v10436
  %v10616 = vunpack.c.l.b16 %v10440
  %v10617 = vunpack.c.l.b16 %v10443
  %v10618 = vunpack.c.l.b16 %v10447
  %v10619 = vunpack.c.l.b16 %v10450
  %v10620 = vunpack.c.l.b16 %v10454
  %v10621 = vunpack.c.l.b16 %v10457
  %v10622 = vunpack.c.l.b16 %v10461
  %v10623 = vunpack.c.l.b16 %v10464
  %v10624 = vunpack.c.l.b16 %v10468
  %v10625 = vunpack.c.l.b16 %v10471
  %v10626 = vunpack.c.l.b16 %v10475
  %v10627 = vunpack.c.l.b16 %v10478
  %v10628 = vunpack.c.l.b16 %v10482
  %v10629 = vunpack.c.l.b16 %v10485
  %v10630 = vunpack.c.l.b16 %v10489
  %v10631 = vunpack.c.l.b16 %v10492
  %v10632 = vunpack.c.l.b16 %v10496
  %v10633 = vunpack.c.l.b16 %v10499
  %v10634 = vunpack.c.l.b16 %v10503
  %v10635 = vunpack.c.l.b16 %v10506
  %v10636 = vunpack.c.l.b16 %v10510
  %v10637 = vunpack.c.l.b16 %v10513
  %v10638 = vunpack.c.l.b16 %v10517
  %v10639 = vunpack.c.l.b16 %v10520
  %v10640 = vunpack.c.l.b16 %v10524
  %v10641 = vunpack.c.l.b16 %v10527
  %v10642 = vunpack.c.l.b16 %v10531
  %v10643 = vunpack.c.l.b16 %v10534
  %v10644 = vunpack.c.l.b16 %v10538
  %v10645 = vunpack.c.l.b16 %v10541
  %v10646 = vunpack.c.l.b16 %v10545
  %v10647 = vunpack.c.l.b16 %v10548
  %v10648 = vunpack.c.l.b16 %v10552
  %v10649 = vunpack.c.l.b16 %v10555
  %v10650 = vunpack.c.l.b16 %v10559
  %v10651 = vunpack.c.l.b16 %v10562
  %v10652 = vunpack.c.l.b16 %v10566
  %v10653 = vunpack.c.l.b16 %v10569
  %v10654 = vunpack.c.l.b16 %v10573
  %v10655 = vunpack.c.l.b16 %v10576
  %v10656 = vunpack.c.l.b16 %v10580
  %v10657 = vunpack.c.l.b16 %v10583
  %v10658 = vunpack.c.l.b16 %v10587
  %v10659 = vunpack.c.l.b16 %v10590
  %v10660 = vpack.c.b16 %v10597, %v10596
  %v10661 = vpack.c.b16 %v10599, %v10598
  %v10662 = vpack.c.b16 %v10601, %v10600
  %v10663 = vpack.c.b16 %v10603, %v10602
  %v10664 = vpack.c.b16 %v10605, %v10604
  %v10665 = vpack.c.b16 %v10607, %v10606
  %v10666 = vpack.c.b16 %v10609, %v10608
  %v10667 = vpack.c.b16 %v10611, %v10610
  %v10668 = vpack.c.b16 %v10613, %v10612
  %v10669 = vpack.c.b16 %v10615, %v10614
  %v10670 = vpack.c.b16 %v10617, %v10616
  %v10671 = vpack.c.b16 %v10619, %v10618
  %v10672 = vpack.c.b16 %v10621, %v10620
  %v10673 = vpack.c.b16 %v10623, %v10622
  %v10674 = vpack.c.b16 %v10625, %v10624
  %v10675 = vpack.c.b16 %v10627, %v10626
  %v10676 = vpack.c.b16 %v10629, %v10628
  %v10677 = vpack.c.b16 %v10631, %v10630
  %v10678 = vpack.c.b16 %v10633, %v10632
  %v10679 = vpack.c.b16 %v10635, %v10634
  %v10680 = vpack.c.b16 %v10637, %v10636
  %v10681 = vpack.c.b16 %v10639, %v10638
  %v10682 = vpack.c.b16 %v10641, %v10640
  %v10683 = vpack.c.b16 %v10643, %v10642
  %v10684 = vpack.c.b16 %v10645, %v10644
  %v10685 = vpack.c.b16 %v10647, %v10646
  %v10686 = vpack.c.b16 %v10649, %v10648
  %v10687 = vpack.c.b16 %v10651, %v10650
  %v10688 = vpack.c.b16 %v10653, %v10652
  %v10689 = vpack.c.b16 %v10655, %v10654
  %v10690 = vpack.c.b16 %v10657, %v10656
  %v10691 = vpack.c.b16 %v10659, %v10658
  %v10696 = vunpack.c.l.b16 %v10592
  %v10697 = vunpack.c.l.b16 %v10593
  %v10698 = vunpack.c.l.b16 %v10594
  %v10699 = vunpack.c.l.b16 %v10595
  %v10700 = vpack.c.b16 %v10697, %v10696
  %v10701 = vpack.c.b16 %v10699, %v10698
  %v10705 = vsel %vm3264, %v10660, 0
  %v10708 = vsel %vm3264, %v10661, 0
  %v10711 = vsel %vm3264, %v10662, 0
  %v10714 = vsel %vm3264, %v10663, 0
  %v10717 = vsel %vm3264, %v10664, 0
  %v10720 = vsel %vm3264, %v10665, 0
  %v10723 = vsel %vm3264, %v10666, 0
  %v10726 = vsel %vm3264, %v10667, 0
  %v10729 = vsel %vm3264, %v10668, 0
  %v10732 = vsel %vm3264, %v10669, 0
  %v10735 = vsel %vm3264, %v10670, 0
  %v10738 = vsel %vm3264, %v10671, 0
  %v10741 = vsel %vm3264, %v10672, 0
  %v10744 = vsel %vm3264, %v10673, 0
  %v10747 = vsel %vm3264, %v10674, 0
  %v10750 = vsel %vm3264, %v10675, 0
  %v10753 = vsel %vm3264, %v10676, 0
  %v10756 = vsel %vm3264, %v10677, 0
  %v10759 = vsel %vm3264, %v10678, 0
  %v10762 = vsel %vm3264, %v10679, 0
  %v10765 = vsel %vm3264, %v10680, 0
  %v10768 = vsel %vm3264, %v10681, 0
  %v10771 = vsel %vm3264, %v10682, 0
  %v10774 = vsel %vm3264, %v10683, 0
  %v10777 = vsel %vm3264, %v10684, 0
  %v10780 = vsel %vm3264, %v10685, 0
  %v10783 = vsel %vm3264, %v10686, 0
  %v10786 = vsel %vm3264, %v10687, 0
  %v10789 = vsel %vm3264, %v10688, 0
  %v10792 = vsel %vm3264, %v10689, 0
  %v10795 = vsel %vm3264, %v10690, 0
  %v10798 = vsel %vm3264, %v10691, 0
  %10800 = vmatprep.subr.bf16.mxu0 0
  %10801 = vmatpush1.bf16.msra.mxu0 %v10700
  %10802 = vmatprep.subr.bf16.mxu0 0
  %10803 = vmatpush1.bf16.msra.mxu0 %v10701
  %10804 = vmatprep.subr.bf16.mxu0 0
  %10805 = vmatpush1.bf16.msra.mxu0 0
  %10806 = vmatprep.subr.bf16.mxu0 0
  %10807 = vmatpush1.bf16.msra.mxu0 0
  %10808 = vmatprep.subr.bf16.mxu0 0
  %10809 = vmatpush1.bf16.msra.mxu0 0
  %10810 = vmatprep.subr.bf16.mxu0 0
  %10811 = vmatpush1.bf16.msra.mxu0 0
  %10812 = vmatprep.subr.bf16.mxu0 0
  %10813 = vmatpush1.bf16.msra.mxu0 0
  %10814 = vmatprep.subr.bf16.mxu0 0
  %10815 = vmatpush1.bf16.msra.mxu0 0
  %10816 = vmatprep.subr.bf16.mxu0 0
  %10817 = vmatpush1.bf16.msra.mxu0 0
  %10818 = vmatprep.subr.bf16.mxu0 0
  %10819 = vmatpush1.bf16.msra.mxu0 0
  %10820 = vmatprep.subr.bf16.mxu0 0
  %10821 = vmatpush1.bf16.msra.mxu0 0
  %10822 = vmatprep.subr.bf16.mxu0 0
  %10823 = vmatpush1.bf16.msra.mxu0 0
  %10824 = vmatprep.subr.bf16.mxu0 0
  %10825 = vmatpush1.bf16.msra.mxu0 0
  %10826 = vmatprep.subr.bf16.mxu0 0
  %10827 = vmatpush1.bf16.msra.mxu0 0
  %10828 = vmatprep.subr.bf16.mxu0 0
  %10829 = vmatpush1.bf16.msra.mxu0 0
  %10830 = vmatprep.subr.bf16.mxu0 0
  %10831 = vmatpush1.bf16.msra.mxu0 0
  %10832 = vmatprep.mubr.bf16.mxu0 0
  %10833 = vmatmul.mubr.bf16.gmra.mrb[0].mxu0 %v10705
  %v10834 = vpop.f32.mrb[0].mxu0
  %v10835 = vadd.f32 0.0, %v10834
  %v10836 = vpop.f32.mrb[0].mxu0
  %v10837 = vpop.f32.mrb[0].mxu0
  %v10838 = vadd.f32 0.0, %v10837
  %v10839 = vpop.f32.mrb[0].mxu0
  %10840 = vmatprep.mubr.bf16.mxu0 0
  %10841 = vmatmul.mubr.bf16.gmra.mrb[0].mxu0 %v10708
  %v10842 = vpop.f32.mrb[0].mxu0
  %v10843 = vadd.f32 0.0, %v10842
  %v10844 = vpop.f32.mrb[0].mxu0
  %v10845 = vpop.f32.mrb[0].mxu0
  %v10846 = vadd.f32 0.0, %v10845
  %v10847 = vpop.f32.mrb[0].mxu0
  %10848 = vmatprep.mubr.bf16.mxu0 0
  %10849 = vmatmul.mubr.bf16.gmra.mrb[0].mxu0 %v10711
  %v10850 = vpop.f32.mrb[0].mxu0
  %v10851 = vadd.f32 0.0, %v10850
  %v10852 = vpop.f32.mrb[0].mxu0
  %v10853 = vpop.f32.mrb[0].mxu0
  %v10854 = vadd.f32 0.0, %v10853
  %v10855 = vpop.f32.mrb[0].mxu0
  %10856 = vmatprep.mubr.bf16.mxu0 0
  %10857 = vmatmul.mubr.bf16.gmra.mrb[0].mxu0 %v10714
  %v10858 = vpop.f32.mrb[0].mxu0
  %v10859 = vadd.f32 0.0, %v10858
  %v10860 = vpop.f32.mrb[0].mxu0
  %v10861 = vpop.f32.mrb[0].mxu0
  %v10862 = vadd.f32 0.0, %v10861
  %v10863 = vpop.f32.mrb[0].mxu0
  %10864 = vmatprep.mubr.bf16.mxu0 0
  %10865 = vmatmul.mubr.bf16.gmra.mrb[0].mxu0 %v10717
  %v10866 = vpop.f32.mrb[0].mxu0
  %v10867 = vadd.f32 0.0, %v10866
  %v10868 = vpop.f32.mrb[0].mxu0
  %v10869 = vpop.f32.mrb[0].mxu0
  %v10870 = vadd.f32 0.0, %v10869
  %v10871 = vpop.f32.mrb[0].mxu0
  %10872 = vmatprep.mubr.bf16.mxu0 0
  %10873 = vmatmul.mubr.bf16.gmra.mrb[0].mxu0 %v10720
  %v10874 = vpop.f32.mrb[0].mxu0
  %v10875 = vadd.f32 0.0, %v10874
  %v10876 = vpop.f32.mrb[0].mxu0
  %v10877 = vpop.f32.mrb[0].mxu0
  %v10878 = vadd.f32 0.0, %v10877
  %v10879 = vpop.f32.mrb[0].mxu0
  %10880 = vmatprep.mubr.bf16.mxu0 0
  %10881 = vmatmul.mubr.bf16.gmra.mrb[0].mxu0 %v10723
  %v10882 = vpop.f32.mrb[0].mxu0
  %v10883 = vadd.f32 0.0, %v10882
  %v10884 = vpop.f32.mrb[0].mxu0
  %v10885 = vpop.f32.mrb[0].mxu0
  %v10886 = vadd.f32 0.0, %v10885
  %v10887 = vpop.f32.mrb[0].mxu0
  %10888 = vmatprep.mubr.bf16.mxu0 0
  %10889 = vmatmul.mubr.bf16.gmra.mrb[0].mxu0 %v10726
  %v10890 = vpop.f32.mrb[0].mxu0
  %v10891 = vadd.f32 0.0, %v10890
  %v10892 = vpop.f32.mrb[0].mxu0
  %v10893 = vpop.f32.mrb[0].mxu0
  %v10894 = vadd.f32 0.0, %v10893
  %v10895 = vpop.f32.mrb[0].mxu0
  %10896 = vmatprep.mubr.bf16.mxu0 0
  %10897 = vmatmul.mubr.bf16.gmra.mrb[0].mxu0 %v10729
  %v10898 = vpop.f32.mrb[0].mxu0
  %v10899 = vadd.f32 0.0, %v10898
  %v10900 = vpop.f32.mrb[0].mxu0
  %v10901 = vpop.f32.mrb[0].mxu0
  %v10902 = vadd.f32 0.0, %v10901
  %v10903 = vpop.f32.mrb[0].mxu0
  %10904 = vmatprep.mubr.bf16.mxu0 0
  %10905 = vmatmul.mubr.bf16.gmra.mrb[0].mxu0 %v10732
  %v10906 = vpop.f32.mrb[0].mxu0
  %v10907 = vadd.f32 0.0, %v10906
  %v10908 = vpop.f32.mrb[0].mxu0
  %v10909 = vpop.f32.mrb[0].mxu0
  %v10910 = vadd.f32 0.0, %v10909
  %v10911 = vpop.f32.mrb[0].mxu0
  %10912 = vmatprep.mubr.bf16.mxu0 0
  %10913 = vmatmul.mubr.bf16.gmra.mrb[0].mxu0 %v10735
  %v10914 = vpop.f32.mrb[0].mxu0
  %v10915 = vadd.f32 0.0, %v10914
  %v10916 = vpop.f32.mrb[0].mxu0
  %v10917 = vpop.f32.mrb[0].mxu0
  %v10918 = vadd.f32 0.0, %v10917
  %v10919 = vpop.f32.mrb[0].mxu0
  %10920 = vmatprep.mubr.bf16.mxu0 0
  %10921 = vmatmul.mubr.bf16.gmra.mrb[0].mxu0 %v10738
  %v10922 = vpop.f32.mrb[0].mxu0
  %v10923 = vadd.f32 0.0, %v10922
  %v10924 = vpop.f32.mrb[0].mxu0
  %v10925 = vpop.f32.mrb[0].mxu0
  %v10926 = vadd.f32 0.0, %v10925
  %v10927 = vpop.f32.mrb[0].mxu0
  %10928 = vmatprep.mubr.bf16.mxu0 0
  %10929 = vmatmul.mubr.bf16.gmra.mrb[0].mxu0 %v10741
  %v10930 = vpop.f32.mrb[0].mxu0
  %v10931 = vadd.f32 0.0, %v10930
  %v10932 = vpop.f32.mrb[0].mxu0
  %v10933 = vpop.f32.mrb[0].mxu0
  %v10934 = vadd.f32 0.0, %v10933
  %v10935 = vpop.f32.mrb[0].mxu0
  %10936 = vmatprep.mubr.bf16.mxu0 0
  %10937 = vmatmul.mubr.bf16.gmra.mrb[0].mxu0 %v10744
  %v10938 = vpop.f32.mrb[0].mxu0
  %v10939 = vadd.f32 0.0, %v10938
  %v10940 = vpop.f32.mrb[0].mxu0
  %v10941 = vpop.f32.mrb[0].mxu0
  %v10942 = vadd.f32 0.0, %v10941
  %v10943 = vpop.f32.mrb[0].mxu0
  %10944 = vmatprep.mubr.bf16.mxu0 0
  %10945 = vmatmul.mubr.bf16.gmra.mrb[0].mxu0 %v10747
  %v10946 = vpop.f32.mrb[0].mxu0
  %v10947 = vadd.f32 0.0, %v10946
  %v10948 = vpop.f32.mrb[0].mxu0
  %v10949 = vpop.f32.mrb[0].mxu0
  %v10950 = vadd.f32 0.0, %v10949
  %v10951 = vpop.f32.mrb[0].mxu0
  %10952 = vmatprep.mubr.bf16.mxu0 0
  %10953 = vmatmul.mubr.bf16.gmra.mrb[0].mxu0 %v10750
  %v10954 = vpop.f32.mrb[0].mxu0
  %v10955 = vadd.f32 0.0, %v10954
  %v10956 = vpop.f32.mrb[0].mxu0
  %v10957 = vpop.f32.mrb[0].mxu0
  %v10958 = vadd.f32 0.0, %v10957
  %v10959 = vpop.f32.mrb[0].mxu0
  %10960 = vmatprep.mubr.bf16.mxu0 0
  %10961 = vmatmul.mubr.bf16.gmra.mrb[0].mxu0 %v10753
  %v10962 = vpop.f32.mrb[0].mxu0
  %v10963 = vadd.f32 0.0, %v10962
  %v10964 = vpop.f32.mrb[0].mxu0
  %v10965 = vpop.f32.mrb[0].mxu0
  %v10966 = vadd.f32 0.0, %v10965
  %v10967 = vpop.f32.mrb[0].mxu0
  %10968 = vmatprep.mubr.bf16.mxu0 0
  %10969 = vmatmul.mubr.bf16.gmra.mrb[0].mxu0 %v10756
  %v10970 = vpop.f32.mrb[0].mxu0
  %v10971 = vadd.f32 0.0, %v10970
  %v10972 = vpop.f32.mrb[0].mxu0
  %v10973 = vpop.f32.mrb[0].mxu0
  %v10974 = vadd.f32 0.0, %v10973
  %v10975 = vpop.f32.mrb[0].mxu0
  %10976 = vmatprep.mubr.bf16.mxu0 0
  %10977 = vmatmul.mubr.bf16.gmra.mrb[0].mxu0 %v10759
  %v10978 = vpop.f32.mrb[0].mxu0
  %v10979 = vadd.f32 0.0, %v10978
  %v10980 = vpop.f32.mrb[0].mxu0
  %v10981 = vpop.f32.mrb[0].mxu0
  %v10982 = vadd.f32 0.0, %v10981
  %v10983 = vpop.f32.mrb[0].mxu0
  %10984 = vmatprep.mubr.bf16.mxu0 0
  %10985 = vmatmul.mubr.bf16.gmra.mrb[0].mxu0 %v10762
  %v10986 = vpop.f32.mrb[0].mxu0
  %v10987 = vadd.f32 0.0, %v10986
  %v10988 = vpop.f32.mrb[0].mxu0
  %v10989 = vpop.f32.mrb[0].mxu0
  %v10990 = vadd.f32 0.0, %v10989
  %v10991 = vpop.f32.mrb[0].mxu0
  %10992 = vmatprep.mubr.bf16.mxu0 0
  %10993 = vmatmul.mubr.bf16.gmra.mrb[0].mxu0 %v10765
  %v10994 = vpop.f32.mrb[0].mxu0
  %v10995 = vadd.f32 0.0, %v10994
  %v10996 = vpop.f32.mrb[0].mxu0
  %v10997 = vpop.f32.mrb[0].mxu0
  %v10998 = vadd.f32 0.0, %v10997
  %v10999 = vpop.f32.mrb[0].mxu0
  %11000 = vmatprep.mubr.bf16.mxu0 0
  %11001 = vmatmul.mubr.bf16.gmra.mrb[0].mxu0 %v10768
  %v11002 = vpop.f32.mrb[0].mxu0
  %v11003 = vadd.f32 0.0, %v11002
  %v11004 = vpop.f32.mrb[0].mxu0
  %v11005 = vpop.f32.mrb[0].mxu0
  %v11006 = vadd.f32 0.0, %v11005
  %v11007 = vpop.f32.mrb[0].mxu0
  %11008 = vmatprep.mubr.bf16.mxu0 0
  %11009 = vmatmul.mubr.bf16.gmra.mrb[0].mxu0 %v10771
  %v11010 = vpop.f32.mrb[0].mxu0
  %v11011 = vadd.f32 0.0, %v11010
  %v11012 = vpop.f32.mrb[0].mxu0
  %v11013 = vpop.f32.mrb[0].mxu0
  %v11014 = vadd.f32 0.0, %v11013
  %v11015 = vpop.f32.mrb[0].mxu0
  %11016 = vmatprep.mubr.bf16.mxu0 0
  %11017 = vmatmul.mubr.bf16.gmra.mrb[0].mxu0 %v10774
  %v11018 = vpop.f32.mrb[0].mxu0
  %v11019 = vadd.f32 0.0, %v11018
  %v11020 = vpop.f32.mrb[0].mxu0
  %v11021 = vpop.f32.mrb[0].mxu0
  %v11022 = vadd.f32 0.0, %v11021
  %v11023 = vpop.f32.mrb[0].mxu0
  %11024 = vmatprep.mubr.bf16.mxu0 0
  %11025 = vmatmul.mubr.bf16.gmra.mrb[0].mxu0 %v10777
  %v11026 = vpop.f32.mrb[0].mxu0
  %v11027 = vadd.f32 0.0, %v11026
  %v11028 = vpop.f32.mrb[0].mxu0
  %v11029 = vpop.f32.mrb[0].mxu0
  %v11030 = vadd.f32 0.0, %v11029
  %v11031 = vpop.f32.mrb[0].mxu0
  %11032 = vmatprep.mubr.bf16.mxu0 0
  %11033 = vmatmul.mubr.bf16.gmra.mrb[0].mxu0 %v10780
  %v11034 = vpop.f32.mrb[0].mxu0
  %v11035 = vadd.f32 0.0, %v11034
  %v11036 = vpop.f32.mrb[0].mxu0
  %v11037 = vpop.f32.mrb[0].mxu0
  %v11038 = vadd.f32 0.0, %v11037
  %v11039 = vpop.f32.mrb[0].mxu0
  %11040 = vmatprep.mubr.bf16.mxu0 0
  %11041 = vmatmul.mubr.bf16.gmra.mrb[0].mxu0 %v10783
  %v11042 = vpop.f32.mrb[0].mxu0
  %v11043 = vadd.f32 0.0, %v11042
  %v11044 = vpop.f32.mrb[0].mxu0
  %v11045 = vpop.f32.mrb[0].mxu0
  %v11046 = vadd.f32 0.0, %v11045
  %v11047 = vpop.f32.mrb[0].mxu0
  %11048 = vmatprep.mubr.bf16.mxu0 0
  %11049 = vmatmul.mubr.bf16.gmra.mrb[0].mxu0 %v10786
  %v11050 = vpop.f32.mrb[0].mxu0
  %v11051 = vadd.f32 0.0, %v11050
  %v11052 = vpop.f32.mrb[0].mxu0
  %v11053 = vpop.f32.mrb[0].mxu0
  %v11054 = vadd.f32 0.0, %v11053
  %v11055 = vpop.f32.mrb[0].mxu0
  %11056 = vmatprep.mubr.bf16.mxu0 0
  %11057 = vmatmul.mubr.bf16.gmra.mrb[0].mxu0 %v10789
  %v11058 = vpop.f32.mrb[0].mxu0
  %v11059 = vadd.f32 0.0, %v11058
  %v11060 = vpop.f32.mrb[0].mxu0
  %v11061 = vpop.f32.mrb[0].mxu0
  %v11062 = vadd.f32 0.0, %v11061
  %v11063 = vpop.f32.mrb[0].mxu0
  %11064 = vmatprep.mubr.bf16.mxu0 0
  %11065 = vmatmul.mubr.bf16.gmra.mrb[0].mxu0 %v10792
  %v11066 = vpop.f32.mrb[0].mxu0
  %v11067 = vadd.f32 0.0, %v11066
  %v11068 = vpop.f32.mrb[0].mxu0
  %v11069 = vpop.f32.mrb[0].mxu0
  %v11070 = vadd.f32 0.0, %v11069
  %v11071 = vpop.f32.mrb[0].mxu0
  %11072 = vmatprep.mubr.bf16.mxu0 0
  %11073 = vmatmul.mubr.bf16.gmra.mrb[0].mxu0 %v10795
  %v11074 = vpop.f32.mrb[0].mxu0
  %v11075 = vadd.f32 0.0, %v11074
  %v11076 = vpop.f32.mrb[0].mxu0
  %v11077 = vpop.f32.mrb[0].mxu0
  %v11078 = vadd.f32 0.0, %v11077
  %v11079 = vpop.f32.mrb[0].mxu0
  %11080 = vmatprep.mubr.bf16.mxu0 0
  %11081 = vmatmul.mubr.bf16.gmra.mrb[0].mxu0 %v10798
  %v11082 = vpop.f32.mrb[0].mxu0
  %v11083 = vadd.f32 0.0, %v11082
  %v11084 = vpop.f32.mrb[0].mxu0
  %v11085 = vpop.f32.mrb[0].mxu0
  %v11086 = vadd.f32 0.0, %v11085
  %v11087 = vpop.f32.mrb[0].mxu0
  %11088 = vdwg.mxu0
  %v11089 = vadd.f32 %v10175, %v10835
  %v11090 = vadd.f32 %v10176, %v10838
  %v11091 = vadd.f32 %v10177, %v10843
  %v11092 = vadd.f32 %v10178, %v10846
  %v11093 = vadd.f32 %v10179, %v10851
  %v11094 = vadd.f32 %v10180, %v10854
  %v11095 = vadd.f32 %v10181, %v10859
  %v11096 = vadd.f32 %v10182, %v10862
  %v11097 = vadd.f32 %v10183, %v10867
  %v11098 = vadd.f32 %v10184, %v10870
  %v11099 = vadd.f32 %v10185, %v10875
  %v11100 = vadd.f32 %v10186, %v10878
  %v11101 = vadd.f32 %v10187, %v10883
  %v11102 = vadd.f32 %v10188, %v10886
  %v11103 = vadd.f32 %v10189, %v10891
  %v11104 = vadd.f32 %v10190, %v10894
  %v11105 = vadd.f32 %v10191, %v10899
  %v11106 = vadd.f32 %v10192, %v10902
  %v11107 = vadd.f32 %v10193, %v10907
  %v11108 = vadd.f32 %v10194, %v10910
  %v11109 = vadd.f32 %v10195, %v10915
  %v11110 = vadd.f32 %v10196, %v10918
  %v11111 = vadd.f32 %v10197, %v10923
  %v11112 = vadd.f32 %v10198, %v10926
  %v11113 = vadd.f32 %v10199, %v10931
  %v11114 = vadd.f32 %v10200, %v10934
  %v11115 = vadd.f32 %v10201, %v10939
  %v11116 = vadd.f32 %v10202, %v10942
  %v11117 = vadd.f32 %v10203, %v10947
  %v11118 = vadd.f32 %v10204, %v10950
  %v11119 = vadd.f32 %v10205, %v10955
  %v11120 = vadd.f32 %v10206, %v10958
  %v11121 = vadd.f32 %v10207, %v10963
  %v11122 = vadd.f32 %v10208, %v10966
  %v11123 = vadd.f32 %v10209, %v10971
  %v11124 = vadd.f32 %v10210, %v10974
  %v11125 = vadd.f32 %v10211, %v10979
  %v11126 = vadd.f32 %v10212, %v10982
  %v11127 = vadd.f32 %v10213, %v10987
  %v11128 = vadd.f32 %v10214, %v10990
  %v11129 = vadd.f32 %v10215, %v10995
  %v11130 = vadd.f32 %v10216, %v10998
  %v11131 = vadd.f32 %v10217, %v11003
  %v11132 = vadd.f32 %v10218, %v11006
  %v11133 = vadd.f32 %v10219, %v11011
  %v11134 = vadd.f32 %v10220, %v11014
  %v11135 = vadd.f32 %v10221, %v11019
  %v11136 = vadd.f32 %v10222, %v11022
  %v11137 = vadd.f32 %v10223, %v11027
  %v11138 = vadd.f32 %v10224, %v11030
  %v11139 = vadd.f32 %v10225, %v11035
  %v11140 = vadd.f32 %v10226, %v11038
  %v11141 = vadd.f32 %v10227, %v11043
  %v11142 = vadd.f32 %v10228, %v11046
  %v11143 = vadd.f32 %v10229, %v11051
  %v11144 = vadd.f32 %v10230, %v11054
  %v11145 = vadd.f32 %v10231, %v11059
  %v11146 = vadd.f32 %v10232, %v11062
  %v11147 = vadd.f32 %v10233, %v11067
  %v11148 = vadd.f32 %v10234, %v11070
  %v11149 = vadd.f32 %v10235, %v11075
  %v11150 = vadd.f32 %v10236, %v11078
  %v11151 = vadd.f32 %v10237, %v11083
  %v11152 = vadd.f32 %v10238, %v11086
  %v11153 = vld [vmem:[%s5] sm:$0x1]
  %v11155 = vlaneseq
  %v11156 = vshrl.u32 %v11155, 7
  %v11157 = vsub.s32 0, %v11156
  %v11158 = vrot.slane %v11153, %v11157
  %v11160 = vmul.f32 %v11089, %v11158
  %v11161 = vmul.f32 %v11090, %v11158
  %v11162 = vmul.f32 %v11091, %v11158
  %v11163 = vmul.f32 %v11092, %v11158
  %v11164 = vmul.f32 %v11093, %v11158
  %v11165 = vmul.f32 %v11094, %v11158
  %v11166 = vmul.f32 %v11095, %v11158
  %v11167 = vmul.f32 %v11096, %v11158
  %v11168 = vmul.f32 %v11097, %v11158
  %v11169 = vmul.f32 %v11098, %v11158
  %v11170 = vmul.f32 %v11099, %v11158
  %v11171 = vmul.f32 %v11100, %v11158
  %v11172 = vmul.f32 %v11101, %v11158
  %v11173 = vmul.f32 %v11102, %v11158
  %v11174 = vmul.f32 %v11103, %v11158
  %v11175 = vmul.f32 %v11104, %v11158
  %v11176 = vmul.f32 %v11105, %v11158
  %v11177 = vmul.f32 %v11106, %v11158
  %v11178 = vmul.f32 %v11107, %v11158
  %v11179 = vmul.f32 %v11108, %v11158
  %v11180 = vmul.f32 %v11109, %v11158
  %v11181 = vmul.f32 %v11110, %v11158
  %v11182 = vmul.f32 %v11111, %v11158
  %v11183 = vmul.f32 %v11112, %v11158
  %v11184 = vmul.f32 %v11113, %v11158
  %v11185 = vmul.f32 %v11114, %v11158
  %v11186 = vmul.f32 %v11115, %v11158
  %v11187 = vmul.f32 %v11116, %v11158
  %v11188 = vmul.f32 %v11117, %v11158
  %v11189 = vmul.f32 %v11118, %v11158
  %v11190 = vmul.f32 %v11119, %v11158
  %v11191 = vmul.f32 %v11120, %v11158
  %v11192 = vmul.f32 %v11121, %v11158
  %v11193 = vmul.f32 %v11122, %v11158
  %v11194 = vmul.f32 %v11123, %v11158
  %v11195 = vmul.f32 %v11124, %v11158
  %v11196 = vmul.f32 %v11125, %v11158
  %v11197 = vmul.f32 %v11126, %v11158
  %v11198 = vmul.f32 %v11127, %v11158
  %v11199 = vmul.f32 %v11128, %v11158
  %v11200 = vmul.f32 %v11129, %v11158
  %v11201 = vmul.f32 %v11130, %v11158
  %v11202 = vmul.f32 %v11131, %v11158
  %v11203 = vmul.f32 %v11132, %v11158
  %v11204 = vmul.f32 %v11133, %v11158
  %v11205 = vmul.f32 %v11134, %v11158
  %v11206 = vmul.f32 %v11135, %v11158
  %v11207 = vmul.f32 %v11136, %v11158
  %v11208 = vmul.f32 %v11137, %v11158
  %v11209 = vmul.f32 %v11138, %v11158
  %v11210 = vmul.f32 %v11139, %v11158
  %v11211 = vmul.f32 %v11140, %v11158
  %v11212 = vmul.f32 %v11141, %v11158
  %v11213 = vmul.f32 %v11142, %v11158
  %v11214 = vmul.f32 %v11143, %v11158
  %v11215 = vmul.f32 %v11144, %v11158
  %v11216 = vmul.f32 %v11145, %v11158
  %v11217 = vmul.f32 %v11146, %v11158
  %v11218 = vmul.f32 %v11147, %v11158
  %v11219 = vmul.f32 %v11148, %v11158
  %v11220 = vmul.f32 %v11149, %v11158
  %v11221 = vmul.f32 %v11150, %v11158
  %v11222 = vmul.f32 %v11151, %v11158
  %v11223 = vmul.f32 %v11152, %v11158
  %v11224 = vld [vmem:[%s6] sm:$0x1]
  %v11226 = vlaneseq
  %v11227 = vshrl.u32 %v11226, 7
  %v11228 = vsub.s32 0, %v11227
  %v11229 = vrot.slane %v11224, %v11228
  %v11231 = vadd.f32 %v11160, %v11229
  %v11232 = vadd.f32 %v11161, %v11229
  %v11233 = vadd.f32 %v11162, %v11229
  %v11234 = vadd.f32 %v11163, %v11229
  %v11235 = vadd.f32 %v11164, %v11229
  %v11236 = vadd.f32 %v11165, %v11229
  %v11237 = vadd.f32 %v11166, %v11229
  %v11238 = vadd.f32 %v11167, %v11229
  %v11239 = vadd.f32 %v11168, %v11229
  %v11240 = vadd.f32 %v11169, %v11229
  %v11241 = vadd.f32 %v11170, %v11229
  %v11242 = vadd.f32 %v11171, %v11229
  %v11243 = vadd.f32 %v11172, %v11229
  %v11244 = vadd.f32 %v11173, %v11229
  %v11245 = vadd.f32 %v11174, %v11229
  %v11246 = vadd.f32 %v11175, %v11229
  %v11247 = vadd.f32 %v11176, %v11229
  %v11248 = vadd.f32 %v11177, %v11229
  %v11249 = vadd.f32 %v11178, %v11229
  %v11250 = vadd.f32 %v11179, %v11229
  %v11251 = vadd.f32 %v11180, %v11229
  %v11252 = vadd.f32 %v11181, %v11229
  %v11253 = vadd.f32 %v11182, %v11229
  %v11254 = vadd.f32 %v11183, %v11229
  %v11255 = vadd.f32 %v11184, %v11229
  %v11256 = vadd.f32 %v11185, %v11229
  %v11257 = vadd.f32 %v11186, %v11229
  %v11258 = vadd.f32 %v11187, %v11229
  %v11259 = vadd.f32 %v11188, %v11229
  %v11260 = vadd.f32 %v11189, %v11229
  %v11261 = vadd.f32 %v11190, %v11229
  %v11262 = vadd.f32 %v11191, %v11229
  %v11263 = vadd.f32 %v11192, %v11229
  %v11264 = vadd.f32 %v11193, %v11229
  %v11265 = vadd.f32 %v11194, %v11229
  %v11266 = vadd.f32 %v11195, %v11229
  %v11267 = vadd.f32 %v11196, %v11229
  %v11268 = vadd.f32 %v11197, %v11229
  %v11269 = vadd.f32 %v11198, %v11229
  %v11270 = vadd.f32 %v11199, %v11229
  %v11271 = vadd.f32 %v11200, %v11229
  %v11272 = vadd.f32 %v11201, %v11229
  %v11273 = vadd.f32 %v11202, %v11229
  %v11274 = vadd.f32 %v11203, %v11229
  %v11275 = vadd.f32 %v11204, %v11229
  %v11276 = vadd.f32 %v11205, %v11229
  %v11277 = vadd.f32 %v11206, %v11229
  %v11278 = vadd.f32 %v11207, %v11229
  %v11279 = vadd.f32 %v11208, %v11229
  %v11280 = vadd.f32 %v11209, %v11229
  %v11281 = vadd.f32 %v11210, %v11229
  %v11282 = vadd.f32 %v11211, %v11229
  %v11283 = vadd.f32 %v11212, %v11229
  %v11284 = vadd.f32 %v11213, %v11229
  %v11285 = vadd.f32 %v11214, %v11229
  %v11286 = vadd.f32 %v11215, %v11229
  %v11287 = vadd.f32 %v11216, %v11229
  %v11288 = vadd.f32 %v11217, %v11229
  %v11289 = vadd.f32 %v11218, %v11229
  %v11290 = vadd.f32 %v11219, %v11229
  %v11291 = vadd.f32 %v11220, %v11229
  %v11292 = vadd.f32 %v11221, %v11229
  %v11293 = vadd.f32 %v11222, %v11229
  %v11294 = vadd.f32 %v11223, %v11229
  %vm11295 = vcmp.gt.f32.partialorder %v11231, 0.0
  %vm11296 = vcmp.gt.f32.partialorder %v11232, 0.0
  %vm11297 = vcmp.gt.f32.partialorder %v11233, 0.0
  %vm11298 = vcmp.gt.f32.partialorder %v11234, 0.0
  %vm11299 = vcmp.gt.f32.partialorder %v11235, 0.0
  %vm11300 = vcmp.gt.f32.partialorder %v11236, 0.0
  %vm11301 = vcmp.gt.f32.partialorder %v11237, 0.0
  %vm11302 = vcmp.gt.f32.partialorder %v11238, 0.0
  %vm11303 = vcmp.gt.f32.partialorder %v11239, 0.0
  %vm11304 = vcmp.gt.f32.partialorder %v11240, 0.0
  %vm11305 = vcmp.gt.f32.partialorder %v11241, 0.0
  %vm11306 = vcmp.gt.f32.partialorder %v11242, 0.0
  %vm11307 = vcmp.gt.f32.partialorder %v11243, 0.0
  %vm11308 = vcmp.gt.f32.partialorder %v11244, 0.0
  %vm11309 = vcmp.gt.f32.partialorder %v11245, 0.0
  %vm11310 = vcmp.gt.f32.partialorder %v11246, 0.0
  %vm11311 = vcmp.gt.f32.partialorder %v11247, 0.0
  %vm11312 = vcmp.gt.f32.partialorder %v11248, 0.0
  %vm11313 = vcmp.gt.f32.partialorder %v11249, 0.0
  %vm11314 = vcmp.gt.f32.partialorder %v11250, 0.0
  %vm11315 = vcmp.gt.f32.partialorder %v11251, 0.0
  %vm11316 = vcmp.gt.f32.partialorder %v11252, 0.0
  %vm11317 = vcmp.gt.f32.partialorder %v11253, 0.0
  %vm11318 = vcmp.gt.f32.partialorder %v11254, 0.0
  %vm11319 = vcmp.gt.f32.partialorder %v11255, 0.0
  %vm11320 = vcmp.gt.f32.partialorder %v11256, 0.0
  %vm11321 = vcmp.gt.f32.partialorder %v11257, 0.0
  %vm11322 = vcmp.gt.f32.partialorder %v11258, 0.0
  %vm11323 = vcmp.gt.f32.partialorder %v11259, 0.0
  %vm11324 = vcmp.gt.f32.partialorder %v11260, 0.0
  %vm11325 = vcmp.gt.f32.partialorder %v11261, 0.0
  %vm11326 = vcmp.gt.f32.partialorder %v11262, 0.0
  %vm11327 = vcmp.gt.f32.partialorder %v11263, 0.0
  %vm11328 = vcmp.gt.f32.partialorder %v11264, 0.0
  %vm11329 = vcmp.gt.f32.partialorder %v11265, 0.0
  %vm11330 = vcmp.gt.f32.partialorder %v11266, 0.0
  %vm11331 = vcmp.gt.f32.partialorder %v11267, 0.0
  %vm11332 = vcmp.gt.f32.partialorder %v11268, 0.0
  %vm11333 = vcmp.gt.f32.partialorder %v11269, 0.0
  %vm11334 = vcmp.gt.f32.partialorder %v11270, 0.0
  %vm11335 = vcmp.gt.f32.partialorder %v11271, 0.0
  %vm11336 = vcmp.gt.f32.partialorder %v11272, 0.0
  %vm11337 = vcmp.gt.f32.partialorder %v11273, 0.0
  %vm11338 = vcmp.gt.f32.partialorder %v11274, 0.0
  %vm11339 = vcmp.gt.f32.partialorder %v11275, 0.0
  %vm11340 = vcmp.gt.f32.partialorder %v11276, 0.0
  %vm11341 = vcmp.gt.f32.partialorder %v11277, 0.0
  %vm11342 = vcmp.gt.f32.partialorder %v11278, 0.0
  %vm11343 = vcmp.gt.f32.partialorder %v11279, 0.0
  %vm11344 = vcmp.gt.f32.partialorder %v11280, 0.0
  %vm11345 = vcmp.gt.f32.partialorder %v11281, 0.0
  %vm11346 = vcmp.gt.f32.partialorder %v11282, 0.0
  %vm11347 = vcmp.gt.f32.partialorder %v11283, 0.0
  %vm11348 = vcmp.gt.f32.partialorder %v11284, 0.0
  %vm11349 = vcmp.gt.f32.partialorder %v11285, 0.0
  %vm11350 = vcmp.gt.f32.partialorder %v11286, 0.0
  %vm11351 = vcmp.gt.f32.partialorder %v11287, 0.0
  %vm11352 = vcmp.gt.f32.partialorder %v11288, 0.0
  %vm11353 = vcmp.gt.f32.partialorder %v11289, 0.0
  %vm11354 = vcmp.gt.f32.partialorder %v11290, 0.0
  %vm11355 = vcmp.gt.f32.partialorder %v11291, 0.0
  %vm11356 = vcmp.gt.f32.partialorder %v11292, 0.0
  %vm11357 = vcmp.gt.f32.partialorder %v11293, 0.0
  %vm11358 = vcmp.gt.f32.partialorder %v11294, 0.0
  %v11359 = vmul.f32 %v11231, 0.01
  %v11360 = vmul.f32 %v11232, 0.01
  %v11361 = vmul.f32 %v11233, 0.01
  %v11362 = vmul.f32 %v11234, 0.01
  %v11363 = vmul.f32 %v11235, 0.01
  %v11364 = vmul.f32 %v11236, 0.01
  %v11365 = vmul.f32 %v11237, 0.01
  %v11366 = vmul.f32 %v11238, 0.01
  %v11367 = vmul.f32 %v11239, 0.01
  %v11368 = vmul.f32 %v11240, 0.01
  %v11369 = vmul.f32 %v11241, 0.01
  %v11370 = vmul.f32 %v11242, 0.01
  %v11371 = vmul.f32 %v11243, 0.01
  %v11372 = vmul.f32 %v11244, 0.01
  %v11373 = vmul.f32 %v11245, 0.01
  %v11374 = vmul.f32 %v11246, 0.01
  %v11375 = vmul.f32 %v11247, 0.01
  %v11376 = vmul.f32 %v11248, 0.01
  %v11377 = vmul.f32 %v11249, 0.01
  %v11378 = vmul.f32 %v11250, 0.01
  %v11379 = vmul.f32 %v11251, 0.01
  %v11380 = vmul.f32 %v11252, 0.01
  %v11381 = vmul.f32 %v11253, 0.01
  %v11382 = vmul.f32 %v11254, 0.01
  %v11383 = vmul.f32 %v11255, 0.01
  %v11384 = vmul.f32 %v11256, 0.01
  %v11385 = vmul.f32 %v11257, 0.01
  %v11386 = vmul.f32 %v11258, 0.01
  %v11387 = vmul.f32 %v11259, 0.01
  %v11388 = vmul.f32 %v11260, 0.01
  %v11389 = vmul.f32 %v11261, 0.01
  %v11390 = vmul.f32 %v11262, 0.01
  %v11391 = vmul.f32 %v11263, 0.01
  %v11392 = vmul.f32 %v11264, 0.01
  %v11393 = vmul.f32 %v11265, 0.01
  %v11394 = vmul.f32 %v11266, 0.01
  %v11395 = vmul.f32 %v11267, 0.01
  %v11396 = vmul.f32 %v11268, 0.01
  %v11397 = vmul.f32 %v11269, 0.01
  %v11398 = vmul.f32 %v11270, 0.01
  %v11399 = vmul.f32 %v11271, 0.01
  %v11400 = vmul.f32 %v11272, 0.01
  %v11401 = vmul.f32 %v11273, 0.01
  %v11402 = vmul.f32 %v11274, 0.01
  %v11403 = vmul.f32 %v11275, 0.01
  %v11404 = vmul.f32 %v11276, 0.01
  %v11405 = vmul.f32 %v11277, 0.01
  %v11406 = vmul.f32 %v11278, 0.01
  %v11407 = vmul.f32 %v11279, 0.01
  %v11408 = vmul.f32 %v11280, 0.01
  %v11409 = vmul.f32 %v11281, 0.01
  %v11410 = vmul.f32 %v11282, 0.01
  %v11411 = vmul.f32 %v11283, 0.01
  %v11412 = vmul.f32 %v11284, 0.01
  %v11413 = vmul.f32 %v11285, 0.01
  %v11414 = vmul.f32 %v11286, 0.01
  %v11415 = vmul.f32 %v11287, 0.01
  %v11416 = vmul.f32 %v11288, 0.01
  %v11417 = vmul.f32 %v11289, 0.01
  %v11418 = vmul.f32 %v11290, 0.01
  %v11419 = vmul.f32 %v11291, 0.01
  %v11420 = vmul.f32 %v11292, 0.01
  %v11421 = vmul.f32 %v11293, 0.01
  %v11422 = vmul.f32 %v11294, 0.01
  %v11423 = vsel %vm11295, %v11231, %v11359
  %v11424 = vsel %vm11296, %v11232, %v11360
  %v11425 = vsel %vm11297, %v11233, %v11361
  %v11426 = vsel %vm11298, %v11234, %v11362
  %v11427 = vsel %vm11299, %v11235, %v11363
  %v11428 = vsel %vm11300, %v11236, %v11364
  %v11429 = vsel %vm11301, %v11237, %v11365
  %v11430 = vsel %vm11302, %v11238, %v11366
  %v11431 = vsel %vm11303, %v11239, %v11367
  %v11432 = vsel %vm11304, %v11240, %v11368
  %v11433 = vsel %vm11305, %v11241, %v11369
  %v11434 = vsel %vm11306, %v11242, %v11370
  %v11435 = vsel %vm11307, %v11243, %v11371
  %v11436 = vsel %vm11308, %v11244, %v11372
  %v11437 = vsel %vm11309, %v11245, %v11373
  %v11438 = vsel %vm11310, %v11246, %v11374
  %v11439 = vsel %vm11311, %v11247, %v11375
  %v11440 = vsel %vm11312, %v11248, %v11376
  %v11441 = vsel %vm11313, %v11249, %v11377
  %v11442 = vsel %vm11314, %v11250, %v11378
  %v11443 = vsel %vm11315, %v11251, %v11379
  %v11444 = vsel %vm11316, %v11252, %v11380
  %v11445 = vsel %vm11317, %v11253, %v11381
  %v11446 = vsel %vm11318, %v11254, %v11382
  %v11447 = vsel %vm11319, %v11255, %v11383
  %v11448 = vsel %vm11320, %v11256, %v11384
  %v11449 = vsel %vm11321, %v11257, %v11385
  %v11450 = vsel %vm11322, %v11258, %v11386
  %v11451 = vsel %vm11323, %v11259, %v11387
  %v11452 = vsel %vm11324, %v11260, %v11388
  %v11453 = vsel %vm11325, %v11261, %v11389
  %v11454 = vsel %vm11326, %v11262, %v11390
  %v11455 = vsel %vm11327, %v11263, %v11391
  %v11456 = vsel %vm11328, %v11264, %v11392
  %v11457 = vsel %vm11329, %v11265, %v11393
  %v11458 = vsel %vm11330, %v11266, %v11394
  %v11459 = vsel %vm11331, %v11267, %v11395
  %v11460 = vsel %vm11332, %v11268, %v11396
  %v11461 = vsel %vm11333, %v11269, %v11397
  %v11462 = vsel %vm11334, %v11270, %v11398
  %v11463 = vsel %vm11335, %v11271, %v11399
  %v11464 = vsel %vm11336, %v11272, %v11400
  %v11465 = vsel %vm11337, %v11273, %v11401
  %v11466 = vsel %vm11338, %v11274, %v11402
  %v11467 = vsel %vm11339, %v11275, %v11403
  %v11468 = vsel %vm11340, %v11276, %v11404
  %v11469 = vsel %vm11341, %v11277, %v11405
  %v11470 = vsel %vm11342, %v11278, %v11406
  %v11471 = vsel %vm11343, %v11279, %v11407
  %v11472 = vsel %vm11344, %v11280, %v11408
  %v11473 = vsel %vm11345, %v11281, %v11409
  %v11474 = vsel %vm11346, %v11282, %v11410
  %v11475 = vsel %vm11347, %v11283, %v11411
  %v11476 = vsel %vm11348, %v11284, %v11412
  %v11477 = vsel %vm11349, %v11285, %v11413
  %v11478 = vsel %vm11350, %v11286, %v11414
  %v11479 = vsel %vm11351, %v11287, %v11415
  %v11480 = vsel %vm11352, %v11288, %v11416
  %v11481 = vsel %vm11353, %v11289, %v11417
  %v11482 = vsel %vm11354, %v11290, %v11418
  %v11483 = vsel %vm11355, %v11291, %v11419
  %v11484 = vsel %vm11356, %v11292, %v11420
  %v11485 = vsel %vm11357, %v11293, %v11421
  %v11486 = vsel %vm11358, %v11294, %v11422
  %v11487 = vsel %vm3264, %v11423, 0.0
  %v11488 = vsel %vm3264, %v11424, 0.0
  %v11489 = vadd.f32 %v11487, %v11488
  %v11490 = vsel %vm3264, %v11425, 0.0
  %v11491 = vadd.f32 %v11489, %v11490
  %v11492 = vsel %vm3264, %v11426, 0.0
  %v11493 = vadd.f32 %v11491, %v11492
  %v11494 = vsel %vm3264, %v11427, 0.0
  %v11495 = vadd.f32 %v11493, %v11494
  %v11496 = vsel %vm3264, %v11428, 0.0
  %v11497 = vadd.f32 %v11495, %v11496
  %v11498 = vsel %vm3264, %v11429, 0.0
  %v11499 = vadd.f32 %v11497, %v11498
  %v11500 = vsel %vm3264, %v11430, 0.0
  %v11501 = vadd.f32 %v11499, %v11500
  %v11502 = vsel %vm3264, %v11431, 0.0
  %v11503 = vadd.f32 %v11501, %v11502
  %v11504 = vsel %vm3264, %v11432, 0.0
  %v11505 = vadd.f32 %v11503, %v11504
  %v11506 = vsel %vm3264, %v11433, 0.0
  %v11507 = vadd.f32 %v11505, %v11506
  %v11508 = vsel %vm3264, %v11434, 0.0
  %v11509 = vadd.f32 %v11507, %v11508
  %v11510 = vsel %vm3264, %v11435, 0.0
  %v11511 = vadd.f32 %v11509, %v11510
  %v11512 = vsel %vm3264, %v11436, 0.0
  %v11513 = vadd.f32 %v11511, %v11512
  %v11514 = vsel %vm3264, %v11437, 0.0
  %v11515 = vadd.f32 %v11513, %v11514
  %v11516 = vsel %vm3264, %v11438, 0.0
  %v11517 = vadd.f32 %v11515, %v11516
  %v11518 = vsel %vm3264, %v11439, 0.0
  %v11519 = vadd.f32 %v11517, %v11518
  %v11520 = vsel %vm3264, %v11440, 0.0
  %v11521 = vadd.f32 %v11519, %v11520
  %v11522 = vsel %vm3264, %v11441, 0.0
  %v11523 = vadd.f32 %v11521, %v11522
  %v11524 = vsel %vm3264, %v11442, 0.0
  %v11525 = vadd.f32 %v11523, %v11524
  %v11526 = vsel %vm3264, %v11443, 0.0
  %v11527 = vadd.f32 %v11525, %v11526
  %v11528 = vsel %vm3264, %v11444, 0.0
  %v11529 = vadd.f32 %v11527, %v11528
  %v11530 = vsel %vm3264, %v11445, 0.0
  %v11531 = vadd.f32 %v11529, %v11530
  %v11532 = vsel %vm3264, %v11446, 0.0
  %v11533 = vadd.f32 %v11531, %v11532
  %v11534 = vsel %vm3264, %v11447, 0.0
  %v11535 = vadd.f32 %v11533, %v11534
  %v11536 = vsel %vm3264, %v11448, 0.0
  %v11537 = vadd.f32 %v11535, %v11536
  %v11538 = vsel %vm3264, %v11449, 0.0
  %v11539 = vadd.f32 %v11537, %v11538
  %v11540 = vsel %vm3264, %v11450, 0.0
  %v11541 = vadd.f32 %v11539, %v11540
  %v11542 = vsel %vm3264, %v11451, 0.0
  %v11543 = vadd.f32 %v11541, %v11542
  %v11544 = vsel %vm3264, %v11452, 0.0
  %v11545 = vadd.f32 %v11543, %v11544
  %v11546 = vsel %vm3264, %v11453, 0.0
  %v11547 = vadd.f32 %v11545, %v11546
  %v11548 = vsel %vm3264, %v11454, 0.0
  %v11549 = vadd.f32 %v11547, %v11548
  %v11550 = vrot.slane %v11549, 4
  %v11551 = vadd.f32 %v11549, %v11550
  %v11552 = vrot.slane %v11551, 2
  %v11553 = vadd.f32 %v11551, %v11552
  %v11554 = vrot.slane %v11553, 1
  %v11555 = vadd.f32 %v11553, %v11554
  %v11556 = vrcp.pop 256.0
  %v11557 = vmul.f32 %v11555, %v11556
  %v11558 = vld [vmem:[%s7] sm:$0xff]
  %v11559 = vld [vmem:[%s7 + $0x8] sm:$0xff]
  %v11560 = vld [vmem:[%s7 + $0x10] sm:$0xff]
  %v11561 = vld [vmem:[%s7 + $0x18] sm:$0xff]
  %v11562 = vld [vmem:[%s8] sm:$0x1]
  %v11564 = vsel %vm3264, %v11557, 0
  %11566 = vmatprep.subr.mxu0 0.0
  %11567 = vmatpush1.msra.mxu0 %v11558
  %11568 = vmatprep.subr.mxu0 0.0
  %11569 = vmatpush1.msra.mxu0 %v11559
  %11570 = vmatprep.subr.mxu0 0.0
  %11571 = vmatpush1.msra.mxu0 %v11560
  %11572 = vmatprep.subr.mxu0 0.0
  %11573 = vmatpush1.msra.mxu0 %v11561
  %11574 = vmatprep.subr.mxu0 0.0
  %11575 = vmatpush1.msra.mxu0 0.0
  %11576 = vmatprep.subr.mxu0 0.0
  %11577 = vmatpush1.msra.mxu0 0.0
  %11578 = vmatprep.subr.mxu0 0.0
  %11579 = vmatpush1.msra.mxu0 0.0
  %11580 = vmatprep.subr.mxu0 0.0
  %11581 = vmatpush1.msra.mxu0 0.0
  %11582 = vmatprep.subr.mxu0 0.0
  %11583 = vmatpush1.msra.mxu0 0.0
  %11584 = vmatprep.subr.mxu0 0.0
  %11585 = vmatpush1.msra.mxu0 0.0
  %11586 = vmatprep.subr.mxu0 0.0
  %11587 = vmatpush1.msra.mxu0 0.0
  %11588 = vmatprep.subr.mxu0 0.0
  %11589 = vmatpush1.msra.mxu0 0.0
  %11590 = vmatprep.subr.mxu0 0.0
  %11591 = vmatpush1.msra.mxu0 0.0
  %11592 = vmatprep.subr.mxu0 0.0
  %11593 = vmatpush1.msra.mxu0 0.0
  %11594 = vmatprep.subr.mxu0 0.0
  %11595 = vmatpush1.msra.mxu0 0.0
  %11596 = vmatprep.subr.mxu0 0.0
  %11597 = vmatpush1.msra.mxu0 0.0
  %11598 = vmatprep.subr.mxu0 0.0
  %11599 = vmatpush1.msra.mxu0 0.0
  %11600 = vmatprep.subr.mxu0 0.0
  %11601 = vmatpush1.msra.mxu0 0.0
  %11602 = vmatprep.subr.mxu0 0.0
  %11603 = vmatpush1.msra.mxu0 0.0
  %11604 = vmatprep.subr.mxu0 0.0
  %11605 = vmatpush1.msra.mxu0 0.0
  %11606 = vmatprep.subr.mxu0 0.0
  %11607 = vmatpush1.msra.mxu0 0.0
  %11608 = vmatprep.subr.mxu0 0.0
  %11609 = vmatpush1.msra.mxu0 0.0
  %11610 = vmatprep.subr.mxu0 0.0
  %11611 = vmatpush1.msra.mxu0 0.0
  %11612 = vmatprep.subr.mxu0 0.0
  %11613 = vmatpush1.msra.mxu0 0.0
  %11614 = vmatprep.subr.mxu0 0.0
  %11615 = vmatpush1.msra.mxu0 0.0
  %11616 = vmatprep.subr.mxu0 0.0
  %11617 = vmatpush1.msra.mxu0 0.0
  %11618 = vmatprep.subr.mxu0 0.0
  %11619 = vmatpush1.msra.mxu0 0.0
  %11620 = vmatprep.subr.mxu0 0.0
  %11621 = vmatpush1.msra.mxu0 0.0
  %11622 = vmatprep.subr.mxu0 0.0
  %11623 = vmatpush1.msra.mxu0 0.0
  %11624 = vmatprep.subr.mxu0 0.0
  %11625 = vmatpush1.msra.mxu0 0.0
  %11626 = vmatprep.subr.mxu0 0.0
  %11627 = vmatpush1.msra.mxu0 0.0
  %11628 = vmatprep.subr.mxu0 0.0
  %11629 = vmatpush1.msra.mxu0 0.0
  %11630 = vmatprep.mubr.f32.mxu0 0.0
  %11631 = vmatmul.mubr.f32.gmra.mrb[0].mxu0 %v11564
  %v11632 = vpop.f32.mrb[0].mxu0
  %v11633 = vadd.f32 %v11562, %v11632
  %v11634 = vpop.f32.mrb[0].mxu0
  %11635 = vdwg.mxu0
  %vm11636 = vcmp.gt.f32.partialorder %v11633, 0.0
  %v11637 = vmul.f32 %v11633, 0.01
  %v11638 = vsel %vm11636, %v11633, %v11637
  %v11639 = vld [vmem:[%s9] sm:$0xff]
  %v11640 = vld [vmem:[%s9 + $0x8] sm:$0xff]
  %v11641 = vld [vmem:[%s10] sm:$0x1]
  %vm11642 = vcmask 130048
  %v11644 = vsel %vm11642, %v11638, 0
  %11646 = vmatprep.subr.mxu0 0.0
  %11647 = vmatpush1.msra.mxu0 %v11639
  %11648 = vmatprep.subr.mxu0 0.0
  %11649 = vmatpush1.msra.mxu0 %v11640
  %11650 = vmatprep.subr.mxu0 0.0
  %11651 = vmatpush1.msra.mxu0 0.0
  %11652 = vmatprep.subr.mxu0 0.0
  %11653 = vmatpush1.msra.mxu0 0.0
  %11654 = vmatprep.subr.mxu0 0.0
  %11655 = vmatpush1.msra.mxu0 0.0
  %11656 = vmatprep.subr.mxu0 0.0
  %11657 = vmatpush1.msra.mxu0 0.0
  %11658 = vmatprep.subr.mxu0 0.0
  %11659 = vmatpush1.msra.mxu0 0.0
  %11660 = vmatprep.subr.mxu0 0.0
  %11661 = vmatpush1.msra.mxu0 0.0
  %11662 = vmatprep.subr.mxu0 0.0
  %11663 = vmatpush1.msra.mxu0 0.0
  %11664 = vmatprep.subr.mxu0 0.0
  %11665 = vmatpush1.msra.mxu0 0.0
  %11666 = vmatprep.subr.mxu0 0.0
  %11667 = vmatpush1.msra.mxu0 0.0
  %11668 = vmatprep.subr.mxu0 0.0
  %11669 = vmatpush1.msra.mxu0 0.0
  %11670 = vmatprep.subr.mxu0 0.0
  %11671 = vmatpush1.msra.mxu0 0.0
  %11672 = vmatprep.subr.mxu0 0.0
  %11673 = vmatpush1.msra.mxu0 0.0
  %11674 = vmatprep.subr.mxu0 0.0
  %11675 = vmatpush1.msra.mxu0 0.0
  %11676 = vmatprep.subr.mxu0 0.0
  %11677 = vmatpush1.msra.mxu0 0.0
  %11678 = vmatprep.subr.mxu0 0.0
  %11679 = vmatpush1.msra.mxu0 0.0
  %11680 = vmatprep.subr.mxu0 0.0
  %11681 = vmatpush1.msra.mxu0 0.0
  %11682 = vmatprep.subr.mxu0 0.0
  %11683 = vmatpush1.msra.mxu0 0.0
  %11684 = vmatprep.subr.mxu0 0.0
  %11685 = vmatpush1.msra.mxu0 0.0
  %11686 = vmatprep.subr.mxu0 0.0
  %11687 = vmatpush1.msra.mxu0 0.0
  %11688 = vmatprep.subr.mxu0 0.0
  %11689 = vmatpush1.msra.mxu0 0.0
  %11690 = vmatprep.subr.mxu0 0.0
  %11691 = vmatpush1.msra.mxu0 0.0
  %11692 = vmatprep.subr.mxu0 0.0
  %11693 = vmatpush1.msra.mxu0 0.0
  %11694 = vmatprep.subr.mxu0 0.0
  %11695 = vmatpush1.msra.mxu0 0.0
  %11696 = vmatprep.subr.mxu0 0.0
  %11697 = vmatpush1.msra.mxu0 0.0
  %11698 = vmatprep.subr.mxu0 0.0
  %11699 = vmatpush1.msra.mxu0 0.0
  %11700 = vmatprep.subr.mxu0 0.0
  %11701 = vmatpush1.msra.mxu0 0.0
  %11702 = vmatprep.subr.mxu0 0.0
  %11703 = vmatpush1.msra.mxu0 0.0
  %11704 = vmatprep.subr.mxu0 0.0
  %11705 = vmatpush1.msra.mxu0 0.0
  %11706 = vmatprep.subr.mxu0 0.0
  %11707 = vmatpush1.msra.mxu0 0.0
  %11708 = vmatprep.subr.mxu0 0.0
  %11709 = vmatpush1.msra.mxu0 0.0
  %11710 = vmatprep.mubr.f32.mxu0 0.0
  %11711 = vmatmul.mubr.f32.gmra.mrb[0].mxu0 %v11644
  %v11712 = vpop.f32.mrb[0].mxu0
  %v11713 = vadd.f32 %v11641, %v11712
  %v11714 = vpop.f32.mrb[0].mxu0
  %11715 = vdwg.mxu0
  %v11716 = vmax.f32 %v11713, 0.0
  %v11717 = vadd.f32 %v11716, 1.0
  %v11718 = vlaneseq
  %v11719 = vshrl.u32 %v11718, 7
  %v11720 = vsub.s32 0, %v11719
  %v11721 = vrot.slane %v11717, %v11720
  %v11722 = vmul.f32 %v11423, %v11721
  %v11723 = vmul.f32 %v11424, %v11721
  %v11724 = vmul.f32 %v11425, %v11721
  %v11725 = vmul.f32 %v11426, %v11721
  %v11726 = vmul.f32 %v11427, %v11721
  %v11727 = vmul.f32 %v11428, %v11721
  %v11728 = vmul.f32 %v11429, %v11721
  %v11729 = vmul.f32 %v11430, %v11721
  %v11730 = vmul.f32 %v11431, %v11721
  %v11731 = vmul.f32 %v11432, %v11721
  %v11732 = vmul.f32 %v11433, %v11721
  %v11733 = vmul.f32 %v11434, %v11721
  %v11734 = vmul.f32 %v11435, %v11721
  %v11735 = vmul.f32 %v11436, %v11721
  %v11736 = vmul.f32 %v11437, %v11721
  %v11737 = vmul.f32 %v11438, %v11721
  %v11738 = vmul.f32 %v11439, %v11721
  %v11739 = vmul.f32 %v11440, %v11721
  %v11740 = vmul.f32 %v11441, %v11721
  %v11741 = vmul.f32 %v11442, %v11721
  %v11742 = vmul.f32 %v11443, %v11721
  %v11743 = vmul.f32 %v11444, %v11721
  %v11744 = vmul.f32 %v11445, %v11721
  %v11745 = vmul.f32 %v11446, %v11721
  %v11746 = vmul.f32 %v11447, %v11721
  %v11747 = vmul.f32 %v11448, %v11721
  %v11748 = vmul.f32 %v11449, %v11721
  %v11749 = vmul.f32 %v11450, %v11721
  %v11750 = vmul.f32 %v11451, %v11721
  %v11751 = vmul.f32 %v11452, %v11721
  %v11752 = vmul.f32 %v11453, %v11721
  %v11753 = vmul.f32 %v11454, %v11721
  %v11754 = vpack.c.bf16 %v11723, %v11722
  %v11755 = vpack.c.bf16 %v11725, %v11724
  %v11756 = vpack.c.bf16 %v11727, %v11726
  %v11757 = vpack.c.bf16 %v11729, %v11728
  %v11758 = vpack.c.bf16 %v11731, %v11730
  %v11759 = vpack.c.bf16 %v11733, %v11732
  %v11760 = vpack.c.bf16 %v11735, %v11734
  %v11761 = vpack.c.bf16 %v11737, %v11736
  %v11762 = vpack.c.bf16 %v11739, %v11738
  %v11763 = vpack.c.bf16 %v11741, %v11740
  %v11764 = vpack.c.bf16 %v11743, %v11742
  %v11765 = vpack.c.bf16 %v11745, %v11744
  %v11766 = vpack.c.bf16 %v11747, %v11746
  %v11767 = vpack.c.bf16 %v11749, %v11748
  %v11768 = vpack.c.bf16 %v11751, %v11750
  %v11769 = vpack.c.bf16 %v11753, %v11752
  %v11786 = vunpack.c.l.b16 %v11754
  %v11787 = vunpack.c.h.b16 %v11754
  %v11788 = vunpack.c.l.b16 %v11755
  %v11789 = vunpack.c.h.b16 %v11755
  %v11790 = vunpack.c.l.b16 %v11756
  %v11791 = vunpack.c.h.b16 %v11756
  %v11792 = vunpack.c.l.b16 %v11757
  %v11793 = vunpack.c.h.b16 %v11757
  %v11794 = vunpack.c.l.b16 %v11758
  %v11795 = vunpack.c.h.b16 %v11758
  %v11796 = vunpack.c.l.b16 %v11759
  %v11797 = vunpack.c.h.b16 %v11759
  %v11798 = vunpack.c.l.b16 %v11760
  %v11799 = vunpack.c.h.b16 %v11760
  %v11800 = vunpack.c.l.b16 %v11761
  %v11801 = vunpack.c.h.b16 %v11761
  %v11802 = vunpack.c.l.b16 %v11762
  %v11803 = vunpack.c.h.b16 %v11762
  %v11804 = vunpack.c.l.b16 %v11763
  %v11805 = vunpack.c.h.b16 %v11763
  %v11806 = vunpack.c.l.b16 %v11764
  %v11807 = vunpack.c.h.b16 %v11764
  %v11808 = vunpack.c.l.b16 %v11765
  %v11809 = vunpack.c.h.b16 %v11765
  %v11810 = vunpack.c.l.b16 %v11766
  %v11811 = vunpack.c.h.b16 %v11766
  %v11812 = vunpack.c.l.b16 %v11767
  %v11813 = vunpack.c.h.b16 %v11767
  %v11814 = vunpack.c.l.b16 %v11768
  %v11815 = vunpack.c.h.b16 %v11768
  %v11816 = vunpack.c.l.b16 %v11769
  %v11817 = vunpack.c.h.b16 %v11769
  %v11818 = vpack.c.b16 %v11786, %v11786
  %v11819 = vpack.c.b16 %v11787, %v11787
  %v11820 = vpack.c.b16 %v11788, %v11788
  %v11821 = vpack.c.b16 %v11789, %v11789
  %v11822 = vpack.c.b16 %v11790, %v11790
  %v11823 = vpack.c.b16 %v11791, %v11791
  %v11824 = vpack.c.b16 %v11792, %v11792
  %v11825 = vpack.c.b16 %v11793, %v11793
  %v11826 = vpack.c.b16 %v11794, %v11794
  %v11827 = vpack.c.b16 %v11795, %v11795
  %v11828 = vpack.c.b16 %v11796, %v11796
  %v11829 = vpack.c.b16 %v11797, %v11797
  %v11830 = vpack.c.b16 %v11798, %v11798
  %v11831 = vpack.c.b16 %v11799, %v11799
  %v11832 = vpack.c.b16 %v11800, %v11800
  %v11833 = vpack.c.b16 %v11801, %v11801
  %v11834 = vpack.c.b16 %v11802, %v11802
  %v11835 = vpack.c.b16 %v11803, %v11803
  %v11836 = vpack.c.b16 %v11804, %v11804
  %v11837 = vpack.c.b16 %v11805, %v11805
  %v11838 = vpack.c.b16 %v11806, %v11806
  %v11839 = vpack.c.b16 %v11807, %v11807
  %v11840 = vpack.c.b16 %v11808, %v11808
  %v11841 = vpack.c.b16 %v11809, %v11809
  %v11842 = vpack.c.b16 %v11810, %v11810
  %v11843 = vpack.c.b16 %v11811, %v11811
  %v11844 = vpack.c.b16 %v11812, %v11812
  %v11845 = vpack.c.b16 %v11813, %v11813
  %v11846 = vpack.c.b16 %v11814, %v11814
  %v11847 = vpack.c.b16 %v11815, %v11815
  %v11848 = vpack.c.b16 %v11816, %v11816
  %v11849 = vpack.c.b16 %v11817, %v11817
  %11882 = vst.msk [vmem:[%s11] sm:$0xf] %vm1007, %v11818
  %11883 = vst.msk [vmem:[%s11 + $0x4] sm:$0xf] %vm1007, %v11819
  %11884 = vst.msk [vmem:[%s11 + $0x8] sm:$0xf] %vm1007, %v11820
  %11885 = vst.msk [vmem:[%s11 + $0xc] sm:$0xf] %vm1007, %v11821
  %11886 = vst.msk [vmem:[%s11 + $0x10] sm:$0xf] %vm1007, %v11822
  %11887 = vst.msk [vmem:[%s11 + $0x14] sm:$0xf] %vm1007, %v11823
  %11888 = vst.msk [vmem:[%s11 + $0x18] sm:$0xf] %vm1007, %v11824
  %11889 = vst.msk [vmem:[%s11 + $0x1c] sm:$0xf] %vm1007, %v11825
  %11890 = vst.msk [vmem:[%s11 + $0x20] sm:$0xf] %vm1007, %v11826
  %11891 = vst.msk [vmem:[%s11 + $0x24] sm:$0xf] %vm1007, %v11827
  %11892 = vst.msk [vmem:[%s11 + $0x28] sm:$0xf] %vm1007, %v11828
  %11893 = vst.msk [vmem:[%s11 + $0x2c] sm:$0xf] %vm1007, %v11829
  %11894 = vst.msk [vmem:[%s11 + $0x30] sm:$0xf] %vm1007, %v11830
  %11895 = vst.msk [vmem:[%s11 + $0x34] sm:$0xf] %vm1007, %v11831
  %11896 = vst.msk [vmem:[%s11 + $0x38] sm:$0xf] %vm1007, %v11832
  %11897 = vst.msk [vmem:[%s11 + $0x3c] sm:$0xf] %vm1007, %v11833
  %11898 = vst.msk [vmem:[%s11 + $0x40] sm:$0xf] %vm1007, %v11834
  %11899 = vst.msk [vmem:[%s11 + $0x44] sm:$0xf] %vm1007, %v11835
  %11900 = vst.msk [vmem:[%s11 + $0x48] sm:$0xf] %vm1007, %v11836
  %11901 = vst.msk [vmem:[%s11 + $0x4c] sm:$0xf] %vm1007, %v11837
  %11902 = vst.msk [vmem:[%s11 + $0x50] sm:$0xf] %vm1007, %v11838
  %11903 = vst.msk [vmem:[%s11 + $0x54] sm:$0xf] %vm1007, %v11839
  %11904 = vst.msk [vmem:[%s11 + $0x58] sm:$0xf] %vm1007, %v11840
  %11905 = vst.msk [vmem:[%s11 + $0x5c] sm:$0xf] %vm1007, %v11841
  %11906 = vst.msk [vmem:[%s11 + $0x60] sm:$0xf] %vm1007, %v11842
  %11907 = vst.msk [vmem:[%s11 + $0x64] sm:$0xf] %vm1007, %v11843
  %11908 = vst.msk [vmem:[%s11 + $0x68] sm:$0xf] %vm1007, %v11844
  %11909 = vst.msk [vmem:[%s11 + $0x6c] sm:$0xf] %vm1007, %v11845
  %11910 = vst.msk [vmem:[%s11 + $0x70] sm:$0xf] %vm1007, %v11846
  %11911 = vst.msk [vmem:[%s11 + $0x74] sm:$0xf] %vm1007, %v11847
  %11912 = vst.msk [vmem:[%s11 + $0x78] sm:$0xf] %vm1007, %v11848
  %11913 = vst.msk [vmem:[%s11 + $0x7c] sm:$0xf] %vm1007, %v11849
  %v11914 = vsel %vm3264, %v11455, 0.0
  %v11915 = vsel %vm3264, %v11456, 0.0
  %v11916 = vadd.f32 %v11914, %v11915
  %v11917 = vsel %vm3264, %v11457, 0.0
  %v11918 = vadd.f32 %v11916, %v11917
  %v11919 = vsel %vm3264, %v11458, 0.0
  %v11920 = vadd.f32 %v11918, %v11919
  %v11921 = vsel %vm3264, %v11459, 0.0
  %v11922 = vadd.f32 %v11920, %v11921
  %v11923 = vsel %vm3264, %v11460, 0.0
  %v11924 = vadd.f32 %v11922, %v11923
  %v11925 = vsel %vm3264, %v11461, 0.0
  %v11926 = vadd.f32 %v11924, %v11925
  %v11927 = vsel %vm3264, %v11462, 0.0
  %v11928 = vadd.f32 %v11926, %v11927
  %v11929 = vsel %vm3264, %v11463, 0.0
  %v11930 = vadd.f32 %v11928, %v11929
  %v11931 = vsel %vm3264, %v11464, 0.0
  %v11932 = vadd.f32 %v11930, %v11931
  %v11933 = vsel %vm3264, %v11465, 0.0
  %v11934 = vadd.f32 %v11932, %v11933
  %v11935 = vsel %vm3264, %v11466, 0.0
  %v11936 = vadd.f32 %v11934, %v11935
  %v11937 = vsel %vm3264, %v11467, 0.0
  %v11938 = vadd.f32 %v11936, %v11937
  %v11939 = vsel %vm3264, %v11468, 0.0
  %v11940 = vadd.f32 %v11938, %v11939
  %v11941 = vsel %vm3264, %v11469, 0.0
  %v11942 = vadd.f32 %v11940, %v11941
  %v11943 = vsel %vm3264, %v11470, 0.0
  %v11944 = vadd.f32 %v11942, %v11943
  %v11945 = vsel %vm3264, %v11471, 0.0
  %v11946 = vadd.f32 %v11944, %v11945
  %v11947 = vsel %vm3264, %v11472, 0.0
  %v11948 = vadd.f32 %v11946, %v11947
  %v11949 = vsel %vm3264, %v11473, 0.0
  %v11950 = vadd.f32 %v11948, %v11949
  %v11951 = vsel %vm3264, %v11474, 0.0
  %v11952 = vadd.f32 %v11950, %v11951
  %v11953 = vsel %vm3264, %v11475, 0.0
  %v11954 = vadd.f32 %v11952, %v11953
  %v11955 = vsel %vm3264, %v11476, 0.0
  %v11956 = vadd.f32 %v11954, %v11955
  %v11957 = vsel %vm3264, %v11477, 0.0
  %v11958 = vadd.f32 %v11956, %v11957
  %v11959 = vsel %vm3264, %v11478, 0.0
  %v11960 = vadd.f32 %v11958, %v11959
  %v11961 = vsel %vm3264, %v11479, 0.0
  %v11962 = vadd.f32 %v11960, %v11961
  %v11963 = vsel %vm3264, %v11480, 0.0
  %v11964 = vadd.f32 %v11962, %v11963
  %v11965 = vsel %vm3264, %v11481, 0.0
  %v11966 = vadd.f32 %v11964, %v11965
  %v11967 = vsel %vm3264, %v11482, 0.0
  %v11968 = vadd.f32 %v11966, %v11967
  %v11969 = vsel %vm3264, %v11483, 0.0
  %v11970 = vadd.f32 %v11968, %v11969
  %v11971 = vsel %vm3264, %v11484, 0.0
  %v11972 = vadd.f32 %v11970, %v11971
  %v11973 = vsel %vm3264, %v11485, 0.0
  %v11974 = vadd.f32 %v11972, %v11973
  %v11975 = vsel %vm3264, %v11486, 0.0
  %v11976 = vadd.f32 %v11974, %v11975
  %v11977 = vrot.slane %v11976, 4
  %v11978 = vadd.f32 %v11976, %v11977
  %v11979 = vrot.slane %v11978, 2
  %v11980 = vadd.f32 %v11978, %v11979
  %v11981 = vrot.slane %v11980, 1
  %v11982 = vadd.f32 %v11980, %v11981
  %v11983 = vmul.f32 %v11982, %v11556
  %v11984 = vld [vmem:[%s7] sm:$0xff]
  %v11985 = vld [vmem:[%s7 + $0x8] sm:$0xff]
  %v11986 = vld [vmem:[%s7 + $0x10] sm:$0xff]
  %v11987 = vld [vmem:[%s7 + $0x18] sm:$0xff]
  %v11988 = vld [vmem:[%s8] sm:$0x1]
  %v11990 = vsel %vm3264, %v11983, 0
  %11992 = vmatprep.subr.mxu0 0.0
  %11993 = vmatpush1.msra.mxu0 %v11984
  %11994 = vmatprep.subr.mxu0 0.0
  %11995 = vmatpush1.msra.mxu0 %v11985
  %11996 = vmatprep.subr.mxu0 0.0
  %11997 = vmatpush1.msra.mxu0 %v11986
  %11998 = vmatprep.subr.mxu0 0.0
  %11999 = vmatpush1.msra.mxu0 %v11987
  %12000 = vmatprep.subr.mxu0 0.0
  %12001 = vmatpush1.msra.mxu0 0.0
  %12002 = vmatprep.subr.mxu0 0.0
  %12003 = vmatpush1.msra.mxu0 0.0
  %12004 = vmatprep.subr.mxu0 0.0
  %12005 = vmatpush1.msra.mxu0 0.0
  %12006 = vmatprep.subr.mxu0 0.0
  %12007 = vmatpush1.msra.mxu0 0.0
  %12008 = vmatprep.subr.mxu0 0.0
  %12009 = vmatpush1.msra.mxu0 0.0
  %12010 = vmatprep.subr.mxu0 0.0
  %12011 = vmatpush1.msra.mxu0 0.0
  %12012 = vmatprep.subr.mxu0 0.0
  %12013 = vmatpush1.msra.mxu0 0.0
  %12014 = vmatprep.subr.mxu0 0.0
  %12015 = vmatpush1.msra.mxu0 0.0
  %12016 = vmatprep.subr.mxu0 0.0
  %12017 = vmatpush1.msra.mxu0 0.0
  %12018 = vmatprep.subr.mxu0 0.0
  %12019 = vmatpush1.msra.mxu0 0.0
  %12020 = vmatprep.subr.mxu0 0.0
  %12021 = vmatpush1.msra.mxu0 0.0
  %12022 = vmatprep.subr.mxu0 0.0
  %12023 = vmatpush1.msra.mxu0 0.0
  %12024 = vmatprep.subr.mxu0 0.0
  %12025 = vmatpush1.msra.mxu0 0.0
  %12026 = vmatprep.subr.mxu0 0.0
  %12027 = vmatpush1.msra.mxu0 0.0
  %12028 = vmatprep.subr.mxu0 0.0
  %12029 = vmatpush1.msra.mxu0 0.0
  %12030 = vmatprep.subr.mxu0 0.0
  %12031 = vmatpush1.msra.mxu0 0.0
  %12032 = vmatprep.subr.mxu0 0.0
  %12033 = vmatpush1.msra.mxu0 0.0
  %12034 = vmatprep.subr.mxu0 0.0
  %12035 = vmatpush1.msra.mxu0 0.0
  %12036 = vmatprep.subr.mxu0 0.0
  %12037 = vmatpush1.msra.mxu0 0.0
  %12038 = vmatprep.subr.mxu0 0.0
  %12039 = vmatpush1.msra.mxu0 0.0
  %12040 = vmatprep.subr.mxu0 0.0
  %12041 = vmatpush1.msra.mxu0 0.0
  %12042 = vmatprep.subr.mxu0 0.0
  %12043 = vmatpush1.msra.mxu0 0.0
  %12044 = vmatprep.subr.mxu0 0.0
  %12045 = vmatpush1.msra.mxu0 0.0
  %12046 = vmatprep.subr.mxu0 0.0
  %12047 = vmatpush1.msra.mxu0 0.0
  %12048 = vmatprep.subr.mxu0 0.0
  %12049 = vmatpush1.msra.mxu0 0.0
  %12050 = vmatprep.subr.mxu0 0.0
  %12051 = vmatpush1.msra.mxu0 0.0
  %12052 = vmatprep.subr.mxu0 0.0
  %12053 = vmatpush1.msra.mxu0 0.0
  %12054 = vmatprep.subr.mxu0 0.0
  %12055 = vmatpush1.msra.mxu0 0.0
  %12056 = vmatprep.mubr.f32.mxu0 0.0
  %12057 = vmatmul.mubr.f32.gmra.mrb[0].mxu0 %v11990
  %v12058 = vpop.f32.mrb[0].mxu0
  %v12059 = vadd.f32 %v11988, %v12058
  %v12060 = vpop.f32.mrb[0].mxu0
  %12061 = vdwg.mxu0
  %vm12062 = vcmp.gt.f32.partialorder %v12059, 0.0
  %v12063 = vmul.f32 %v12059, 0.01
  %v12064 = vsel %vm12062, %v12059, %v12063
  %v12065 = vld [vmem:[%s9] sm:$0xff]
  %v12066 = vld [vmem:[%s9 + $0x8] sm:$0xff]
  %v12067 = vld [vmem:[%s10] sm:$0x1]
  %v12069 = vsel %vm11642, %v12064, 0
  %12071 = vmatprep.subr.mxu0 0.0
  %12072 = vmatpush1.msra.mxu0 %v12065
  %12073 = vmatprep.subr.mxu0 0.0
  %12074 = vmatpush1.msra.mxu0 %v12066
  %12075 = vmatprep.subr.mxu0 0.0
  %12076 = vmatpush1.msra.mxu0 0.0
  %12077 = vmatprep.subr.mxu0 0.0
  %12078 = vmatpush1.msra.mxu0 0.0
  %12079 = vmatprep.subr.mxu0 0.0
  %12080 = vmatpush1.msra.mxu0 0.0
  %12081 = vmatprep.subr.mxu0 0.0
  %12082 = vmatpush1.msra.mxu0 0.0
  %12083 = vmatprep.subr.mxu0 0.0
  %12084 = vmatpush1.msra.mxu0 0.0
  %12085 = vmatprep.subr.mxu0 0.0
  %12086 = vmatpush1.msra.mxu0 0.0
  %12087 = vmatprep.subr.mxu0 0.0
  %12088 = vmatpush1.msra.mxu0 0.0
  %12089 = vmatprep.subr.mxu0 0.0
  %12090 = vmatpush1.msra.mxu0 0.0
  %12091 = vmatprep.subr.mxu0 0.0
  %12092 = vmatpush1.msra.mxu0 0.0
  %12093 = vmatprep.subr.mxu0 0.0
  %12094 = vmatpush1.msra.mxu0 0.0
  %12095 = vmatprep.subr.mxu0 0.0
  %12096 = vmatpush1.msra.mxu0 0.0
  %12097 = vmatprep.subr.mxu0 0.0
  %12098 = vmatpush1.msra.mxu0 0.0
  %12099 = vmatprep.subr.mxu0 0.0
  %12100 = vmatpush1.msra.mxu0 0.0
  %12101 = vmatprep.subr.mxu0 0.0
  %12102 = vmatpush1.msra.mxu0 0.0
  %12103 = vmatprep.subr.mxu0 0.0
  %12104 = vmatpush1.msra.mxu0 0.0
  %12105 = vmatprep.subr.mxu0 0.0
  %12106 = vmatpush1.msra.mxu0 0.0
  %12107 = vmatprep.subr.mxu0 0.0
  %12108 = vmatpush1.msra.mxu0 0.0
  %12109 = vmatprep.subr.mxu0 0.0
  %12110 = vmatpush1.msra.mxu0 0.0
  %12111 = vmatprep.subr.mxu0 0.0
  %12112 = vmatpush1.msra.mxu0 0.0
  %12113 = vmatprep.subr.mxu0 0.0
  %12114 = vmatpush1.msra.mxu0 0.0
  %12115 = vmatprep.subr.mxu0 0.0
  %12116 = vmatpush1.msra.mxu0 0.0
  %12117 = vmatprep.subr.mxu0 0.0
  %12118 = vmatpush1.msra.mxu0 0.0
  %12119 = vmatprep.subr.mxu0 0.0
  %12120 = vmatpush1.msra.mxu0 0.0
  %12121 = vmatprep.subr.mxu0 0.0
  %12122 = vmatpush1.msra.mxu0 0.0
  %12123 = vmatprep.subr.mxu0 0.0
  %12124 = vmatpush1.msra.mxu0 0.0
  %12125 = vmatprep.subr.mxu0 0.0
  %12126 = vmatpush1.msra.mxu0 0.0
  %12127 = vmatprep.subr.mxu0 0.0
  %12128 = vmatpush1.msra.mxu0 0.0
  %12129 = vmatprep.subr.mxu0 0.0
  %12130 = vmatpush1.msra.mxu0 0.0
  %12131 = vmatprep.subr.mxu0 0.0
  %12132 = vmatpush1.msra.mxu0 0.0
  %12133 = vmatprep.subr.mxu0 0.0
  %12134 = vmatpush1.msra.mxu0 0.0
  %12135 = vmatprep.mubr.f32.mxu0 0.0
  %12136 = vmatmul.mubr.f32.gmra.mrb[0].mxu0 %v12069
  %v12137 = vpop.f32.mrb[0].mxu0
  %v12138 = vadd.f32 %v12067, %v12137
  %v12139 = vpop.f32.mrb[0].mxu0
  %12140 = vdwg.mxu0
  %v12141 = vmax.f32 %v12138, 0.0
  %v12142 = vadd.f32 %v12141, 1.0
  %v12143 = vlaneseq
  %v12144 = vshrl.u32 %v12143, 7
  %v12145 = vsub.s32 0, %v12144
  %v12146 = vrot.slane %v12142, %v12145
  %v12147 = vmul.f32 %v11455, %v12146
  %v12148 = vmul.f32 %v11456, %v12146
  %v12149 = vmul.f32 %v11457, %v12146
  %v12150 = vmul.f32 %v11458, %v12146
  %v12151 = vmul.f32 %v11459, %v12146
  %v12152 = vmul.f32 %v11460, %v12146
  %v12153 = vmul.f32 %v11461, %v12146
  %v12154 = vmul.f32 %v11462, %v12146
  %v12155 = vmul.f32 %v11463, %v12146
  %v12156 = vmul.f32 %v11464, %v12146
  %v12157 = vmul.f32 %v11465, %v12146
  %v12158 = vmul.f32 %v11466, %v12146
  %v12159 = vmul.f32 %v11467, %v12146
  %v12160 = vmul.f32 %v11468, %v12146
  %v12161 = vmul.f32 %v11469, %v12146
  %v12162 = vmul.f32 %v11470, %v12146
  %v12163 = vmul.f32 %v11471, %v12146
  %v12164 = vmul.f32 %v11472, %v12146
  %v12165 = vmul.f32 %v11473, %v12146
  %v12166 = vmul.f32 %v11474, %v12146
  %v12167 = vmul.f32 %v11475, %v12146
  %v12168 = vmul.f32 %v11476, %v12146
  %v12169 = vmul.f32 %v11477, %v12146
  %v12170 = vmul.f32 %v11478, %v12146
  %v12171 = vmul.f32 %v11479, %v12146
  %v12172 = vmul.f32 %v11480, %v12146
  %v12173 = vmul.f32 %v11481, %v12146
  %v12174 = vmul.f32 %v11482, %v12146
  %v12175 = vmul.f32 %v11483, %v12146
  %v12176 = vmul.f32 %v11484, %v12146
  %v12177 = vmul.f32 %v11485, %v12146
  %v12178 = vmul.f32 %v11486, %v12146
  %v12179 = vpack.c.bf16 %v12148, %v12147
  %v12180 = vpack.c.bf16 %v12150, %v12149
  %v12181 = vpack.c.bf16 %v12152, %v12151
  %v12182 = vpack.c.bf16 %v12154, %v12153
  %v12183 = vpack.c.bf16 %v12156, %v12155
  %v12184 = vpack.c.bf16 %v12158, %v12157
  %v12185 = vpack.c.bf16 %v12160, %v12159
  %v12186 = vpack.c.bf16 %v12162, %v12161
  %v12187 = vpack.c.bf16 %v12164, %v12163
  %v12188 = vpack.c.bf16 %v12166, %v12165
  %v12189 = vpack.c.bf16 %v12168, %v12167
  %v12190 = vpack.c.bf16 %v12170, %v12169
  %v12191 = vpack.c.bf16 %v12172, %v12171
  %v12192 = vpack.c.bf16 %v12174, %v12173
  %v12193 = vpack.c.bf16 %v12176, %v12175
  %v12194 = vpack.c.bf16 %v12178, %v12177
  %v12211 = vunpack.c.l.b16 %v12179
  %v12212 = vunpack.c.h.b16 %v12179
  %v12213 = vunpack.c.l.b16 %v12180
  %v12214 = vunpack.c.h.b16 %v12180
  %v12215 = vunpack.c.l.b16 %v12181
  %v12216 = vunpack.c.h.b16 %v12181
  %v12217 = vunpack.c.l.b16 %v12182
  %v12218 = vunpack.c.h.b16 %v12182
  %v12219 = vunpack.c.l.b16 %v12183
  %v12220 = vunpack.c.h.b16 %v12183
  %v12221 = vunpack.c.l.b16 %v12184
  %v12222 = vunpack.c.h.b16 %v12184
  %v12223 = vunpack.c.l.b16 %v12185
  %v12224 = vunpack.c.h.b16 %v12185
  %v12225 = vunpack.c.l.b16 %v12186
  %v12226 = vunpack.c.h.b16 %v12186
  %v12227 = vunpack.c.l.b16 %v12187
  %v12228 = vunpack.c.h.b16 %v12187
  %v12229 = vunpack.c.l.b16 %v12188
  %v12230 = vunpack.c.h.b16 %v12188
  %v12231 = vunpack.c.l.b16 %v12189
  %v12232 = vunpack.c.h.b16 %v12189
  %v12233 = vunpack.c.l.b16 %v12190
  %v12234 = vunpack.c.h.b16 %v12190
  %v12235 = vunpack.c.l.b16 %v12191
  %v12236 = vunpack.c.h.b16 %v12191
  %v12237 = vunpack.c.l.b16 %v12192
  %v12238 = vunpack.c.h.b16 %v12192
  %v12239 = vunpack.c.l.b16 %v12193
  %v12240 = vunpack.c.h.b16 %v12193
  %v12241 = vunpack.c.l.b16 %v12194
  %v12242 = vunpack.c.h.b16 %v12194
  %v12243 = vpack.c.b16 %v12211, %v12211
  %v12244 = vpack.c.b16 %v12212, %v12212
  %v12245 = vpack.c.b16 %v12213, %v12213
  %v12246 = vpack.c.b16 %v12214, %v12214
  %v12247 = vpack.c.b16 %v12215, %v12215
  %v12248 = vpack.c.b16 %v12216, %v12216
  %v12249 = vpack.c.b16 %v12217, %v12217
  %v12250 = vpack.c.b16 %v12218, %v12218
  %v12251 = vpack.c.b16 %v12219, %v12219
  %v12252 = vpack.c.b16 %v12220, %v12220
  %v12253 = vpack.c.b16 %v12221, %v12221
  %v12254 = vpack.c.b16 %v12222, %v12222
  %v12255 = vpack.c.b16 %v12223, %v12223
  %v12256 = vpack.c.b16 %v12224, %v12224
  %v12257 = vpack.c.b16 %v12225, %v12225
  %v12258 = vpack.c.b16 %v12226, %v12226
  %v12259 = vpack.c.b16 %v12227, %v12227
  %v12260 = vpack.c.b16 %v12228, %v12228
  %v12261 = vpack.c.b16 %v12229, %v12229
  %v12262 = vpack.c.b16 %v12230, %v12230
  %v12263 = vpack.c.b16 %v12231, %v12231
  %v12264 = vpack.c.b16 %v12232, %v12232
  %v12265 = vpack.c.b16 %v12233, %v12233
  %v12266 = vpack.c.b16 %v12234, %v12234
  %v12267 = vpack.c.b16 %v12235, %v12235
  %v12268 = vpack.c.b16 %v12236, %v12236
  %v12269 = vpack.c.b16 %v12237, %v12237
  %v12270 = vpack.c.b16 %v12238, %v12238
  %v12271 = vpack.c.b16 %v12239, %v12239
  %v12272 = vpack.c.b16 %v12240, %v12240
  %v12273 = vpack.c.b16 %v12241, %v12241
  %v12274 = vpack.c.b16 %v12242, %v12242
  %s12307 = scalar_lea.vmem %s11, 128
  %12308 = vst.msk [vmem:[%s12307] sm:$0xf] %vm1007, %v12243
  %12309 = vst.msk [vmem:[%s12307 + $0x4] sm:$0xf] %vm1007, %v12244
  %12310 = vst.msk [vmem:[%s12307 + $0x8] sm:$0xf] %vm1007, %v12245
  %12311 = vst.msk [vmem:[%s12307 + $0xc] sm:$0xf] %vm1007, %v12246
  %12312 = vst.msk [vmem:[%s12307 + $0x10] sm:$0xf] %vm1007, %v12247
  %12313 = vst.msk [vmem:[%s12307 + $0x14] sm:$0xf] %vm1007, %v12248
  %12314 = vst.msk [vmem:[%s12307 + $0x18] sm:$0xf] %vm1007, %v12249
  %12315 = vst.msk [vmem:[%s12307 + $0x1c] sm:$0xf] %vm1007, %v12250
  %12316 = vst.msk [vmem:[%s12307 + $0x20] sm:$0xf] %vm1007, %v12251
  %12317 = vst.msk [vmem:[%s12307 + $0x24] sm:$0xf] %vm1007, %v12252
  %12318 = vst.msk [vmem:[%s12307 + $0x28] sm:$0xf] %vm1007, %v12253
  %12319 = vst.msk [vmem:[%s12307 + $0x2c] sm:$0xf] %vm1007, %v12254
  %12320 = vst.msk [vmem:[%s12307 + $0x30] sm:$0xf] %vm1007, %v12255
  %12321 = vst.msk [vmem:[%s12307 + $0x34] sm:$0xf] %vm1007, %v12256
  %12322 = vst.msk [vmem:[%s12307 + $0x38] sm:$0xf] %vm1007, %v12257
  %12323 = vst.msk [vmem:[%s12307 + $0x3c] sm:$0xf] %vm1007, %v12258
  %12324 = vst.msk [vmem:[%s12307 + $0x40] sm:$0xf] %vm1007, %v12259
  %12325 = vst.msk [vmem:[%s12307 + $0x44] sm:$0xf] %vm1007, %v12260
  %12326 = vst.msk [vmem:[%s12307 + $0x48] sm:$0xf] %vm1007, %v12261
  %12327 = vst.msk [vmem:[%s12307 + $0x4c] sm:$0xf] %vm1007, %v12262
  %12328 = vst.msk [vmem:[%s12307 + $0x50] sm:$0xf] %vm1007, %v12263
  %12329 = vst.msk [vmem:[%s12307 + $0x54] sm:$0xf] %vm1007, %v12264
  %12330 = vst.msk [vmem:[%s12307 + $0x58] sm:$0xf] %vm1007, %v12265
  %12331 = vst.msk [vmem:[%s12307 + $0x5c] sm:$0xf] %vm1007, %v12266
  %12332 = vst.msk [vmem:[%s12307 + $0x60] sm:$0xf] %vm1007, %v12267
  %12333 = vst.msk [vmem:[%s12307 + $0x64] sm:$0xf] %vm1007, %v12268
  %12334 = vst.msk [vmem:[%s12307 + $0x68] sm:$0xf] %vm1007, %v12269
  %12335 = vst.msk [vmem:[%s12307 + $0x6c] sm:$0xf] %vm1007, %v12270
  %12336 = vst.msk [vmem:[%s12307 + $0x70] sm:$0xf] %vm1007, %v12271
  %12337 = vst.msk [vmem:[%s12307 + $0x74] sm:$0xf] %vm1007, %v12272
  %12338 = vst.msk [vmem:[%s12307 + $0x78] sm:$0xf] %vm1007, %v12273
  %12339 = vst.msk [vmem:[%s12307 + $0x7c] sm:$0xf] %vm1007, %v12274
  // Predicated region
  $region46: #{conv_bn_act_block.1} parent=0 // pred_check
    _
  $region47: #{conv_bn_act_block.1} parent=0 // pred_check_branch
    %12341 = sbr.rel (0) target = $region49
  $region48: #{conv_bn_act_block.1} parent=0 // pred_region
    _
  $region49: #{conv_bn_act_block.1} parent=0 // pred_fallthru
    _
  // Predicated region
  $region50: #{conv_bn_act_block.1} parent=0 // pred_check
    _
  $region51: #{conv_bn_act_block.1} parent=0 // pred_check_branch
    %12343 = sbr.rel (0) target = $region53
  $region52: #{conv_bn_act_block.1} parent=0 // pred_region
    _
  $region53: #{conv_bn_act_block.1} parent=0 // pred_fallthru
    _

</llo_original>
